<compile_context>
chip_gen: v7x
topology: tpu7x:2x2x1
jax: 0.10.0
libtpu: 0.0.40
codegen_flags: <defaults>
</compile_context>

<pallas_src>
import functools

import jax
import jax.numpy as jnp
from jax import lax
from jax.experimental import pallas as pl
from jax.experimental.pallas import tpu as pltpu

LEAKY_SLOPE = 0.01
BN_EPS = 1e-5
MAX_LANE_TILE = 2048         # tile on the big B*T*H*W axis (parallel grid axis)
CH_PAD = 8                   # conv output-channel padding multiple (sublane granule)
ACT_DTYPE = jnp.bfloat16     # MXU operand / activation storage dtype


def _rup(n, m):
    return ((n + m - 1) // m) * m


# ---------------------------------------------------------------------------
# Fused GEMM kernel:  out = epilogue( W @ X )
#   W: (Cout, K)   X: (K, M)   out: (Cout, M)      (M is lane-dense)
#   epilogue: (+bias -> LeakyReLU)? -> *scale+shift (folded BN) -> +residual? -> sigmoid?
# ---------------------------------------------------------------------------

def _fused_mm_kernel(w_ref, x_ref, aux_ref, *rest, act, slope, has_res, use_sigmoid):
    if has_res:
        res_ref, o_ref = rest
    else:
        (o_ref,) = rest
    y = jnp.dot(w_ref[...], x_ref[...], preferred_element_type=jnp.float32)
    if act:
        y = y + aux_ref[:, 0:1]                      # bias (only needed before the act;
        y = jnp.where(y >= 0, y, slope * y)          #  otherwise folded into shift)
    y = y * aux_ref[:, 1:2] + aux_ref[:, 2:3]        # folded BatchNorm affine
    if has_res:
        y = y + res_ref[...].astype(jnp.float32)     # fused residual add
    if use_sigmoid:
        y = jax.nn.sigmoid(y)                        # fused final nn.Sigmoid
    o_ref[...] = y.astype(o_ref.dtype)


def _choose_lane_tile(m):
    """Lane tile: full extent for tiny M; otherwise a 128-aligned tile giving >= 2 grid
    steps so the single 'parallel' axis can be sharded across both v7x TensorCores
    (no effect on 1-TC v5e/v6e beyond bigger, overhead-amortizing tiles)."""
    if m <= 128:
        return m
    return min(MAX_LANE_TILE, max(128, _rup(pl.cdiv(m, 2), 128)))


def fused_matmul(w, x, bias, scale=None, shift=None, *, act=False,
                 residual=None, use_sigmoid=False, out_dtype=ACT_DTYPE):
    """out = epilogue(w @ x); w:(Cout,K), x:(K,M), per-Cout bias/scale/shift."""
    Cout, K = w.shape
    K2, M = x.shape
    assert K == K2, (w.shape, x.shape)
    bias = bias.astype(jnp.float32)
    scale = jnp.ones((Cout,), jnp.float32) if scale is None else scale.astype(jnp.float32)
    shift = jnp.zeros((Cout,), jnp.float32) if shift is None else shift.astype(jnp.float32)
    if not act:
        # (y + b)*s + t == y*s + (b*s + t): fold bias into the shift, skip one VPU add.
        shift = shift + bias * scale
        bias = jnp.zeros_like(bias)
    aux = jnp.stack([bias, scale, shift], axis=1)                 # (Cout, 3) f32

    tn = _choose_lane_tile(M)
    grid = (pl.cdiv(M, tn),)

    operands = [w.astype(ACT_DTYPE), x.astype(ACT_DTYPE), aux]
    in_specs = [
        pl.BlockSpec((Cout, K), lambda j: (0, 0)),    # weights stay resident
        pl.BlockSpec((K, tn), lambda j: (0, j)),
        pl.BlockSpec((Cout, 3), lambda j: (0, 0)),    # packed bias/scale/shift
    ]
    if residual is not None:
        operands.append(residual.reshape(Cout, M).astype(ACT_DTYPE))
        in_specs.append(pl.BlockSpec((Cout, tn), lambda j: (0, j)))

    # Explicit VMEM budget (double-buffered blocks) -> safe on v7x's 64 MiB VMEM while
    # allowing the larger lane tiles on v5e/v6e.
    out_item = jnp.dtype(out_dtype).itemsize
    blk_bytes = (Cout * K * 2 + K * tn * 2 + Cout * 3 * 4 + Cout * tn * out_item
                 + (Cout * tn * 2 if residual is not None else 0))
    vmem_limit = int(min(48 << 20, max(16 << 20, 3 * blk_bytes)))

    kern = functools.partial(_fused_mm_kernel, act=act, slope=LEAKY_SLOPE,
                             has_res=residual is not None, use_sigmoid=use_sigmoid)
    # K (= Cin*k^3 or fc width) fits a single block for this module, so there is no
    # K grid axis, no accumulator scratch and no pad/slice copies of the activations.
    return pl.pallas_call(
        kern,
        out_shape=jax.ShapeDtypeStruct((Cout, M), out_dtype),
        grid_spec=pltpu.PrefetchScalarGridSpec(
            num_scalar_prefetch=0,
            grid=grid,
            in_specs=in_specs,
            out_specs=pl.BlockSpec((Cout, tn), lambda j: (0, j)),
        ),
        compiler_params=pltpu.CompilerParams(
            dimension_semantics=("parallel",),
            vmem_limit_bytes=vmem_limit),
    )(*operands)


# ---------------------------------------------------------------------------
# Fused FC stack: all Linear / LeakyReLU / BatchNorm1d layers in ONE pallas_call.
# ---------------------------------------------------------------------------

def _fc_stack_kernel(*refs, acts, slope):
    x_ref = refs[0]
    o_ref = refs[-1]
    y = x_ref[...]
    for li, act in enumerate(acts):
        w_ref = refs[1 + 2 * li]
        aux_ref = refs[2 + 2 * li]
        z = jnp.dot(w_ref[...], y.astype(w_ref.dtype),
                    preferred_element_type=jnp.float32)
        if act:
            z = z + aux_ref[:, 0:1]
            z = jnp.where(z >= 0, z, slope * z)
        z = z * aux_ref[:, 1:2] + aux_ref[:, 2:3]
        y = z
    o_ref[...] = y.astype(o_ref.dtype)


def fc_stack(x, layers):
    """x: (features, B*t).  Runs every fc layer in a single kernel; weights, biases and
    folded BN affines all stay resident in VMEM (a few tens of KiB for this module)."""
    if not layers:
        return x
    M = x.shape[1]
    operands = [x.astype(ACT_DTYPE)]
    in_specs = [pl.BlockSpec(x.shape, lambda i: (0, 0))]
    acts = []
    d_last = x.shape[0]
    for p in layers:
        w = p['w']
        d_out, d_in = w.shape
        assert d_in == d_last, (d_in, d_last)
        d_last = d_out
        if 'bn' in p:
            s, t = bn_fold(*p['bn'])
        else:
            s = jnp.ones((d_out,), jnp.float32)
            t = jnp.zeros((d_out,), jnp.float32)
        b = p['b'].astype(jnp.float32)
        act = bool(p['act'])
        if not act:                                   # fold bias into shift
            t = t + b * s
            b = jnp.zeros_like(b)
        aux = jnp.stack([b, s, t], axis=1)
        operands += [w.astype(ACT_DTYPE), aux]
        in_specs += [pl.BlockSpec(w.shape, lambda i: (0, 0)),
                     pl.BlockSpec((d_out, 3), lambda i: (0, 0))]
        acts.append(act)

    kern = functools.partial(_fc_stack_kernel, acts=tuple(acts), slope=LEAKY_SLOPE)
    return pl.pallas_call(
        kern,
        out_shape=jax.ShapeDtypeStruct((d_last, M), ACT_DTYPE),
        grid_spec=pltpu.PrefetchScalarGridSpec(
            num_scalar_prefetch=0,
            grid=(1,),
            in_specs=in_specs,
            out_specs=pl.BlockSpec((d_last, M), lambda i: (0, 0)),
        ),
        compiler_params=pltpu.CompilerParams(
            dimension_semantics=("arbitrary",)),
    )(*operands)


# ---------------------------------------------------------------------------
# Convolutions (im2col glue in JAX, hot path = one fused Pallas GEMM each)
# ---------------------------------------------------------------------------

def conv3d(x, w, bias, stride, pad, *, scale=None, shift=None, act=False,
           residual=None, use_sigmoid=False, out_dtype=ACT_DTYPE):
    """x: (C>=Cin, B,T,H,W); w: (Cout,Cin,kT,kH,kW) (PyTorch Conv3d weight layout).
    pad = ((t_lo,t_hi),(h_lo,h_hi),(w_lo,w_hi)) -- asymmetric allowed (causal convs).
    Zero-padded channels of the producer are sliced off so they never hit the im2col."""
    Cout, Cin, kT, kH, kW = w.shape
    x = x[:Cin]
    _, B, T, H, W = x.shape
    sT, sH, sW = stride
    (tl, th_), (hl, hh), (wl, wh) = pad
    if any((tl, th_, hl, hh, wl, wh)):
        x = jnp.pad(x, ((0, 0), (0, 0), (tl, th_), (hl, hh), (wl, wh)))
    Tp, Hp, Wp = T + tl + th_, H + hl + hh, W + wl + wh
    To = (Tp - kT) // sT + 1
    Ho = (Hp - kH) // sH + 1
    Wo = (Wp - kW) // sW + 1
    cols = []
    for dt in range(kT):
        for dh in range(kH):
            for dw in range(kW):
                cols.append(x[:, :,
                              dt: dt + sT * (To - 1) + 1: sT,
                              dh: dh + sH * (Ho - 1) + 1: sH,
                              dw: dw + sW * (Wo - 1) + 1: sW])
    # (Cin, k^3, B, To, Ho, Wo) is already in (K, M) order: the reshape is layout-free.
    col = jnp.stack(cols, axis=1).reshape(Cin * kT * kH * kW, B * To * Ho * Wo)
    w2 = w.reshape(Cout, Cin * kT * kH * kW)
    y = fused_matmul(w2, col, bias, scale, shift, act=act, residual=residual,
                     use_sigmoid=use_sigmoid, out_dtype=out_dtype)
    return y.reshape(Cout, B, To, Ho, Wo)


def causal_conv3d(x, w, bias, stride, space_pad, **kw):
    # PyTorch CausalConv3d pads both temporal sides by kT-1 and chomps the trailing
    # (kT-1)//stride_t frames; for kT=3 and stride_t in {1,2} this is numerically
    # identical to a left-only pad of kT-1 (verified window-by-window), so the chomped
    # frames are simply never computed.  For stride_t >= 3 the conventions diverge.
    kT = w.shape[2]
    assert stride[0] in (1, 2), "left-pad == pad+chomp equivalence needs stride_t in {1,2}"
    pad = ((kT - 1, 0), (space_pad, space_pad), (space_pad, space_pad))
    return conv3d(x, w, bias, stride, pad, **kw)


def _phase_taps(kernel, stride, pad_):
    """Per output phase: list of (kernel tap k, input offset m), i.e. i = q + m."""
    out = []
    for phase in range(stride):
        taps = []
        for k in range(kernel):
            num = phase + pad_ - k
            if num % stride == 0:
                taps.append((k, num // stride))
        out.append(taps)
    return out


def conv_transpose3d(x, w, bias, stride, padding, output_padding, *,
                     scale=None, shift=None, act=False, out_dtype=ACT_DTYPE):
    """Sub-pixel (phase) decomposition of ConvTranspose3d, fused into ONE pallas_call:
    per-phase weights are stacked along the Cout/sublane axis (zeros where a phase has
    no tap) and share a single union-of-input-offset column matrix, so nothing ever
    multiplies against a zero-stuffed input and launch count drops from
    stride[0]*stride[1]*stride[2] to 1.
    x: (C>=Cin,B,T,H,W); w: (Cin,Cout,kT,kH,kW) (PyTorch ConvTranspose3d layout)."""
    Cin = w.shape[0]
    x = x[:Cin]
    _, B, T, H, W = x.shape
    _, Cout, kT, kH, kW = w.shape
    ks = (kT, kH, kW)
    dims = (T, H, W)
    outs = tuple((i - 1) * s - 2 * p + k + op
                 for i, s, p, k, op in zip(dims, stride, padding, ks, output_padding))
    assert all(o % s == 0 for o, s in zip(outs, stride))
    Q = tuple(o // s for o, s in zip(outs, stride))

    taps = [_phase_taps(k, s, p) for k, s, p in zip(ks, stride, padding)]
    m_vals = [sorted({m for tl in taps[d] for _, m in tl}) for d in range(3)]
    m_pos = [{m: i for i, m in enumerate(mv)} for mv in m_vals]
    n_md = [len(mv) for mv in m_vals]
    n_m = n_md[0] * n_md[1] * n_md[2]
    n_ph = stride[0] * stride[1] * stride[2]

    pad_cfg = [(max(0, -mv[0]), max(0, (q - 1) + mv[-1] - (d - 1)))
               for mv, q, d in zip(m_vals, Q, dims)]
    xp = jnp.pad(x, ((0, 0), (0, 0), *pad_cfg))

    # Union-of-offsets column matrix, shared by every phase (<= 12 slabs).
    slabs = []
    for mt in m_vals[0]:
        for mh in m_vals[1]:
            for mw in m_vals[2]:
                st = mt + pad_cfg[0][0]
                sh = mh + pad_cfg[1][0]
                sw = mw + pad_cfg[2][0]
                slabs.append(xp[:, :, st:st + Q[0], sh:sh + Q[1], sw:sw + Q[2]])
    M = B * Q[0] * Q[1] * Q[2]
    col = jnp.stack(slabs, axis=1).reshape(Cin * n_m, M)

    # Stacked per-phase weights (n_ph*Cout, Cin*n_m); built from constants only, so XLA
    # folds the construction at compile time.
    wstack = jnp.zeros((n_ph, Cout, Cin, n_m), w.dtype)
    pi = 0
    for pt in range(stride[0]):
        for ph in range(stride[1]):
            for pw in range(stride[2]):
                for kt_, mt in taps[0][pt]:
                    for kh_, mh in taps[1][ph]:
                        for kw_, mw in taps[2][pw]:
                            mc = (m_pos[0][mt] * n_md[1] + m_pos[1][mh]) * n_md[2] \
                                 + m_pos[2][mw]
                            wstack = wstack.at[pi, :, :, mc].set(w[:, :, kt_, kh_, kw_].T)
                pi += 1
    w2 = wstack.reshape(n_ph * Cout, Cin * n_m)

    if scale is None:
        scale = jnp.ones((Cout,), jnp.float32)
    if shift is None:
        shift = jnp.zeros((Cout,), jnp.float32)
    y = fused_matmul(w2, col,
                     jnp.tile(bias.astype(jnp.float32), n_ph),
                     jnp.tile(scale.astype(jnp.float32), n_ph),
                     jnp.tile(shift.astype(jnp.float32), n_ph),
                     act=act, out_dtype=out_dtype)

    # Phase de-interleave.  TODO(synk): write the phase-interleaved layout directly from
    # the kernel (phase-indexed 8-D out BlockSpec) to remove this XLA relayout copy.
    y = y.reshape(stride[0], stride[1], stride[2], Cout, B, Q[0], Q[1], Q[2])
    y = y.transpose(3, 4, 5, 0, 6, 1, 7, 2).reshape(
        Cout, B, Q[0] * stride[0], Q[1] * stride[1], Q[2] * stride[2])
    return y


def decoder_residual_dense(x, w, scale):
    """ConvTranspose3d(k=1, stride=(ts,2,2), output_padding=(ts-1,1,1)) + BN residual:
    only positions (ts*t, 2h, 2w) receive input contributions.  Returns the dense
    (input-resolution) contribution already scaled by the folded BN scale; the constant
    background bias*scale+shift is folded into the next conv's shift, and the scatter to
    output resolution is a zero lax.pad.
    TODO(synk): stream only the dense low-res residual into the final conv (mask-add by
    lane index / phase-aware output write) instead of the zero-stuffed full-res tensor."""
    Cin = w.shape[0]
    x = x[:Cin]
    _, B, T, H, W = x.shape
    Cout = w.shape[1]
    w2 = w.reshape(Cin, Cout).T                      # (Cout, Cin)
    y = fused_matmul(w2, x.reshape(Cin, B * T * H * W),
                     jnp.zeros((Cout,), jnp.float32), scale, None, act=False)
    return y.reshape(Cout, B, T, H, W)


# ---------------------------------------------------------------------------
# Parameters (deterministic synthetic init; channel padding rows/cols are exact zeros /
# BN-neutral so the real-channel computation is identical to the unpadded architecture)
# ---------------------------------------------------------------------------

class ParamGen:
    def __init__(self, seed):
        self._key = jax.random.PRNGKey(seed)
        self._n = 0

    def next(self, shape, scale=0.1):
        self._n += 1
        k = jax.random.fold_in(self._key, self._n)
        return scale * jax.random.normal(k, shape, jnp.float32)


def _padv(v, n, value=0.0):
    return jnp.pad(v, (0, n - v.shape[0]), constant_values=value)


def _pad_axis(a, axis, n):
    pad = [(0, 0)] * a.ndim
    pad[axis] = (0, n - a.shape[axis])
    return jnp.pad(a, pad)


def init_bn(pg, c_real, c_pad):
    gamma = _padv(1.0 + pg.next((c_real,)), c_pad, 1.0)
    beta = _padv(pg.next((c_real,)), c_pad, 0.0)
    rmean = _padv(pg.next((c_real,)), c_pad, 0.0)
    rvar = _padv(1.0 + jnp.abs(pg.next((c_real,))), c_pad, 1.0)
    return (gamma, beta, rmean, rvar)


def bn_fold(gamma, beta, rmean, rvar):
    s = gamma * lax.rsqrt(rvar + BN_EPS)
    return s, beta - rmean * s


def init_encoder_block(pg, cin, cout):
    cp = _rup(cout, CH_PAD)
    return dict(
        res_w=_pad_axis(pg.next((cout, cin, 1, 1, 1)), 0, cp),
        res_b=_padv(pg.next((cout,)), cp), res_bn=init_bn(pg, cout, cp),
        c1_w=_pad_axis(pg.next((cout, cin, 3, 3, 3)), 0, cp),
        c1_b=_padv(pg.next((cout,)), cp), bn1=init_bn(pg, cout, cp),
        c2_w=_pad_axis(pg.next((cout, cout, 3, 3, 3)), 0, cp),
        c2_b=_padv(pg.next((cout,)), cp), bn2=init_bn(pg, cout, cp),
        c3_w=_pad_axis(pg.next((cout, cout, 3, 3, 3)), 0, cp),
        c3_b=_padv(pg.next((cout,)), cp), bn3=init_bn(pg, cout, cp),
    )


def init_decoder_block(pg, cin, cout):
    cp = _rup(cout, CH_PAD)
    return dict(
        res_w=_pad_axis(pg.next((cin, cout, 1, 1, 1)), 1, cp),
        res_b=_padv(pg.next((cout,)), cp), res_bn=init_bn(pg, cout, cp),
        ct_w=_pad_axis(pg.next((cin, cout, 3, 3, 3)), 1, cp),
        ct_b=_padv(pg.next((cout,)), cp), bn1=init_bn(pg, cout, cp),
        c2_w=_pad_axis(pg.next((cout, cout, 3, 3, 3)), 0, cp),
        c2_b=_padv(pg.next((cout,)), cp), bn2=init_bn(pg, cout, cp),
        c3_w=_pad_axis(pg.next((cout, cout, 3, 3, 3)), 0, cp),
        c3_b=_padv(pg.next((cout,)), cp), bn3=init_bn(pg, cout, cp),
    )


def init_fc_layer(pg, d_in, d_out, batchnorm, act):
    p = dict(w=pg.next((d_out, d_in)), b=pg.next((d_out,)), act=act)   # (out, in)
    if batchnorm:
        p['bn'] = (1.0 + pg.next((d_out,)), pg.next((d_out,)),
                   pg.next((d_out,)), 1.0 + jnp.abs(pg.next((d_out,))))
    return p


def init_model(seed, *, input_shape, encoder_sizes, fc_sizes, temporal_strides,
               color_channels, decoder_sizes=None):
    pg = ParamGen(seed)
    decoder_sizes = (list(decoder_sizes) if decoder_sizes is not None
                     else list(reversed(encoder_sizes)))
    enc_dims = list(zip([color_channels, *encoder_sizes], encoder_sizes))
    temporal_strides = list(temporal_strides)
    assert len(temporal_strides) == len(enc_dims)

    params = {}
    params['enc_blocks'] = [init_encoder_block(pg, ci, co) for ci, co in enc_dims]

    # shape math for the conv-encoder output (real, unpadded channel count)
    t, h, w = input_shape
    for ts in temporal_strides:
        t = (t - 1) // ts + 1
        h = (h - 1) // 2 + 1
        w = (w - 1) // 2 + 1
    c = encoder_sizes[-1]
    intermediate_shape = (t, c, h, w)
    first_fc = c * h * w

    fc_dims = list(zip([first_fc, *fc_sizes], fc_sizes))
    fc_enc = []
    if fc_dims:
        for d_in, d_out in fc_dims[:-1]:
            fc_enc.append(init_fc_layer(pg, d_in, d_out, batchnorm=True, act=True))
        d_in, d_out = fc_dims[-1]
        fc_enc.append(init_fc_layer(pg, d_in, d_out, batchnorm=False, act=False))
    params['fc_encoder'] = fc_enc
    params['fc_decoder'] = [init_fc_layer(pg, d_out, d_in, batchnorm=True, act=True)
                            for d_in, d_out in reversed(fc_dims)]

    dec_dims = list(zip(decoder_sizes, [*decoder_sizes[1:], color_channels]))
    params['dec_blocks'] = [init_decoder_block(pg, ci, co) for ci, co in dec_dims]

    meta = dict(temporal_strides=temporal_strides,
                intermediate_shape=intermediate_shape,
                color_channels=color_channels)
    return params, meta


# ---------------------------------------------------------------------------
# Forward pass
# ---------------------------------------------------------------------------

def encoder_block(x, p, ts):
    s_r, t_r = bn_fold(*p['res_bn'])
    res = conv3d(x, p['res_w'], p['res_b'], (ts, 2, 2),
                 ((0, 0), (0, 0), (0, 0)), scale=s_r, shift=t_r, act=False)
    s1, t1 = bn_fold(*p['bn1'])
    s2, t2 = bn_fold(*p['bn2'])
    s3, t3 = bn_fold(*p['bn3'])
    # PyTorch op order inside each Sequential is Conv -> LeakyReLU -> BatchNorm.
    y = causal_conv3d(x, p['c1_w'], p['c1_b'], (ts, 2, 2), 1,
                      scale=s1, shift=t1, act=True)
    y = causal_conv3d(y, p['c2_w'], p['c2_b'], (1, 1, 1), 1,
                      scale=s2, shift=t2, act=True)
    # residual add fused into the last conv's epilogue
    y = causal_conv3d(y, p['c3_w'], p['c3_b'], (1, 1, 1), 1,
                      scale=s3, shift=t3, act=False, residual=res)
    return y


def decoder_block(x, p, ts, *, final_sigmoid=False):
    s_r, t_r = bn_fold(*p['res_bn'])
    dense = decoder_residual_dense(x, p['res_w'], s_r)
    res = lax.pad(dense, jnp.zeros((), dense.dtype),
                  ((0, 0, 0), (0, 0, 0),
                   (0, ts - 1, ts - 1), (0, 1, 1), (0, 1, 1)))
    c_r = p['res_b'] * s_r + t_r              # residual bias/BN constant, folded below

    s1, t1 = bn_fold(*p['bn1'])
    s2, t2 = bn_fold(*p['bn2'])
    s3, t3 = bn_fold(*p['bn3'])
    y = conv_transpose3d(x, p['ct_w'], p['ct_b'], (ts, 2, 2), (1, 1, 1),
                         (ts - 1, 1, 1), scale=s1, shift=t1, act=True)
    y = conv3d(y, p['c2_w'], p['c2_b'], (1, 1, 1), ((1, 1), (1, 1), (1, 1)),
               scale=s2, shift=t2, act=True)
    # residual add (+ its constant via the shift) and the final nn.Sigmoid are fused
    # into the last conv's epilogue.
    y = conv3d(y, p['c3_w'], p['c3_b'], (1, 1, 1), ((1, 1), (1, 1), (1, 1)),
               scale=s3, shift=t3 + c_r, act=False, residual=res,
               use_sigmoid=final_sigmoid,
               out_dtype=jnp.float32 if final_sigmoid else ACT_DTYPE)
    return y


def model_forward(params, meta, x):
    ts_list = meta['temporal_strides']
    t, c, h, w = meta['intermediate_shape']
    B = x.shape[0]

    # NCDHW -> internal (C, B, T, H, W) layout, bf16 activations
    y = jnp.transpose(x, (1, 0, 2, 3, 4)).astype(ACT_DTYPE)

    for p, ts in zip(params['enc_blocks'], ts_list):
        y = encoder_block(y, p, ts)

    # conv -> fc boundary: (c,B,t,h,w) -> (c*h*w, B*t); features ordered (c,h,w),
    # columns ordered (b,t) -- matches PyTorch's permute+view.  Drop channel padding.
    y = y[:c].transpose(0, 3, 4, 1, 2).reshape(c * h * w, B * t)
    y = fc_stack(y, params['fc_encoder'] + params['fc_decoder'])
    # fc -> conv boundary
    y = y.reshape(c, h, w, B, t).transpose(0, 3, 4, 1, 2)

    n_dec = len(params['dec_blocks'])
    for i, (p, ts) in enumerate(zip(params['dec_blocks'], list(reversed(ts_list)))):
        y = decoder_block(y, p, ts, final_sigmoid=(i == n_dec - 1))

    # drop channel padding, back to NCDHW
    return jnp.transpose(y[:meta['color_channels']], (1, 0, 2, 3, 4))


# ---------------------------------------------------------------------------

if __name__ == "__main__":
    # Equivalent PyTorch config:
    #   ResidualVideoAE((8, 16, 16), encoder_sizes=[6, 8], fc_sizes=[32],
    #                   color_channels=3, temporal_strides=[1, 2])
    input_shape = (8, 16, 16)
    encoder_sizes = [6, 8]
    fc_sizes = [32]
    temporal_strides = [1, 2]
    color_channels = 3

    params, meta = init_model(
        0, input_shape=input_shape, encoder_sizes=encoder_sizes,
        fc_sizes=fc_sizes, temporal_strides=temporal_strides,
        color_channels=color_channels)

    key = jax.random.PRNGKey(0)
    x = jax.random.normal(key, (2, color_channels, *input_shape), jnp.float32)

    fwd = jax.jit(lambda v: model_forward(params, meta, v))
    y = jax.block_until_ready(fwd(x))

    assert y.shape == x.shape, (y.shape, x.shape)
    assert bool(jnp.all(jnp.isfinite(y)))
    print("KERNEL_OK")
</pallas_src>

<mosaic_0001>
module attributes {stable_mosaic.version = 11 : i64} {
  func.func @_fused_mm_kernel(%arg0: i32, %arg1: memref<8x3xbf16, #tpu.memory_space<vmem>>, %arg2: memref<3x512xbf16, #tpu.memory_space<vmem>>, %arg3: memref<8x3xf32, #tpu.memory_space<vmem>>, %arg4: memref<8x512xbf16, #tpu.memory_space<vmem>>) attributes {dimension_semantics = [#tpu.dimension_semantics<parallel>], iteration_bounds = array<i64: 2>, scalar_prefetch = 0 : i64, scratch_operands = 0 : i64, tpu.core_type = #tpu.core_type<tc>, window_params = [{pipeline_mode = #tpu.pipeline_mode<synchronous>, transform_indices = @transform_0, window_bounds = array<i64: 8, 3>}, {transform_indices = @transform_1, window_bounds = array<i64: 3, 512>}, {pipeline_mode = #tpu.pipeline_mode<synchronous>, transform_indices = @transform_2, window_bounds = array<i64: 8, 3>}, {transform_indices = @transform_3, window_bounds = array<i64: 8, 512>}]} {
    %c0 = arith.constant 0 : index
    %c0_0 = arith.constant 0 : index
    %0 = vector.load %arg1[%c0, %c0_0] : memref<8x3xbf16, #tpu.memory_space<vmem>>, vector<8x3xbf16>
    %c0_1 = arith.constant 0 : index
    %c0_2 = arith.constant 0 : index
    %1 = vector.load %arg2[%c0_1, %c0_2] : memref<3x512xbf16, #tpu.memory_space<vmem>>, vector<3x512xbf16>
    %cst = arith.constant dense<0.000000e+00> : vector<8x512xf32>
    %2 = tpu.matmul %0, %1, %cst {dimension_numbers = #tpu.dot_dimension_numbers<[1], [0], [0], [1], [0, 0, 1, 1], [], []>} : vector<8x3xbf16>, vector<3x512xbf16>, vector<8x512xf32> -> vector<8x512xf32>
    %c0_3 = arith.constant 0 : index
    %c1 = arith.constant 1 : index
    %3 = vector.load %arg3[%c0_3, %c1] : memref<8x3xf32, #tpu.memory_space<vmem>>, vector<8x1xf32>
    %4 = vector.broadcast %3 : vector<8x1xf32> to vector<8x512xf32>
    %5 = arith.mulf %2, %4 : vector<8x512xf32>
    %c0_4 = arith.constant 0 : index
    %c2 = arith.constant 2 : index
    %6 = vector.load %arg3[%c0_4, %c2] : memref<8x3xf32, #tpu.memory_space<vmem>>, vector<8x1xf32>
    %7 = vector.broadcast %6 : vector<8x1xf32> to vector<8x512xf32>
    %8 = arith.addf %5, %7 : vector<8x512xf32>
    %9 = arith.truncf %8 : vector<8x512xf32> to vector<8x512xbf16>
    %c0_5 = arith.constant 0 : index
    %c0_6 = arith.constant 0 : index
    %10 = vector.load %arg4[%c0_5, %c0_6] : memref<8x512xbf16, #tpu.memory_space<vmem>>, vector<8x512xbf16>
    tpu.vector_store %arg4[%c0_5, %c0_6], %9 {strides = array<i32>} : memref<8x512xbf16, #tpu.memory_space<vmem>>, vector<8x512xbf16>,
    return
  }
  func.func @transform_0(%arg0: i32) -> (i32, i32) {
    %c0_i32 = arith.constant 0 : i32
    %c0_i32_0 = arith.constant 0 : i32
    %c0_i32_1 = arith.constant 0 : i32
    return %c0_i32, %c0_i32_0 : i32, i32
  }
  func.func @transform_1(%arg0: i32) -> (i32, i32) {
    %c0_i32 = arith.constant 0 : i32
    %c0_i32_0 = arith.constant 0 : i32
    return %c0_i32, %arg0 : i32, i32
  }
  func.func @transform_2(%arg0: i32) -> (i32, i32) {
    %c0_i32 = arith.constant 0 : i32
    %c0_i32_0 = arith.constant 0 : i32
    %c0_i32_1 = arith.constant 0 : i32
    return %c0_i32, %c0_i32_0 : i32, i32
  }
  func.func @transform_3(%arg0: i32) -> (i32, i32) {
    %c0_i32 = arith.constant 0 : i32
    %c0_i32_0 = arith.constant 0 : i32
    return %c0_i32, %arg0 : i32, i32
  }
}

module attributes {stable_mosaic.version = 11 : i64} {
  func.func @_fused_mm_kernel(%arg0: i32, %arg1: memref<8x81xbf16, #tpu.memory_space<vmem>>, %arg2: memref<81x512xbf16, #tpu.memory_space<vmem>>, %arg3: memref<8x3xf32, #tpu.memory_space<vmem>>, %arg4: memref<8x512xbf16, #tpu.memory_space<vmem>>) attributes {dimension_semantics = [#tpu.dimension_semantics<parallel>], iteration_bounds = array<i64: 2>, scalar_prefetch = 0 : i64, scratch_operands = 0 : i64, tpu.core_type = #tpu.core_type<tc>, window_params = [{pipeline_mode = #tpu.pipeline_mode<synchronous>, transform_indices = @transform_0, window_bounds = array<i64: 8, 81>}, {transform_indices = @transform_1, window_bounds = array<i64: 81, 512>}, {pipeline_mode = #tpu.pipeline_mode<synchronous>, transform_indices = @transform_2, window_bounds = array<i64: 8, 3>}, {transform_indices = @transform_3, window_bounds = array<i64: 8, 512>}]} {
    %c0 = arith.constant 0 : index
    %c0_0 = arith.constant 0 : index
    %0 = vector.load %arg1[%c0, %c0_0] : memref<8x81xbf16, #tpu.memory_space<vmem>>, vector<8x81xbf16>
    %c0_1 = arith.constant 0 : index
    %c0_2 = arith.constant 0 : index
    %1 = vector.load %arg2[%c0_1, %c0_2] : memref<81x512xbf16, #tpu.memory_space<vmem>>, vector<81x512xbf16>
    %cst = arith.constant dense<0.000000e+00> : vector<8x512xf32>
    %2 = tpu.matmul %0, %1, %cst {dimension_numbers = #tpu.dot_dimension_numbers<[1], [0], [0], [1], [0, 0, 1, 1], [], []>} : vector<8x81xbf16>, vector<81x512xbf16>, vector<8x512xf32> -> vector<8x512xf32>
    %c0_3 = arith.constant 0 : index
    %c0_4 = arith.constant 0 : index
    %3 = vector.load %arg3[%c0_3, %c0_4] : memref<8x3xf32, #tpu.memory_space<vmem>>, vector<8x1xf32>
    %4 = vector.broadcast %3 : vector<8x1xf32> to vector<8x512xf32>
    %5 = arith.addf %2, %4 : vector<8x512xf32>
    %cst_5 = arith.constant 0.000000e+00 : f32
    %6 = vector.broadcast %cst_5 : f32 to vector<8x512xf32>
    %7 = arith.cmpf oge, %5, %6 : vector<8x512xf32>
    %cst_6 = arith.constant 0.00999999977 : f32
    %8 = vector.broadcast %cst_6 : f32 to vector<8x512xf32>
    %9 = arith.mulf %8, %5 : vector<8x512xf32>
    %10 = arith.select %7, %5, %9 : vector<8x512xi1>, vector<8x512xf32>
    %c0_7 = arith.constant 0 : index
    %c1 = arith.constant 1 : index
    %11 = vector.load %arg3[%c0_7, %c1] : memref<8x3xf32, #tpu.memory_space<vmem>>, vector<8x1xf32>
    %12 = vector.broadcast %11 : vector<8x1xf32> to vector<8x512xf32>
    %13 = arith.mulf %10, %12 : vector<8x512xf32>
    %c0_8 = arith.constant 0 : index
    %c2 = arith.constant 2 : index
    %14 = vector.load %arg3[%c0_8, %c2] : memref<8x3xf32, #tpu.memory_space<vmem>>, vector<8x1xf32>
    %15 = vector.broadcast %14 : vector<8x1xf32> to vector<8x512xf32>
    %16 = arith.addf %13, %15 : vector<8x512xf32>
    %17 = arith.truncf %16 : vector<8x512xf32> to vector<8x512xbf16>
    %c0_9 = arith.constant 0 : index
    %c0_10 = arith.constant 0 : index
    %18 = vector.load %arg4[%c0_9, %c0_10] : memref<8x512xbf16, #tpu.memory_space<vmem>>, vector<8x512xbf16>
    tpu.vector_store %arg4[%c0_9, %c0_10], %17 {strides = array<i32>} : memref<8x512xbf16, #tpu.memory_space<vmem>>, vector<8x512xbf16>,
    return
  }
  func.func @transform_0(%arg0: i32) -> (i32, i32) {
    %c0_i32 = arith.constant 0 : i32
    %c0_i32_0 = arith.constant 0 : i32
    %c0_i32_1 = arith.constant 0 : i32
    return %c0_i32, %c0_i32_0 : i32, i32
  }
  func.func @transform_1(%arg0: i32) -> (i32, i32) {
    %c0_i32 = arith.constant 0 : i32
    %c0_i32_0 = arith.constant 0 : i32
    return %c0_i32, %arg0 : i32, i32
  }
  func.func @transform_2(%arg0: i32) -> (i32, i32) {
    %c0_i32 = arith.constant 0 : i32
    %c0_i32_0 = arith.constant 0 : i32
    %c0_i32_1 = arith.constant 0 : i32
    return %c0_i32, %c0_i32_0 : i32, i32
  }
  func.func @transform_3(%arg0: i32) -> (i32, i32) {
    %c0_i32 = arith.constant 0 : i32
    %c0_i32_0 = arith.constant 0 : i32
    return %c0_i32, %arg0 : i32, i32
  }
}

module attributes {stable_mosaic.version = 11 : i64} {
  func.func @_fused_mm_kernel(%arg0: i32, %arg1: memref<8x162xbf16, #tpu.memory_space<vmem>>, %arg2: memref<162x512xbf16, #tpu.memory_space<vmem>>, %arg3: memref<8x3xf32, #tpu.memory_space<vmem>>, %arg4: memref<8x512xbf16, #tpu.memory_space<vmem>>) attributes {dimension_semantics = [#tpu.dimension_semantics<parallel>], iteration_bounds = array<i64: 2>, scalar_prefetch = 0 : i64, scratch_operands = 0 : i64, tpu.core_type = #tpu.core_type<tc>, window_params = [{pipeline_mode = #tpu.pipeline_mode<synchronous>, transform_indices = @transform_0, window_bounds = array<i64: 8, 162>}, {transform_indices = @transform_1, window_bounds = array<i64: 162, 512>}, {pipeline_mode = #tpu.pipeline_mode<synchronous>, transform_indices = @transform_2, window_bounds = array<i64: 8, 3>}, {transform_indices = @transform_3, window_bounds = array<i64: 8, 512>}]} {
    %c0 = arith.constant 0 : index
    %c0_0 = arith.constant 0 : index
    %0 = vector.load %arg1[%c0, %c0_0] : memref<8x162xbf16, #tpu.memory_space<vmem>>, vector<8x162xbf16>
    %c0_1 = arith.constant 0 : index
    %c0_2 = arith.constant 0 : index
    %1 = vector.load %arg2[%c0_1, %c0_2] : memref<162x512xbf16, #tpu.memory_space<vmem>>, vector<162x512xbf16>
    %cst = arith.constant dense<0.000000e+00> : vector<8x512xf32>
    %2 = tpu.matmul %0, %1, %cst {dimension_numbers = #tpu.dot_dimension_numbers<[1], [0], [0], [1], [0, 0, 1, 1], [], []>} : vector<8x162xbf16>, vector<162x512xbf16>, vector<8x512xf32> -> vector<8x512xf32>
    %c0_3 = arith.constant 0 : index
    %c0_4 = arith.constant 0 : index
    %3 = vector.load %arg3[%c0_3, %c0_4] : memref<8x3xf32, #tpu.memory_space<vmem>>, vector<8x1xf32>
    %4 = vector.broadcast %3 : vector<8x1xf32> to vector<8x512xf32>
    %5 = arith.addf %2, %4 : vector<8x512xf32>
    %cst_5 = arith.constant 0.000000e+00 : f32
    %6 = vector.broadcast %cst_5 : f32 to vector<8x512xf32>
    %7 = arith.cmpf oge, %5, %6 : vector<8x512xf32>
    %cst_6 = arith.constant 0.00999999977 : f32
    %8 = vector.broadcast %cst_6 : f32 to vector<8x512xf32>
    %9 = arith.mulf %8, %5 : vector<8x512xf32>
    %10 = arith.select %7, %5, %9 : vector<8x512xi1>, vector<8x512xf32>
    %c0_7 = arith.constant 0 : index
    %c1 = arith.constant 1 : index
    %11 = vector.load %arg3[%c0_7, %c1] : memref<8x3xf32, #tpu.memory_space<vmem>>, vector<8x1xf32>
    %12 = vector.broadcast %11 : vector<8x1xf32> to vector<8x512xf32>
    %13 = arith.mulf %10, %12 : vector<8x512xf32>
    %c0_8 = arith.constant 0 : index
    %c2 = arith.constant 2 : index
    %14 = vector.load %arg3[%c0_8, %c2] : memref<8x3xf32, #tpu.memory_space<vmem>>, vector<8x1xf32>
    %15 = vector.broadcast %14 : vector<8x1xf32> to vector<8x512xf32>
    %16 = arith.addf %13, %15 : vector<8x512xf32>
    %17 = arith.truncf %16 : vector<8x512xf32> to vector<8x512xbf16>
    %c0_9 = arith.constant 0 : index
    %c0_10 = arith.constant 0 : index
    %18 = vector.load %arg4[%c0_9, %c0_10] : memref<8x512xbf16, #tpu.memory_space<vmem>>, vector<8x512xbf16>
    tpu.vector_store %arg4[%c0_9, %c0_10], %17 {strides = array<i32>} : memref<8x512xbf16, #tpu.memory_space<vmem>>, vector<8x512xbf16>,
    return
  }
  func.func @transform_0(%arg0: i32) -> (i32, i32) {
    %c0_i32 = arith.constant 0 : i32
    %c0_i32_0 = arith.constant 0 : i32
    %c0_i32_1 = arith.constant 0 : i32
    return %c0_i32, %c0_i32_0 : i32, i32
  }
  func.func @transform_1(%arg0: i32) -> (i32, i32) {
    %c0_i32 = arith.constant 0 : i32
    %c0_i32_0 = arith.constant 0 : i32
    return %c0_i32, %arg0 : i32, i32
  }
  func.func @transform_2(%arg0: i32) -> (i32, i32) {
    %c0_i32 = arith.constant 0 : i32
    %c0_i32_0 = arith.constant 0 : i32
    %c0_i32_1 = arith.constant 0 : i32
    return %c0_i32, %c0_i32_0 : i32, i32
  }
  func.func @transform_3(%arg0: i32) -> (i32, i32) {
    %c0_i32 = arith.constant 0 : i32
    %c0_i32_0 = arith.constant 0 : i32
    return %c0_i32, %arg0 : i32, i32
  }
}

module attributes {stable_mosaic.version = 11 : i64} {
  func.func @_fused_mm_kernel(%arg0: i32, %arg1: memref<8x162xbf16, #tpu.memory_space<vmem>>, %arg2: memref<162x512xbf16, #tpu.memory_space<vmem>>, %arg3: memref<8x3xf32, #tpu.memory_space<vmem>>, %arg4: memref<8x512xbf16, #tpu.memory_space<vmem>>, %arg5: memref<8x512xbf16, #tpu.memory_space<vmem>>) attributes {dimension_semantics = [#tpu.dimension_semantics<parallel>], iteration_bounds = array<i64: 2>, scalar_prefetch = 0 : i64, scratch_operands = 0 : i64, tpu.core_type = #tpu.core_type<tc>, window_params = [{pipeline_mode = #tpu.pipeline_mode<synchronous>, transform_indices = @transform_0, window_bounds = array<i64: 8, 162>}, {transform_indices = @transform_1, window_bounds = array<i64: 162, 512>}, {pipeline_mode = #tpu.pipeline_mode<synchronous>, transform_indices = @transform_2, window_bounds = array<i64: 8, 3>}, {transform_indices = @transform_3, window_bounds = array<i64: 8, 512>}, {transform_indices = @transform_4, window_bounds = array<i64: 8, 512>}]} {
    %c0 = arith.constant 0 : index
    %c0_0 = arith.constant 0 : index
    %0 = vector.load %arg1[%c0, %c0_0] : memref<8x162xbf16, #tpu.memory_space<vmem>>, vector<8x162xbf16>
    %c0_1 = arith.constant 0 : index
    %c0_2 = arith.constant 0 : index
    %1 = vector.load %arg2[%c0_1, %c0_2] : memref<162x512xbf16, #tpu.memory_space<vmem>>, vector<162x512xbf16>
    %cst = arith.constant dense<0.000000e+00> : vector<8x512xf32>
    %2 = tpu.matmul %0, %1, %cst {dimension_numbers = #tpu.dot_dimension_numbers<[1], [0], [0], [1], [0, 0, 1, 1], [], []>} : vector<8x162xbf16>, vector<162x512xbf16>, vector<8x512xf32> -> vector<8x512xf32>
    %c0_3 = arith.constant 0 : index
    %c1 = arith.constant 1 : index
    %3 = vector.load %arg3[%c0_3, %c1] : memref<8x3xf32, #tpu.memory_space<vmem>>, vector<8x1xf32>
    %4 = vector.broadcast %3 : vector<8x1xf32> to vector<8x512xf32>
    %5 = arith.mulf %2, %4 : vector<8x512xf32>
    %c0_4 = arith.constant 0 : index
    %c2 = arith.constant 2 : index
    %6 = vector.load %arg3[%c0_4, %c2] : memref<8x3xf32, #tpu.memory_space<vmem>>, vector<8x1xf32>
    %7 = vector.broadcast %6 : vector<8x1xf32> to vector<8x512xf32>
    %8 = arith.addf %5, %7 : vector<8x512xf32>
    %c0_5 = arith.constant 0 : index
    %c0_6 = arith.constant 0 : index
    %9 = vector.load %arg4[%c0_5, %c0_6] : memref<8x512xbf16, #tpu.memory_space<vmem>>, vector<8x512xbf16>
    %10 = arith.extf %9 : vector<8x512xbf16> to vector<8x512xf32>
    %11 = arith.addf %8, %10 : vector<8x512xf32>
    %12 = arith.truncf %11 : vector<8x512xf32> to vector<8x512xbf16>
    %c0_7 = arith.constant 0 : index
    %c0_8 = arith.constant 0 : index
    %13 = vector.load %arg5[%c0_7, %c0_8] : memref<8x512xbf16, #tpu.memory_space<vmem>>, vector<8x512xbf16>
    tpu.vector_store %arg5[%c0_7, %c0_8], %12 {strides = array<i32>} : memref<8x512xbf16, #tpu.memory_space<vmem>>, vector<8x512xbf16>,
    return
  }
  func.func @transform_0(%arg0: i32) -> (i32, i32) {
    %c0_i32 = arith.constant 0 : i32
    %c0_i32_0 = arith.constant 0 : i32
    %c0_i32_1 = arith.constant 0 : i32
    return %c0_i32, %c0_i32_0 : i32, i32
  }
  func.func @transform_1(%arg0: i32) -> (i32, i32) {
    %c0_i32 = arith.constant 0 : i32
    %c0_i32_0 = arith.constant 0 : i32
    return %c0_i32, %arg0 : i32, i32
  }
  func.func @transform_2(%arg0: i32) -> (i32, i32) {
    %c0_i32 = arith.constant 0 : i32
    %c0_i32_0 = arith.constant 0 : i32
    %c0_i32_1 = arith.constant 0 : i32
    return %c0_i32, %c0_i32_0 : i32, i32
  }
  func.func @transform_3(%arg0: i32) -> (i32, i32) {
    %c0_i32 = arith.constant 0 : i32
    %c0_i32_0 = arith.constant 0 : i32
    return %c0_i32, %arg0 : i32, i32
  }
  func.func @transform_4(%arg0: i32) -> (i32, i32) {
    %c0_i32 = arith.constant 0 : i32
    %c0_i32_0 = arith.constant 0 : i32
    return %c0_i32, %arg0 : i32, i32
  }
}

module attributes {stable_mosaic.version = 11 : i64} {
  func.func @_fused_mm_kernel(%arg0: i32, %arg1: memref<8x6xbf16, #tpu.memory_space<vmem>>, %arg2: memref<6x128xbf16, #tpu.memory_space<vmem>>, %arg3: memref<8x3xf32, #tpu.memory_space<vmem>>, %arg4: memref<8x128xbf16, #tpu.memory_space<vmem>>) attributes {dimension_semantics = [#tpu.dimension_semantics<parallel>], iteration_bounds = array<i64: 1>, scalar_prefetch = 0 : i64, scratch_operands = 0 : i64, tpu.core_type = #tpu.core_type<tc>, window_params = [{pipeline_mode = #tpu.pipeline_mode<synchronous>, transform_indices = @transform_0, window_bounds = array<i64: 8, 6>}, {transform_indices = @transform_1, window_bounds = array<i64: 6, 128>}, {pipeline_mode = #tpu.pipeline_mode<synchronous>, transform_indices = @transform_2, window_bounds = array<i64: 8, 3>}, {transform_indices = @transform_3, window_bounds = array<i64: 8, 128>}]} {
    %c0 = arith.constant 0 : index
    %c0_0 = arith.constant 0 : index
    %0 = vector.load %arg1[%c0, %c0_0] : memref<8x6xbf16, #tpu.memory_space<vmem>>, vector<8x6xbf16>
    %c0_1 = arith.constant 0 : index
    %c0_2 = arith.constant 0 : index
    %1 = vector.load %arg2[%c0_1, %c0_2] : memref<6x128xbf16, #tpu.memory_space<vmem>>, vector<6x128xbf16>
    %cst = arith.constant dense<0.000000e+00> : vector<8x128xf32>
    %2 = tpu.matmul %0, %1, %cst {dimension_numbers = #tpu.dot_dimension_numbers<[1], [0], [0], [1], [0, 0, 1, 1], [], []>} : vector<8x6xbf16>, vector<6x128xbf16>, vector<8x128xf32> -> vector<8x128xf32>
    %c0_3 = arith.constant 0 : index
    %c1 = arith.constant 1 : index
    %3 = vector.load %arg3[%c0_3, %c1] : memref<8x3xf32, #tpu.memory_space<vmem>>, vector<8x1xf32>
    %4 = vector.broadcast %3 : vector<8x1xf32> to vector<8x128xf32>
    %5 = arith.mulf %2, %4 : vector<8x128xf32>
    %c0_4 = arith.constant 0 : index
    %c2 = arith.constant 2 : index
    %6 = vector.load %arg3[%c0_4, %c2] : memref<8x3xf32, #tpu.memory_space<vmem>>, vector<8x1xf32>
    %7 = vector.broadcast %6 : vector<8x1xf32> to vector<8x128xf32>
    %8 = arith.addf %5, %7 : vector<8x128xf32>
    %9 = arith.truncf %8 : vector<8x128xf32> to vector<8x128xbf16>
    %c0_5 = arith.constant 0 : index
    %c0_6 = arith.constant 0 : index
    %10 = vector.load %arg4[%c0_5, %c0_6] : memref<8x128xbf16, #tpu.memory_space<vmem>>, vector<8x128xbf16>
    tpu.vector_store %arg4[%c0_5, %c0_6], %9 {strides = array<i32>} : memref<8x128xbf16, #tpu.memory_space<vmem>>, vector<8x128xbf16>,
    return
  }
  func.func @transform_0(%arg0: i32) -> (i32, i32) {
    %c0_i32 = arith.constant 0 : i32
    %c0_i32_0 = arith.constant 0 : i32
    %c0_i32_1 = arith.constant 0 : i32
    return %c0_i32, %c0_i32_0 : i32, i32
  }
  func.func @transform_1(%arg0: i32) -> (i32, i32) {
    %c0_i32 = arith.constant 0 : i32
    %c0_i32_0 = arith.constant 0 : i32
    return %c0_i32, %arg0 : i32, i32
  }
  func.func @transform_2(%arg0: i32) -> (i32, i32) {
    %c0_i32 = arith.constant 0 : i32
    %c0_i32_0 = arith.constant 0 : i32
    %c0_i32_1 = arith.constant 0 : i32
    return %c0_i32, %c0_i32_0 : i32, i32
  }
  func.func @transform_3(%arg0: i32) -> (i32, i32) {
    %c0_i32 = arith.constant 0 : i32
    %c0_i32_0 = arith.constant 0 : i32
    return %c0_i32, %arg0 : i32, i32
  }
}

module attributes {stable_mosaic.version = 11 : i64} {
  func.func @_fused_mm_kernel(%arg0: i32, %arg1: memref<8x162xbf16, #tpu.memory_space<vmem>>, %arg2: memref<162x128xbf16, #tpu.memory_space<vmem>>, %arg3: memref<8x3xf32, #tpu.memory_space<vmem>>, %arg4: memref<8x128xbf16, #tpu.memory_space<vmem>>) attributes {dimension_semantics = [#tpu.dimension_semantics<parallel>], iteration_bounds = array<i64: 1>, scalar_prefetch = 0 : i64, scratch_operands = 0 : i64, tpu.core_type = #tpu.core_type<tc>, window_params = [{pipeline_mode = #tpu.pipeline_mode<synchronous>, transform_indices = @transform_0, window_bounds = array<i64: 8, 162>}, {transform_indices = @transform_1, window_bounds = array<i64: 162, 128>}, {pipeline_mode = #tpu.pipeline_mode<synchronous>, transform_indices = @transform_2, window_bounds = array<i64: 8, 3>}, {transform_indices = @transform_3, window_bounds = array<i64: 8, 128>}]} {
    %c0 = arith.constant 0 : index
    %c0_0 = arith.constant 0 : index
    %0 = vector.load %arg1[%c0, %c0_0] : memref<8x162xbf16, #tpu.memory_space<vmem>>, vector<8x162xbf16>
    %c0_1 = arith.constant 0 : index
    %c0_2 = arith.constant 0 : index
    %1 = vector.load %arg2[%c0_1, %c0_2] : memref<162x128xbf16, #tpu.memory_space<vmem>>, vector<162x128xbf16>
    %cst = arith.constant dense<0.000000e+00> : vector<8x128xf32>
    %2 = tpu.matmul %0, %1, %cst {dimension_numbers = #tpu.dot_dimension_numbers<[1], [0], [0], [1], [0, 0, 1, 1], [], []>} : vector<8x162xbf16>, vector<162x128xbf16>, vector<8x128xf32> -> vector<8x128xf32>
    %c0_3 = arith.constant 0 : index
    %c0_4 = arith.constant 0 : index
    %3 = vector.load %arg3[%c0_3, %c0_4] : memref<8x3xf32, #tpu.memory_space<vmem>>, vector<8x1xf32>
    %4 = vector.broadcast %3 : vector<8x1xf32> to vector<8x128xf32>
    %5 = arith.addf %2, %4 : vector<8x128xf32>
    %cst_5 = arith.constant 0.000000e+00 : f32
    %6 = vector.broadcast %cst_5 : f32 to vector<8x128xf32>
    %7 = arith.cmpf oge, %5, %6 : vector<8x128xf32>
    %cst_6 = arith.constant 0.00999999977 : f32
    %8 = vector.broadcast %cst_6 : f32 to vector<8x128xf32>
    %9 = arith.mulf %8, %5 : vector<8x128xf32>
    %10 = arith.select %7, %5, %9 : vector<8x128xi1>, vector<8x128xf32>
    %c0_7 = arith.constant 0 : index
    %c1 = arith.constant 1 : index
    %11 = vector.load %arg3[%c0_7, %c1] : memref<8x3xf32, #tpu.memory_space<vmem>>, vector<8x1xf32>
    %12 = vector.broadcast %11 : vector<8x1xf32> to vector<8x128xf32>
    %13 = arith.mulf %10, %12 : vector<8x128xf32>
    %c0_8 = arith.constant 0 : index
    %c2 = arith.constant 2 : index
    %14 = vector.load %arg3[%c0_8, %c2] : memref<8x3xf32, #tpu.memory_space<vmem>>, vector<8x1xf32>
    %15 = vector.broadcast %14 : vector<8x1xf32> to vector<8x128xf32>
    %16 = arith.addf %13, %15 : vector<8x128xf32>
    %17 = arith.truncf %16 : vector<8x128xf32> to vector<8x128xbf16>
    %c0_9 = arith.constant 0 : index
    %c0_10 = arith.constant 0 : index
    %18 = vector.load %arg4[%c0_9, %c0_10] : memref<8x128xbf16, #tpu.memory_space<vmem>>, vector<8x128xbf16>
    tpu.vector_store %arg4[%c0_9, %c0_10], %17 {strides = array<i32>} : memref<8x128xbf16, #tpu.memory_space<vmem>>, vector<8x128xbf16>,
    return
  }
  func.func @transform_0(%arg0: i32) -> (i32, i32) {
    %c0_i32 = arith.constant 0 : i32
    %c0_i32_0 = arith.constant 0 : i32
    %c0_i32_1 = arith.constant 0 : i32
    return %c0_i32, %c0_i32_0 : i32, i32
  }
  func.func @transform_1(%arg0: i32) -> (i32, i32) {
    %c0_i32 = arith.constant 0 : i32
    %c0_i32_0 = arith.constant 0 : i32
    return %c0_i32, %arg0 : i32, i32
  }
  func.func @transform_2(%arg0: i32) -> (i32, i32) {
    %c0_i32 = arith.constant 0 : i32
    %c0_i32_0 = arith.constant 0 : i32
    %c0_i32_1 = arith.constant 0 : i32
    return %c0_i32, %c0_i32_0 : i32, i32
  }
  func.func @transform_3(%arg0: i32) -> (i32, i32) {
    %c0_i32 = arith.constant 0 : i32
    %c0_i32_0 = arith.constant 0 : i32
    return %c0_i32, %arg0 : i32, i32
  }
}

module attributes {stable_mosaic.version = 11 : i64} {
  func.func @_fused_mm_kernel(%arg0: i32, %arg1: memref<8x216xbf16, #tpu.memory_space<vmem>>, %arg2: memref<216x128xbf16, #tpu.memory_space<vmem>>, %arg3: memref<8x3xf32, #tpu.memory_space<vmem>>, %arg4: memref<8x128xbf16, #tpu.memory_space<vmem>>) attributes {dimension_semantics = [#tpu.dimension_semantics<parallel>], iteration_bounds = array<i64: 1>, scalar_prefetch = 0 : i64, scratch_operands = 0 : i64, tpu.core_type = #tpu.core_type<tc>, window_params = [{pipeline_mode = #tpu.pipeline_mode<synchronous>, transform_indices = @transform_0, window_bounds = array<i64: 8, 216>}, {transform_indices = @transform_1, window_bounds = array<i64: 216, 128>}, {pipeline_mode = #tpu.pipeline_mode<synchronous>, transform_indices = @transform_2, window_bounds = array<i64: 8, 3>}, {transform_indices = @transform_3, window_bounds = array<i64: 8, 128>}]} {
    %c0 = arith.constant 0 : index
    %c0_0 = arith.constant 0 : index
    %0 = vector.load %arg1[%c0, %c0_0] : memref<8x216xbf16, #tpu.memory_space<vmem>>, vector<8x216xbf16>
    %c0_1 = arith.constant 0 : index
    %c0_2 = arith.constant 0 : index
    %1 = vector.load %arg2[%c0_1, %c0_2] : memref<216x128xbf16, #tpu.memory_space<vmem>>, vector<216x128xbf16>
    %cst = arith.constant dense<0.000000e+00> : vector<8x128xf32>
    %2 = tpu.matmul %0, %1, %cst {dimension_numbers = #tpu.dot_dimension_numbers<[1], [0], [0], [1], [0, 0, 1, 1], [], []>} : vector<8x216xbf16>, vector<216x128xbf16>, vector<8x128xf32> -> vector<8x128xf32>
    %c0_3 = arith.constant 0 : index
    %c0_4 = arith.constant 0 : index
    %3 = vector.load %arg3[%c0_3, %c0_4] : memref<8x3xf32, #tpu.memory_space<vmem>>, vector<8x1xf32>
    %4 = vector.broadcast %3 : vector<8x1xf32> to vector<8x128xf32>
    %5 = arith.addf %2, %4 : vector<8x128xf32>
    %cst_5 = arith.constant 0.000000e+00 : f32
    %6 = vector.broadcast %cst_5 : f32 to vector<8x128xf32>
    %7 = arith.cmpf oge, %5, %6 : vector<8x128xf32>
    %cst_6 = arith.constant 0.00999999977 : f32
    %8 = vector.broadcast %cst_6 : f32 to vector<8x128xf32>
    %9 = arith.mulf %8, %5 : vector<8x128xf32>
    %10 = arith.select %7, %5, %9 : vector<8x128xi1>, vector<8x128xf32>
    %c0_7 = arith.constant 0 : index
    %c1 = arith.constant 1 : index
    %11 = vector.load %arg3[%c0_7, %c1] : memref<8x3xf32, #tpu.memory_space<vmem>>, vector<8x1xf32>
    %12 = vector.broadcast %11 : vector<8x1xf32> to vector<8x128xf32>
    %13 = arith.mulf %10, %12 : vector<8x128xf32>
    %c0_8 = arith.constant 0 : index
    %c2 = arith.constant 2 : index
    %14 = vector.load %arg3[%c0_8, %c2] : memref<8x3xf32, #tpu.memory_space<vmem>>, vector<8x1xf32>
    %15 = vector.broadcast %14 : vector<8x1xf32> to vector<8x128xf32>
    %16 = arith.addf %13, %15 : vector<8x128xf32>
    %17 = arith.truncf %16 : vector<8x128xf32> to vector<8x128xbf16>
    %c0_9 = arith.constant 0 : index
    %c0_10 = arith.constant 0 : index
    %18 = vector.load %arg4[%c0_9, %c0_10] : memref<8x128xbf16, #tpu.memory_space<vmem>>, vector<8x128xbf16>
    tpu.vector_store %arg4[%c0_9, %c0_10], %17 {strides = array<i32>} : memref<8x128xbf16, #tpu.memory_space<vmem>>, vector<8x128xbf16>,
    return
  }
  func.func @transform_0(%arg0: i32) -> (i32, i32) {
    %c0_i32 = arith.constant 0 : i32
    %c0_i32_0 = arith.constant 0 : i32
    %c0_i32_1 = arith.constant 0 : i32
    return %c0_i32, %c0_i32_0 : i32, i32
  }
  func.func @transform_1(%arg0: i32) -> (i32, i32) {
    %c0_i32 = arith.constant 0 : i32
    %c0_i32_0 = arith.constant 0 : i32
    return %c0_i32, %arg0 : i32, i32
  }
  func.func @transform_2(%arg0: i32) -> (i32, i32) {
    %c0_i32 = arith.constant 0 : i32
    %c0_i32_0 = arith.constant 0 : i32
    %c0_i32_1 = arith.constant 0 : i32
    return %c0_i32, %c0_i32_0 : i32, i32
  }
  func.func @transform_3(%arg0: i32) -> (i32, i32) {
    %c0_i32 = arith.constant 0 : i32
    %c0_i32_0 = arith.constant 0 : i32
    return %c0_i32, %arg0 : i32, i32
  }
}

module attributes {stable_mosaic.version = 11 : i64} {
  func.func @_fused_mm_kernel(%arg0: i32, %arg1: memref<8x216xbf16, #tpu.memory_space<vmem>>, %arg2: memref<216x128xbf16, #tpu.memory_space<vmem>>, %arg3: memref<8x3xf32, #tpu.memory_space<vmem>>, %arg4: memref<8x128xbf16, #tpu.memory_space<vmem>>, %arg5: memref<8x128xbf16, #tpu.memory_space<vmem>>) attributes {dimension_semantics = [#tpu.dimension_semantics<parallel>], iteration_bounds = array<i64: 1>, scalar_prefetch = 0 : i64, scratch_operands = 0 : i64, tpu.core_type = #tpu.core_type<tc>, window_params = [{pipeline_mode = #tpu.pipeline_mode<synchronous>, transform_indices = @transform_0, window_bounds = array<i64: 8, 216>}, {transform_indices = @transform_1, window_bounds = array<i64: 216, 128>}, {pipeline_mode = #tpu.pipeline_mode<synchronous>, transform_indices = @transform_2, window_bounds = array<i64: 8, 3>}, {transform_indices = @transform_3, window_bounds = array<i64: 8, 128>}, {transform_indices = @transform_4, window_bounds = array<i64: 8, 128>}]} {
    %c0 = arith.constant 0 : index
    %c0_0 = arith.constant 0 : index
    %0 = vector.load %arg1[%c0, %c0_0] : memref<8x216xbf16, #tpu.memory_space<vmem>>, vector<8x216xbf16>
    %c0_1 = arith.constant 0 : index
    %c0_2 = arith.constant 0 : index
    %1 = vector.load %arg2[%c0_1, %c0_2] : memref<216x128xbf16, #tpu.memory_space<vmem>>, vector<216x128xbf16>
    %cst = arith.constant dense<0.000000e+00> : vector<8x128xf32>
    %2 = tpu.matmul %0, %1, %cst {dimension_numbers = #tpu.dot_dimension_numbers<[1], [0], [0], [1], [0, 0, 1, 1], [], []>} : vector<8x216xbf16>, vector<216x128xbf16>, vector<8x128xf32> -> vector<8x128xf32>
    %c0_3 = arith.constant 0 : index
    %c1 = arith.constant 1 : index
    %3 = vector.load %arg3[%c0_3, %c1] : memref<8x3xf32, #tpu.memory_space<vmem>>, vector<8x1xf32>
    %4 = vector.broadcast %3 : vector<8x1xf32> to vector<8x128xf32>
    %5 = arith.mulf %2, %4 : vector<8x128xf32>
    %c0_4 = arith.constant 0 : index
    %c2 = arith.constant 2 : index
    %6 = vector.load %arg3[%c0_4, %c2] : memref<8x3xf32, #tpu.memory_space<vmem>>, vector<8x1xf32>
    %7 = vector.broadcast %6 : vector<8x1xf32> to vector<8x128xf32>
    %8 = arith.addf %5, %7 : vector<8x128xf32>
    %c0_5 = arith.constant 0 : index
    %c0_6 = arith.constant 0 : index
    %9 = vector.load %arg4[%c0_5, %c0_6] : memref<8x128xbf16, #tpu.memory_space<vmem>>, vector<8x128xbf16>
    %10 = arith.extf %9 : vector<8x128xbf16> to vector<8x128xf32>
    %11 = arith.addf %8, %10 : vector<8x128xf32>
    %12 = arith.truncf %11 : vector<8x128xf32> to vector<8x128xbf16>
    %c0_7 = arith.constant 0 : index
    %c0_8 = arith.constant 0 : index
    %13 = vector.load %arg5[%c0_7, %c0_8] : memref<8x128xbf16, #tpu.memory_space<vmem>>, vector<8x128xbf16>
    tpu.vector_store %arg5[%c0_7, %c0_8], %12 {strides = array<i32>} : memref<8x128xbf16, #tpu.memory_space<vmem>>, vector<8x128xbf16>,
    return
  }
  func.func @transform_0(%arg0: i32) -> (i32, i32) {
    %c0_i32 = arith.constant 0 : i32
    %c0_i32_0 = arith.constant 0 : i32
    %c0_i32_1 = arith.constant 0 : i32
    return %c0_i32, %c0_i32_0 : i32, i32
  }
  func.func @transform_1(%arg0: i32) -> (i32, i32) {
    %c0_i32 = arith.constant 0 : i32
    %c0_i32_0 = arith.constant 0 : i32
    return %c0_i32, %arg0 : i32, i32
  }
  func.func @transform_2(%arg0: i32) -> (i32, i32) {
    %c0_i32 = arith.constant 0 : i32
    %c0_i32_0 = arith.constant 0 : i32
    %c0_i32_1 = arith.constant 0 : i32
    return %c0_i32, %c0_i32_0 : i32, i32
  }
  func.func @transform_3(%arg0: i32) -> (i32, i32) {
    %c0_i32 = arith.constant 0 : i32
    %c0_i32_0 = arith.constant 0 : i32
    return %c0_i32, %arg0 : i32, i32
  }
  func.func @transform_4(%arg0: i32) -> (i32, i32) {
    %c0_i32 = arith.constant 0 : i32
    %c0_i32_0 = arith.constant 0 : i32
    return %c0_i32, %arg0 : i32, i32
  }
}

module attributes {stable_mosaic.version = 11 : i64} {
  func.func @_fc_stack_kernel(%arg0: i32, %arg1: memref<128x8xbf16, #tpu.memory_space<vmem>>, %arg2: memref<32x128xbf16, #tpu.memory_space<vmem>>, %arg3: memref<32x3xf32, #tpu.memory_space<vmem>>, %arg4: memref<128x32xbf16, #tpu.memory_space<vmem>>, %arg5: memref<128x3xf32, #tpu.memory_space<vmem>>, %arg6: memref<128x8xbf16, #tpu.memory_space<vmem>>) attributes {dimension_semantics = [#tpu.dimension_semantics<arbitrary>], iteration_bounds = array<i64: 1>, scalar_prefetch = 0 : i64, scratch_operands = 0 : i64, tpu.core_type = #tpu.core_type<tc>, window_params = [{pipeline_mode = #tpu.pipeline_mode<synchronous>, transform_indices = @transform_0, window_bounds = array<i64: 128, 8>}, {pipeline_mode = #tpu.pipeline_mode<synchronous>, transform_indices = @transform_1, window_bounds = array<i64: 32, 128>}, {pipeline_mode = #tpu.pipeline_mode<synchronous>, transform_indices = @transform_2, window_bounds = array<i64: 32, 3>}, {pipeline_mode = #tpu.pipeline_mode<synchronous>, transform_indices = @transform_3, window_bounds = array<i64: 128, 32>}, {pipeline_mode = #tpu.pipeline_mode<synchronous>, transform_indices = @transform_4, window_bounds = array<i64: 128, 3>}, {pipeline_mode = #tpu.pipeline_mode<synchronous>, transform_indices = @transform_5, window_bounds = array<i64: 128, 8>}]} {
    %c0 = arith.constant 0 : index
    %c0_0 = arith.constant 0 : index
    %0 = vector.load %arg1[%c0, %c0_0] : memref<128x8xbf16, #tpu.memory_space<vmem>>, vector<128x8xbf16>
    %c0_1 = arith.constant 0 : index
    %c0_2 = arith.constant 0 : index
    %1 = vector.load %arg2[%c0_1, %c0_2] : memref<32x128xbf16, #tpu.memory_space<vmem>>, vector<32x128xbf16>
    %cst = arith.constant dense<0.000000e+00> : vector<32x8xf32>
    %2 = tpu.matmul %1, %0, %cst {dimension_numbers = #tpu.dot_dimension_numbers<[1], [0], [0], [1], [0, 0, 1, 1], [], []>} : vector<32x128xbf16>, vector<128x8xbf16>, vector<32x8xf32> -> vector<32x8xf32>
    %c0_3 = arith.constant 0 : index
    %c1 = arith.constant 1 : index
    %3 = vector.load %arg3[%c0_3, %c1] : memref<32x3xf32, #tpu.memory_space<vmem>>, vector<32x1xf32>
    %4 = vector.broadcast %3 : vector<32x1xf32> to vector<32x8xf32>
    %5 = arith.mulf %2, %4 : vector<32x8xf32>
    %c0_4 = arith.constant 0 : index
    %c2 = arith.constant 2 : index
    %6 = vector.load %arg3[%c0_4, %c2] : memref<32x3xf32, #tpu.memory_space<vmem>>, vector<32x1xf32>
    %7 = vector.broadcast %6 : vector<32x1xf32> to vector<32x8xf32>
    %8 = arith.addf %5, %7 : vector<32x8xf32>
    %c0_5 = arith.constant 0 : index
    %c0_6 = arith.constant 0 : index
    %9 = vector.load %arg4[%c0_5, %c0_6] : memref<128x32xbf16, #tpu.memory_space<vmem>>, vector<128x32xbf16>
    %10 = arith.truncf %8 : vector<32x8xf32> to vector<32x8xbf16>
    %cst_7 = arith.constant dense<0.000000e+00> : vector<128x8xf32>
    %11 = tpu.matmul %9, %10, %cst_7 {dimension_numbers = #tpu.dot_dimension_numbers<[1], [0], [0], [1], [0, 0, 1, 1], [], []>} : vector<128x32xbf16>, vector<32x8xbf16>, vector<128x8xf32> -> vector<128x8xf32>
    %c0_8 = arith.constant 0 : index
    %c0_9 = arith.constant 0 : index
    %12 = vector.load %arg5[%c0_8, %c0_9] : memref<128x3xf32, #tpu.memory_space<vmem>>, vector<128x1xf32>
    %13 = vector.broadcast %12 : vector<128x1xf32> to vector<128x8xf32>
    %14 = arith.addf %11, %13 : vector<128x8xf32>
    %cst_10 = arith.constant 0.000000e+00 : f32
    %15 = vector.broadcast %cst_10 : f32 to vector<128x8xf32>
    %16 = arith.cmpf oge, %14, %15 : vector<128x8xf32>
    %cst_11 = arith.constant 0.00999999977 : f32
    %17 = vector.broadcast %cst_11 : f32 to vector<128x8xf32>
    %18 = arith.mulf %17, %14 : vector<128x8xf32>
    %19 = arith.select %16, %14, %18 : vector<128x8xi1>, vector<128x8xf32>
    %c0_12 = arith.constant 0 : index
    %c1_13 = arith.constant 1 : index
    %20 = vector.load %arg5[%c0_12, %c1_13] : memref<128x3xf32, #tpu.memory_space<vmem>>, vector<128x1xf32>
    %21 = vector.broadcast %20 : vector<128x1xf32> to vector<128x8xf32>
    %22 = arith.mulf %19, %21 : vector<128x8xf32>
    %c0_14 = arith.constant 0 : index
    %c2_15 = arith.constant 2 : index
    %23 = vector.load %arg5[%c0_14, %c2_15] : memref<128x3xf32, #tpu.memory_space<vmem>>, vector<128x1xf32>
    %24 = vector.broadcast %23 : vector<128x1xf32> to vector<128x8xf32>
    %25 = arith.addf %22, %24 : vector<128x8xf32>
    %26 = arith.truncf %25 : vector<128x8xf32> to vector<128x8xbf16>
    %c0_16 = arith.constant 0 : index
    %c0_17 = arith.constant 0 : index
    %27 = vector.load %arg6[%c0_16, %c0_17] : memref<128x8xbf16, #tpu.memory_space<vmem>>, vector<128x8xbf16>
    tpu.vector_store %arg6[%c0_16, %c0_17], %26 {strides = array<i32>} : memref<128x8xbf16, #tpu.memory_space<vmem>>, vector<128x8xbf16>,
    return
  }
  func.func @transform_0(%arg0: i32) -> (i32, i32) {
    %c0_i32 = arith.constant 0 : i32
    %c0_i32_0 = arith.constant 0 : i32
    %c0_i32_1 = arith.constant 0 : i32
    return %c0_i32, %c0_i32_0 : i32, i32
  }
  func.func @transform_1(%arg0: i32) -> (i32, i32) {
    %c0_i32 = arith.constant 0 : i32
    %c0_i32_0 = arith.constant 0 : i32
    %c0_i32_1 = arith.constant 0 : i32
    return %c0_i32, %c0_i32_0 : i32, i32
  }
  func.func @transform_2(%arg0: i32) -> (i32, i32) {
    %c0_i32 = arith.constant 0 : i32
    %c0_i32_0 = arith.constant 0 : i32
    %c0_i32_1 = arith.constant 0 : i32
    return %c0_i32, %c0_i32_0 : i32, i32
  }
  func.func @transform_3(%arg0: i32) -> (i32, i32) {
    %c0_i32 = arith.constant 0 : i32
    %c0_i32_0 = arith.constant 0 : i32
    %c0_i32_1 = arith.constant 0 : i32
    return %c0_i32, %c0_i32_0 : i32, i32
  }
  func.func @transform_4(%arg0: i32) -> (i32, i32) {
    %c0_i32 = arith.constant 0 : i32
    %c0_i32_0 = arith.constant 0 : i32
    %c0_i32_1 = arith.constant 0 : i32
    return %c0_i32, %c0_i32_0 : i32, i32
  }
  func.func @transform_5(%arg0: i32) -> (i32, i32) {
    %c0_i32 = arith.constant 0 : i32
    %c0_i32_0 = arith.constant 0 : i32
    %c0_i32_1 = arith.constant 0 : i32
    return %c0_i32, %c0_i32_0 : i32, i32
  }
}

module attributes {stable_mosaic.version = 11 : i64} {
  func.func @_fused_mm_kernel(%arg0: i32, %arg1: memref<8x8xbf16, #tpu.memory_space<vmem>>, %arg2: memref<8x128xbf16, #tpu.memory_space<vmem>>, %arg3: memref<8x3xf32, #tpu.memory_space<vmem>>, %arg4: memref<8x128xbf16, #tpu.memory_space<vmem>>) attributes {dimension_semantics = [#tpu.dimension_semantics<parallel>], iteration_bounds = array<i64: 1>, scalar_prefetch = 0 : i64, scratch_operands = 0 : i64, tpu.core_type = #tpu.core_type<tc>, window_params = [{pipeline_mode = #tpu.pipeline_mode<synchronous>, transform_indices = @transform_0, window_bounds = array<i64: 8, 8>}, {transform_indices = @transform_1, window_bounds = array<i64: 8, 128>}, {pipeline_mode = #tpu.pipeline_mode<synchronous>, transform_indices = @transform_2, window_bounds = array<i64: 8, 3>}, {transform_indices = @transform_3, window_bounds = array<i64: 8, 128>}]} {
    %c0 = arith.constant 0 : index
    %c0_0 = arith.constant 0 : index
    %0 = vector.load %arg1[%c0, %c0_0] : memref<8x8xbf16, #tpu.memory_space<vmem>>, vector<8x8xbf16>
    %c0_1 = arith.constant 0 : index
    %c0_2 = arith.constant 0 : index
    %1 = vector.load %arg2[%c0_1, %c0_2] : memref<8x128xbf16, #tpu.memory_space<vmem>>, vector<8x128xbf16>
    %cst = arith.constant dense<0.000000e+00> : vector<8x128xf32>
    %2 = tpu.matmul %0, %1, %cst {dimension_numbers = #tpu.dot_dimension_numbers<[1], [0], [0], [1], [0, 0, 1, 1], [], []>} : vector<8x8xbf16>, vector<8x128xbf16>, vector<8x128xf32> -> vector<8x128xf32>
    %c0_3 = arith.constant 0 : index
    %c1 = arith.constant 1 : index
    %3 = vector.load %arg3[%c0_3, %c1] : memref<8x3xf32, #tpu.memory_space<vmem>>, vector<8x1xf32>
    %4 = vector.broadcast %3 : vector<8x1xf32> to vector<8x128xf32>
    %5 = arith.mulf %2, %4 : vector<8x128xf32>
    %c0_4 = arith.constant 0 : index
    %c2 = arith.constant 2 : index
    %6 = vector.load %arg3[%c0_4, %c2] : memref<8x3xf32, #tpu.memory_space<vmem>>, vector<8x1xf32>
    %7 = vector.broadcast %6 : vector<8x1xf32> to vector<8x128xf32>
    %8 = arith.addf %5, %7 : vector<8x128xf32>
    %9 = arith.truncf %8 : vector<8x128xf32> to vector<8x128xbf16>
    %c0_5 = arith.constant 0 : index
    %c0_6 = arith.constant 0 : index
    %10 = vector.load %arg4[%c0_5, %c0_6] : memref<8x128xbf16, #tpu.memory_space<vmem>>, vector<8x128xbf16>
    tpu.vector_store %arg4[%c0_5, %c0_6], %9 {strides = array<i32>} : memref<8x128xbf16, #tpu.memory_space<vmem>>, vector<8x128xbf16>,
    return
  }
  func.func @transform_0(%arg0: i32) -> (i32, i32) {
    %c0_i32 = arith.constant 0 : i32
    %c0_i32_0 = arith.constant 0 : i32
    %c0_i32_1 = arith.constant 0 : i32
    return %c0_i32, %c0_i32_0 : i32, i32
  }
  func.func @transform_1(%arg0: i32) -> (i32, i32) {
    %c0_i32 = arith.constant 0 : i32
    %c0_i32_0 = arith.constant 0 : i32
    return %c0_i32, %arg0 : i32, i32
  }
  func.func @transform_2(%arg0: i32) -> (i32, i32) {
    %c0_i32 = arith.constant 0 : i32
    %c0_i32_0 = arith.constant 0 : i32
    %c0_i32_1 = arith.constant 0 : i32
    return %c0_i32, %c0_i32_0 : i32, i32
  }
  func.func @transform_3(%arg0: i32) -> (i32, i32) {
    %c0_i32 = arith.constant 0 : i32
    %c0_i32_0 = arith.constant 0 : i32
    return %c0_i32, %arg0 : i32, i32
  }
}

module attributes {stable_mosaic.version = 11 : i64} {
  func.func @_fused_mm_kernel(%arg0: i32, %arg1: memref<64x64xbf16, #tpu.memory_space<vmem>>, %arg2: memref<64x128xbf16, #tpu.memory_space<vmem>>, %arg3: memref<64x3xf32, #tpu.memory_space<vmem>>, %arg4: memref<64x128xbf16, #tpu.memory_space<vmem>>) attributes {dimension_semantics = [#tpu.dimension_semantics<parallel>], iteration_bounds = array<i64: 1>, scalar_prefetch = 0 : i64, scratch_operands = 0 : i64, tpu.core_type = #tpu.core_type<tc>, window_params = [{pipeline_mode = #tpu.pipeline_mode<synchronous>, transform_indices = @transform_0, window_bounds = array<i64: 64, 64>}, {transform_indices = @transform_1, window_bounds = array<i64: 64, 128>}, {pipeline_mode = #tpu.pipeline_mode<synchronous>, transform_indices = @transform_2, window_bounds = array<i64: 64, 3>}, {transform_indices = @transform_3, window_bounds = array<i64: 64, 128>}]} {
    %c0 = arith.constant 0 : index
    %c0_0 = arith.constant 0 : index
    %0 = vector.load %arg1[%c0, %c0_0] : memref<64x64xbf16, #tpu.memory_space<vmem>>, vector<64x64xbf16>
    %c0_1 = arith.constant 0 : index
    %c0_2 = arith.constant 0 : index
    %1 = vector.load %arg2[%c0_1, %c0_2] : memref<64x128xbf16, #tpu.memory_space<vmem>>, vector<64x128xbf16>
    %cst = arith.constant dense<0.000000e+00> : vector<64x128xf32>
    %2 = tpu.matmul %0, %1, %cst {dimension_numbers = #tpu.dot_dimension_numbers<[1], [0], [0], [1], [0, 0, 1, 1], [], []>} : vector<64x64xbf16>, vector<64x128xbf16>, vector<64x128xf32> -> vector<64x128xf32>
    %c0_3 = arith.constant 0 : index
    %c0_4 = arith.constant 0 : index
    %3 = vector.load %arg3[%c0_3, %c0_4] : memref<64x3xf32, #tpu.memory_space<vmem>>, vector<64x1xf32>
    %4 = vector.broadcast %3 : vector<64x1xf32> to vector<64x128xf32>
    %5 = arith.addf %2, %4 : vector<64x128xf32>
    %cst_5 = arith.constant 0.000000e+00 : f32
    %6 = vector.broadcast %cst_5 : f32 to vector<64x128xf32>
    %7 = arith.cmpf oge, %5, %6 : vector<64x128xf32>
    %cst_6 = arith.constant 0.00999999977 : f32
    %8 = vector.broadcast %cst_6 : f32 to vector<64x128xf32>
    %9 = arith.mulf %8, %5 : vector<64x128xf32>
    %10 = arith.select %7, %5, %9 : vector<64x128xi1>, vector<64x128xf32>
    %c0_7 = arith.constant 0 : index
    %c1 = arith.constant 1 : index
    %11 = vector.load %arg3[%c0_7, %c1] : memref<64x3xf32, #tpu.memory_space<vmem>>, vector<64x1xf32>
    %12 = vector.broadcast %11 : vector<64x1xf32> to vector<64x128xf32>
    %13 = arith.mulf %10, %12 : vector<64x128xf32>
    %c0_8 = arith.constant 0 : index
    %c2 = arith.constant 2 : index
    %14 = vector.load %arg3[%c0_8, %c2] : memref<64x3xf32, #tpu.memory_space<vmem>>, vector<64x1xf32>
    %15 = vector.broadcast %14 : vector<64x1xf32> to vector<64x128xf32>
    %16 = arith.addf %13, %15 : vector<64x128xf32>
    %17 = arith.truncf %16 : vector<64x128xf32> to vector<64x128xbf16>
    %c0_9 = arith.constant 0 : index
    %c0_10 = arith.constant 0 : index
    %18 = vector.load %arg4[%c0_9, %c0_10] : memref<64x128xbf16, #tpu.memory_space<vmem>>, vector<64x128xbf16>
    tpu.vector_store %arg4[%c0_9, %c0_10], %17 {strides = array<i32>} : memref<64x128xbf16, #tpu.memory_space<vmem>>, vector<64x128xbf16>,
    return
  }
  func.func @transform_0(%arg0: i32) -> (i32, i32) {
    %c0_i32 = arith.constant 0 : i32
    %c0_i32_0 = arith.constant 0 : i32
    %c0_i32_1 = arith.constant 0 : i32
    return %c0_i32, %c0_i32_0 : i32, i32
  }
  func.func @transform_1(%arg0: i32) -> (i32, i32) {
    %c0_i32 = arith.constant 0 : i32
    %c0_i32_0 = arith.constant 0 : i32
    return %c0_i32, %arg0 : i32, i32
  }
  func.func @transform_2(%arg0: i32) -> (i32, i32) {
    %c0_i32 = arith.constant 0 : i32
    %c0_i32_0 = arith.constant 0 : i32
    %c0_i32_1 = arith.constant 0 : i32
    return %c0_i32, %c0_i32_0 : i32, i32
  }
  func.func @transform_3(%arg0: i32) -> (i32, i32) {
    %c0_i32 = arith.constant 0 : i32
    %c0_i32_0 = arith.constant 0 : i32
    return %c0_i32, %arg0 : i32, i32
  }
}

module attributes {stable_mosaic.version = 11 : i64} {
  func.func @_fused_mm_kernel(%arg0: i32, %arg1: memref<8x6xbf16, #tpu.memory_space<vmem>>, %arg2: memref<6x512xbf16, #tpu.memory_space<vmem>>, %arg3: memref<8x3xf32, #tpu.memory_space<vmem>>, %arg4: memref<8x512xbf16, #tpu.memory_space<vmem>>) attributes {dimension_semantics = [#tpu.dimension_semantics<parallel>], iteration_bounds = array<i64: 2>, scalar_prefetch = 0 : i64, scratch_operands = 0 : i64, tpu.core_type = #tpu.core_type<tc>, window_params = [{pipeline_mode = #tpu.pipeline_mode<synchronous>, transform_indices = @transform_0, window_bounds = array<i64: 8, 6>}, {transform_indices = @transform_1, window_bounds = array<i64: 6, 512>}, {pipeline_mode = #tpu.pipeline_mode<synchronous>, transform_indices = @transform_2, window_bounds = array<i64: 8, 3>}, {transform_indices = @transform_3, window_bounds = array<i64: 8, 512>}]} {
    %c0 = arith.constant 0 : index
    %c0_0 = arith.constant 0 : index
    %0 = vector.load %arg1[%c0, %c0_0] : memref<8x6xbf16, #tpu.memory_space<vmem>>, vector<8x6xbf16>
    %c0_1 = arith.constant 0 : index
    %c0_2 = arith.constant 0 : index
    %1 = vector.load %arg2[%c0_1, %c0_2] : memref<6x512xbf16, #tpu.memory_space<vmem>>, vector<6x512xbf16>
    %cst = arith.constant dense<0.000000e+00> : vector<8x512xf32>
    %2 = tpu.matmul %0, %1, %cst {dimension_numbers = #tpu.dot_dimension_numbers<[1], [0], [0], [1], [0, 0, 1, 1], [], []>} : vector<8x6xbf16>, vector<6x512xbf16>, vector<8x512xf32> -> vector<8x512xf32>
    %c0_3 = arith.constant 0 : index
    %c1 = arith.constant 1 : index
    %3 = vector.load %arg3[%c0_3, %c1] : memref<8x3xf32, #tpu.memory_space<vmem>>, vector<8x1xf32>
    %4 = vector.broadcast %3 : vector<8x1xf32> to vector<8x512xf32>
    %5 = arith.mulf %2, %4 : vector<8x512xf32>
    %c0_4 = arith.constant 0 : index
    %c2 = arith.constant 2 : index
    %6 = vector.load %arg3[%c0_4, %c2] : memref<8x3xf32, #tpu.memory_space<vmem>>, vector<8x1xf32>
    %7 = vector.broadcast %6 : vector<8x1xf32> to vector<8x512xf32>
    %8 = arith.addf %5, %7 : vector<8x512xf32>
    %9 = arith.truncf %8 : vector<8x512xf32> to vector<8x512xbf16>
    %c0_5 = arith.constant 0 : index
    %c0_6 = arith.constant 0 : index
    %10 = vector.load %arg4[%c0_5, %c0_6] : memref<8x512xbf16, #tpu.memory_space<vmem>>, vector<8x512xbf16>
    tpu.vector_store %arg4[%c0_5, %c0_6], %9 {strides = array<i32>} : memref<8x512xbf16, #tpu.memory_space<vmem>>, vector<8x512xbf16>,
    return
  }
  func.func @transform_0(%arg0: i32) -> (i32, i32) {
    %c0_i32 = arith.constant 0 : i32
    %c0_i32_0 = arith.constant 0 : i32
    %c0_i32_1 = arith.constant 0 : i32
    return %c0_i32, %c0_i32_0 : i32, i32
  }
  func.func @transform_1(%arg0: i32) -> (i32, i32) {
    %c0_i32 = arith.constant 0 : i32
    %c0_i32_0 = arith.constant 0 : i32
    return %c0_i32, %arg0 : i32, i32
  }
  func.func @transform_2(%arg0: i32) -> (i32, i32) {
    %c0_i32 = arith.constant 0 : i32
    %c0_i32_0 = arith.constant 0 : i32
    %c0_i32_1 = arith.constant 0 : i32
    return %c0_i32, %c0_i32_0 : i32, i32
  }
  func.func @transform_3(%arg0: i32) -> (i32, i32) {
    %c0_i32 = arith.constant 0 : i32
    %c0_i32_0 = arith.constant 0 : i32
    return %c0_i32, %arg0 : i32, i32
  }
}

module attributes {stable_mosaic.version = 11 : i64} {
  func.func @_fused_mm_kernel(%arg0: i32, %arg1: memref<32x72xbf16, #tpu.memory_space<vmem>>, %arg2: memref<72x512xbf16, #tpu.memory_space<vmem>>, %arg3: memref<32x3xf32, #tpu.memory_space<vmem>>, %arg4: memref<32x512xbf16, #tpu.memory_space<vmem>>) attributes {dimension_semantics = [#tpu.dimension_semantics<parallel>], iteration_bounds = array<i64: 2>, scalar_prefetch = 0 : i64, scratch_operands = 0 : i64, tpu.core_type = #tpu.core_type<tc>, window_params = [{pipeline_mode = #tpu.pipeline_mode<synchronous>, transform_indices = @transform_0, window_bounds = array<i64: 32, 72>}, {transform_indices = @transform_1, window_bounds = array<i64: 72, 512>}, {pipeline_mode = #tpu.pipeline_mode<synchronous>, transform_indices = @transform_2, window_bounds = array<i64: 32, 3>}, {transform_indices = @transform_3, window_bounds = array<i64: 32, 512>}]} {
    %c0 = arith.constant 0 : index
    %c0_0 = arith.constant 0 : index
    %0 = vector.load %arg1[%c0, %c0_0] : memref<32x72xbf16, #tpu.memory_space<vmem>>, vector<32x72xbf16>
    %c0_1 = arith.constant 0 : index
    %c0_2 = arith.constant 0 : index
    %1 = vector.load %arg2[%c0_1, %c0_2] : memref<72x512xbf16, #tpu.memory_space<vmem>>, vector<72x512xbf16>
    %cst = arith.constant dense<0.000000e+00> : vector<32x512xf32>
    %2 = tpu.matmul %0, %1, %cst {dimension_numbers = #tpu.dot_dimension_numbers<[1], [0], [0], [1], [0, 0, 1, 1], [], []>} : vector<32x72xbf16>, vector<72x512xbf16>, vector<32x512xf32> -> vector<32x512xf32>
    %c0_3 = arith.constant 0 : index
    %c0_4 = arith.constant 0 : index
    %3 = vector.load %arg3[%c0_3, %c0_4] : memref<32x3xf32, #tpu.memory_space<vmem>>, vector<32x1xf32>
    %4 = vector.broadcast %3 : vector<32x1xf32> to vector<32x512xf32>
    %5 = arith.addf %2, %4 : vector<32x512xf32>
    %cst_5 = arith.constant 0.000000e+00 : f32
    %6 = vector.broadcast %cst_5 : f32 to vector<32x512xf32>
    %7 = arith.cmpf oge, %5, %6 : vector<32x512xf32>
    %cst_6 = arith.constant 0.00999999977 : f32
    %8 = vector.broadcast %cst_6 : f32 to vector<32x512xf32>
    %9 = arith.mulf %8, %5 : vector<32x512xf32>
    %10 = arith.select %7, %5, %9 : vector<32x512xi1>, vector<32x512xf32>
    %c0_7 = arith.constant 0 : index
    %c1 = arith.constant 1 : index
    %11 = vector.load %arg3[%c0_7, %c1] : memref<32x3xf32, #tpu.memory_space<vmem>>, vector<32x1xf32>
    %12 = vector.broadcast %11 : vector<32x1xf32> to vector<32x512xf32>
    %13 = arith.mulf %10, %12 : vector<32x512xf32>
    %c0_8 = arith.constant 0 : index
    %c2 = arith.constant 2 : index
    %14 = vector.load %arg3[%c0_8, %c2] : memref<32x3xf32, #tpu.memory_space<vmem>>, vector<32x1xf32>
    %15 = vector.broadcast %14 : vector<32x1xf32> to vector<32x512xf32>
    %16 = arith.addf %13, %15 : vector<32x512xf32>
    %17 = arith.truncf %16 : vector<32x512xf32> to vector<32x512xbf16>
    %c0_9 = arith.constant 0 : index
    %c0_10 = arith.constant 0 : index
    %18 = vector.load %arg4[%c0_9, %c0_10] : memref<32x512xbf16, #tpu.memory_space<vmem>>, vector<32x512xbf16>
    tpu.vector_store %arg4[%c0_9, %c0_10], %17 {strides = array<i32>} : memref<32x512xbf16, #tpu.memory_space<vmem>>, vector<32x512xbf16>,
    return
  }
  func.func @transform_0(%arg0: i32) -> (i32, i32) {
    %c0_i32 = arith.constant 0 : i32
    %c0_i32_0 = arith.constant 0 : i32
    %c0_i32_1 = arith.constant 0 : i32
    return %c0_i32, %c0_i32_0 : i32, i32
  }
  func.func @transform_1(%arg0: i32) -> (i32, i32) {
    %c0_i32 = arith.constant 0 : i32
    %c0_i32_0 = arith.constant 0 : i32
    return %c0_i32, %arg0 : i32, i32
  }
  func.func @transform_2(%arg0: i32) -> (i32, i32) {
    %c0_i32 = arith.constant 0 : i32
    %c0_i32_0 = arith.constant 0 : i32
    %c0_i32_1 = arith.constant 0 : i32
    return %c0_i32, %c0_i32_0 : i32, i32
  }
  func.func @transform_3(%arg0: i32) -> (i32, i32) {
    %c0_i32 = arith.constant 0 : i32
    %c0_i32_0 = arith.constant 0 : i32
    return %c0_i32, %arg0 : i32, i32
  }
}

module attributes {stable_mosaic.version = 11 : i64} {
  func.func @_fused_mm_kernel(%arg0: i32, %arg1: memref<8x81xbf16, #tpu.memory_space<vmem>>, %arg2: memref<81x2048xbf16, #tpu.memory_space<vmem>>, %arg3: memref<8x3xf32, #tpu.memory_space<vmem>>, %arg4: memref<8x2048xbf16, #tpu.memory_space<vmem>>) attributes {dimension_semantics = [#tpu.dimension_semantics<parallel>], iteration_bounds = array<i64: 2>, scalar_prefetch = 0 : i64, scratch_operands = 0 : i64, tpu.core_type = #tpu.core_type<tc>, window_params = [{pipeline_mode = #tpu.pipeline_mode<synchronous>, transform_indices = @transform_0, window_bounds = array<i64: 8, 81>}, {transform_indices = @transform_1, window_bounds = array<i64: 81, 2048>}, {pipeline_mode = #tpu.pipeline_mode<synchronous>, transform_indices = @transform_2, window_bounds = array<i64: 8, 3>}, {transform_indices = @transform_3, window_bounds = array<i64: 8, 2048>}]} {
    %c0 = arith.constant 0 : index
    %c0_0 = arith.constant 0 : index
    %0 = vector.load %arg1[%c0, %c0_0] : memref<8x81xbf16, #tpu.memory_space<vmem>>, vector<8x81xbf16>
    %c0_1 = arith.constant 0 : index
    %c0_2 = arith.constant 0 : index
    %1 = vector.load %arg2[%c0_1, %c0_2] : memref<81x2048xbf16, #tpu.memory_space<vmem>>, vector<81x2048xbf16>
    %cst = arith.constant dense<0.000000e+00> : vector<8x2048xf32>
    %2 = tpu.matmul %0, %1, %cst {dimension_numbers = #tpu.dot_dimension_numbers<[1], [0], [0], [1], [0, 0, 1, 1], [], []>} : vector<8x81xbf16>, vector<81x2048xbf16>, vector<8x2048xf32> -> vector<8x2048xf32>
    %c0_3 = arith.constant 0 : index
    %c0_4 = arith.constant 0 : index
    %3 = vector.load %arg3[%c0_3, %c0_4] : memref<8x3xf32, #tpu.memory_space<vmem>>, vector<8x1xf32>
    %4 = vector.broadcast %3 : vector<8x1xf32> to vector<8x2048xf32>
    %5 = arith.addf %2, %4 : vector<8x2048xf32>
    %cst_5 = arith.constant 0.000000e+00 : f32
    %6 = vector.broadcast %cst_5 : f32 to vector<8x2048xf32>
    %7 = arith.cmpf oge, %5, %6 : vector<8x2048xf32>
    %cst_6 = arith.constant 0.00999999977 : f32
    %8 = vector.broadcast %cst_6 : f32 to vector<8x2048xf32>
    %9 = arith.mulf %8, %5 : vector<8x2048xf32>
    %10 = arith.select %7, %5, %9 : vector<8x2048xi1>, vector<8x2048xf32>
    %c0_7 = arith.constant 0 : index
    %c1 = arith.constant 1 : index
    %11 = vector.load %arg3[%c0_7, %c1] : memref<8x3xf32, #tpu.memory_space<vmem>>, vector<8x1xf32>
    %12 = vector.broadcast %11 : vector<8x1xf32> to vector<8x2048xf32>
    %13 = arith.mulf %10, %12 : vector<8x2048xf32>
    %c0_8 = arith.constant 0 : index
    %c2 = arith.constant 2 : index
    %14 = vector.load %arg3[%c0_8, %c2] : memref<8x3xf32, #tpu.memory_space<vmem>>, vector<8x1xf32>
    %15 = vector.broadcast %14 : vector<8x1xf32> to vector<8x2048xf32>
    %16 = arith.addf %13, %15 : vector<8x2048xf32>
    %17 = arith.truncf %16 : vector<8x2048xf32> to vector<8x2048xbf16>
    %c0_9 = arith.constant 0 : index
    %c0_10 = arith.constant 0 : index
    %18 = vector.load %arg4[%c0_9, %c0_10] : memref<8x2048xbf16, #tpu.memory_space<vmem>>, vector<8x2048xbf16>
    tpu.vector_store %arg4[%c0_9, %c0_10], %17 {strides = array<i32>} : memref<8x2048xbf16, #tpu.memory_space<vmem>>, vector<8x2048xbf16>,
    return
  }
  func.func @transform_0(%arg0: i32) -> (i32, i32) {
    %c0_i32 = arith.constant 0 : i32
    %c0_i32_0 = arith.constant 0 : i32
    %c0_i32_1 = arith.constant 0 : i32
    return %c0_i32, %c0_i32_0 : i32, i32
  }
  func.func @transform_1(%arg0: i32) -> (i32, i32) {
    %c0_i32 = arith.constant 0 : i32
    %c0_i32_0 = arith.constant 0 : i32
    return %c0_i32, %arg0 : i32, i32
  }
  func.func @transform_2(%arg0: i32) -> (i32, i32) {
    %c0_i32 = arith.constant 0 : i32
    %c0_i32_0 = arith.constant 0 : i32
    %c0_i32_1 = arith.constant 0 : i32
    return %c0_i32, %c0_i32_0 : i32, i32
  }
  func.func @transform_3(%arg0: i32) -> (i32, i32) {
    %c0_i32 = arith.constant 0 : i32
    %c0_i32_0 = arith.constant 0 : i32
    return %c0_i32, %arg0 : i32, i32
  }
}

module attributes {stable_mosaic.version = 11 : i64} {
  func.func @_fused_mm_kernel(%arg0: i32, %arg1: memref<8x81xbf16, #tpu.memory_space<vmem>>, %arg2: memref<81x2048xbf16, #tpu.memory_space<vmem>>, %arg3: memref<8x3xf32, #tpu.memory_space<vmem>>, %arg4: memref<8x2048xbf16, #tpu.memory_space<vmem>>, %arg5: memref<8x2048xf32, #tpu.memory_space<vmem>>) attributes {dimension_semantics = [#tpu.dimension_semantics<parallel>], iteration_bounds = array<i64: 2>, scalar_prefetch = 0 : i64, scratch_operands = 0 : i64, tpu.core_type = #tpu.core_type<tc>, window_params = [{pipeline_mode = #tpu.pipeline_mode<synchronous>, transform_indices = @transform_0, window_bounds = array<i64: 8, 81>}, {transform_indices = @transform_1, window_bounds = array<i64: 81, 2048>}, {pipeline_mode = #tpu.pipeline_mode<synchronous>, transform_indices = @transform_2, window_bounds = array<i64: 8, 3>}, {transform_indices = @transform_3, window_bounds = array<i64: 8, 2048>}, {transform_indices = @transform_4, window_bounds = array<i64: 8, 2048>}]} {
    %c0 = arith.constant 0 : index
    %c0_0 = arith.constant 0 : index
    %0 = vector.load %arg1[%c0, %c0_0] : memref<8x81xbf16, #tpu.memory_space<vmem>>, vector<8x81xbf16>
    %c0_1 = arith.constant 0 : index
    %c0_2 = arith.constant 0 : index
    %1 = vector.load %arg2[%c0_1, %c0_2] : memref<81x2048xbf16, #tpu.memory_space<vmem>>, vector<81x2048xbf16>
    %cst = arith.constant dense<0.000000e+00> : vector<8x2048xf32>
    %2 = tpu.matmul %0, %1, %cst {dimension_numbers = #tpu.dot_dimension_numbers<[1], [0], [0], [1], [0, 0, 1, 1], [], []>} : vector<8x81xbf16>, vector<81x2048xbf16>, vector<8x2048xf32> -> vector<8x2048xf32>
    %c0_3 = arith.constant 0 : index
    %c1 = arith.constant 1 : index
    %3 = vector.load %arg3[%c0_3, %c1] : memref<8x3xf32, #tpu.memory_space<vmem>>, vector<8x1xf32>
    %4 = vector.broadcast %3 : vector<8x1xf32> to vector<8x2048xf32>
    %5 = arith.mulf %2, %4 : vector<8x2048xf32>
    %c0_4 = arith.constant 0 : index
    %c2 = arith.constant 2 : index
    %6 = vector.load %arg3[%c0_4, %c2] : memref<8x3xf32, #tpu.memory_space<vmem>>, vector<8x1xf32>
    %7 = vector.broadcast %6 : vector<8x1xf32> to vector<8x2048xf32>
    %8 = arith.addf %5, %7 : vector<8x2048xf32>
    %c0_5 = arith.constant 0 : index
    %c0_6 = arith.constant 0 : index
    %9 = vector.load %arg4[%c0_5, %c0_6] : memref<8x2048xbf16, #tpu.memory_space<vmem>>, vector<8x2048xbf16>
    %10 = arith.extf %9 : vector<8x2048xbf16> to vector<8x2048xf32>
    %11 = arith.addf %8, %10 : vector<8x2048xf32>
    %12 = arith.negf %11 : vector<8x2048xf32>
    %13 = math.exp %12 : vector<8x2048xf32>
    %cst_7 = arith.constant 1.000000e+00 : f32
    %14 = vector.broadcast %cst_7 : f32 to vector<8x2048xf32>
    %15 = arith.addf %14, %13 : vector<8x2048xf32>
    %16 = arith.divf %14, %15 : vector<8x2048xf32>
    %c0_8 = arith.constant 0 : index
    %c0_9 = arith.constant 0 : index
    %17 = vector.load %arg5[%c0_8, %c0_9] : memref<8x2048xf32, #tpu.memory_space<vmem>>, vector<8x2048xf32>
    tpu.vector_store %arg5[%c0_8, %c0_9], %16 {strides = array<i32>} : memref<8x2048xf32, #tpu.memory_space<vmem>>, vector<8x2048xf32>,
    return
  }
  func.func @transform_0(%arg0: i32) -> (i32, i32) {
    %c0_i32 = arith.constant 0 : i32
    %c0_i32_0 = arith.constant 0 : i32
    %c0_i32_1 = arith.constant 0 : i32
    return %c0_i32, %c0_i32_0 : i32, i32
  }
  func.func @transform_1(%arg0: i32) -> (i32, i32) {
    %c0_i32 = arith.constant 0 : i32
    %c0_i32_0 = arith.constant 0 : i32
    return %c0_i32, %arg0 : i32, i32
  }
  func.func @transform_2(%arg0: i32) -> (i32, i32) {
    %c0_i32 = arith.constant 0 : i32
    %c0_i32_0 = arith.constant 0 : i32
    %c0_i32_1 = arith.constant 0 : i32
    return %c0_i32, %c0_i32_0 : i32, i32
  }
  func.func @transform_3(%arg0: i32) -> (i32, i32) {
    %c0_i32 = arith.constant 0 : i32
    %c0_i32_0 = arith.constant 0 : i32
    return %c0_i32, %arg0 : i32, i32
  }
  func.func @transform_4(%arg0: i32) -> (i32, i32) {
    %c0_i32 = arith.constant 0 : i32
    %c0_i32_0 = arith.constant 0 : i32
    return %c0_i32, %arg0 : i32, i32
  }
}

</mosaic_0001>

<llo_original>
// kernel: tile.38
$region0: #{tile.38}
  #allocation2 [shape = 's32[1]{0}', space=sflag, size = 0x4, scoped, tag = 'scoped memory for tile.38']
  %s0 = inlined_call_operand.hbm [shape: f32[8], index: 0, kind: input, shape index: {}]
  %s1 = inlined_call_operand.vmem [shape: f32[4,8], index: 1, kind: output, shape index: {}]
  $region1: #{tile.38} parent=0
    #allocation0 [shape = 'u8[512]{0}', space=vmem, size = 0x400, scoped, tag = 'operand span for operand 0']
    #allocation1 [shape = 's32[1]{0}', space=sflag, size = 0x4, scoped, tag = 'scoped memory for tile.38']
    %2 = vsyncpa [#allocation1], 0
    // Predicated region
    $region2: #{tile.38} parent=1 // pred_check
      _
    $region3: #{tile.38} parent=1 // pred_check_branch
      %4 = sbr.rel (0) target = $region5
    $region4: #{tile.38} parent=1 // pred_region
      %s6 = ssub.s32 16, 16
      %7 = vsyncadd [#allocation1], %s6
      %s9 = sshll.u32 [#allocation0], 4
      %s10 = int_to_ptr.vmem [resolvable:$true] %s9
      %12 = dma.hbm_to_vmem [thread:$0]  %s0, 16, %s10, [#allocation1]
    $region5: #{tile.38} parent=1 // pred_fallthru
      _
    // Predicated region
    $region6: #{tile.38} parent=1 // pred_check
      _
    $region7: #{tile.38} parent=1 // pred_check_branch
      %14 = sbr.rel (0) target = $region9
    $region8: #{tile.38} parent=1 // pred_region
      %15 = dma.done [#allocation1], 16
    $region9: #{tile.38} parent=1 // pred_fallthru
      _
    %v16 = vld [vmem:[#allocation0] ss:$0 sm:$0xff]
    %17 = vst [vmem:[%s1] sm:$0xf] %v16
    %18 = vsyncpa [#allocation1], 1

// kernel: tile.45
$region0: #{tile.45}
  %s0 = inlined_call_operand.vmem [shape: f32[4,8], index: 0, kind: input, shape index: {}]
  %s1 = inlined_call_operand.vmem [shape: f32[32,1], index: 1, kind: output, shape index: {}]
  $region1: #{tile.45} parent=0
    #allocation0 [shape = 'u8[4096]{0}', space=vmem, size = 0x1000, scoped, tag = 'scoped mem for output reshape']
    #allocation1 [shape = 'u8[4096]{0}', space=vmem, size = 0x1000, scoped, tag = 'scoped mem for input reshape']
    %s3 = sshllo.u32 0, 4
    %v4 = vld [vmem:[%s0] sm:%s3]
    %5 = vst [vmem:[#allocation1] sm:%s3] %v4
    %v6 = vld [vmem:[#allocation1] sm:$0x1]
    %vm7 = vcmask 64512
    %8 = vst.msk [vmem:[#allocation0] sm:$0x1] %vm7, %v6
    %s9 = scalar_lea.vmem [#allocation1], 3
    %v10 = vld [vmem:[%s9] sm:$0x1]
    %11 = vrot.lane.b32.xlu0 %v10, 24
    %v12 = vpop.permute.xlu0 %11
    %vm13 = vcmask 261312
    %14 = vst.msk [vmem:[#allocation0] sm:$0x1] %vm13, %v12
    %s15 = scalar_lea.vmem [#allocation1], 2
    %v16 = vld [vmem:[%s15] sm:$0x1]
    %17 = vrot.lane.b32.xlu0 %v16, 16
    %v18 = vpop.permute.xlu0 %17
    %vm19 = vcmask 195712
    %20 = vst.msk [vmem:[#allocation0] sm:$0x1] %vm19, %v18
    %s21 = scalar_lea.vmem [#allocation1], 1
    %v22 = vld [vmem:[%s21] sm:$0x1]
    %23 = vrot.lane.b32.xlu0 %v22, 8
    %v24 = vpop.permute.xlu0 %23
    %vm25 = vcmask 130112
    %26 = vst.msk [vmem:[#allocation0] sm:$0x1] %vm25, %v24
    %s28 = sshllo.u32 0, 1
    %v30 = vld [vmem:[#allocation0] sm:%s28]
    %s31 = sshllo.u32 0, 1
    %32 = vst [vmem:[%s1] sm:%s31] %v30

// kernel: tile.33
$region0: #{tile.33}
  %s0 = inlined_call_operand.vmem [shape: f32[8,8], index: 0, kind: input, shape index: {}]
  %s1 = inlined_call_operand.vmem [shape: f32[64,1], index: 1, kind: output, shape index: {}]
  $region1: #{tile.33} parent=0
    #allocation0 [shape = 'u8[4096]{0}', space=vmem, size = 0x1000, scoped, tag = 'scoped mem for output reshape']
    %v2 = vld [vmem:[%s0] sm:$0x1]
    %vm3 = vcmask 64512
    %4 = vst.msk [vmem:[#allocation0] sm:$0x1] %vm3, %v2
    %s5 = scalar_lea.vmem %s0, 7
    %v6 = vld [vmem:[%s5] sm:$0x1]
    %7 = vrot.lane.b32.xlu0 %v6, 56
    %v8 = vpop.permute.xlu0 %7
    %vm9 = vcmask 523712
    %10 = vst.msk [vmem:[#allocation0] sm:$0x1] %vm9, %v8
    %s11 = scalar_lea.vmem %s0, 6
    %v12 = vld [vmem:[%s11] sm:$0x1]
    %13 = vrot.lane.b32.xlu0 %v12, 48
    %v14 = vpop.permute.xlu0 %13
    %vm15 = vcmask 458112
    %16 = vst.msk [vmem:[#allocation0] sm:$0x1] %vm15, %v14
    %s17 = scalar_lea.vmem %s0, 5
    %v18 = vld [vmem:[%s17] sm:$0x1]
    %19 = vrot.lane.b32.xlu0 %v18, 40
    %v20 = vpop.permute.xlu0 %19
    %vm21 = vcmask 392512
    %22 = vst.msk [vmem:[#allocation0] sm:$0x1] %vm21, %v20
    %s23 = scalar_lea.vmem %s0, 4
    %v24 = vld [vmem:[%s23] sm:$0x1]
    %25 = vrot.lane.b32.xlu0 %v24, 32
    %v26 = vpop.permute.xlu0 %25
    %vm27 = vcmask 326912
    %28 = vst.msk [vmem:[#allocation0] sm:$0x1] %vm27, %v26
    %s29 = scalar_lea.vmem %s0, 3
    %v30 = vld [vmem:[%s29] sm:$0x1]
    %31 = vrot.lane.b32.xlu0 %v30, 24
    %v32 = vpop.permute.xlu0 %31
    %vm33 = vcmask 261312
    %34 = vst.msk [vmem:[#allocation0] sm:$0x1] %vm33, %v32
    %s35 = scalar_lea.vmem %s0, 2
    %v36 = vld [vmem:[%s35] sm:$0x1]
    %37 = vrot.lane.b32.xlu0 %v36, 16
    %v38 = vpop.permute.xlu0 %37
    %vm39 = vcmask 195712
    %40 = vst.msk [vmem:[#allocation0] sm:$0x1] %vm39, %v38
    %s41 = scalar_lea.vmem %s0, 1
    %v42 = vld [vmem:[%s41] sm:$0x1]
    %43 = vrot.lane.b32.xlu0 %v42, 8
    %v44 = vpop.permute.xlu0 %43
    %vm45 = vcmask 130112
    %46 = vst.msk [vmem:[#allocation0] sm:$0x1] %vm45, %v44
    %s48 = sshllo.u32 0, 1
    %v50 = vld [vmem:[#allocation0] sm:%s48]
    %s51 = sshllo.u32 0, 1
    %52 = vst [vmem:[%s1] sm:%s51] %v50

// kernel: tile.26
$region0: #{tile.26}
  #allocation2 [shape = 's32[1]{0}', space=sflag, size = 0x4, scoped, tag = 'scoped memory for tile.26']
  %s0 = inlined_call_operand.hbm [shape: f32[8], index: 0, kind: input, shape index: {}]
  %s1 = inlined_call_operand.vmem [shape: f32[8,8], index: 1, kind: output, shape index: {}]
  $region1: #{tile.26} parent=0
    #allocation0 [shape = 'u8[512]{0}', space=vmem, size = 0x400, scoped, tag = 'operand span for operand 0']
    #allocation1 [shape = 's32[1]{0}', space=sflag, size = 0x4, scoped, tag = 'scoped memory for tile.26']
    %2 = vsyncpa [#allocation1], 0
    // Predicated region
    $region2: #{tile.26} parent=1 // pred_check
      _
    $region3: #{tile.26} parent=1 // pred_check_branch
      %4 = sbr.rel (0) target = $region5
    $region4: #{tile.26} parent=1 // pred_region
      %s6 = ssub.s32 16, 16
      %7 = vsyncadd [#allocation1], %s6
      %s9 = sshll.u32 [#allocation0], 4
      %s10 = int_to_ptr.vmem [resolvable:$true] %s9
      %12 = dma.hbm_to_vmem [thread:$0]  %s0, 16, %s10, [#allocation1]
    $region5: #{tile.26} parent=1 // pred_fallthru
      _
    // Predicated region
    $region6: #{tile.26} parent=1 // pred_check
      _
    $region7: #{tile.26} parent=1 // pred_check_branch
      %14 = sbr.rel (0) target = $region9
    $region8: #{tile.26} parent=1 // pred_region
      %15 = dma.done [#allocation1], 16
    $region9: #{tile.26} parent=1 // pred_fallthru
      _
    %v16 = vld [vmem:[#allocation0] ss:$0 sm:$0xff]
    %17 = vst [vmem:[%s1] sm:$0xff] %v16
    %18 = vsyncpa [#allocation1], 1

// kernel: _lambda_.17
$region0: #{_lambda_.17}
  #allocation0 [shape = 'u32[]', space=smem, size = 0x4, offset = 0x4, fixed_abs, tag = 'smem constant byte address 0x4 - core index']
  #allocation1 [shape = 'u32[144,128]{1,0:T(1,128)}', space=vmem, size = 0x12000, scoped, tag = 'internal scratch']
  %s0 = inlined_call_operand.hbm [shape: bf16[8,3], index: 0, kind: input, shape index: {}]
  %s1 = inlined_call_operand.vmem [shape: bf16[3,1024], index: 1, kind: input, shape index: {}]
  %s2 = inlined_call_operand.hbm [shape: f32[8,3], index: 2, kind: input, shape index: {}]
  %s3 = inlined_call_operand.vmem [shape: bf16[8,1024], index: 3, kind: output, shape index: {}]
  %s4 = sld [smem:[#allocation0]]
  $region53: #{_lambda_.17} parent=0
    _
  %s6 = ssub.s32 1, %s4
  %s7 = scalar_select 0, %s6, %s4
  $region1: #{_lambda_.17} parent=0
    #allocation2 [shape = 'u8[2048]{0}', space=vmem, size = 0x800, scoped, tag = 'input window, operand 0, single buffered']
    #allocation3 [shape = 's32[2]{0}', space=sflag, size = 0x8, scoped, tag = 'scoped memory for _lambda_.17']
    #allocation4 [shape = 'u8[4096]{0}', space=vmem, size = 0x1000, scoped, tag = 'input window, operand 2, single buffered']
    #allocation5 [shape = 's32[1]{0}', space=sflag, size = 0x4, scoped, tag = 'scoped memory for _lambda_.17']
    %8 = vsyncpa [#allocation3], 0
    %9 = vsyncpa [#allocation5], 0
    loop: start=0, step=1, limit=4
    $region2: #{_lambda_.17} parent=1 // loop_pre_header
      _
    $region3: #{_lambda_.17} parent=1 // loop_header
      %s11 = sphi 0, %s15
      %p12 = scmp.ge.s32.totalorder %s11, 4
      %s19 = sphi 0, %s19
      %s21 = sphi 0, %s19
      %s22 = sphi 0, %s21
      %s36 = sphi 0, %s22
      %s42 = sphi 0, %s44
      %s45 = sphi 0, %s42
      %s46 = sphi 0, %s45
      %s62 = sphi 0, %s46
      %s66 = sphi 0, %s66
      %s68 = sphi 0, %s66
      %s69 = sphi 0, %s68
      %s83 = sphi 0, %s69
      %s89 = sphi 0, %s91
      %s92 = sphi 0, %s89
      %s93 = sphi 0, %s92
      %s109 = sphi 0, %s93
    $region4: #{_lambda_.17} parent=1 // loop_header_branch
      %14 = sbr.rel (%p12) target = $region8
    $region5: #{_lambda_.17} parent=1 // loop_body
      %s16 = ssub.s32 %s11, 1
      %s17 = ssub.s32 %s11, 2
      %s18 = sadd.s32 %s11, 1
      %s20 = sadd.s32 %s19, 1
      %p23 = scmp.eq.s32.totalorder %s11, 1
      %p24 = scmp.ne.s32.totalorder %s19, %s21
      %p25 = scmp.eq.s32.totalorder %s11, 0
      %p26 = por %p24, %p25
      %p27 = scmp.ne.s32.totalorder %s19, %s21
      %p28 = scmp.eq.s32.totalorder %s16, 1
      %p29 = por %p27, %p28
      %p30 = scmp.ne.s32.totalorder %s21, %s22
      %p31 = scmp.eq.s32.totalorder %s16, 0
      %p32 = por %p30, %p31
      %p33 = scmp.ne.s32.totalorder %s21, %s22
      %p34 = scmp.eq.s32.totalorder %s17, 1
      %p35 = por %p33, %p34
      %p37 = scmp.ne.s32.totalorder %s22, %s36
      %p38 = scmp.eq.s32.totalorder %s17, 0
      %p39 = por %p37, %p38
      %s40 = ssub.s32 %s11, %s18
      %p41 = scmp.eq.s32.totalorder %s40, 0
      %s43 = sadd.s32 %s42, 1
      %s44 = scalar_select %p41, %s42, %s43
      %p47 = pneg %p41
      %p48 = scmp.eq.s32.totalorder %s11, 1
      %p49 = por %p47, %p48
      %p50 = scmp.ne.s32.totalorder %s42, %s45
      %p51 = scmp.eq.s32.totalorder %s11, 0
      %p52 = por %p50, %p51
      %p53 = scmp.ne.s32.totalorder %s42, %s45
      %p54 = scmp.eq.s32.totalorder %s16, 1
      %p55 = por %p53, %p54
      %p56 = scmp.ne.s32.totalorder %s45, %s46
      %p57 = scmp.eq.s32.totalorder %s16, 0
      %p58 = por %p56, %p57
      %p59 = scmp.ne.s32.totalorder %s45, %s46
      %p60 = scmp.eq.s32.totalorder %s17, 1
      %p61 = por %p59, %p60
      %p63 = scmp.ne.s32.totalorder %s46, %s62
      %p64 = scmp.eq.s32.totalorder %s17, 0
      %p65 = por %p63, %p64
      %s67 = sadd.s32 %s66, 1
      %p70 = scmp.eq.s32.totalorder %s11, 1
      %p71 = scmp.ne.s32.totalorder %s66, %s68
      %p72 = scmp.eq.s32.totalorder %s11, 0
      %p73 = por %p71, %p72
      %p74 = scmp.ne.s32.totalorder %s66, %s68
      %p75 = scmp.eq.s32.totalorder %s16, 1
      %p76 = por %p74, %p75
      %p77 = scmp.ne.s32.totalorder %s68, %s69
      %p78 = scmp.eq.s32.totalorder %s16, 0
      %p79 = por %p77, %p78
      %p80 = scmp.ne.s32.totalorder %s68, %s69
      %p81 = scmp.eq.s32.totalorder %s17, 1
      %p82 = por %p80, %p81
      %p84 = scmp.ne.s32.totalorder %s69, %s83
      %p85 = scmp.eq.s32.totalorder %s17, 0
      %p86 = por %p84, %p85
      %s87 = ssub.s32 %s11, %s18
      %p88 = scmp.eq.s32.totalorder %s87, 0
      %s90 = sadd.s32 %s89, 1
      %s91 = scalar_select %p88, %s89, %s90
      %p94 = pneg %p88
      %p95 = scmp.eq.s32.totalorder %s11, 1
      %p96 = por %p94, %p95
      %p97 = scmp.ne.s32.totalorder %s89, %s92
      %p98 = scmp.eq.s32.totalorder %s11, 0
      %p99 = por %p97, %p98
      %p100 = scmp.ne.s32.totalorder %s89, %s92
      %p101 = scmp.eq.s32.totalorder %s16, 1
      %p102 = por %p100, %p101
      %p103 = scmp.ne.s32.totalorder %s92, %s93
      %p104 = scmp.eq.s32.totalorder %s16, 0
      %p105 = por %p103, %p104
      %p106 = scmp.ne.s32.totalorder %s92, %s93
      %p107 = scmp.eq.s32.totalorder %s17, 1
      %p108 = por %p106, %p107
      %p110 = scmp.ne.s32.totalorder %s93, %s109
      %p111 = scmp.eq.s32.totalorder %s17, 0
      %p112 = por %p110, %p111
      %p113 = scmp.le.s32.totalorder 1, %s11
      %p114 = scmp.lt.s32.totalorder %s11, 3
      %p115 = pnand %p113, %p114
      %p116 = pneg %p115
      // Predicated region
      $region9: #{_lambda_.17} parent=5 // pred_check
        _
      $region10: #{_lambda_.17} parent=5 // pred_check_branch
        %118 = sbr.rel (%p115) target = $region12
      $region11: #{_lambda_.17} parent=5 // pred_region
        %s119 = ssub.s32 %s11, 1
        // Predicated region
        $region13: #{_lambda_.17} parent=11 // pred_check
          %p120 = pneg %p32
        $region14: #{_lambda_.17} parent=11 // pred_check_branch
          %122 = sbr.rel (%p120) target = $region16
        $region15: #{_lambda_.17} parent=11 // pred_region
          %s124 = ssub.s32 64, 64
          %125 = vsyncadd [#allocation3], %s124
          %s127 = sshll.u32 [#allocation2], 4
          %s128 = int_to_ptr.vmem [resolvable:$true] %s127
          %130 = dma.hbm_to_vmem [thread:$0]  %s0, 64, %s128, [#allocation3]
        $region16: #{_lambda_.17} parent=11 // pred_fallthru
          _
        // Predicated region
        $region17: #{_lambda_.17} parent=11 // pred_check
          %p131 = pneg %p79
        $region18: #{_lambda_.17} parent=11 // pred_check_branch
          %133 = sbr.rel (%p131) target = $region20
        $region19: #{_lambda_.17} parent=11 // pred_region
          %s135 = ssub.s32 128, 128
          %136 = vsyncadd [#allocation5], %s135
          %s138 = sshll.u32 [#allocation4], 4
          %s139 = int_to_ptr.vmem [resolvable:$true] %s138
          %141 = dma.hbm_to_vmem [thread:$0]  %s2, 128, %s139, [#allocation5]
        $region20: #{_lambda_.17} parent=11 // pred_fallthru
          _
      $region12: #{_lambda_.17} parent=5 // pred_fallthru
        _
      %p142 = scmp.lt.s32.totalorder %s11, 2
      // Predicated region
      $region21: #{_lambda_.17} parent=5 // pred_check
        %p143 = pneg %p142
      $region22: #{_lambda_.17} parent=5 // pred_check_branch
        %145 = sbr.rel (%p143) target = $region24
      $region23: #{_lambda_.17} parent=5 // pred_region
        // Predicated region
        $region25: #{_lambda_.17} parent=23 // pred_check
          %p146 = pneg %p52
        $region26: #{_lambda_.17} parent=23 // pred_check_branch
          %148 = sbr.rel (%p146) target = $region28
        $region27: #{_lambda_.17} parent=23 // pred_region
          %s149 = smul.u32 4, %s11
          %p150 = scmp.lt.s32.totalorder %s149, 7
          %s151 = scalar_select %p150, %s149, 7
          %s152 = smul.addr %s151, 2
          %s153 = scalar_lea.vmem %s1, %s152
          %s154 = smul.u32 4, %s11
        $region28: #{_lambda_.17} parent=23 // pred_fallthru
          _
      $region24: #{_lambda_.17} parent=5 // pred_fallthru
        _
      %p155 = scmp.le.s32.totalorder 1, %s11
      %p156 = scmp.lt.s32.totalorder %s11, 3
      %p157 = pnand %p155, %p156
      %p158 = pneg %p157
      // Predicated region
      $region29: #{_lambda_.17} parent=5 // pred_check
        _
      $region30: #{_lambda_.17} parent=5 // pred_check_branch
        %160 = sbr.rel (%p157) target = $region32
      $region31: #{_lambda_.17} parent=5 // pred_region
        %s161 = ssub.s32 %s11, 1
        // Predicated region
        $region33: #{_lambda_.17} parent=31 // pred_check
          %p162 = pneg %p32
        $region34: #{_lambda_.17} parent=31 // pred_check_branch
          %164 = sbr.rel (%p162) target = $region36
        $region35: #{_lambda_.17} parent=31 // pred_region
          %165 = dma.done [#allocation3], 64
        $region36: #{_lambda_.17} parent=31 // pred_fallthru
          _
        // Predicated region
        $region37: #{_lambda_.17} parent=31 // pred_check
          %p166 = pneg %p79
        $region38: #{_lambda_.17} parent=31 // pred_check_branch
          %168 = sbr.rel (%p166) target = $region40
        $region39: #{_lambda_.17} parent=31 // pred_region
          %169 = dma.done [#allocation5], 128
        $region40: #{_lambda_.17} parent=31 // pred_fallthru
          _
        %p170 = pneg %p32
        %p171 = pneg %p29
        %s172 = smul.u32 4, %s16
        %p173 = scmp.lt.s32.totalorder %s172, 7
        %s174 = scalar_select %p173, %s172, 7
        %s175 = smul.addr %s174, 2
        %s176 = scalar_lea.vmem %s1, %s175
        %p177 = pneg %p58
        %p178 = pneg %p55
        %p179 = pneg %p79
        %p180 = pneg %p76
        %p181 = pneg %p105
        %p182 = pneg %p102
        %s183 = smul.u32 4, %s16
        %p184 = scmp.lt.s32.totalorder %s183, 7
        %s185 = scalar_select %p184, %s183, 7
        %s186 = smul.addr %s185, 4
        %s187 = scalar_lea.vmem %s3, %s186
        %s188 = smul.u32 4, %s16
        %p189 = scmp.lt.s32.totalorder %s188, 7
        %s190 = scalar_select %p189, %s188, 7
        %s191 = smul.addr %s190, 2
        %s192 = scalar_lea.vmem %s1, %s191
        %s193 = smul.u32 4, %s16
        %s194 = smul.u32 4, %s16
        %p195 = scmp.lt.s32.totalorder %s194, 7
        %s196 = scalar_select %p195, %s194, 7
        %s197 = smul.addr %s196, 4
        %s198 = scalar_lea.vmem %s3, %s197
        %s199 = smul.u32 4, %s16
        %v201 = vld [vmem:[#allocation2] sm:$0xf]
        %v202 = vld [vmem:[%s192] sm:$0xff]
        %v204 = vcombine.high %v202, %v202
        %v206 = vunpack.c.l.s4 1983009808
        %v207 = vunpack.c.0.s8 %v206
        %v208 = vlaneseq
        %v209 = vshrl.u32 %v208, 7
        %v210 = vsub.s32 %v207, %v209
        %v211 = vrot.slane %v202, %v210
        %v213 = vunpack.c.l.s4 1983009808
        %v214 = vunpack.c.0.s8 %v213
        %v215 = vlaneseq
        %v216 = vshrl.u32 %v215, 7
        %v217 = vsub.s32 %v214, %v216
        %v218 = vrot.slane %v204, %v217
        %v219 = vcombine.high %v211, %v211
        %v220 = vcombine.high %v218, %v218
        %vm221 = vcmask 23552
        %v223 = vsel %vm221, %v201, 0
        %vm225 = vcmask 1040384
        %vm226 = vcmask 1041408
        %v227 = vsel %vm225, 4294967295, 65535
        %v228 = vsel %vm226, %v227, 0
        %v230 = vand.u32 %v211, %v228
        %v233 = vand.u32 %v219, %v228
        %v236 = vand.u32 %v218, %v228
        %v239 = vand.u32 %v220, %v228
        %241 = vmatprep.subr.bf16.mxu0 %v233
        %242 = vmatpush1.bf16.msra.mxu0 %v230
        %243 = vmatprep.subr.bf16.mxu0 0
        %244 = vmatpush1.bf16.msra.mxu0 0
        %245 = vmatprep.subr.bf16.mxu0 0
        %246 = vmatpush1.bf16.msra.mxu0 0
        %247 = vmatprep.subr.bf16.mxu0 0
        %248 = vmatpush1.bf16.msra.mxu0 0
        %249 = vmatprep.subr.bf16.mxu0 0
        %250 = vmatpush1.bf16.msra.mxu0 0
        %251 = vmatprep.subr.bf16.mxu0 0
        %252 = vmatpush1.bf16.msra.mxu0 0
        %253 = vmatprep.subr.bf16.mxu0 0
        %254 = vmatpush1.bf16.msra.mxu0 0
        %255 = vmatprep.subr.bf16.mxu0 0
        %256 = vmatpush1.bf16.msra.mxu0 0
        %257 = vmatprep.subr.bf16.mxu0 0
        %258 = vmatpush1.bf16.msra.mxu0 0
        %259 = vmatprep.subr.bf16.mxu0 0
        %260 = vmatpush1.bf16.msra.mxu0 0
        %261 = vmatprep.subr.bf16.mxu0 0
        %262 = vmatpush1.bf16.msra.mxu0 0
        %263 = vmatprep.subr.bf16.mxu0 0
        %264 = vmatpush1.bf16.msra.mxu0 0
        %265 = vmatprep.subr.bf16.mxu0 0
        %266 = vmatpush1.bf16.msra.mxu0 0
        %267 = vmatprep.subr.bf16.mxu0 0
        %268 = vmatpush1.bf16.msra.mxu0 0
        %269 = vmatprep.subr.bf16.mxu0 0
        %270 = vmatpush1.bf16.msra.mxu0 0
        %271 = vmatprep.subr.bf16.mxu0 0
        %272 = vmatpush1.bf16.msra.mxu0 0
        %273 = vmatprep.mubr.bf16.mxu0 0
        %274 = vmatmul.mubr.bf16.gmra.mrb[0].mxu0 %v223
        %v275 = vpop.f32.mrb[0].mxu0
        %v276 = vadd.f32 0.0, %v275
        %v277 = vpop.f32.mrb[0].mxu0
        %v278 = vadd.f32 0.0, %v277
        %v279 = vpop.f32.mrb[0].mxu0
        %v280 = vpop.f32.mrb[0].mxu0
        %281 = vdwg.mxu0
        %282 = vmatprep.subr.bf16.mxu0 %v239
        %283 = vmatpush1.bf16.msra.mxu0 %v236
        %284 = vmatprep.subr.bf16.mxu0 0
        %285 = vmatpush1.bf16.msra.mxu0 0
        %286 = vmatprep.subr.bf16.mxu0 0
        %287 = vmatpush1.bf16.msra.mxu0 0
        %288 = vmatprep.subr.bf16.mxu0 0
        %289 = vmatpush1.bf16.msra.mxu0 0
        %290 = vmatprep.subr.bf16.mxu0 0
        %291 = vmatpush1.bf16.msra.mxu0 0
        %292 = vmatprep.subr.bf16.mxu0 0
        %293 = vmatpush1.bf16.msra.mxu0 0
        %294 = vmatprep.subr.bf16.mxu0 0
        %295 = vmatpush1.bf16.msra.mxu0 0
        %296 = vmatprep.subr.bf16.mxu0 0
        %297 = vmatpush1.bf16.msra.mxu0 0
        %298 = vmatprep.subr.bf16.mxu0 0
        %299 = vmatpush1.bf16.msra.mxu0 0
        %300 = vmatprep.subr.bf16.mxu0 0
        %301 = vmatpush1.bf16.msra.mxu0 0
        %302 = vmatprep.subr.bf16.mxu0 0
        %303 = vmatpush1.bf16.msra.mxu0 0
        %304 = vmatprep.subr.bf16.mxu0 0
        %305 = vmatpush1.bf16.msra.mxu0 0
        %306 = vmatprep.subr.bf16.mxu0 0
        %307 = vmatpush1.bf16.msra.mxu0 0
        %308 = vmatprep.subr.bf16.mxu0 0
        %309 = vmatpush1.bf16.msra.mxu0 0
        %310 = vmatprep.subr.bf16.mxu0 0
        %311 = vmatpush1.bf16.msra.mxu0 0
        %312 = vmatprep.subr.bf16.mxu0 0
        %313 = vmatpush1.bf16.msra.mxu0 0
        %314 = vmatprep.mubr.bf16.mxu0 0
        %315 = vmatmul.mubr.bf16.gmra.mrb[0].mxu0 %v223
        %v316 = vpop.f32.mrb[0].mxu0
        %v317 = vadd.f32 0.0, %v316
        %v318 = vpop.f32.mrb[0].mxu0
        %v319 = vadd.f32 0.0, %v318
        %v320 = vpop.f32.mrb[0].mxu0
        %v321 = vpop.f32.mrb[0].mxu0
        %322 = vdwg.mxu0
        %v323 = vld [vmem:[#allocation4] sm:$0xff]
        %325 = vset.pattern.permute.xlu0 1
        %326 = vperm.xlu0 %325, %v323
        %v327 = vpop.permute.xlu0 %326
        %v329 = vmul.f32 %v276, %v327
        %v330 = vmul.f32 %v278, %v327
        %v331 = vmul.f32 %v317, %v327
        %v332 = vmul.f32 %v319, %v327
        %333 = vset.pattern.permute.xlu0 2
        %334 = vperm.xlu0 %333, %v323
        %v335 = vpop.permute.xlu0 %334
        %v337 = vadd.f32 %v329, %v335
        %v338 = vadd.f32 %v330, %v335
        %v339 = vadd.f32 %v331, %v335
        %v340 = vadd.f32 %v332, %v335
        %v341 = vpack.c.bf16 %v337, %v337
        %v342 = vpack.c.bf16 %v338, %v338
        %v343 = vpack.c.bf16 %v339, %v339
        %v344 = vpack.c.bf16 %v340, %v340
        %v349 = vunpack.c.l.b16 %v341
        %v350 = vunpack.c.l.b16 %v342
        %v351 = vunpack.c.l.b16 %v343
        %v352 = vunpack.c.l.b16 %v344
        %v353 = vpack.c.b16 %v350, %v349
        %v354 = vpack.c.b16 %v352, %v351
        %357 = vst [vmem:[%s198] sm:$0xff] %v353
        %358 = vst [vmem:[%s198 + $0x8] sm:$0xff] %v354
        %s359 = smul.u32 4, %s16
        %p360 = scmp.lt.s32.totalorder %s359, 7
        %s361 = scalar_select %p360, %s359, 7
        %s362 = smul.addr %s361, 4
        %s363 = scalar_lea.vmem %s3, %s362
        // Predicated region
        $region41: #{_lambda_.17} parent=31 // pred_check
          %p364 = pneg %p102
        $region42: #{_lambda_.17} parent=31 // pred_check_branch
          %366 = sbr.rel (%p364) target = $region44
        $region43: #{_lambda_.17} parent=31 // pred_region
          %s367 = smul.u32 4, %s16
        $region44: #{_lambda_.17} parent=31 // pred_fallthru
          _
      $region32: #{_lambda_.17} parent=5 // pred_fallthru
        _
      %p368 = scmp.le.s32.totalorder 2, %s11
      // Predicated region
      $region45: #{_lambda_.17} parent=5 // pred_check
        %p369 = pneg %p368
      $region46: #{_lambda_.17} parent=5 // pred_check_branch
        %371 = sbr.rel (%p369) target = $region48
      $region47: #{_lambda_.17} parent=5 // pred_region
        %s372 = ssub.s32 %s11, 2
        // Predicated region
        $region49: #{_lambda_.17} parent=47 // pred_check
          %p373 = pneg %p108
        $region50: #{_lambda_.17} parent=47 // pred_check_branch
          %375 = sbr.rel (%p373) target = $region52
        $region51: #{_lambda_.17} parent=47 // pred_region
          %s376 = smul.u32 4, %s17
          %p377 = scmp.lt.s32.totalorder %s376, 7
          %s378 = scalar_select %p377, %s376, 7
          %s379 = smul.addr %s378, 4
          %s380 = scalar_lea.vmem %s3, %s379
        $region52: #{_lambda_.17} parent=47 // pred_fallthru
          _
      $region48: #{_lambda_.17} parent=5 // pred_fallthru
        _
    $region6: #{_lambda_.17} parent=1 // loop_footer
      %s15 = sadd.s32 1, %s11
    $region7: #{_lambda_.17} parent=1 // loop_footer_branch
      %10 = sbr.rel target = $region3
    $region8: #{_lambda_.17} parent=1 // loop_exit
      _
    %381 = vsyncpa [#allocation3], 1
    %s382 = scalar_lea.sflag [#allocation3], 1
    %383 = vsyncpa %s382, 1
    %384 = vsyncpa [#allocation5], 1

// kernel: _lambda_.18
$region0: #{_lambda_.18}
  #allocation0 [shape = 'u32[]', space=smem, size = 0x4, offset = 0x4, fixed_abs, tag = 'smem constant byte address 0x4 - core index']
  #allocation1 [shape = 'u32[144,128]{1,0:T(1,128)}', space=vmem, size = 0x12000, scoped, tag = 'internal scratch']
  %s0 = inlined_call_operand.vmem [shape: bf16[8,81], index: 0, kind: input, shape index: {}]
  %s1 = inlined_call_operand.vmem [shape: bf16[81,1024], index: 1, kind: input, shape index: {}]
  %s2 = inlined_call_operand.vmem [shape: f32[8,3], index: 2, kind: input, shape index: {}]
  %s3 = inlined_call_operand.vmem [shape: bf16[8,1024], index: 3, kind: output, shape index: {}]
  %s4 = sld [smem:[#allocation0]]
  $region68: #{_lambda_.18} parent=0
    _
  %s6 = ssub.s32 1, %s4
  %s7 = scalar_select 0, %s6, %s4
  $region1: #{_lambda_.18} parent=0
    #allocation2 [shape = 'u8[180224]{0}', space=vmem, size = 0x2c000, scoped, tag = 'input window, operand 1']
    loop: start=0, step=1, limit=4
    $region2: #{_lambda_.18} parent=1 // loop_pre_header
      _
    $region3: #{_lambda_.18} parent=1 // loop_header
      %s9 = sphi 0, %s13
      %p10 = scmp.ge.s32.totalorder %s9, 4
      %s17 = sphi 0, %s17
      %s19 = sphi 0, %s17
      %s20 = sphi 0, %s19
      %s34 = sphi 0, %s20
      %s40 = sphi 0, %s42
      %s43 = sphi 0, %s40
      %s44 = sphi 0, %s43
      %s60 = sphi 0, %s44
      %s64 = sphi 0, %s64
      %s66 = sphi 0, %s64
      %s67 = sphi 0, %s66
      %s81 = sphi 0, %s67
      %s87 = sphi 0, %s89
      %s90 = sphi 0, %s87
      %s91 = sphi 0, %s90
      %s107 = sphi 0, %s91
    $region4: #{_lambda_.18} parent=1 // loop_header_branch
      %12 = sbr.rel (%p10) target = $region8
    $region5: #{_lambda_.18} parent=1 // loop_body
      %s14 = ssub.s32 %s9, 1
      %s15 = ssub.s32 %s9, 2
      %s16 = sadd.s32 %s9, 1
      %s18 = sadd.s32 %s17, 1
      %p21 = scmp.eq.s32.totalorder %s9, 1
      %p22 = scmp.ne.s32.totalorder %s17, %s19
      %p23 = scmp.eq.s32.totalorder %s9, 0
      %p24 = por %p22, %p23
      %p25 = scmp.ne.s32.totalorder %s17, %s19
      %p26 = scmp.eq.s32.totalorder %s14, 1
      %p27 = por %p25, %p26
      %p28 = scmp.ne.s32.totalorder %s19, %s20
      %p29 = scmp.eq.s32.totalorder %s14, 0
      %p30 = por %p28, %p29
      %p31 = scmp.ne.s32.totalorder %s19, %s20
      %p32 = scmp.eq.s32.totalorder %s15, 1
      %p33 = por %p31, %p32
      %p35 = scmp.ne.s32.totalorder %s20, %s34
      %p36 = scmp.eq.s32.totalorder %s15, 0
      %p37 = por %p35, %p36
      %s38 = ssub.s32 %s9, %s16
      %p39 = scmp.eq.s32.totalorder %s38, 0
      %s41 = sadd.s32 %s40, 1
      %s42 = scalar_select %p39, %s40, %s41
      %p45 = pneg %p39
      %p46 = scmp.eq.s32.totalorder %s9, 1
      %p47 = por %p45, %p46
      %p48 = scmp.ne.s32.totalorder %s40, %s43
      %p49 = scmp.eq.s32.totalorder %s9, 0
      %p50 = por %p48, %p49
      %p51 = scmp.ne.s32.totalorder %s40, %s43
      %p52 = scmp.eq.s32.totalorder %s14, 1
      %p53 = por %p51, %p52
      %p54 = scmp.ne.s32.totalorder %s43, %s44
      %p55 = scmp.eq.s32.totalorder %s14, 0
      %p56 = por %p54, %p55
      %p57 = scmp.ne.s32.totalorder %s43, %s44
      %p58 = scmp.eq.s32.totalorder %s15, 1
      %p59 = por %p57, %p58
      %p61 = scmp.ne.s32.totalorder %s44, %s60
      %p62 = scmp.eq.s32.totalorder %s15, 0
      %p63 = por %p61, %p62
      %s65 = sadd.s32 %s64, 1
      %p68 = scmp.eq.s32.totalorder %s9, 1
      %p69 = scmp.ne.s32.totalorder %s64, %s66
      %p70 = scmp.eq.s32.totalorder %s9, 0
      %p71 = por %p69, %p70
      %p72 = scmp.ne.s32.totalorder %s64, %s66
      %p73 = scmp.eq.s32.totalorder %s14, 1
      %p74 = por %p72, %p73
      %p75 = scmp.ne.s32.totalorder %s66, %s67
      %p76 = scmp.eq.s32.totalorder %s14, 0
      %p77 = por %p75, %p76
      %p78 = scmp.ne.s32.totalorder %s66, %s67
      %p79 = scmp.eq.s32.totalorder %s15, 1
      %p80 = por %p78, %p79
      %p82 = scmp.ne.s32.totalorder %s67, %s81
      %p83 = scmp.eq.s32.totalorder %s15, 0
      %p84 = por %p82, %p83
      %s85 = ssub.s32 %s9, %s16
      %p86 = scmp.eq.s32.totalorder %s85, 0
      %s88 = sadd.s32 %s87, 1
      %s89 = scalar_select %p86, %s87, %s88
      %p92 = pneg %p86
      %p93 = scmp.eq.s32.totalorder %s9, 1
      %p94 = por %p92, %p93
      %p95 = scmp.ne.s32.totalorder %s87, %s90
      %p96 = scmp.eq.s32.totalorder %s9, 0
      %p97 = por %p95, %p96
      %p98 = scmp.ne.s32.totalorder %s87, %s90
      %p99 = scmp.eq.s32.totalorder %s14, 1
      %p100 = por %p98, %p99
      %p101 = scmp.ne.s32.totalorder %s90, %s91
      %p102 = scmp.eq.s32.totalorder %s14, 0
      %p103 = por %p101, %p102
      %p104 = scmp.ne.s32.totalorder %s90, %s91
      %p105 = scmp.eq.s32.totalorder %s15, 1
      %p106 = por %p104, %p105
      %p108 = scmp.ne.s32.totalorder %s91, %s107
      %p109 = scmp.eq.s32.totalorder %s15, 0
      %p110 = por %p108, %p109
      %p111 = scmp.le.s32.totalorder 1, %s9
      %p112 = scmp.lt.s32.totalorder %s9, 3
      %p113 = pnand %p111, %p112
      %p114 = pneg %p113
      // Predicated region
      $region9: #{_lambda_.18} parent=5 // pred_check
        _
      $region10: #{_lambda_.18} parent=5 // pred_check_branch
        %116 = sbr.rel (%p113) target = $region12
      $region11: #{_lambda_.18} parent=5 // pred_region
        %s117 = ssub.s32 %s9, 1
        // Predicated region
        $region13: #{_lambda_.18} parent=11 // pred_check
          %p118 = pneg %p30
        $region14: #{_lambda_.18} parent=11 // pred_check_branch
          %120 = sbr.rel (%p118) target = $region16
        $region15: #{_lambda_.18} parent=11 // pred_region
          _
        $region16: #{_lambda_.18} parent=11 // pred_fallthru
          _
        // Predicated region
        $region17: #{_lambda_.18} parent=11 // pred_check
          %p121 = pneg %p77
        $region18: #{_lambda_.18} parent=11 // pred_check_branch
          %123 = sbr.rel (%p121) target = $region20
        $region19: #{_lambda_.18} parent=11 // pred_region
          _
        $region20: #{_lambda_.18} parent=11 // pred_fallthru
          _
      $region12: #{_lambda_.18} parent=5 // pred_fallthru
        _
      %p124 = scmp.lt.s32.totalorder %s9, 2
      // Predicated region
      $region21: #{_lambda_.18} parent=5 // pred_check
        %p125 = pneg %p124
      $region22: #{_lambda_.18} parent=5 // pred_check_branch
        %127 = sbr.rel (%p125) target = $region24
      $region23: #{_lambda_.18} parent=5 // pred_region
        // Predicated region
        $region25: #{_lambda_.18} parent=23 // pred_check
          %p128 = pneg %p50
        $region26: #{_lambda_.18} parent=23 // pred_check_branch
          %130 = sbr.rel (%p128) target = $region28
        $region27: #{_lambda_.18} parent=23 // pred_region
          %s131 = sand.u32 %s40, 1
          %s132 = sand.u32 %s40, 1
          %s133 = smul.addr %s132, 176
          %s134 = scalar_lea.vmem [#allocation2], %s133
          %s135 = smul.u32 4, %s9
          %s136 = smul.addr %s135, 4
          %s137 = scalar_lea.vmem %s1, %s136
          // Predicated region
          $region29: #{_lambda_.18} parent=27 // pred_check
            _
          $region30: #{_lambda_.18} parent=27 // pred_check_branch
            %139 = sbr.rel (0) target = $region32
          $region31: #{_lambda_.18} parent=27 // pred_region
            // Predicated region
            $region33: #{_lambda_.18} parent=31 // pred_check
              _
            $region34: #{_lambda_.18} parent=31 // pred_check_branch
              %141 = sbr.rel (0) target = $region36
            $region35: #{_lambda_.18} parent=31 // pred_region
              loop: start=0, step=1, limit=1
              $region37: #{_lambda_.18} parent=35 // loop_pre_header
                _
              $region38: #{_lambda_.18} parent=35 // loop_header
                %s143 = sphi 0, %s147
                %p144 = scmp.ge.s32.totalorder %s143, 1
                %s148 = sphi %s137, %s137
                %s149 = sphi %s134, %s134
              $region39: #{_lambda_.18} parent=35 // loop_header_branch
                %146 = sbr.rel (%p144) target = $region43
              $region40: #{_lambda_.18} parent=35 // loop_body
                %v150 = vld [vmem:[%s148] sm:$0xff]
                %151 = vst [vmem:[%s149] sm:$0xff] %v150
                %v152 = vld [vmem:[%s148 + $0x8] sm:$0xff]
                %153 = vst [vmem:[%s149 + $0x8] sm:$0xff] %v152
                %v154 = vld [vmem:[%s148 + $0x20] sm:$0xff]
                %155 = vst [vmem:[%s149 + $0x10] sm:$0xff] %v154
                %v156 = vld [vmem:[%s148 + $0x28] sm:$0xff]
                %157 = vst [vmem:[%s149 + $0x18] sm:$0xff] %v156
                %v158 = vld [vmem:[%s148 + $0x40] sm:$0xff]
                %159 = vst [vmem:[%s149 + $0x20] sm:$0xff] %v158
                %v160 = vld [vmem:[%s148 + $0x48] sm:$0xff]
                %161 = vst [vmem:[%s149 + $0x28] sm:$0xff] %v160
                %v162 = vld [vmem:[%s148 + $0x60] sm:$0xff]
                %163 = vst [vmem:[%s149 + $0x30] sm:$0xff] %v162
                %v164 = vld [vmem:[%s148 + $0x68] sm:$0xff]
                %165 = vst [vmem:[%s149 + $0x38] sm:$0xff] %v164
                %v166 = vld [vmem:[%s148 + $0x80] sm:$0xff]
                %167 = vst [vmem:[%s149 + $0x40] sm:$0xff] %v166
                %v168 = vld [vmem:[%s148 + $0x88] sm:$0xff]
                %169 = vst [vmem:[%s149 + $0x48] sm:$0xff] %v168
                %v170 = vld [vmem:[%s148 + $0xa0] sm:$0xff]
                %171 = vst [vmem:[%s149 + $0x50] sm:$0xff] %v170
                %v172 = vld [vmem:[%s148 + $0xa8] sm:$0xff]
                %173 = vst [vmem:[%s149 + $0x58] sm:$0xff] %v172
                %v174 = vld [vmem:[%s148 + $0xc0] sm:$0xff]
                %175 = vst [vmem:[%s149 + $0x60] sm:$0xff] %v174
                %v176 = vld [vmem:[%s148 + $0xc8] sm:$0xff]
                %177 = vst [vmem:[%s149 + $0x68] sm:$0xff] %v176
                %v178 = vld [vmem:[%s148 + $0xe0] sm:$0xff]
                %179 = vst [vmem:[%s149 + $0x70] sm:$0xff] %v178
                %v180 = vld [vmem:[%s148 + $0xe8] sm:$0xff]
                %181 = vst [vmem:[%s149 + $0x78] sm:$0xff] %v180
                %v182 = vld [vmem:[%s148 + $0x100] sm:$0xff]
                %183 = vst [vmem:[%s149 + $0x80] sm:$0xff] %v182
                %v184 = vld [vmem:[%s148 + $0x108] sm:$0xff]
                %185 = vst [vmem:[%s149 + $0x88] sm:$0xff] %v184
                %v186 = vld [vmem:[%s148 + $0x120] sm:$0xff]
                %187 = vst [vmem:[%s149 + $0x90] sm:$0xff] %v186
                %v188 = vld [vmem:[%s148 + $0x128] sm:$0xff]
                %189 = vst [vmem:[%s149 + $0x98] sm:$0xff] %v188
                %v190 = vld [vmem:[%s148 + $0x140] sm:$0xff]
                %191 = vst [vmem:[%s149 + $0xa0] sm:$0xff] %v190
                %v192 = vld [vmem:[%s148 + $0x148] sm:$0xff]
                %193 = vst [vmem:[%s149 + $0xa8] sm:$0xff] %v192
              $region41: #{_lambda_.18} parent=35 // loop_footer
                %s147 = sadd.s32 1, %s143
              $region42: #{_lambda_.18} parent=35 // loop_footer_branch
                %142 = sbr.rel target = $region38
              $region43: #{_lambda_.18} parent=35 // loop_exit
                _
            $region36: #{_lambda_.18} parent=31 // pred_fallthru
              _
            // Predicated region
            $region44: #{_lambda_.18} parent=31 // pred_check
              _
            $region45: #{_lambda_.18} parent=31 // pred_check_branch
              %195 = sbr.rel target = $region47
            $region46: #{_lambda_.18} parent=31 // pred_region
              _
            $region47: #{_lambda_.18} parent=31 // pred_fallthru
              _
          $region32: #{_lambda_.18} parent=27 // pred_fallthru
            _
          %196 = vnop
        $region28: #{_lambda_.18} parent=23 // pred_fallthru
          _
      $region24: #{_lambda_.18} parent=5 // pred_fallthru
        _
      %p197 = scmp.le.s32.totalorder 1, %s9
      %p198 = scmp.lt.s32.totalorder %s9, 3
      %p199 = pnand %p197, %p198
      %p200 = pneg %p199
      // Predicated region
      $region48: #{_lambda_.18} parent=5 // pred_check
        _
      $region49: #{_lambda_.18} parent=5 // pred_check_branch
        %202 = sbr.rel (%p199) target = $region51
      $region50: #{_lambda_.18} parent=5 // pred_region
        %s203 = ssub.s32 %s9, 1
        %s204 = sand.u32 %s43, 1
        %s205 = sand.u32 %s43, 1
        %s206 = smul.addr %s205, 176
        %s207 = scalar_lea.vmem [#allocation2], %s206
        // Predicated region
        $region52: #{_lambda_.18} parent=50 // pred_check
          %p208 = pneg %p56
        $region53: #{_lambda_.18} parent=50 // pred_check_branch
          %210 = sbr.rel (%p208) target = $region55
        $region54: #{_lambda_.18} parent=50 // pred_region
          _
        $region55: #{_lambda_.18} parent=50 // pred_fallthru
          _
        %p211 = pneg %p30
        %p212 = pneg %p27
        %s213 = sand.u32 %s43, 1
        %s214 = sand.u32 %s43, 1
        %s215 = smul.addr %s214, 176
        %s216 = scalar_lea.vmem [#allocation2], %s215
        %p217 = pneg %p56
        %p218 = pneg %p53
        %p219 = pneg %p77
        %p220 = pneg %p74
        %p221 = pneg %p103
        %p222 = pneg %p100
        %s223 = smul.u32 4, %s14
        %p224 = scmp.lt.s32.totalorder %s223, 7
        %s225 = scalar_select %p224, %s223, 7
        %s226 = smul.addr %s225, 4
        %s227 = scalar_lea.vmem %s3, %s226
        %s228 = smul.u32 4, %s14
        %s229 = smul.u32 4, %s14
        %p230 = scmp.lt.s32.totalorder %s229, 7
        %s231 = scalar_select %p230, %s229, 7
        %s232 = smul.addr %s231, 4
        %s233 = scalar_lea.vmem %s3, %s232
        %s234 = smul.u32 4, %s14
        %v236 = vld [vmem:[%s0] sm:$0xf]
        %v237 = vld [vmem:[%s207] sm:$0xff]
        %v238 = vld [vmem:[%s207 + $0x8] sm:$0xff]
        %v239 = vld [vmem:[%s207 + $0x10] sm:$0xff]
        %v240 = vld [vmem:[%s207 + $0x18] sm:$0xff]
        %v241 = vld [vmem:[%s207 + $0x20] sm:$0xff]
        %v242 = vld [vmem:[%s207 + $0x28] sm:$0xff]
        %v243 = vld [vmem:[%s207 + $0x30] sm:$0xff]
        %v244 = vld [vmem:[%s207 + $0x38] sm:$0xff]
        %v245 = vld [vmem:[%s207 + $0x40] sm:$0xff]
        %v246 = vld [vmem:[%s207 + $0x48] sm:$0xff]
        %v247 = vld [vmem:[%s207 + $0x50] sm:$0xff]
        %v248 = vld [vmem:[%s207 + $0x58] sm:$0xff]
        %v249 = vld [vmem:[%s207 + $0x60] sm:$0xff]
        %v250 = vld [vmem:[%s207 + $0x68] sm:$0xff]
        %v251 = vld [vmem:[%s207 + $0x70] sm:$0xff]
        %v252 = vld [vmem:[%s207 + $0x78] sm:$0xff]
        %v253 = vld [vmem:[%s207 + $0x80] sm:$0xff]
        %v254 = vld [vmem:[%s207 + $0x88] sm:$0xff]
        %v255 = vld [vmem:[%s207 + $0x90] sm:$0xff]
        %v256 = vld [vmem:[%s207 + $0x98] sm:$0xff]
        %v257 = vld [vmem:[%s207 + $0xa0] sm:$0x11]
        %v258 = vld [vmem:[%s207 + $0xa8] sm:$0x11]
        %v259 = vld [vmem:[%s2] sm:$0xff]
        %261 = vset.pattern.permute.xlu0 0
        %262 = vperm.xlu0 %261, %v259
        %v263 = vpop.permute.xlu0 %262
        %v287 = vunpack.c.l.b16 %v237
        %v288 = vunpack.c.h.b16 %v237
        %v289 = vunpack.c.l.b16 %v238
        %v290 = vunpack.c.h.b16 %v238
        %v291 = vunpack.c.l.b16 %v239
        %v292 = vunpack.c.h.b16 %v239
        %v293 = vunpack.c.l.b16 %v240
        %v294 = vunpack.c.h.b16 %v240
        %v295 = vunpack.c.l.b16 %v241
        %v296 = vunpack.c.h.b16 %v241
        %v297 = vunpack.c.l.b16 %v242
        %v298 = vunpack.c.h.b16 %v242
        %v299 = vunpack.c.l.b16 %v243
        %v300 = vunpack.c.h.b16 %v243
        %v301 = vunpack.c.l.b16 %v244
        %v302 = vunpack.c.h.b16 %v244
        %v303 = vunpack.c.l.b16 %v245
        %v304 = vunpack.c.h.b16 %v245
        %v305 = vunpack.c.l.b16 %v246
        %v306 = vunpack.c.h.b16 %v246
        %v307 = vunpack.c.l.b16 %v247
        %v308 = vunpack.c.h.b16 %v247
        %v309 = vunpack.c.l.b16 %v248
        %v310 = vunpack.c.h.b16 %v248
        %v311 = vunpack.c.l.b16 %v249
        %v312 = vunpack.c.h.b16 %v249
        %v313 = vunpack.c.l.b16 %v250
        %v314 = vunpack.c.h.b16 %v250
        %v315 = vunpack.c.l.b16 %v251
        %v316 = vunpack.c.h.b16 %v251
        %v317 = vunpack.c.l.b16 %v252
        %v318 = vunpack.c.h.b16 %v252
        %v319 = vunpack.c.l.b16 %v253
        %v320 = vunpack.c.h.b16 %v253
        %v321 = vunpack.c.l.b16 %v254
        %v322 = vunpack.c.h.b16 %v254
        %v323 = vunpack.c.l.b16 %v255
        %v324 = vunpack.c.h.b16 %v255
        %v325 = vunpack.c.l.b16 %v256
        %v326 = vunpack.c.h.b16 %v256
        %v327 = vunpack.c.l.b16 %v257
        %v328 = vunpack.c.h.b16 %v257
        %v329 = vunpack.c.l.b16 %v258
        %v330 = vunpack.c.h.b16 %v258
        %v331 = vpack.c.b16 %v291, %v287
        %v332 = vpack.c.b16 %v292, %v288
        %v333 = vpack.c.b16 %v293, %v289
        %v334 = vpack.c.b16 %v294, %v290
        %v335 = vpack.c.b16 %v299, %v295
        %v336 = vpack.c.b16 %v300, %v296
        %v337 = vpack.c.b16 %v301, %v297
        %v338 = vpack.c.b16 %v302, %v298
        %v339 = vpack.c.b16 %v307, %v303
        %v340 = vpack.c.b16 %v308, %v304
        %v341 = vpack.c.b16 %v309, %v305
        %v342 = vpack.c.b16 %v310, %v306
        %v343 = vpack.c.b16 %v315, %v311
        %v344 = vpack.c.b16 %v316, %v312
        %v345 = vpack.c.b16 %v317, %v313
        %v346 = vpack.c.b16 %v318, %v314
        %v347 = vpack.c.b16 %v323, %v319
        %v348 = vpack.c.b16 %v324, %v320
        %v349 = vpack.c.b16 %v325, %v321
        %v350 = vpack.c.b16 %v326, %v322
        %v351 = vpack.c.b16 %v327, %v327
        %v352 = vpack.c.b16 %v328, %v328
        %v353 = vpack.c.b16 %v329, %v329
        %v354 = vpack.c.b16 %v330, %v330
        %vm375 = vcmask 662528
        %v377 = vsel %vm375, %v236, 0
        %vm379 = vcmask 1040384
        %v380 = vsel 0, 4294967295, 65535
        %v381 = vsel %vm379, %v380, 0
        %v383 = vand.u32 %v351, %v381
        %v386 = vand.u32 %v352, %v381
        %v389 = vand.u32 %v353, %v381
        %v392 = vand.u32 %v354, %v381
        %394 = vmatprep.subr.bf16.mxu0 %v332
        %395 = vmatpush1.bf16.msra.mxu0 %v331
        %396 = vmatprep.subr.bf16.mxu0 %v336
        %397 = vmatpush1.bf16.msra.mxu0 %v335
        %398 = vmatprep.subr.bf16.mxu0 %v340
        %399 = vmatpush1.bf16.msra.mxu0 %v339
        %400 = vmatprep.subr.bf16.mxu0 %v344
        %401 = vmatpush1.bf16.msra.mxu0 %v343
        %402 = vmatprep.subr.bf16.mxu0 %v348
        %403 = vmatpush1.bf16.msra.mxu0 %v347
        %404 = vmatprep.subr.bf16.mxu0 %v386
        %405 = vmatpush1.bf16.msra.mxu0 %v383
        %406 = vmatprep.subr.bf16.mxu0 0
        %407 = vmatpush1.bf16.msra.mxu0 0
        %408 = vmatprep.subr.bf16.mxu0 0
        %409 = vmatpush1.bf16.msra.mxu0 0
        %410 = vmatprep.subr.bf16.mxu0 0
        %411 = vmatpush1.bf16.msra.mxu0 0
        %412 = vmatprep.subr.bf16.mxu0 0
        %413 = vmatpush1.bf16.msra.mxu0 0
        %414 = vmatprep.subr.bf16.mxu0 0
        %415 = vmatpush1.bf16.msra.mxu0 0
        %416 = vmatprep.subr.bf16.mxu0 0
        %417 = vmatpush1.bf16.msra.mxu0 0
        %418 = vmatprep.subr.bf16.mxu0 0
        %419 = vmatpush1.bf16.msra.mxu0 0
        %420 = vmatprep.subr.bf16.mxu0 0
        %421 = vmatpush1.bf16.msra.mxu0 0
        %422 = vmatprep.subr.bf16.mxu0 0
        %423 = vmatpush1.bf16.msra.mxu0 0
        %424 = vmatprep.subr.bf16.mxu0 0
        %425 = vmatpush1.bf16.msra.mxu0 0
        %426 = vmatprep.mubr.bf16.mxu0 0
        %427 = vmatmul.mubr.bf16.gmra.mrb[0].mxu0 %v377
        %v428 = vpop.f32.mrb[0].mxu0
        %v429 = vadd.f32 %v263, %v428
        %v430 = vpop.f32.mrb[0].mxu0
        %v431 = vadd.f32 %v263, %v430
        %v432 = vpop.f32.mrb[0].mxu0
        %v433 = vpop.f32.mrb[0].mxu0
        %434 = vdwg.mxu0
        %435 = vmatprep.subr.bf16.mxu0 %v334
        %436 = vmatpush1.bf16.msra.mxu0 %v333
        %437 = vmatprep.subr.bf16.mxu0 %v338
        %438 = vmatpush1.bf16.msra.mxu0 %v337
        %439 = vmatprep.subr.bf16.mxu0 %v342
        %440 = vmatpush1.bf16.msra.mxu0 %v341
        %441 = vmatprep.subr.bf16.mxu0 %v346
        %442 = vmatpush1.bf16.msra.mxu0 %v345
        %443 = vmatprep.subr.bf16.mxu0 %v350
        %444 = vmatpush1.bf16.msra.mxu0 %v349
        %445 = vmatprep.subr.bf16.mxu0 %v392
        %446 = vmatpush1.bf16.msra.mxu0 %v389
        %447 = vmatprep.subr.bf16.mxu0 0
        %448 = vmatpush1.bf16.msra.mxu0 0
        %449 = vmatprep.subr.bf16.mxu0 0
        %450 = vmatpush1.bf16.msra.mxu0 0
        %451 = vmatprep.subr.bf16.mxu0 0
        %452 = vmatpush1.bf16.msra.mxu0 0
        %453 = vmatprep.subr.bf16.mxu0 0
        %454 = vmatpush1.bf16.msra.mxu0 0
        %455 = vmatprep.subr.bf16.mxu0 0
        %456 = vmatpush1.bf16.msra.mxu0 0
        %457 = vmatprep.subr.bf16.mxu0 0
        %458 = vmatpush1.bf16.msra.mxu0 0
        %459 = vmatprep.subr.bf16.mxu0 0
        %460 = vmatpush1.bf16.msra.mxu0 0
        %461 = vmatprep.subr.bf16.mxu0 0
        %462 = vmatpush1.bf16.msra.mxu0 0
        %463 = vmatprep.subr.bf16.mxu0 0
        %464 = vmatpush1.bf16.msra.mxu0 0
        %465 = vmatprep.subr.bf16.mxu0 0
        %466 = vmatpush1.bf16.msra.mxu0 0
        %467 = vmatprep.mubr.bf16.mxu0 0
        %468 = vmatmul.mubr.bf16.gmra.mrb[0].mxu0 %v377
        %v469 = vpop.f32.mrb[0].mxu0
        %v470 = vadd.f32 %v263, %v469
        %v471 = vpop.f32.mrb[0].mxu0
        %v472 = vadd.f32 %v263, %v471
        %v473 = vpop.f32.mrb[0].mxu0
        %v474 = vpop.f32.mrb[0].mxu0
        %475 = vdwg.mxu0
        %vm476 = vcmp.ge.f32.partialorder %v429, 0.0
        %vm477 = vcmp.ge.f32.partialorder %v431, 0.0
        %vm478 = vcmp.ge.f32.partialorder %v470, 0.0
        %vm479 = vcmp.ge.f32.partialorder %v472, 0.0
        %v480 = vmul.f32 %v429, 0.01
        %v481 = vmul.f32 %v431, 0.01
        %v482 = vmul.f32 %v470, 0.01
        %v483 = vmul.f32 %v472, 0.01
        %v484 = vsel %vm476, %v429, %v480
        %v485 = vsel %vm477, %v431, %v481
        %v486 = vsel %vm478, %v470, %v482
        %v487 = vsel %vm479, %v472, %v483
        %488 = vset.pattern.permute.xlu0 1
        %489 = vperm.xlu0 %488, %v259
        %v490 = vpop.permute.xlu0 %489
        %v492 = vmul.f32 %v484, %v490
        %v493 = vmul.f32 %v485, %v490
        %v494 = vmul.f32 %v486, %v490
        %v495 = vmul.f32 %v487, %v490
        %496 = vset.pattern.permute.xlu0 2
        %497 = vperm.xlu0 %496, %v259
        %v498 = vpop.permute.xlu0 %497
        %v500 = vadd.f32 %v492, %v498
        %v501 = vadd.f32 %v493, %v498
        %v502 = vadd.f32 %v494, %v498
        %v503 = vadd.f32 %v495, %v498
        %v504 = vpack.c.bf16 %v500, %v500
        %v505 = vpack.c.bf16 %v501, %v501
        %v506 = vpack.c.bf16 %v502, %v502
        %v507 = vpack.c.bf16 %v503, %v503
        %v512 = vunpack.c.l.b16 %v504
        %v513 = vunpack.c.l.b16 %v505
        %v514 = vunpack.c.l.b16 %v506
        %v515 = vunpack.c.l.b16 %v507
        %v516 = vpack.c.b16 %v513, %v512
        %v517 = vpack.c.b16 %v515, %v514
        %520 = vst [vmem:[%s233] sm:$0xff] %v516
        %521 = vst [vmem:[%s233 + $0x8] sm:$0xff] %v517
        %s522 = smul.u32 4, %s14
        %p523 = scmp.lt.s32.totalorder %s522, 7
        %s524 = scalar_select %p523, %s522, 7
        %s525 = smul.addr %s524, 4
        %s526 = scalar_lea.vmem %s3, %s525
        // Predicated region
        $region56: #{_lambda_.18} parent=50 // pred_check
          %p527 = pneg %p100
        $region57: #{_lambda_.18} parent=50 // pred_check_branch
          %529 = sbr.rel (%p527) target = $region59
        $region58: #{_lambda_.18} parent=50 // pred_region
          %s530 = smul.u32 4, %s14
        $region59: #{_lambda_.18} parent=50 // pred_fallthru
          _
      $region51: #{_lambda_.18} parent=5 // pred_fallthru
        _
      %p531 = scmp.le.s32.totalorder 2, %s9
      // Predicated region
      $region60: #{_lambda_.18} parent=5 // pred_check
        %p532 = pneg %p531
      $region61: #{_lambda_.18} parent=5 // pred_check_branch
        %534 = sbr.rel (%p532) target = $region63
      $region62: #{_lambda_.18} parent=5 // pred_region
        %s535 = ssub.s32 %s9, 2
        // Predicated region
        $region64: #{_lambda_.18} parent=62 // pred_check
          %p536 = pneg %p106
        $region65: #{_lambda_.18} parent=62 // pred_check_branch
          %538 = sbr.rel (%p536) target = $region67
        $region66: #{_lambda_.18} parent=62 // pred_region
          %s539 = smul.u32 4, %s15
          %p540 = scmp.lt.s32.totalorder %s539, 7
          %s541 = scalar_select %p540, %s539, 7
          %s542 = smul.addr %s541, 4
          %s543 = scalar_lea.vmem %s3, %s542
        $region67: #{_lambda_.18} parent=62 // pred_fallthru
          _
      $region63: #{_lambda_.18} parent=5 // pred_fallthru
        _
    $region6: #{_lambda_.18} parent=1 // loop_footer
      %s13 = sadd.s32 1, %s9
    $region7: #{_lambda_.18} parent=1 // loop_footer_branch
      %8 = sbr.rel target = $region3
    $region8: #{_lambda_.18} parent=1 // loop_exit
      _

// kernel: _lambda_.19
$region0: #{_lambda_.19}
  #allocation0 [shape = 'u32[]', space=smem, size = 0x4, offset = 0x4, fixed_abs, tag = 'smem constant byte address 0x4 - core index']
  #allocation1 [shape = 'u32[144,128]{1,0:T(1,128)}', space=vmem, size = 0x12000, scoped, tag = 'internal scratch']
  %s0 = inlined_call_operand.vmem [shape: bf16[8,162], index: 0, kind: input, shape index: {}]
  %s1 = inlined_call_operand.vmem [shape: bf16[162,1024], index: 1, kind: input, shape index: {}]
  %s2 = inlined_call_operand.vmem [shape: f32[8,3], index: 2, kind: input, shape index: {}]
  %s3 = inlined_call_operand.vmem [shape: bf16[8,1024], index: 3, kind: output, shape index: {}]
  %s4 = sld [smem:[#allocation0]]
  $region68: #{_lambda_.19} parent=0
    _
  %s6 = ssub.s32 1, %s4
  %s7 = scalar_select 0, %s6, %s4
  $region1: #{_lambda_.19} parent=0
    #allocation2 [shape = 'u8[344064]{0}', space=vmem, size = 0x54000, scoped, tag = 'input window, operand 1']
    loop: start=0, step=1, limit=4
    $region2: #{_lambda_.19} parent=1 // loop_pre_header
      _
    $region3: #{_lambda_.19} parent=1 // loop_header
      %s9 = sphi 0, %s13
      %p10 = scmp.ge.s32.totalorder %s9, 4
      %s17 = sphi 0, %s17
      %s19 = sphi 0, %s17
      %s20 = sphi 0, %s19
      %s34 = sphi 0, %s20
      %s40 = sphi 0, %s42
      %s43 = sphi 0, %s40
      %s44 = sphi 0, %s43
      %s60 = sphi 0, %s44
      %s64 = sphi 0, %s64
      %s66 = sphi 0, %s64
      %s67 = sphi 0, %s66
      %s81 = sphi 0, %s67
      %s87 = sphi 0, %s89
      %s90 = sphi 0, %s87
      %s91 = sphi 0, %s90
      %s107 = sphi 0, %s91
    $region4: #{_lambda_.19} parent=1 // loop_header_branch
      %12 = sbr.rel (%p10) target = $region8
    $region5: #{_lambda_.19} parent=1 // loop_body
      %s14 = ssub.s32 %s9, 1
      %s15 = ssub.s32 %s9, 2
      %s16 = sadd.s32 %s9, 1
      %s18 = sadd.s32 %s17, 1
      %p21 = scmp.eq.s32.totalorder %s9, 1
      %p22 = scmp.ne.s32.totalorder %s17, %s19
      %p23 = scmp.eq.s32.totalorder %s9, 0
      %p24 = por %p22, %p23
      %p25 = scmp.ne.s32.totalorder %s17, %s19
      %p26 = scmp.eq.s32.totalorder %s14, 1
      %p27 = por %p25, %p26
      %p28 = scmp.ne.s32.totalorder %s19, %s20
      %p29 = scmp.eq.s32.totalorder %s14, 0
      %p30 = por %p28, %p29
      %p31 = scmp.ne.s32.totalorder %s19, %s20
      %p32 = scmp.eq.s32.totalorder %s15, 1
      %p33 = por %p31, %p32
      %p35 = scmp.ne.s32.totalorder %s20, %s34
      %p36 = scmp.eq.s32.totalorder %s15, 0
      %p37 = por %p35, %p36
      %s38 = ssub.s32 %s9, %s16
      %p39 = scmp.eq.s32.totalorder %s38, 0
      %s41 = sadd.s32 %s40, 1
      %s42 = scalar_select %p39, %s40, %s41
      %p45 = pneg %p39
      %p46 = scmp.eq.s32.totalorder %s9, 1
      %p47 = por %p45, %p46
      %p48 = scmp.ne.s32.totalorder %s40, %s43
      %p49 = scmp.eq.s32.totalorder %s9, 0
      %p50 = por %p48, %p49
      %p51 = scmp.ne.s32.totalorder %s40, %s43
      %p52 = scmp.eq.s32.totalorder %s14, 1
      %p53 = por %p51, %p52
      %p54 = scmp.ne.s32.totalorder %s43, %s44
      %p55 = scmp.eq.s32.totalorder %s14, 0
      %p56 = por %p54, %p55
      %p57 = scmp.ne.s32.totalorder %s43, %s44
      %p58 = scmp.eq.s32.totalorder %s15, 1
      %p59 = por %p57, %p58
      %p61 = scmp.ne.s32.totalorder %s44, %s60
      %p62 = scmp.eq.s32.totalorder %s15, 0
      %p63 = por %p61, %p62
      %s65 = sadd.s32 %s64, 1
      %p68 = scmp.eq.s32.totalorder %s9, 1
      %p69 = scmp.ne.s32.totalorder %s64, %s66
      %p70 = scmp.eq.s32.totalorder %s9, 0
      %p71 = por %p69, %p70
      %p72 = scmp.ne.s32.totalorder %s64, %s66
      %p73 = scmp.eq.s32.totalorder %s14, 1
      %p74 = por %p72, %p73
      %p75 = scmp.ne.s32.totalorder %s66, %s67
      %p76 = scmp.eq.s32.totalorder %s14, 0
      %p77 = por %p75, %p76
      %p78 = scmp.ne.s32.totalorder %s66, %s67
      %p79 = scmp.eq.s32.totalorder %s15, 1
      %p80 = por %p78, %p79
      %p82 = scmp.ne.s32.totalorder %s67, %s81
      %p83 = scmp.eq.s32.totalorder %s15, 0
      %p84 = por %p82, %p83
      %s85 = ssub.s32 %s9, %s16
      %p86 = scmp.eq.s32.totalorder %s85, 0
      %s88 = sadd.s32 %s87, 1
      %s89 = scalar_select %p86, %s87, %s88
      %p92 = pneg %p86
      %p93 = scmp.eq.s32.totalorder %s9, 1
      %p94 = por %p92, %p93
      %p95 = scmp.ne.s32.totalorder %s87, %s90
      %p96 = scmp.eq.s32.totalorder %s9, 0
      %p97 = por %p95, %p96
      %p98 = scmp.ne.s32.totalorder %s87, %s90
      %p99 = scmp.eq.s32.totalorder %s14, 1
      %p100 = por %p98, %p99
      %p101 = scmp.ne.s32.totalorder %s90, %s91
      %p102 = scmp.eq.s32.totalorder %s14, 0
      %p103 = por %p101, %p102
      %p104 = scmp.ne.s32.totalorder %s90, %s91
      %p105 = scmp.eq.s32.totalorder %s15, 1
      %p106 = por %p104, %p105
      %p108 = scmp.ne.s32.totalorder %s91, %s107
      %p109 = scmp.eq.s32.totalorder %s15, 0
      %p110 = por %p108, %p109
      %p111 = scmp.le.s32.totalorder 1, %s9
      %p112 = scmp.lt.s32.totalorder %s9, 3
      %p113 = pnand %p111, %p112
      %p114 = pneg %p113
      // Predicated region
      $region9: #{_lambda_.19} parent=5 // pred_check
        _
      $region10: #{_lambda_.19} parent=5 // pred_check_branch
        %116 = sbr.rel (%p113) target = $region12
      $region11: #{_lambda_.19} parent=5 // pred_region
        %s117 = ssub.s32 %s9, 1
        // Predicated region
        $region13: #{_lambda_.19} parent=11 // pred_check
          %p118 = pneg %p30
        $region14: #{_lambda_.19} parent=11 // pred_check_branch
          %120 = sbr.rel (%p118) target = $region16
        $region15: #{_lambda_.19} parent=11 // pred_region
          _
        $region16: #{_lambda_.19} parent=11 // pred_fallthru
          _
        // Predicated region
        $region17: #{_lambda_.19} parent=11 // pred_check
          %p121 = pneg %p77
        $region18: #{_lambda_.19} parent=11 // pred_check_branch
          %123 = sbr.rel (%p121) target = $region20
        $region19: #{_lambda_.19} parent=11 // pred_region
          _
        $region20: #{_lambda_.19} parent=11 // pred_fallthru
          _
      $region12: #{_lambda_.19} parent=5 // pred_fallthru
        _
      %p124 = scmp.lt.s32.totalorder %s9, 2
      // Predicated region
      $region21: #{_lambda_.19} parent=5 // pred_check
        %p125 = pneg %p124
      $region22: #{_lambda_.19} parent=5 // pred_check_branch
        %127 = sbr.rel (%p125) target = $region24
      $region23: #{_lambda_.19} parent=5 // pred_region
        // Predicated region
        $region25: #{_lambda_.19} parent=23 // pred_check
          %p128 = pneg %p50
        $region26: #{_lambda_.19} parent=23 // pred_check_branch
          %130 = sbr.rel (%p128) target = $region28
        $region27: #{_lambda_.19} parent=23 // pred_region
          %s131 = sand.u32 %s40, 1
          %s132 = sand.u32 %s40, 1
          %s133 = smul.addr %s132, 336
          %s134 = scalar_lea.vmem [#allocation2], %s133
          %s135 = smul.u32 4, %s9
          %s136 = smul.addr %s135, 4
          %s137 = scalar_lea.vmem %s1, %s136
          // Predicated region
          $region29: #{_lambda_.19} parent=27 // pred_check
            _
          $region30: #{_lambda_.19} parent=27 // pred_check_branch
            %139 = sbr.rel (0) target = $region32
          $region31: #{_lambda_.19} parent=27 // pred_region
            // Predicated region
            $region33: #{_lambda_.19} parent=31 // pred_check
              _
            $region34: #{_lambda_.19} parent=31 // pred_check_branch
              %141 = sbr.rel (0) target = $region36
            $region35: #{_lambda_.19} parent=31 // pred_region
              loop: start=0, step=1, limit=1
              $region37: #{_lambda_.19} parent=35 // loop_pre_header
                _
              $region38: #{_lambda_.19} parent=35 // loop_header
                %s143 = sphi 0, %s147
                %p144 = scmp.ge.s32.totalorder %s143, 1
                %s148 = sphi %s137, %s137
                %s149 = sphi %s134, %s134
              $region39: #{_lambda_.19} parent=35 // loop_header_branch
                %146 = sbr.rel (%p144) target = $region43
              $region40: #{_lambda_.19} parent=35 // loop_body
                %v150 = vld [vmem:[%s148] sm:$0xff]
                %151 = vst [vmem:[%s149] sm:$0xff] %v150
                %v152 = vld [vmem:[%s148 + $0x8] sm:$0xff]
                %153 = vst [vmem:[%s149 + $0x8] sm:$0xff] %v152
                %v154 = vld [vmem:[%s148 + $0x20] sm:$0xff]
                %155 = vst [vmem:[%s149 + $0x10] sm:$0xff] %v154
                %v156 = vld [vmem:[%s148 + $0x28] sm:$0xff]
                %157 = vst [vmem:[%s149 + $0x18] sm:$0xff] %v156
                %v158 = vld [vmem:[%s148 + $0x40] sm:$0xff]
                %159 = vst [vmem:[%s149 + $0x20] sm:$0xff] %v158
                %v160 = vld [vmem:[%s148 + $0x48] sm:$0xff]
                %161 = vst [vmem:[%s149 + $0x28] sm:$0xff] %v160
                %v162 = vld [vmem:[%s148 + $0x60] sm:$0xff]
                %163 = vst [vmem:[%s149 + $0x30] sm:$0xff] %v162
                %v164 = vld [vmem:[%s148 + $0x68] sm:$0xff]
                %165 = vst [vmem:[%s149 + $0x38] sm:$0xff] %v164
                %v166 = vld [vmem:[%s148 + $0x80] sm:$0xff]
                %167 = vst [vmem:[%s149 + $0x40] sm:$0xff] %v166
                %v168 = vld [vmem:[%s148 + $0x88] sm:$0xff]
                %169 = vst [vmem:[%s149 + $0x48] sm:$0xff] %v168
                %v170 = vld [vmem:[%s148 + $0xa0] sm:$0xff]
                %171 = vst [vmem:[%s149 + $0x50] sm:$0xff] %v170
                %v172 = vld [vmem:[%s148 + $0xa8] sm:$0xff]
                %173 = vst [vmem:[%s149 + $0x58] sm:$0xff] %v172
                %v174 = vld [vmem:[%s148 + $0xc0] sm:$0xff]
                %175 = vst [vmem:[%s149 + $0x60] sm:$0xff] %v174
                %v176 = vld [vmem:[%s148 + $0xc8] sm:$0xff]
                %177 = vst [vmem:[%s149 + $0x68] sm:$0xff] %v176
                %v178 = vld [vmem:[%s148 + $0xe0] sm:$0xff]
                %179 = vst [vmem:[%s149 + $0x70] sm:$0xff] %v178
                %v180 = vld [vmem:[%s148 + $0xe8] sm:$0xff]
                %181 = vst [vmem:[%s149 + $0x78] sm:$0xff] %v180
                %v182 = vld [vmem:[%s148 + $0x100] sm:$0xff]
                %183 = vst [vmem:[%s149 + $0x80] sm:$0xff] %v182
                %v184 = vld [vmem:[%s148 + $0x108] sm:$0xff]
                %185 = vst [vmem:[%s149 + $0x88] sm:$0xff] %v184
                %v186 = vld [vmem:[%s148 + $0x120] sm:$0xff]
                %187 = vst [vmem:[%s149 + $0x90] sm:$0xff] %v186
                %v188 = vld [vmem:[%s148 + $0x128] sm:$0xff]
                %189 = vst [vmem:[%s149 + $0x98] sm:$0xff] %v188
                %v190 = vld [vmem:[%s148 + $0x140] sm:$0xff]
                %191 = vst [vmem:[%s149 + $0xa0] sm:$0xff] %v190
                %v192 = vld [vmem:[%s148 + $0x148] sm:$0xff]
                %193 = vst [vmem:[%s149 + $0xa8] sm:$0xff] %v192
                %v194 = vld [vmem:[%s148 + $0x160] sm:$0xff]
                %195 = vst [vmem:[%s149 + $0xb0] sm:$0xff] %v194
                %v196 = vld [vmem:[%s148 + $0x168] sm:$0xff]
                %197 = vst [vmem:[%s149 + $0xb8] sm:$0xff] %v196
                %v198 = vld [vmem:[%s148 + $0x180] sm:$0xff]
                %199 = vst [vmem:[%s149 + $0xc0] sm:$0xff] %v198
                %v200 = vld [vmem:[%s148 + $0x188] sm:$0xff]
                %201 = vst [vmem:[%s149 + $0xc8] sm:$0xff] %v200
                %v202 = vld [vmem:[%s148 + $0x1a0] sm:$0xff]
                %203 = vst [vmem:[%s149 + $0xd0] sm:$0xff] %v202
                %v204 = vld [vmem:[%s148 + $0x1a8] sm:$0xff]
                %205 = vst [vmem:[%s149 + $0xd8] sm:$0xff] %v204
                %v206 = vld [vmem:[%s148 + $0x1c0] sm:$0xff]
                %207 = vst [vmem:[%s149 + $0xe0] sm:$0xff] %v206
                %v208 = vld [vmem:[%s148 + $0x1c8] sm:$0xff]
                %209 = vst [vmem:[%s149 + $0xe8] sm:$0xff] %v208
                %v210 = vld [vmem:[%s148 + $0x1e0] sm:$0xff]
                %211 = vst [vmem:[%s149 + $0xf0] sm:$0xff] %v210
                %v212 = vld [vmem:[%s148 + $0x1e8] sm:$0xff]
                %213 = vst [vmem:[%s149 + $0xf8] sm:$0xff] %v212
                %v214 = vld [vmem:[%s148 + $0x200] sm:$0xff]
                %215 = vst [vmem:[%s149 + $0x100] sm:$0xff] %v214
                %v216 = vld [vmem:[%s148 + $0x208] sm:$0xff]
                %217 = vst [vmem:[%s149 + $0x108] sm:$0xff] %v216
                %v218 = vld [vmem:[%s148 + $0x220] sm:$0xff]
                %219 = vst [vmem:[%s149 + $0x110] sm:$0xff] %v218
                %v220 = vld [vmem:[%s148 + $0x228] sm:$0xff]
                %221 = vst [vmem:[%s149 + $0x118] sm:$0xff] %v220
                %v222 = vld [vmem:[%s148 + $0x240] sm:$0xff]
                %223 = vst [vmem:[%s149 + $0x120] sm:$0xff] %v222
                %v224 = vld [vmem:[%s148 + $0x248] sm:$0xff]
                %225 = vst [vmem:[%s149 + $0x128] sm:$0xff] %v224
                %v226 = vld [vmem:[%s148 + $0x260] sm:$0xff]
                %227 = vst [vmem:[%s149 + $0x130] sm:$0xff] %v226
                %v228 = vld [vmem:[%s148 + $0x268] sm:$0xff]
                %229 = vst [vmem:[%s149 + $0x138] sm:$0xff] %v228
                %v230 = vld [vmem:[%s148 + $0x280] sm:$0xff]
                %231 = vst [vmem:[%s149 + $0x140] sm:$0xff] %v230
                %v232 = vld [vmem:[%s148 + $0x288] sm:$0xff]
                %233 = vst [vmem:[%s149 + $0x148] sm:$0xff] %v232
              $region41: #{_lambda_.19} parent=35 // loop_footer
                %s147 = sadd.s32 1, %s143
              $region42: #{_lambda_.19} parent=35 // loop_footer_branch
                %142 = sbr.rel target = $region38
              $region43: #{_lambda_.19} parent=35 // loop_exit
                _
            $region36: #{_lambda_.19} parent=31 // pred_fallthru
              _
            // Predicated region
            $region44: #{_lambda_.19} parent=31 // pred_check
              _
            $region45: #{_lambda_.19} parent=31 // pred_check_branch
              %235 = sbr.rel target = $region47
            $region46: #{_lambda_.19} parent=31 // pred_region
              _
            $region47: #{_lambda_.19} parent=31 // pred_fallthru
              _
          $region32: #{_lambda_.19} parent=27 // pred_fallthru
            _
          %236 = vnop
        $region28: #{_lambda_.19} parent=23 // pred_fallthru
          _
      $region24: #{_lambda_.19} parent=5 // pred_fallthru
        _
      %p237 = scmp.le.s32.totalorder 1, %s9
      %p238 = scmp.lt.s32.totalorder %s9, 3
      %p239 = pnand %p237, %p238
      %p240 = pneg %p239
      // Predicated region
      $region48: #{_lambda_.19} parent=5 // pred_check
        _
      $region49: #{_lambda_.19} parent=5 // pred_check_branch
        %242 = sbr.rel (%p239) target = $region51
      $region50: #{_lambda_.19} parent=5 // pred_region
        %s243 = ssub.s32 %s9, 1
        %s244 = sand.u32 %s43, 1
        %s245 = sand.u32 %s43, 1
        %s246 = smul.addr %s245, 336
        %s247 = scalar_lea.vmem [#allocation2], %s246
        // Predicated region
        $region52: #{_lambda_.19} parent=50 // pred_check
          %p248 = pneg %p56
        $region53: #{_lambda_.19} parent=50 // pred_check_branch
          %250 = sbr.rel (%p248) target = $region55
        $region54: #{_lambda_.19} parent=50 // pred_region
          _
        $region55: #{_lambda_.19} parent=50 // pred_fallthru
          _
        %p251 = pneg %p30
        %p252 = pneg %p27
        %s253 = sand.u32 %s43, 1
        %s254 = sand.u32 %s43, 1
        %s255 = smul.addr %s254, 336
        %s256 = scalar_lea.vmem [#allocation2], %s255
        %p257 = pneg %p56
        %p258 = pneg %p53
        %p259 = pneg %p77
        %p260 = pneg %p74
        %p261 = pneg %p103
        %p262 = pneg %p100
        %s263 = smul.u32 4, %s14
        %p264 = scmp.lt.s32.totalorder %s263, 7
        %s265 = scalar_select %p264, %s263, 7
        %s266 = smul.addr %s265, 4
        %s267 = scalar_lea.vmem %s3, %s266
        %s268 = smul.u32 4, %s14
        %s269 = smul.u32 4, %s14
        %p270 = scmp.lt.s32.totalorder %s269, 7
        %s271 = scalar_select %p270, %s269, 7
        %s272 = smul.addr %s271, 4
        %s273 = scalar_lea.vmem %s3, %s272
        %s274 = smul.u32 4, %s14
        %v276 = vld [vmem:[%s0] sm:$0xff]
        %v277 = vld [vmem:[%s247] sm:$0xff]
        %v278 = vld [vmem:[%s247 + $0x8] sm:$0xff]
        %v279 = vld [vmem:[%s247 + $0x10] sm:$0xff]
        %v280 = vld [vmem:[%s247 + $0x18] sm:$0xff]
        %v281 = vld [vmem:[%s247 + $0x20] sm:$0xff]
        %v282 = vld [vmem:[%s247 + $0x28] sm:$0xff]
        %v283 = vld [vmem:[%s247 + $0x30] sm:$0xff]
        %v284 = vld [vmem:[%s247 + $0x38] sm:$0xff]
        %v285 = vld [vmem:[%s247 + $0x40] sm:$0xff]
        %v286 = vld [vmem:[%s247 + $0x48] sm:$0xff]
        %v287 = vld [vmem:[%s247 + $0x50] sm:$0xff]
        %v288 = vld [vmem:[%s247 + $0x58] sm:$0xff]
        %v289 = vld [vmem:[%s247 + $0x60] sm:$0xff]
        %v290 = vld [vmem:[%s247 + $0x68] sm:$0xff]
        %v291 = vld [vmem:[%s247 + $0x70] sm:$0xff]
        %v292 = vld [vmem:[%s247 + $0x78] sm:$0xff]
        %v293 = vld [vmem:[%s247 + $0x80] sm:$0xff]
        %v294 = vld [vmem:[%s247 + $0x88] sm:$0xff]
        %v295 = vld [vmem:[%s247 + $0x90] sm:$0xff]
        %v296 = vld [vmem:[%s247 + $0x98] sm:$0xff]
        %v297 = vld [vmem:[%s247 + $0xa0] sm:$0xff]
        %v298 = vld [vmem:[%s247 + $0xa8] sm:$0xff]
        %v299 = vld [vmem:[%s247 + $0xb0] sm:$0xff]
        %v300 = vld [vmem:[%s247 + $0xb8] sm:$0xff]
        %v301 = vld [vmem:[%s247 + $0xc0] sm:$0xff]
        %v302 = vld [vmem:[%s247 + $0xc8] sm:$0xff]
        %v303 = vld [vmem:[%s247 + $0xd0] sm:$0xff]
        %v304 = vld [vmem:[%s247 + $0xd8] sm:$0xff]
        %v305 = vld [vmem:[%s247 + $0xe0] sm:$0xff]
        %v306 = vld [vmem:[%s247 + $0xe8] sm:$0xff]
        %v307 = vld [vmem:[%s247 + $0xf0] sm:$0xff]
        %v308 = vld [vmem:[%s247 + $0xf8] sm:$0xff]
        %v309 = vld [vmem:[%s247 + $0x100] sm:$0xff]
        %v310 = vld [vmem:[%s247 + $0x108] sm:$0xff]
        %v311 = vld [vmem:[%s247 + $0x110] sm:$0xff]
        %v312 = vld [vmem:[%s247 + $0x118] sm:$0xff]
        %v313 = vld [vmem:[%s247 + $0x120] sm:$0xff]
        %v314 = vld [vmem:[%s247 + $0x128] sm:$0xff]
        %v315 = vld [vmem:[%s247 + $0x130] sm:$0xff]
        %v316 = vld [vmem:[%s247 + $0x138] sm:$0xff]
        %v317 = vld [vmem:[%s247 + $0x140] sm:$0x11]
        %v318 = vld [vmem:[%s247 + $0x148] sm:$0x11]
        %v319 = vld [vmem:[%s2] sm:$0xff]
        %321 = vset.pattern.permute.xlu0 0
        %322 = vperm.xlu0 %321, %v319
        %v323 = vpop.permute.xlu0 %322
        %v326 = vunpack.c.l.b16 %v276
        %v327 = vunpack.c.h.b16 %v276
        %v328 = vpack.c.b16 %v326, %v326
        %v329 = vpack.c.b16 %v327, %v327
        %v373 = vunpack.c.l.b16 %v277
        %v374 = vunpack.c.h.b16 %v277
        %v375 = vunpack.c.l.b16 %v278
        %v376 = vunpack.c.h.b16 %v278
        %v377 = vunpack.c.l.b16 %v279
        %v378 = vunpack.c.h.b16 %v279
        %v379 = vunpack.c.l.b16 %v280
        %v380 = vunpack.c.h.b16 %v280
        %v381 = vunpack.c.l.b16 %v281
        %v382 = vunpack.c.h.b16 %v281
        %v383 = vunpack.c.l.b16 %v282
        %v384 = vunpack.c.h.b16 %v282
        %v385 = vunpack.c.l.b16 %v283
        %v386 = vunpack.c.h.b16 %v283
        %v387 = vunpack.c.l.b16 %v284
        %v388 = vunpack.c.h.b16 %v284
        %v389 = vunpack.c.l.b16 %v285
        %v390 = vunpack.c.h.b16 %v285
        %v391 = vunpack.c.l.b16 %v286
        %v392 = vunpack.c.h.b16 %v286
        %v393 = vunpack.c.l.b16 %v287
        %v394 = vunpack.c.h.b16 %v287
        %v395 = vunpack.c.l.b16 %v288
        %v396 = vunpack.c.h.b16 %v288
        %v397 = vunpack.c.l.b16 %v289
        %v398 = vunpack.c.h.b16 %v289
        %v399 = vunpack.c.l.b16 %v290
        %v400 = vunpack.c.h.b16 %v290
        %v401 = vunpack.c.l.b16 %v291
        %v402 = vunpack.c.h.b16 %v291
        %v403 = vunpack.c.l.b16 %v292
        %v404 = vunpack.c.h.b16 %v292
        %v405 = vunpack.c.l.b16 %v293
        %v406 = vunpack.c.h.b16 %v293
        %v407 = vunpack.c.l.b16 %v294
        %v408 = vunpack.c.h.b16 %v294
        %v409 = vunpack.c.l.b16 %v295
        %v410 = vunpack.c.h.b16 %v295
        %v411 = vunpack.c.l.b16 %v296
        %v412 = vunpack.c.h.b16 %v296
        %v413 = vunpack.c.l.b16 %v297
        %v414 = vunpack.c.h.b16 %v297
        %v415 = vunpack.c.l.b16 %v298
        %v416 = vunpack.c.h.b16 %v298
        %v417 = vunpack.c.l.b16 %v299
        %v418 = vunpack.c.h.b16 %v299
        %v419 = vunpack.c.l.b16 %v300
        %v420 = vunpack.c.h.b16 %v300
        %v421 = vunpack.c.l.b16 %v301
        %v422 = vunpack.c.h.b16 %v301
        %v423 = vunpack.c.l.b16 %v302
        %v424 = vunpack.c.h.b16 %v302
        %v425 = vunpack.c.l.b16 %v303
        %v426 = vunpack.c.h.b16 %v303
        %v427 = vunpack.c.l.b16 %v304
        %v428 = vunpack.c.h.b16 %v304
        %v429 = vunpack.c.l.b16 %v305
        %v430 = vunpack.c.h.b16 %v305
        %v431 = vunpack.c.l.b16 %v306
        %v432 = vunpack.c.h.b16 %v306
        %v433 = vunpack.c.l.b16 %v307
        %v434 = vunpack.c.h.b16 %v307
        %v435 = vunpack.c.l.b16 %v308
        %v436 = vunpack.c.h.b16 %v308
        %v437 = vunpack.c.l.b16 %v309
        %v438 = vunpack.c.h.b16 %v309
        %v439 = vunpack.c.l.b16 %v310
        %v440 = vunpack.c.h.b16 %v310
        %v441 = vunpack.c.l.b16 %v311
        %v442 = vunpack.c.h.b16 %v311
        %v443 = vunpack.c.l.b16 %v312
        %v444 = vunpack.c.h.b16 %v312
        %v445 = vunpack.c.l.b16 %v313
        %v446 = vunpack.c.h.b16 %v313
        %v447 = vunpack.c.l.b16 %v314
        %v448 = vunpack.c.h.b16 %v314
        %v449 = vunpack.c.l.b16 %v315
        %v450 = vunpack.c.h.b16 %v315
        %v451 = vunpack.c.l.b16 %v316
        %v452 = vunpack.c.h.b16 %v316
        %v453 = vunpack.c.l.b16 %v317
        %v454 = vunpack.c.h.b16 %v317
        %v455 = vunpack.c.l.b16 %v318
        %v456 = vunpack.c.h.b16 %v318
        %v457 = vpack.c.b16 %v377, %v373
        %v458 = vpack.c.b16 %v378, %v374
        %v459 = vpack.c.b16 %v379, %v375
        %v460 = vpack.c.b16 %v380, %v376
        %v461 = vpack.c.b16 %v385, %v381
        %v462 = vpack.c.b16 %v386, %v382
        %v463 = vpack.c.b16 %v387, %v383
        %v464 = vpack.c.b16 %v388, %v384
        %v465 = vpack.c.b16 %v393, %v389
        %v466 = vpack.c.b16 %v394, %v390
        %v467 = vpack.c.b16 %v395, %v391
        %v468 = vpack.c.b16 %v396, %v392
        %v469 = vpack.c.b16 %v401, %v397
        %v470 = vpack.c.b16 %v402, %v398
        %v471 = vpack.c.b16 %v403, %v399
        %v472 = vpack.c.b16 %v404, %v400
        %v473 = vpack.c.b16 %v409, %v405
        %v474 = vpack.c.b16 %v410, %v406
        %v475 = vpack.c.b16 %v411, %v407
        %v476 = vpack.c.b16 %v412, %v408
        %v477 = vpack.c.b16 %v417, %v413
        %v478 = vpack.c.b16 %v418, %v414
        %v479 = vpack.c.b16 %v419, %v415
        %v480 = vpack.c.b16 %v420, %v416
        %v481 = vpack.c.b16 %v425, %v421
        %v482 = vpack.c.b16 %v426, %v422
        %v483 = vpack.c.b16 %v427, %v423
        %v484 = vpack.c.b16 %v428, %v424
        %v485 = vpack.c.b16 %v433, %v429
        %v486 = vpack.c.b16 %v434, %v430
        %v487 = vpack.c.b16 %v435, %v431
        %v488 = vpack.c.b16 %v436, %v432
        %v489 = vpack.c.b16 %v441, %v437
        %v490 = vpack.c.b16 %v442, %v438
        %v491 = vpack.c.b16 %v443, %v439
        %v492 = vpack.c.b16 %v444, %v440
        %v493 = vpack.c.b16 %v449, %v445
        %v494 = vpack.c.b16 %v450, %v446
        %v495 = vpack.c.b16 %v451, %v447
        %v496 = vpack.c.b16 %v452, %v448
        %v497 = vpack.c.b16 %v453, %v453
        %v498 = vpack.c.b16 %v454, %v454
        %v499 = vpack.c.b16 %v455, %v455
        %v500 = vpack.c.b16 %v456, %v456
        %vm541 = vcmask 277504
        %v543 = vsel %vm541, %v329, 0
        %vm545 = vcmask 1040384
        %v547 = vsel %vm545, %v497, 0
        %v550 = vsel %vm545, %v498, 0
        %v553 = vsel %vm545, %v499, 0
        %v556 = vsel %vm545, %v500, 0
        %558 = vmatprep.subr.bf16.mxu0 %v458
        %559 = vmatpush1.bf16.msra.mxu0 %v457
        %560 = vmatprep.subr.bf16.mxu0 %v462
        %561 = vmatpush1.bf16.msra.mxu0 %v461
        %562 = vmatprep.subr.bf16.mxu0 %v466
        %563 = vmatpush1.bf16.msra.mxu0 %v465
        %564 = vmatprep.subr.bf16.mxu0 %v470
        %565 = vmatpush1.bf16.msra.mxu0 %v469
        %566 = vmatprep.subr.bf16.mxu0 %v474
        %567 = vmatpush1.bf16.msra.mxu0 %v473
        %568 = vmatprep.subr.bf16.mxu0 %v478
        %569 = vmatpush1.bf16.msra.mxu0 %v477
        %570 = vmatprep.subr.bf16.mxu0 %v482
        %571 = vmatpush1.bf16.msra.mxu0 %v481
        %572 = vmatprep.subr.bf16.mxu0 %v486
        %573 = vmatpush1.bf16.msra.mxu0 %v485
        %574 = vmatprep.subr.bf16.mxu0 %v490
        %575 = vmatpush1.bf16.msra.mxu0 %v489
        %576 = vmatprep.subr.bf16.mxu0 %v494
        %577 = vmatpush1.bf16.msra.mxu0 %v493
        %578 = vmatprep.subr.bf16.mxu0 %v550
        %579 = vmatpush1.bf16.msra.mxu0 %v547
        %580 = vmatprep.subr.bf16.mxu0 0
        %581 = vmatpush1.bf16.msra.mxu0 0
        %582 = vmatprep.subr.bf16.mxu0 0
        %583 = vmatpush1.bf16.msra.mxu0 0
        %584 = vmatprep.subr.bf16.mxu0 0
        %585 = vmatpush1.bf16.msra.mxu0 0
        %586 = vmatprep.subr.bf16.mxu0 0
        %587 = vmatpush1.bf16.msra.mxu0 0
        %588 = vmatprep.subr.bf16.mxu0 0
        %589 = vmatpush1.bf16.msra.mxu0 0
        %590 = vmatprep.mubr.bf16.mxu0 %v543
        %591 = vmatmul.mubr.bf16.gmra.mrb[0].mxu0 %v328
        %v592 = vpop.f32.mrb[0].mxu0
        %v593 = vadd.f32 %v323, %v592
        %v594 = vpop.f32.mrb[0].mxu0
        %v595 = vadd.f32 %v323, %v594
        %v596 = vpop.f32.mrb[0].mxu0
        %v597 = vpop.f32.mrb[0].mxu0
        %598 = vdwg.mxu0
        %599 = vmatprep.subr.bf16.mxu0 %v460
        %600 = vmatpush1.bf16.msra.mxu0 %v459
        %601 = vmatprep.subr.bf16.mxu0 %v464
        %602 = vmatpush1.bf16.msra.mxu0 %v463
        %603 = vmatprep.subr.bf16.mxu0 %v468
        %604 = vmatpush1.bf16.msra.mxu0 %v467
        %605 = vmatprep.subr.bf16.mxu0 %v472
        %606 = vmatpush1.bf16.msra.mxu0 %v471
        %607 = vmatprep.subr.bf16.mxu0 %v476
        %608 = vmatpush1.bf16.msra.mxu0 %v475
        %609 = vmatprep.subr.bf16.mxu0 %v480
        %610 = vmatpush1.bf16.msra.mxu0 %v479
        %611 = vmatprep.subr.bf16.mxu0 %v484
        %612 = vmatpush1.bf16.msra.mxu0 %v483
        %613 = vmatprep.subr.bf16.mxu0 %v488
        %614 = vmatpush1.bf16.msra.mxu0 %v487
        %615 = vmatprep.subr.bf16.mxu0 %v492
        %616 = vmatpush1.bf16.msra.mxu0 %v491
        %617 = vmatprep.subr.bf16.mxu0 %v496
        %618 = vmatpush1.bf16.msra.mxu0 %v495
        %619 = vmatprep.subr.bf16.mxu0 %v556
        %620 = vmatpush1.bf16.msra.mxu0 %v553
        %621 = vmatprep.subr.bf16.mxu0 0
        %622 = vmatpush1.bf16.msra.mxu0 0
        %623 = vmatprep.subr.bf16.mxu0 0
        %624 = vmatpush1.bf16.msra.mxu0 0
        %625 = vmatprep.subr.bf16.mxu0 0
        %626 = vmatpush1.bf16.msra.mxu0 0
        %627 = vmatprep.subr.bf16.mxu0 0
        %628 = vmatpush1.bf16.msra.mxu0 0
        %629 = vmatprep.subr.bf16.mxu0 0
        %630 = vmatpush1.bf16.msra.mxu0 0
        %631 = vmatprep.mubr.bf16.mxu0 %v543
        %632 = vmatmul.mubr.bf16.gmra.mrb[0].mxu0 %v328
        %v633 = vpop.f32.mrb[0].mxu0
        %v634 = vadd.f32 %v323, %v633
        %v635 = vpop.f32.mrb[0].mxu0
        %v636 = vadd.f32 %v323, %v635
        %v637 = vpop.f32.mrb[0].mxu0
        %v638 = vpop.f32.mrb[0].mxu0
        %639 = vdwg.mxu0
        %vm640 = vcmp.ge.f32.partialorder %v593, 0.0
        %vm641 = vcmp.ge.f32.partialorder %v595, 0.0
        %vm642 = vcmp.ge.f32.partialorder %v634, 0.0
        %vm643 = vcmp.ge.f32.partialorder %v636, 0.0
        %v644 = vmul.f32 %v593, 0.01
        %v645 = vmul.f32 %v595, 0.01
        %v646 = vmul.f32 %v634, 0.01
        %v647 = vmul.f32 %v636, 0.01
        %v648 = vsel %vm640, %v593, %v644
        %v649 = vsel %vm641, %v595, %v645
        %v650 = vsel %vm642, %v634, %v646
        %v651 = vsel %vm643, %v636, %v647
        %652 = vset.pattern.permute.xlu0 1
        %653 = vperm.xlu0 %652, %v319
        %v654 = vpop.permute.xlu0 %653
        %v656 = vmul.f32 %v648, %v654
        %v657 = vmul.f32 %v649, %v654
        %v658 = vmul.f32 %v650, %v654
        %v659 = vmul.f32 %v651, %v654
        %660 = vset.pattern.permute.xlu0 2
        %661 = vperm.xlu0 %660, %v319
        %v662 = vpop.permute.xlu0 %661
        %v664 = vadd.f32 %v656, %v662
        %v665 = vadd.f32 %v657, %v662
        %v666 = vadd.f32 %v658, %v662
        %v667 = vadd.f32 %v659, %v662
        %v668 = vpack.c.bf16 %v664, %v664
        %v669 = vpack.c.bf16 %v665, %v665
        %v670 = vpack.c.bf16 %v666, %v666
        %v671 = vpack.c.bf16 %v667, %v667
        %v676 = vunpack.c.l.b16 %v668
        %v677 = vunpack.c.l.b16 %v669
        %v678 = vunpack.c.l.b16 %v670
        %v679 = vunpack.c.l.b16 %v671
        %v680 = vpack.c.b16 %v677, %v676
        %v681 = vpack.c.b16 %v679, %v678
        %684 = vst [vmem:[%s273] sm:$0xff] %v680
        %685 = vst [vmem:[%s273 + $0x8] sm:$0xff] %v681
        %s686 = smul.u32 4, %s14
        %p687 = scmp.lt.s32.totalorder %s686, 7
        %s688 = scalar_select %p687, %s686, 7
        %s689 = smul.addr %s688, 4
        %s690 = scalar_lea.vmem %s3, %s689
        // Predicated region
        $region56: #{_lambda_.19} parent=50 // pred_check
          %p691 = pneg %p100
        $region57: #{_lambda_.19} parent=50 // pred_check_branch
          %693 = sbr.rel (%p691) target = $region59
        $region58: #{_lambda_.19} parent=50 // pred_region
          %s694 = smul.u32 4, %s14
        $region59: #{_lambda_.19} parent=50 // pred_fallthru
          _
      $region51: #{_lambda_.19} parent=5 // pred_fallthru
        _
      %p695 = scmp.le.s32.totalorder 2, %s9
      // Predicated region
      $region60: #{_lambda_.19} parent=5 // pred_check
        %p696 = pneg %p695
      $region61: #{_lambda_.19} parent=5 // pred_check_branch
        %698 = sbr.rel (%p696) target = $region63
      $region62: #{_lambda_.19} parent=5 // pred_region
        %s699 = ssub.s32 %s9, 2
        // Predicated region
        $region64: #{_lambda_.19} parent=62 // pred_check
          %p700 = pneg %p106
        $region65: #{_lambda_.19} parent=62 // pred_check_branch
          %702 = sbr.rel (%p700) target = $region67
        $region66: #{_lambda_.19} parent=62 // pred_region
          %s703 = smul.u32 4, %s15
          %p704 = scmp.lt.s32.totalorder %s703, 7
          %s705 = scalar_select %p704, %s703, 7
          %s706 = smul.addr %s705, 4
          %s707 = scalar_lea.vmem %s3, %s706
        $region67: #{_lambda_.19} parent=62 // pred_fallthru
          _
      $region63: #{_lambda_.19} parent=5 // pred_fallthru
        _
    $region6: #{_lambda_.19} parent=1 // loop_footer
      %s13 = sadd.s32 1, %s9
    $region7: #{_lambda_.19} parent=1 // loop_footer_branch
      %8 = sbr.rel target = $region3
    $region8: #{_lambda_.19} parent=1 // loop_exit
      _

// kernel: _lambda_.20
$region0: #{_lambda_.20}
  #allocation0 [shape = 'u32[]', space=smem, size = 0x4, offset = 0x4, fixed_abs, tag = 'smem constant byte address 0x4 - core index']
  #allocation1 [shape = 'u32[144,128]{1,0:T(1,128)}', space=vmem, size = 0x12000, scoped, tag = 'internal scratch']
  %s0 = inlined_call_operand.vmem [shape: bf16[8,162], index: 0, kind: input, shape index: {}]
  %s1 = inlined_call_operand.vmem [shape: bf16[162,1024], index: 1, kind: input, shape index: {}]
  %s2 = inlined_call_operand.vmem [shape: f32[8,3], index: 2, kind: input, shape index: {}]
  %s3 = inlined_call_operand.vmem [shape: bf16[8,1024], index: 3, kind: input, shape index: {}]
  %s4 = inlined_call_operand.vmem [shape: bf16[8,1024], index: 4, kind: output, shape index: {}]
  %s5 = sld [smem:[#allocation0]]
  $region72: #{_lambda_.20} parent=0
    _
  %s7 = ssub.s32 1, %s5
  %s8 = scalar_select 0, %s7, %s5
  $region1: #{_lambda_.20} parent=0
    #allocation2 [shape = 'u8[344064]{0}', space=vmem, size = 0x54000, scoped, tag = 'input window, operand 1']
    loop: start=0, step=1, limit=4
    $region2: #{_lambda_.20} parent=1 // loop_pre_header
      _
    $region3: #{_lambda_.20} parent=1 // loop_header
      %s10 = sphi 0, %s14
      %p11 = scmp.ge.s32.totalorder %s10, 4
      %s18 = sphi 0, %s18
      %s20 = sphi 0, %s18
      %s21 = sphi 0, %s20
      %s35 = sphi 0, %s21
      %s41 = sphi 0, %s43
      %s44 = sphi 0, %s41
      %s45 = sphi 0, %s44
      %s61 = sphi 0, %s45
      %s65 = sphi 0, %s65
      %s67 = sphi 0, %s65
      %s68 = sphi 0, %s67
      %s82 = sphi 0, %s68
      %s88 = sphi 0, %s90
      %s91 = sphi 0, %s88
      %s92 = sphi 0, %s91
      %s108 = sphi 0, %s92
      %s114 = sphi 0, %s116
      %s117 = sphi 0, %s114
      %s118 = sphi 0, %s117
      %s134 = sphi 0, %s118
    $region4: #{_lambda_.20} parent=1 // loop_header_branch
      %13 = sbr.rel (%p11) target = $region8
    $region5: #{_lambda_.20} parent=1 // loop_body
      %s15 = ssub.s32 %s10, 1
      %s16 = ssub.s32 %s10, 2
      %s17 = sadd.s32 %s10, 1
      %s19 = sadd.s32 %s18, 1
      %p22 = scmp.eq.s32.totalorder %s10, 1
      %p23 = scmp.ne.s32.totalorder %s18, %s20
      %p24 = scmp.eq.s32.totalorder %s10, 0
      %p25 = por %p23, %p24
      %p26 = scmp.ne.s32.totalorder %s18, %s20
      %p27 = scmp.eq.s32.totalorder %s15, 1
      %p28 = por %p26, %p27
      %p29 = scmp.ne.s32.totalorder %s20, %s21
      %p30 = scmp.eq.s32.totalorder %s15, 0
      %p31 = por %p29, %p30
      %p32 = scmp.ne.s32.totalorder %s20, %s21
      %p33 = scmp.eq.s32.totalorder %s16, 1
      %p34 = por %p32, %p33
      %p36 = scmp.ne.s32.totalorder %s21, %s35
      %p37 = scmp.eq.s32.totalorder %s16, 0
      %p38 = por %p36, %p37
      %s39 = ssub.s32 %s10, %s17
      %p40 = scmp.eq.s32.totalorder %s39, 0
      %s42 = sadd.s32 %s41, 1
      %s43 = scalar_select %p40, %s41, %s42
      %p46 = pneg %p40
      %p47 = scmp.eq.s32.totalorder %s10, 1
      %p48 = por %p46, %p47
      %p49 = scmp.ne.s32.totalorder %s41, %s44
      %p50 = scmp.eq.s32.totalorder %s10, 0
      %p51 = por %p49, %p50
      %p52 = scmp.ne.s32.totalorder %s41, %s44
      %p53 = scmp.eq.s32.totalorder %s15, 1
      %p54 = por %p52, %p53
      %p55 = scmp.ne.s32.totalorder %s44, %s45
      %p56 = scmp.eq.s32.totalorder %s15, 0
      %p57 = por %p55, %p56
      %p58 = scmp.ne.s32.totalorder %s44, %s45
      %p59 = scmp.eq.s32.totalorder %s16, 1
      %p60 = por %p58, %p59
      %p62 = scmp.ne.s32.totalorder %s45, %s61
      %p63 = scmp.eq.s32.totalorder %s16, 0
      %p64 = por %p62, %p63
      %s66 = sadd.s32 %s65, 1
      %p69 = scmp.eq.s32.totalorder %s10, 1
      %p70 = scmp.ne.s32.totalorder %s65, %s67
      %p71 = scmp.eq.s32.totalorder %s10, 0
      %p72 = por %p70, %p71
      %p73 = scmp.ne.s32.totalorder %s65, %s67
      %p74 = scmp.eq.s32.totalorder %s15, 1
      %p75 = por %p73, %p74
      %p76 = scmp.ne.s32.totalorder %s67, %s68
      %p77 = scmp.eq.s32.totalorder %s15, 0
      %p78 = por %p76, %p77
      %p79 = scmp.ne.s32.totalorder %s67, %s68
      %p80 = scmp.eq.s32.totalorder %s16, 1
      %p81 = por %p79, %p80
      %p83 = scmp.ne.s32.totalorder %s68, %s82
      %p84 = scmp.eq.s32.totalorder %s16, 0
      %p85 = por %p83, %p84
      %s86 = ssub.s32 %s10, %s17
      %p87 = scmp.eq.s32.totalorder %s86, 0
      %s89 = sadd.s32 %s88, 1
      %s90 = scalar_select %p87, %s88, %s89
      %p93 = pneg %p87
      %p94 = scmp.eq.s32.totalorder %s10, 1
      %p95 = por %p93, %p94
      %p96 = scmp.ne.s32.totalorder %s88, %s91
      %p97 = scmp.eq.s32.totalorder %s10, 0
      %p98 = por %p96, %p97
      %p99 = scmp.ne.s32.totalorder %s88, %s91
      %p100 = scmp.eq.s32.totalorder %s15, 1
      %p101 = por %p99, %p100
      %p102 = scmp.ne.s32.totalorder %s91, %s92
      %p103 = scmp.eq.s32.totalorder %s15, 0
      %p104 = por %p102, %p103
      %p105 = scmp.ne.s32.totalorder %s91, %s92
      %p106 = scmp.eq.s32.totalorder %s16, 1
      %p107 = por %p105, %p106
      %p109 = scmp.ne.s32.totalorder %s92, %s108
      %p110 = scmp.eq.s32.totalorder %s16, 0
      %p111 = por %p109, %p110
      %s112 = ssub.s32 %s10, %s17
      %p113 = scmp.eq.s32.totalorder %s112, 0
      %s115 = sadd.s32 %s114, 1
      %s116 = scalar_select %p113, %s114, %s115
      %p119 = pneg %p113
      %p120 = scmp.eq.s32.totalorder %s10, 1
      %p121 = por %p119, %p120
      %p122 = scmp.ne.s32.totalorder %s114, %s117
      %p123 = scmp.eq.s32.totalorder %s10, 0
      %p124 = por %p122, %p123
      %p125 = scmp.ne.s32.totalorder %s114, %s117
      %p126 = scmp.eq.s32.totalorder %s15, 1
      %p127 = por %p125, %p126
      %p128 = scmp.ne.s32.totalorder %s117, %s118
      %p129 = scmp.eq.s32.totalorder %s15, 0
      %p130 = por %p128, %p129
      %p131 = scmp.ne.s32.totalorder %s117, %s118
      %p132 = scmp.eq.s32.totalorder %s16, 1
      %p133 = por %p131, %p132
      %p135 = scmp.ne.s32.totalorder %s118, %s134
      %p136 = scmp.eq.s32.totalorder %s16, 0
      %p137 = por %p135, %p136
      %p138 = scmp.le.s32.totalorder 1, %s10
      %p139 = scmp.lt.s32.totalorder %s10, 3
      %p140 = pnand %p138, %p139
      %p141 = pneg %p140
      // Predicated region
      $region9: #{_lambda_.20} parent=5 // pred_check
        _
      $region10: #{_lambda_.20} parent=5 // pred_check_branch
        %143 = sbr.rel (%p140) target = $region12
      $region11: #{_lambda_.20} parent=5 // pred_region
        %s144 = ssub.s32 %s10, 1
        // Predicated region
        $region13: #{_lambda_.20} parent=11 // pred_check
          %p145 = pneg %p31
        $region14: #{_lambda_.20} parent=11 // pred_check_branch
          %147 = sbr.rel (%p145) target = $region16
        $region15: #{_lambda_.20} parent=11 // pred_region
          _
        $region16: #{_lambda_.20} parent=11 // pred_fallthru
          _
        // Predicated region
        $region17: #{_lambda_.20} parent=11 // pred_check
          %p148 = pneg %p78
        $region18: #{_lambda_.20} parent=11 // pred_check_branch
          %150 = sbr.rel (%p148) target = $region20
        $region19: #{_lambda_.20} parent=11 // pred_region
          _
        $region20: #{_lambda_.20} parent=11 // pred_fallthru
          _
      $region12: #{_lambda_.20} parent=5 // pred_fallthru
        _
      %p151 = scmp.lt.s32.totalorder %s10, 2
      // Predicated region
      $region21: #{_lambda_.20} parent=5 // pred_check
        %p152 = pneg %p151
      $region22: #{_lambda_.20} parent=5 // pred_check_branch
        %154 = sbr.rel (%p152) target = $region24
      $region23: #{_lambda_.20} parent=5 // pred_region
        // Predicated region
        $region25: #{_lambda_.20} parent=23 // pred_check
          %p155 = pneg %p51
        $region26: #{_lambda_.20} parent=23 // pred_check_branch
          %157 = sbr.rel (%p155) target = $region28
        $region27: #{_lambda_.20} parent=23 // pred_region
          %s158 = sand.u32 %s41, 1
          %s159 = sand.u32 %s41, 1
          %s160 = smul.addr %s159, 336
          %s161 = scalar_lea.vmem [#allocation2], %s160
          %s162 = smul.u32 4, %s10
          %s163 = smul.addr %s162, 4
          %s164 = scalar_lea.vmem %s1, %s163
          // Predicated region
          $region29: #{_lambda_.20} parent=27 // pred_check
            _
          $region30: #{_lambda_.20} parent=27 // pred_check_branch
            %166 = sbr.rel (0) target = $region32
          $region31: #{_lambda_.20} parent=27 // pred_region
            // Predicated region
            $region33: #{_lambda_.20} parent=31 // pred_check
              _
            $region34: #{_lambda_.20} parent=31 // pred_check_branch
              %168 = sbr.rel (0) target = $region36
            $region35: #{_lambda_.20} parent=31 // pred_region
              loop: start=0, step=1, limit=1
              $region37: #{_lambda_.20} parent=35 // loop_pre_header
                _
              $region38: #{_lambda_.20} parent=35 // loop_header
                %s170 = sphi 0, %s174
                %p171 = scmp.ge.s32.totalorder %s170, 1
                %s175 = sphi %s164, %s164
                %s176 = sphi %s161, %s161
              $region39: #{_lambda_.20} parent=35 // loop_header_branch
                %173 = sbr.rel (%p171) target = $region43
              $region40: #{_lambda_.20} parent=35 // loop_body
                %v177 = vld [vmem:[%s175] sm:$0xff]
                %178 = vst [vmem:[%s176] sm:$0xff] %v177
                %v179 = vld [vmem:[%s175 + $0x8] sm:$0xff]
                %180 = vst [vmem:[%s176 + $0x8] sm:$0xff] %v179
                %v181 = vld [vmem:[%s175 + $0x20] sm:$0xff]
                %182 = vst [vmem:[%s176 + $0x10] sm:$0xff] %v181
                %v183 = vld [vmem:[%s175 + $0x28] sm:$0xff]
                %184 = vst [vmem:[%s176 + $0x18] sm:$0xff] %v183
                %v185 = vld [vmem:[%s175 + $0x40] sm:$0xff]
                %186 = vst [vmem:[%s176 + $0x20] sm:$0xff] %v185
                %v187 = vld [vmem:[%s175 + $0x48] sm:$0xff]
                %188 = vst [vmem:[%s176 + $0x28] sm:$0xff] %v187
                %v189 = vld [vmem:[%s175 + $0x60] sm:$0xff]
                %190 = vst [vmem:[%s176 + $0x30] sm:$0xff] %v189
                %v191 = vld [vmem:[%s175 + $0x68] sm:$0xff]
                %192 = vst [vmem:[%s176 + $0x38] sm:$0xff] %v191
                %v193 = vld [vmem:[%s175 + $0x80] sm:$0xff]
                %194 = vst [vmem:[%s176 + $0x40] sm:$0xff] %v193
                %v195 = vld [vmem:[%s175 + $0x88] sm:$0xff]
                %196 = vst [vmem:[%s176 + $0x48] sm:$0xff] %v195
                %v197 = vld [vmem:[%s175 + $0xa0] sm:$0xff]
                %198 = vst [vmem:[%s176 + $0x50] sm:$0xff] %v197
                %v199 = vld [vmem:[%s175 + $0xa8] sm:$0xff]
                %200 = vst [vmem:[%s176 + $0x58] sm:$0xff] %v199
                %v201 = vld [vmem:[%s175 + $0xc0] sm:$0xff]
                %202 = vst [vmem:[%s176 + $0x60] sm:$0xff] %v201
                %v203 = vld [vmem:[%s175 + $0xc8] sm:$0xff]
                %204 = vst [vmem:[%s176 + $0x68] sm:$0xff] %v203
                %v205 = vld [vmem:[%s175 + $0xe0] sm:$0xff]
                %206 = vst [vmem:[%s176 + $0x70] sm:$0xff] %v205
                %v207 = vld [vmem:[%s175 + $0xe8] sm:$0xff]
                %208 = vst [vmem:[%s176 + $0x78] sm:$0xff] %v207
                %v209 = vld [vmem:[%s175 + $0x100] sm:$0xff]
                %210 = vst [vmem:[%s176 + $0x80] sm:$0xff] %v209
                %v211 = vld [vmem:[%s175 + $0x108] sm:$0xff]
                %212 = vst [vmem:[%s176 + $0x88] sm:$0xff] %v211
                %v213 = vld [vmem:[%s175 + $0x120] sm:$0xff]
                %214 = vst [vmem:[%s176 + $0x90] sm:$0xff] %v213
                %v215 = vld [vmem:[%s175 + $0x128] sm:$0xff]
                %216 = vst [vmem:[%s176 + $0x98] sm:$0xff] %v215
                %v217 = vld [vmem:[%s175 + $0x140] sm:$0xff]
                %218 = vst [vmem:[%s176 + $0xa0] sm:$0xff] %v217
                %v219 = vld [vmem:[%s175 + $0x148] sm:$0xff]
                %220 = vst [vmem:[%s176 + $0xa8] sm:$0xff] %v219
                %v221 = vld [vmem:[%s175 + $0x160] sm:$0xff]
                %222 = vst [vmem:[%s176 + $0xb0] sm:$0xff] %v221
                %v223 = vld [vmem:[%s175 + $0x168] sm:$0xff]
                %224 = vst [vmem:[%s176 + $0xb8] sm:$0xff] %v223
                %v225 = vld [vmem:[%s175 + $0x180] sm:$0xff]
                %226 = vst [vmem:[%s176 + $0xc0] sm:$0xff] %v225
                %v227 = vld [vmem:[%s175 + $0x188] sm:$0xff]
                %228 = vst [vmem:[%s176 + $0xc8] sm:$0xff] %v227
                %v229 = vld [vmem:[%s175 + $0x1a0] sm:$0xff]
                %230 = vst [vmem:[%s176 + $0xd0] sm:$0xff] %v229
                %v231 = vld [vmem:[%s175 + $0x1a8] sm:$0xff]
                %232 = vst [vmem:[%s176 + $0xd8] sm:$0xff] %v231
                %v233 = vld [vmem:[%s175 + $0x1c0] sm:$0xff]
                %234 = vst [vmem:[%s176 + $0xe0] sm:$0xff] %v233
                %v235 = vld [vmem:[%s175 + $0x1c8] sm:$0xff]
                %236 = vst [vmem:[%s176 + $0xe8] sm:$0xff] %v235
                %v237 = vld [vmem:[%s175 + $0x1e0] sm:$0xff]
                %238 = vst [vmem:[%s176 + $0xf0] sm:$0xff] %v237
                %v239 = vld [vmem:[%s175 + $0x1e8] sm:$0xff]
                %240 = vst [vmem:[%s176 + $0xf8] sm:$0xff] %v239
                %v241 = vld [vmem:[%s175 + $0x200] sm:$0xff]
                %242 = vst [vmem:[%s176 + $0x100] sm:$0xff] %v241
                %v243 = vld [vmem:[%s175 + $0x208] sm:$0xff]
                %244 = vst [vmem:[%s176 + $0x108] sm:$0xff] %v243
                %v245 = vld [vmem:[%s175 + $0x220] sm:$0xff]
                %246 = vst [vmem:[%s176 + $0x110] sm:$0xff] %v245
                %v247 = vld [vmem:[%s175 + $0x228] sm:$0xff]
                %248 = vst [vmem:[%s176 + $0x118] sm:$0xff] %v247
                %v249 = vld [vmem:[%s175 + $0x240] sm:$0xff]
                %250 = vst [vmem:[%s176 + $0x120] sm:$0xff] %v249
                %v251 = vld [vmem:[%s175 + $0x248] sm:$0xff]
                %252 = vst [vmem:[%s176 + $0x128] sm:$0xff] %v251
                %v253 = vld [vmem:[%s175 + $0x260] sm:$0xff]
                %254 = vst [vmem:[%s176 + $0x130] sm:$0xff] %v253
                %v255 = vld [vmem:[%s175 + $0x268] sm:$0xff]
                %256 = vst [vmem:[%s176 + $0x138] sm:$0xff] %v255
                %v257 = vld [vmem:[%s175 + $0x280] sm:$0xff]
                %258 = vst [vmem:[%s176 + $0x140] sm:$0xff] %v257
                %v259 = vld [vmem:[%s175 + $0x288] sm:$0xff]
                %260 = vst [vmem:[%s176 + $0x148] sm:$0xff] %v259
              $region41: #{_lambda_.20} parent=35 // loop_footer
                %s174 = sadd.s32 1, %s170
              $region42: #{_lambda_.20} parent=35 // loop_footer_branch
                %169 = sbr.rel target = $region38
              $region43: #{_lambda_.20} parent=35 // loop_exit
                _
            $region36: #{_lambda_.20} parent=31 // pred_fallthru
              _
            // Predicated region
            $region44: #{_lambda_.20} parent=31 // pred_check
              _
            $region45: #{_lambda_.20} parent=31 // pred_check_branch
              %262 = sbr.rel target = $region47
            $region46: #{_lambda_.20} parent=31 // pred_region
              _
            $region47: #{_lambda_.20} parent=31 // pred_fallthru
              _
          $region32: #{_lambda_.20} parent=27 // pred_fallthru
            _
          %263 = vnop
        $region28: #{_lambda_.20} parent=23 // pred_fallthru
          _
        // Predicated region
        $region48: #{_lambda_.20} parent=23 // pred_check
          %p264 = pneg %p98
        $region49: #{_lambda_.20} parent=23 // pred_check_branch
          %266 = sbr.rel (%p264) target = $region51
        $region50: #{_lambda_.20} parent=23 // pred_region
          %s267 = smul.u32 4, %s10
          %p268 = scmp.lt.s32.totalorder %s267, 7
          %s269 = scalar_select %p268, %s267, 7
          %s270 = smul.addr %s269, 4
          %s271 = scalar_lea.vmem %s3, %s270
          %s272 = smul.u32 4, %s10
        $region51: #{_lambda_.20} parent=23 // pred_fallthru
          _
      $region24: #{_lambda_.20} parent=5 // pred_fallthru
        _
      %p273 = scmp.le.s32.totalorder 1, %s10
      %p274 = scmp.lt.s32.totalorder %s10, 3
      %p275 = pnand %p273, %p274
      %p276 = pneg %p275
      // Predicated region
      $region52: #{_lambda_.20} parent=5 // pred_check
        _
      $region53: #{_lambda_.20} parent=5 // pred_check_branch
        %278 = sbr.rel (%p275) target = $region55
      $region54: #{_lambda_.20} parent=5 // pred_region
        %s279 = ssub.s32 %s10, 1
        %s280 = sand.u32 %s44, 1
        %s281 = sand.u32 %s44, 1
        %s282 = smul.addr %s281, 336
        %s283 = scalar_lea.vmem [#allocation2], %s282
        // Predicated region
        $region56: #{_lambda_.20} parent=54 // pred_check
          %p284 = pneg %p57
        $region57: #{_lambda_.20} parent=54 // pred_check_branch
          %286 = sbr.rel (%p284) target = $region59
        $region58: #{_lambda_.20} parent=54 // pred_region
          _
        $region59: #{_lambda_.20} parent=54 // pred_fallthru
          _
        %p287 = pneg %p31
        %p288 = pneg %p28
        %s289 = sand.u32 %s44, 1
        %s290 = sand.u32 %s44, 1
        %s291 = smul.addr %s290, 336
        %s292 = scalar_lea.vmem [#allocation2], %s291
        %p293 = pneg %p57
        %p294 = pneg %p54
        %p295 = pneg %p78
        %p296 = pneg %p75
        %s297 = smul.u32 4, %s15
        %p298 = scmp.lt.s32.totalorder %s297, 7
        %s299 = scalar_select %p298, %s297, 7
        %s300 = smul.addr %s299, 4
        %s301 = scalar_lea.vmem %s3, %s300
        %p302 = pneg %p104
        %p303 = pneg %p101
        %p304 = pneg %p130
        %p305 = pneg %p127
        %s306 = smul.u32 4, %s15
        %p307 = scmp.lt.s32.totalorder %s306, 7
        %s308 = scalar_select %p307, %s306, 7
        %s309 = smul.addr %s308, 4
        %s310 = scalar_lea.vmem %s4, %s309
        %s311 = smul.u32 4, %s15
        %s312 = smul.u32 4, %s15
        %p313 = scmp.lt.s32.totalorder %s312, 7
        %s314 = scalar_select %p313, %s312, 7
        %s315 = smul.addr %s314, 4
        %s316 = scalar_lea.vmem %s3, %s315
        %s317 = smul.u32 4, %s15
        %s318 = smul.u32 4, %s15
        %p319 = scmp.lt.s32.totalorder %s318, 7
        %s320 = scalar_select %p319, %s318, 7
        %s321 = smul.addr %s320, 4
        %s322 = scalar_lea.vmem %s4, %s321
        %s323 = smul.u32 4, %s15
        %v325 = vld [vmem:[%s0] sm:$0xff]
        %v326 = vld [vmem:[%s283] sm:$0xff]
        %v327 = vld [vmem:[%s283 + $0x8] sm:$0xff]
        %v328 = vld [vmem:[%s283 + $0x10] sm:$0xff]
        %v329 = vld [vmem:[%s283 + $0x18] sm:$0xff]
        %v330 = vld [vmem:[%s283 + $0x20] sm:$0xff]
        %v331 = vld [vmem:[%s283 + $0x28] sm:$0xff]
        %v332 = vld [vmem:[%s283 + $0x30] sm:$0xff]
        %v333 = vld [vmem:[%s283 + $0x38] sm:$0xff]
        %v334 = vld [vmem:[%s283 + $0x40] sm:$0xff]
        %v335 = vld [vmem:[%s283 + $0x48] sm:$0xff]
        %v336 = vld [vmem:[%s283 + $0x50] sm:$0xff]
        %v337 = vld [vmem:[%s283 + $0x58] sm:$0xff]
        %v338 = vld [vmem:[%s283 + $0x60] sm:$0xff]
        %v339 = vld [vmem:[%s283 + $0x68] sm:$0xff]
        %v340 = vld [vmem:[%s283 + $0x70] sm:$0xff]
        %v341 = vld [vmem:[%s283 + $0x78] sm:$0xff]
        %v342 = vld [vmem:[%s283 + $0x80] sm:$0xff]
        %v343 = vld [vmem:[%s283 + $0x88] sm:$0xff]
        %v344 = vld [vmem:[%s283 + $0x90] sm:$0xff]
        %v345 = vld [vmem:[%s283 + $0x98] sm:$0xff]
        %v346 = vld [vmem:[%s283 + $0xa0] sm:$0xff]
        %v347 = vld [vmem:[%s283 + $0xa8] sm:$0xff]
        %v348 = vld [vmem:[%s283 + $0xb0] sm:$0xff]
        %v349 = vld [vmem:[%s283 + $0xb8] sm:$0xff]
        %v350 = vld [vmem:[%s283 + $0xc0] sm:$0xff]
        %v351 = vld [vmem:[%s283 + $0xc8] sm:$0xff]
        %v352 = vld [vmem:[%s283 + $0xd0] sm:$0xff]
        %v353 = vld [vmem:[%s283 + $0xd8] sm:$0xff]
        %v354 = vld [vmem:[%s283 + $0xe0] sm:$0xff]
        %v355 = vld [vmem:[%s283 + $0xe8] sm:$0xff]
        %v356 = vld [vmem:[%s283 + $0xf0] sm:$0xff]
        %v357 = vld [vmem:[%s283 + $0xf8] sm:$0xff]
        %v358 = vld [vmem:[%s283 + $0x100] sm:$0xff]
        %v359 = vld [vmem:[%s283 + $0x108] sm:$0xff]
        %v360 = vld [vmem:[%s283 + $0x110] sm:$0xff]
        %v361 = vld [vmem:[%s283 + $0x118] sm:$0xff]
        %v362 = vld [vmem:[%s283 + $0x120] sm:$0xff]
        %v363 = vld [vmem:[%s283 + $0x128] sm:$0xff]
        %v364 = vld [vmem:[%s283 + $0x130] sm:$0xff]
        %v365 = vld [vmem:[%s283 + $0x138] sm:$0xff]
        %v366 = vld [vmem:[%s283 + $0x140] sm:$0x11]
        %v367 = vld [vmem:[%s283 + $0x148] sm:$0x11]
        %v369 = vunpack.c.l.b16 %v325
        %v370 = vunpack.c.h.b16 %v325
        %v371 = vpack.c.b16 %v369, %v369
        %v372 = vpack.c.b16 %v370, %v370
        %v416 = vunpack.c.l.b16 %v326
        %v417 = vunpack.c.h.b16 %v326
        %v418 = vunpack.c.l.b16 %v327
        %v419 = vunpack.c.h.b16 %v327
        %v420 = vunpack.c.l.b16 %v328
        %v421 = vunpack.c.h.b16 %v328
        %v422 = vunpack.c.l.b16 %v329
        %v423 = vunpack.c.h.b16 %v329
        %v424 = vunpack.c.l.b16 %v330
        %v425 = vunpack.c.h.b16 %v330
        %v426 = vunpack.c.l.b16 %v331
        %v427 = vunpack.c.h.b16 %v331
        %v428 = vunpack.c.l.b16 %v332
        %v429 = vunpack.c.h.b16 %v332
        %v430 = vunpack.c.l.b16 %v333
        %v431 = vunpack.c.h.b16 %v333
        %v432 = vunpack.c.l.b16 %v334
        %v433 = vunpack.c.h.b16 %v334
        %v434 = vunpack.c.l.b16 %v335
        %v435 = vunpack.c.h.b16 %v335
        %v436 = vunpack.c.l.b16 %v336
        %v437 = vunpack.c.h.b16 %v336
        %v438 = vunpack.c.l.b16 %v337
        %v439 = vunpack.c.h.b16 %v337
        %v440 = vunpack.c.l.b16 %v338
        %v441 = vunpack.c.h.b16 %v338
        %v442 = vunpack.c.l.b16 %v339
        %v443 = vunpack.c.h.b16 %v339
        %v444 = vunpack.c.l.b16 %v340
        %v445 = vunpack.c.h.b16 %v340
        %v446 = vunpack.c.l.b16 %v341
        %v447 = vunpack.c.h.b16 %v341
        %v448 = vunpack.c.l.b16 %v342
        %v449 = vunpack.c.h.b16 %v342
        %v450 = vunpack.c.l.b16 %v343
        %v451 = vunpack.c.h.b16 %v343
        %v452 = vunpack.c.l.b16 %v344
        %v453 = vunpack.c.h.b16 %v344
        %v454 = vunpack.c.l.b16 %v345
        %v455 = vunpack.c.h.b16 %v345
        %v456 = vunpack.c.l.b16 %v346
        %v457 = vunpack.c.h.b16 %v346
        %v458 = vunpack.c.l.b16 %v347
        %v459 = vunpack.c.h.b16 %v347
        %v460 = vunpack.c.l.b16 %v348
        %v461 = vunpack.c.h.b16 %v348
        %v462 = vunpack.c.l.b16 %v349
        %v463 = vunpack.c.h.b16 %v349
        %v464 = vunpack.c.l.b16 %v350
        %v465 = vunpack.c.h.b16 %v350
        %v466 = vunpack.c.l.b16 %v351
        %v467 = vunpack.c.h.b16 %v351
        %v468 = vunpack.c.l.b16 %v352
        %v469 = vunpack.c.h.b16 %v352
        %v470 = vunpack.c.l.b16 %v353
        %v471 = vunpack.c.h.b16 %v353
        %v472 = vunpack.c.l.b16 %v354
        %v473 = vunpack.c.h.b16 %v354
        %v474 = vunpack.c.l.b16 %v355
        %v475 = vunpack.c.h.b16 %v355
        %v476 = vunpack.c.l.b16 %v356
        %v477 = vunpack.c.h.b16 %v356
        %v478 = vunpack.c.l.b16 %v357
        %v479 = vunpack.c.h.b16 %v357
        %v480 = vunpack.c.l.b16 %v358
        %v481 = vunpack.c.h.b16 %v358
        %v482 = vunpack.c.l.b16 %v359
        %v483 = vunpack.c.h.b16 %v359
        %v484 = vunpack.c.l.b16 %v360
        %v485 = vunpack.c.h.b16 %v360
        %v486 = vunpack.c.l.b16 %v361
        %v487 = vunpack.c.h.b16 %v361
        %v488 = vunpack.c.l.b16 %v362
        %v489 = vunpack.c.h.b16 %v362
        %v490 = vunpack.c.l.b16 %v363
        %v491 = vunpack.c.h.b16 %v363
        %v492 = vunpack.c.l.b16 %v364
        %v493 = vunpack.c.h.b16 %v364
        %v494 = vunpack.c.l.b16 %v365
        %v495 = vunpack.c.h.b16 %v365
        %v496 = vunpack.c.l.b16 %v366
        %v497 = vunpack.c.h.b16 %v366
        %v498 = vunpack.c.l.b16 %v367
        %v499 = vunpack.c.h.b16 %v367
        %v500 = vpack.c.b16 %v420, %v416
        %v501 = vpack.c.b16 %v421, %v417
        %v502 = vpack.c.b16 %v422, %v418
        %v503 = vpack.c.b16 %v423, %v419
        %v504 = vpack.c.b16 %v428, %v424
        %v505 = vpack.c.b16 %v429, %v425
        %v506 = vpack.c.b16 %v430, %v426
        %v507 = vpack.c.b16 %v431, %v427
        %v508 = vpack.c.b16 %v436, %v432
        %v509 = vpack.c.b16 %v437, %v433
        %v510 = vpack.c.b16 %v438, %v434
        %v511 = vpack.c.b16 %v439, %v435
        %v512 = vpack.c.b16 %v444, %v440
        %v513 = vpack.c.b16 %v445, %v441
        %v514 = vpack.c.b16 %v446, %v442
        %v515 = vpack.c.b16 %v447, %v443
        %v516 = vpack.c.b16 %v452, %v448
        %v517 = vpack.c.b16 %v453, %v449
        %v518 = vpack.c.b16 %v454, %v450
        %v519 = vpack.c.b16 %v455, %v451
        %v520 = vpack.c.b16 %v460, %v456
        %v521 = vpack.c.b16 %v461, %v457
        %v522 = vpack.c.b16 %v462, %v458
        %v523 = vpack.c.b16 %v463, %v459
        %v524 = vpack.c.b16 %v468, %v464
        %v525 = vpack.c.b16 %v469, %v465
        %v526 = vpack.c.b16 %v470, %v466
        %v527 = vpack.c.b16 %v471, %v467
        %v528 = vpack.c.b16 %v476, %v472
        %v529 = vpack.c.b16 %v477, %v473
        %v530 = vpack.c.b16 %v478, %v474
        %v531 = vpack.c.b16 %v479, %v475
        %v532 = vpack.c.b16 %v484, %v480
        %v533 = vpack.c.b16 %v485, %v481
        %v534 = vpack.c.b16 %v486, %v482
        %v535 = vpack.c.b16 %v487, %v483
        %v536 = vpack.c.b16 %v492, %v488
        %v537 = vpack.c.b16 %v493, %v489
        %v538 = vpack.c.b16 %v494, %v490
        %v539 = vpack.c.b16 %v495, %v491
        %v540 = vpack.c.b16 %v496, %v496
        %v541 = vpack.c.b16 %v497, %v497
        %v542 = vpack.c.b16 %v498, %v498
        %v543 = vpack.c.b16 %v499, %v499
        %vm584 = vcmask 277504
        %v586 = vsel %vm584, %v372, 0
        %vm588 = vcmask 1040384
        %v590 = vsel %vm588, %v540, 0
        %v593 = vsel %vm588, %v541, 0
        %v596 = vsel %vm588, %v542, 0
        %v599 = vsel %vm588, %v543, 0
        %601 = vmatprep.subr.bf16.mxu0 %v501
        %602 = vmatpush1.bf16.msra.mxu0 %v500
        %603 = vmatprep.subr.bf16.mxu0 %v505
        %604 = vmatpush1.bf16.msra.mxu0 %v504
        %605 = vmatprep.subr.bf16.mxu0 %v509
        %606 = vmatpush1.bf16.msra.mxu0 %v508
        %607 = vmatprep.subr.bf16.mxu0 %v513
        %608 = vmatpush1.bf16.msra.mxu0 %v512
        %609 = vmatprep.subr.bf16.mxu0 %v517
        %610 = vmatpush1.bf16.msra.mxu0 %v516
        %611 = vmatprep.subr.bf16.mxu0 %v521
        %612 = vmatpush1.bf16.msra.mxu0 %v520
        %613 = vmatprep.subr.bf16.mxu0 %v525
        %614 = vmatpush1.bf16.msra.mxu0 %v524
        %615 = vmatprep.subr.bf16.mxu0 %v529
        %616 = vmatpush1.bf16.msra.mxu0 %v528
        %617 = vmatprep.subr.bf16.mxu0 %v533
        %618 = vmatpush1.bf16.msra.mxu0 %v532
        %619 = vmatprep.subr.bf16.mxu0 %v537
        %620 = vmatpush1.bf16.msra.mxu0 %v536
        %621 = vmatprep.subr.bf16.mxu0 %v593
        %622 = vmatpush1.bf16.msra.mxu0 %v590
        %623 = vmatprep.subr.bf16.mxu0 0
        %624 = vmatpush1.bf16.msra.mxu0 0
        %625 = vmatprep.subr.bf16.mxu0 0
        %626 = vmatpush1.bf16.msra.mxu0 0
        %627 = vmatprep.subr.bf16.mxu0 0
        %628 = vmatpush1.bf16.msra.mxu0 0
        %629 = vmatprep.subr.bf16.mxu0 0
        %630 = vmatpush1.bf16.msra.mxu0 0
        %631 = vmatprep.subr.bf16.mxu0 0
        %632 = vmatpush1.bf16.msra.mxu0 0
        %633 = vmatprep.mubr.bf16.mxu0 %v586
        %634 = vmatmul.mubr.bf16.gmra.mrb[0].mxu0 %v371
        %v635 = vpop.f32.mrb[0].mxu0
        %v636 = vadd.f32 0.0, %v635
        %v637 = vpop.f32.mrb[0].mxu0
        %v638 = vadd.f32 0.0, %v637
        %v639 = vpop.f32.mrb[0].mxu0
        %v640 = vpop.f32.mrb[0].mxu0
        %641 = vdwg.mxu0
        %642 = vmatprep.subr.bf16.mxu0 %v503
        %643 = vmatpush1.bf16.msra.mxu0 %v502
        %644 = vmatprep.subr.bf16.mxu0 %v507
        %645 = vmatpush1.bf16.msra.mxu0 %v506
        %646 = vmatprep.subr.bf16.mxu0 %v511
        %647 = vmatpush1.bf16.msra.mxu0 %v510
        %648 = vmatprep.subr.bf16.mxu0 %v515
        %649 = vmatpush1.bf16.msra.mxu0 %v514
        %650 = vmatprep.subr.bf16.mxu0 %v519
        %651 = vmatpush1.bf16.msra.mxu0 %v518
        %652 = vmatprep.subr.bf16.mxu0 %v523
        %653 = vmatpush1.bf16.msra.mxu0 %v522
        %654 = vmatprep.subr.bf16.mxu0 %v527
        %655 = vmatpush1.bf16.msra.mxu0 %v526
        %656 = vmatprep.subr.bf16.mxu0 %v531
        %657 = vmatpush1.bf16.msra.mxu0 %v530
        %658 = vmatprep.subr.bf16.mxu0 %v535
        %659 = vmatpush1.bf16.msra.mxu0 %v534
        %660 = vmatprep.subr.bf16.mxu0 %v539
        %661 = vmatpush1.bf16.msra.mxu0 %v538
        %662 = vmatprep.subr.bf16.mxu0 %v599
        %663 = vmatpush1.bf16.msra.mxu0 %v596
        %664 = vmatprep.subr.bf16.mxu0 0
        %665 = vmatpush1.bf16.msra.mxu0 0
        %666 = vmatprep.subr.bf16.mxu0 0
        %667 = vmatpush1.bf16.msra.mxu0 0
        %668 = vmatprep.subr.bf16.mxu0 0
        %669 = vmatpush1.bf16.msra.mxu0 0
        %670 = vmatprep.subr.bf16.mxu0 0
        %671 = vmatpush1.bf16.msra.mxu0 0
        %672 = vmatprep.subr.bf16.mxu0 0
        %673 = vmatpush1.bf16.msra.mxu0 0
        %674 = vmatprep.mubr.bf16.mxu0 %v586
        %675 = vmatmul.mubr.bf16.gmra.mrb[0].mxu0 %v371
        %v676 = vpop.f32.mrb[0].mxu0
        %v677 = vadd.f32 0.0, %v676
        %v678 = vpop.f32.mrb[0].mxu0
        %v679 = vadd.f32 0.0, %v678
        %v680 = vpop.f32.mrb[0].mxu0
        %v681 = vpop.f32.mrb[0].mxu0
        %682 = vdwg.mxu0
        %v683 = vld [vmem:[%s2] sm:$0xff]
        %685 = vset.pattern.permute.xlu0 1
        %686 = vperm.xlu0 %685, %v683
        %v687 = vpop.permute.xlu0 %686
        %v689 = vmul.f32 %v636, %v687
        %v690 = vmul.f32 %v638, %v687
        %v691 = vmul.f32 %v677, %v687
        %v692 = vmul.f32 %v679, %v687
        %693 = vset.pattern.permute.xlu0 2
        %694 = vperm.xlu0 %693, %v683
        %v695 = vpop.permute.xlu0 %694
        %v697 = vadd.f32 %v689, %v695
        %v698 = vadd.f32 %v690, %v695
        %v699 = vadd.f32 %v691, %v695
        %v700 = vadd.f32 %v692, %v695
        %v701 = vld [vmem:[%s316] sm:$0xff]
        %v702 = vld [vmem:[%s316 + $0x8] sm:$0xff]
        %v703 = vunpack.c.l.bf16 %v701
        %v704 = vunpack.c.h.bf16 %v701
        %v705 = vunpack.c.l.bf16 %v702
        %v706 = vunpack.c.h.bf16 %v702
        %v707 = vadd.f32 %v697, %v703
        %v708 = vadd.f32 %v698, %v704
        %v709 = vadd.f32 %v699, %v705
        %v710 = vadd.f32 %v700, %v706
        %v711 = vpack.c.bf16 %v707, %v707
        %v712 = vpack.c.bf16 %v708, %v708
        %v713 = vpack.c.bf16 %v709, %v709
        %v714 = vpack.c.bf16 %v710, %v710
        %v719 = vunpack.c.l.b16 %v711
        %v720 = vunpack.c.l.b16 %v712
        %v721 = vunpack.c.l.b16 %v713
        %v722 = vunpack.c.l.b16 %v714
        %v723 = vpack.c.b16 %v720, %v719
        %v724 = vpack.c.b16 %v722, %v721
        %727 = vst [vmem:[%s322] sm:$0xff] %v723
        %728 = vst [vmem:[%s322 + $0x8] sm:$0xff] %v724
        %s729 = smul.u32 4, %s15
        %p730 = scmp.lt.s32.totalorder %s729, 7
        %s731 = scalar_select %p730, %s729, 7
        %s732 = smul.addr %s731, 4
        %s733 = scalar_lea.vmem %s4, %s732
        // Predicated region
        $region60: #{_lambda_.20} parent=54 // pred_check
          %p734 = pneg %p127
        $region61: #{_lambda_.20} parent=54 // pred_check_branch
          %736 = sbr.rel (%p734) target = $region63
        $region62: #{_lambda_.20} parent=54 // pred_region
          %s737 = smul.u32 4, %s15
        $region63: #{_lambda_.20} parent=54 // pred_fallthru
          _
      $region55: #{_lambda_.20} parent=5 // pred_fallthru
        _
      %p738 = scmp.le.s32.totalorder 2, %s10
      // Predicated region
      $region64: #{_lambda_.20} parent=5 // pred_check
        %p739 = pneg %p738
      $region65: #{_lambda_.20} parent=5 // pred_check_branch
        %741 = sbr.rel (%p739) target = $region67
      $region66: #{_lambda_.20} parent=5 // pred_region
        %s742 = ssub.s32 %s10, 2
        // Predicated region
        $region68: #{_lambda_.20} parent=66 // pred_check
          %p743 = pneg %p133
        $region69: #{_lambda_.20} parent=66 // pred_check_branch
          %745 = sbr.rel (%p743) target = $region71
        $region70: #{_lambda_.20} parent=66 // pred_region
          %s746 = smul.u32 4, %s16
          %p747 = scmp.lt.s32.totalorder %s746, 7
          %s748 = scalar_select %p747, %s746, 7
          %s749 = smul.addr %s748, 4
          %s750 = scalar_lea.vmem %s4, %s749
        $region71: #{_lambda_.20} parent=66 // pred_fallthru
          _
      $region67: #{_lambda_.20} parent=5 // pred_fallthru
        _
    $region6: #{_lambda_.20} parent=1 // loop_footer
      %s14 = sadd.s32 1, %s10
    $region7: #{_lambda_.20} parent=1 // loop_footer_branch
      %9 = sbr.rel target = $region3
    $region8: #{_lambda_.20} parent=1 // loop_exit
      _

// kernel: _lambda_.21
$region0: #{_lambda_.21}
  #allocation0 [shape = 'u32[]', space=smem, size = 0x4, offset = 0x4, fixed_abs, tag = 'smem constant byte address 0x4 - core index']
  #allocation1 [shape = 'u32[144,128]{1,0:T(1,128)}', space=vmem, size = 0x12000, scoped, tag = 'internal scratch']
  %s0 = inlined_call_operand.vmem [shape: bf16[8,6], index: 0, kind: input, shape index: {}]
  %s1 = inlined_call_operand.vmem [shape: bf16[6,128], index: 1, kind: input, shape index: {}]
  %s2 = inlined_call_operand.vmem [shape: f32[8,3], index: 2, kind: input, shape index: {}]
  %s3 = inlined_call_operand.vmem [shape: bf16[8,128], index: 3, kind: output, shape index: {}]
  %s4 = sld [smem:[#allocation0]]
  $region22: #{_lambda_.21} parent=0
    _
  %s6 = ssub.s32 1, %s4
  %s7 = scalar_select 0, %s6, %s4
  // Predicated region
  $region2: #{_lambda_.21} parent=0 // pred_check
    _
  $region3: #{_lambda_.21} parent=0 // pred_check_branch
    %9 = sbr.rel (0) target = $region5
  $region4: #{_lambda_.21} parent=0 // pred_region
    _
  $region5: #{_lambda_.21} parent=0 // pred_fallthru
    _
  // Predicated region
  $region6: #{_lambda_.21} parent=0 // pred_check
    _
  $region7: #{_lambda_.21} parent=0 // pred_check_branch
    %11 = sbr.rel (0) target = $region9
  $region8: #{_lambda_.21} parent=0 // pred_region
    _
  $region9: #{_lambda_.21} parent=0 // pred_fallthru
    _
  // Predicated region
  $region10: #{_lambda_.21} parent=0 // pred_check
    _
  $region11: #{_lambda_.21} parent=0 // pred_check_branch
    %13 = sbr.rel (0) target = $region13
  $region12: #{_lambda_.21} parent=0 // pred_region
    _
  $region13: #{_lambda_.21} parent=0 // pred_fallthru
    _
  %v15 = vld [vmem:[%s0] sm:$0xf]
  %v16 = vld [vmem:[%s1] sm:$0x7]
  %vm17 = vcmask 48128
  %v19 = vsel %vm17, %v15, 0
  %vm21 = vcmask 1042432
  %v23 = vsel %vm21, %v16, 0
  %25 = vmatprep.subr.bf16.mxu0 0
  %26 = vmatpush1.bf16.msra.mxu0 %v23
  %27 = vmatprep.subr.bf16.mxu0 0
  %28 = vmatpush1.bf16.msra.mxu0 0
  %29 = vmatprep.subr.bf16.mxu0 0
  %30 = vmatpush1.bf16.msra.mxu0 0
  %31 = vmatprep.subr.bf16.mxu0 0
  %32 = vmatpush1.bf16.msra.mxu0 0
  %33 = vmatprep.subr.bf16.mxu0 0
  %34 = vmatpush1.bf16.msra.mxu0 0
  %35 = vmatprep.subr.bf16.mxu0 0
  %36 = vmatpush1.bf16.msra.mxu0 0
  %37 = vmatprep.subr.bf16.mxu0 0
  %38 = vmatpush1.bf16.msra.mxu0 0
  %39 = vmatprep.subr.bf16.mxu0 0
  %40 = vmatpush1.bf16.msra.mxu0 0
  %41 = vmatprep.subr.bf16.mxu0 0
  %42 = vmatpush1.bf16.msra.mxu0 0
  %43 = vmatprep.subr.bf16.mxu0 0
  %44 = vmatpush1.bf16.msra.mxu0 0
  %45 = vmatprep.subr.bf16.mxu0 0
  %46 = vmatpush1.bf16.msra.mxu0 0
  %47 = vmatprep.subr.bf16.mxu0 0
  %48 = vmatpush1.bf16.msra.mxu0 0
  %49 = vmatprep.subr.bf16.mxu0 0
  %50 = vmatpush1.bf16.msra.mxu0 0
  %51 = vmatprep.subr.bf16.mxu0 0
  %52 = vmatpush1.bf16.msra.mxu0 0
  %53 = vmatprep.subr.bf16.mxu0 0
  %54 = vmatpush1.bf16.msra.mxu0 0
  %55 = vmatprep.subr.bf16.mxu0 0
  %56 = vmatpush1.bf16.msra.mxu0 0
  %57 = vmatprep.mubr.bf16.mxu0 0
  %58 = vmatmul.mubr.bf16.gmra.mrb[0].mxu0 %v19
  %v59 = vpop.f32.mrb[0].mxu0
  %v60 = vadd.f32 0.0, %v59
  %v61 = vpop.f32.mrb[0].mxu0
  %v62 = vpop.f32.mrb[0].mxu0
  %v63 = vpop.f32.mrb[0].mxu0
  %64 = vdwg.mxu0
  %v65 = vld [vmem:[%s2] sm:$0xff]
  %67 = vset.pattern.permute.xlu0 1
  %68 = vperm.xlu0 %67, %v65
  %v69 = vpop.permute.xlu0 %68
  %v71 = vmul.f32 %v60, %v69
  %72 = vset.pattern.permute.xlu0 2
  %73 = vperm.xlu0 %72, %v65
  %v74 = vpop.permute.xlu0 %73
  %v76 = vadd.f32 %v71, %v74
  %v77 = vpack.c.bf16 %v76, %v76
  %78 = vst [vmem:[%s3] sm:$0xf] %v77
  // Predicated region
  $region14: #{_lambda_.21} parent=0 // pred_check
    _
  $region15: #{_lambda_.21} parent=0 // pred_check_branch
    %80 = sbr.rel (0) target = $region17
  $region16: #{_lambda_.21} parent=0 // pred_region
    _
  $region17: #{_lambda_.21} parent=0 // pred_fallthru
    _
  // Predicated region
  $region18: #{_lambda_.21} parent=0 // pred_check
    _
  $region19: #{_lambda_.21} parent=0 // pred_check_branch
    %82 = sbr.rel (0) target = $region21
  $region20: #{_lambda_.21} parent=0 // pred_region
    _
  $region21: #{_lambda_.21} parent=0 // pred_fallthru
    _

// kernel: _lambda_.22
$region0: #{_lambda_.22}
  #allocation0 [shape = 'u32[]', space=smem, size = 0x4, offset = 0x4, fixed_abs, tag = 'smem constant byte address 0x4 - core index']
  #allocation1 [shape = 'u32[144,128]{1,0:T(1,128)}', space=vmem, size = 0x12000, scoped, tag = 'internal scratch']
  %s0 = inlined_call_operand.vmem [shape: bf16[8,162], index: 0, kind: input, shape index: {}]
  %s1 = inlined_call_operand.vmem [shape: bf16[162,128], index: 1, kind: input, shape index: {}]
  %s2 = inlined_call_operand.vmem [shape: f32[8,3], index: 2, kind: input, shape index: {}]
  %s3 = inlined_call_operand.vmem [shape: bf16[8,128], index: 3, kind: output, shape index: {}]
  %s4 = sld [smem:[#allocation0]]
  $region22: #{_lambda_.22} parent=0
    _
  %s6 = ssub.s32 1, %s4
  %s7 = scalar_select 0, %s6, %s4
  // Predicated region
  $region2: #{_lambda_.22} parent=0 // pred_check
    _
  $region3: #{_lambda_.22} parent=0 // pred_check_branch
    %9 = sbr.rel (0) target = $region5
  $region4: #{_lambda_.22} parent=0 // pred_region
    _
  $region5: #{_lambda_.22} parent=0 // pred_fallthru
    _
  // Predicated region
  $region6: #{_lambda_.22} parent=0 // pred_check
    _
  $region7: #{_lambda_.22} parent=0 // pred_check_branch
    %11 = sbr.rel (0) target = $region9
  $region8: #{_lambda_.22} parent=0 // pred_region
    _
  $region9: #{_lambda_.22} parent=0 // pred_fallthru
    _
  // Predicated region
  $region10: #{_lambda_.22} parent=0 // pred_check
    _
  $region11: #{_lambda_.22} parent=0 // pred_check_branch
    %13 = sbr.rel (0) target = $region13
  $region12: #{_lambda_.22} parent=0 // pred_region
    _
  $region13: #{_lambda_.22} parent=0 // pred_fallthru
    _
  %v15 = vld [vmem:[%s0] sm:$0xff]
  %v16 = vld [vmem:[%s1] sm:$0xf]
  %v17 = vld [vmem:[%s1 + $0x4] sm:$0xf]
  %v18 = vld [vmem:[%s1 + $0x8] sm:$0xf]
  %v19 = vld [vmem:[%s1 + $0xc] sm:$0xf]
  %v20 = vld [vmem:[%s1 + $0x10] sm:$0xf]
  %v21 = vld [vmem:[%s1 + $0x14] sm:$0xf]
  %v22 = vld [vmem:[%s1 + $0x18] sm:$0xf]
  %v23 = vld [vmem:[%s1 + $0x1c] sm:$0xf]
  %v24 = vld [vmem:[%s1 + $0x20] sm:$0xf]
  %v25 = vld [vmem:[%s1 + $0x24] sm:$0xf]
  %v26 = vld [vmem:[%s1 + $0x28] sm:$0xf]
  %v27 = vld [vmem:[%s1 + $0x2c] sm:$0xf]
  %v28 = vld [vmem:[%s1 + $0x30] sm:$0xf]
  %v29 = vld [vmem:[%s1 + $0x34] sm:$0xf]
  %v30 = vld [vmem:[%s1 + $0x38] sm:$0xf]
  %v31 = vld [vmem:[%s1 + $0x3c] sm:$0xf]
  %v32 = vld [vmem:[%s1 + $0x40] sm:$0xf]
  %v33 = vld [vmem:[%s1 + $0x44] sm:$0xf]
  %v34 = vld [vmem:[%s1 + $0x48] sm:$0xf]
  %v35 = vld [vmem:[%s1 + $0x4c] sm:$0xf]
  %v36 = vld [vmem:[%s1 + $0x50] sm:$0x1]
  %v37 = vld [vmem:[%s2] sm:$0xff]
  %39 = vset.pattern.permute.xlu0 0
  %40 = vperm.xlu0 %39, %v37
  %v41 = vpop.permute.xlu0 %40
  %v44 = vunpack.c.l.b16 %v15
  %v45 = vunpack.c.h.b16 %v15
  %v46 = vpack.c.b16 %v44, %v44
  %v47 = vpack.c.b16 %v45, %v45
  %v70 = vunpack.c.l.b16 %v16
  %v71 = vunpack.c.l.b16 %v17
  %v72 = vunpack.c.l.b16 %v18
  %v73 = vunpack.c.l.b16 %v19
  %v74 = vunpack.c.l.b16 %v20
  %v75 = vunpack.c.l.b16 %v21
  %v76 = vunpack.c.l.b16 %v22
  %v77 = vunpack.c.l.b16 %v23
  %v78 = vunpack.c.l.b16 %v24
  %v79 = vunpack.c.l.b16 %v25
  %v80 = vunpack.c.l.b16 %v26
  %v81 = vunpack.c.l.b16 %v27
  %v82 = vunpack.c.l.b16 %v28
  %v83 = vunpack.c.l.b16 %v29
  %v84 = vunpack.c.l.b16 %v30
  %v85 = vunpack.c.l.b16 %v31
  %v86 = vunpack.c.l.b16 %v32
  %v87 = vunpack.c.l.b16 %v33
  %v88 = vunpack.c.l.b16 %v34
  %v89 = vunpack.c.l.b16 %v35
  %v90 = vunpack.c.l.b16 %v36
  %v91 = vpack.c.b16 %v71, %v70
  %v92 = vpack.c.b16 %v73, %v72
  %v93 = vpack.c.b16 %v75, %v74
  %v94 = vpack.c.b16 %v77, %v76
  %v95 = vpack.c.b16 %v79, %v78
  %v96 = vpack.c.b16 %v81, %v80
  %v97 = vpack.c.b16 %v83, %v82
  %v98 = vpack.c.b16 %v85, %v84
  %v99 = vpack.c.b16 %v87, %v86
  %v100 = vpack.c.b16 %v89, %v88
  %v101 = vpack.c.b16 %v90, %v90
  %vm112 = vcmask 277504
  %v114 = vsel %vm112, %v47, 0
  %vm116 = vcmask 1040384
  %v118 = vsel %vm116, %v101, 0
  %120 = vmatprep.subr.bf16.mxu0 0
  %121 = vmatpush1.bf16.msra.mxu0 %v91
  %122 = vmatprep.subr.bf16.mxu0 0
  %123 = vmatpush1.bf16.msra.mxu0 %v92
  %124 = vmatprep.subr.bf16.mxu0 0
  %125 = vmatpush1.bf16.msra.mxu0 %v93
  %126 = vmatprep.subr.bf16.mxu0 0
  %127 = vmatpush1.bf16.msra.mxu0 %v94
  %128 = vmatprep.subr.bf16.mxu0 0
  %129 = vmatpush1.bf16.msra.mxu0 %v95
  %130 = vmatprep.subr.bf16.mxu0 0
  %131 = vmatpush1.bf16.msra.mxu0 %v96
  %132 = vmatprep.subr.bf16.mxu0 0
  %133 = vmatpush1.bf16.msra.mxu0 %v97
  %134 = vmatprep.subr.bf16.mxu0 0
  %135 = vmatpush1.bf16.msra.mxu0 %v98
  %136 = vmatprep.subr.bf16.mxu0 0
  %137 = vmatpush1.bf16.msra.mxu0 %v99
  %138 = vmatprep.subr.bf16.mxu0 0
  %139 = vmatpush1.bf16.msra.mxu0 %v100
  %140 = vmatprep.subr.bf16.mxu0 0
  %141 = vmatpush1.bf16.msra.mxu0 %v118
  %142 = vmatprep.subr.bf16.mxu0 0
  %143 = vmatpush1.bf16.msra.mxu0 0
  %144 = vmatprep.subr.bf16.mxu0 0
  %145 = vmatpush1.bf16.msra.mxu0 0
  %146 = vmatprep.subr.bf16.mxu0 0
  %147 = vmatpush1.bf16.msra.mxu0 0
  %148 = vmatprep.subr.bf16.mxu0 0
  %149 = vmatpush1.bf16.msra.mxu0 0
  %150 = vmatprep.subr.bf16.mxu0 0
  %151 = vmatpush1.bf16.msra.mxu0 0
  %152 = vmatprep.mubr.bf16.mxu0 %v114
  %153 = vmatmul.mubr.bf16.gmra.mrb[0].mxu0 %v46
  %v154 = vpop.f32.mrb[0].mxu0
  %v155 = vadd.f32 %v41, %v154
  %v156 = vpop.f32.mrb[0].mxu0
  %v157 = vpop.f32.mrb[0].mxu0
  %v158 = vpop.f32.mrb[0].mxu0
  %159 = vdwg.mxu0
  %vm160 = vcmp.ge.f32.partialorder %v155, 0.0
  %v161 = vmul.f32 %v155, 0.01
  %v162 = vsel %vm160, %v155, %v161
  %163 = vset.pattern.permute.xlu0 1
  %164 = vperm.xlu0 %163, %v37
  %v165 = vpop.permute.xlu0 %164
  %v167 = vmul.f32 %v162, %v165
  %168 = vset.pattern.permute.xlu0 2
  %169 = vperm.xlu0 %168, %v37
  %v170 = vpop.permute.xlu0 %169
  %v172 = vadd.f32 %v167, %v170
  %v173 = vpack.c.bf16 %v172, %v172
  %174 = vst [vmem:[%s3] sm:$0xf] %v173
  // Predicated region
  $region14: #{_lambda_.22} parent=0 // pred_check
    _
  $region15: #{_lambda_.22} parent=0 // pred_check_branch
    %176 = sbr.rel (0) target = $region17
  $region16: #{_lambda_.22} parent=0 // pred_region
    _
  $region17: #{_lambda_.22} parent=0 // pred_fallthru
    _
  // Predicated region
  $region18: #{_lambda_.22} parent=0 // pred_check
    _
  $region19: #{_lambda_.22} parent=0 // pred_check_branch
    %178 = sbr.rel (0) target = $region21
  $region20: #{_lambda_.22} parent=0 // pred_region
    _
  $region21: #{_lambda_.22} parent=0 // pred_fallthru
    _

// kernel: _lambda_.23
$region0: #{_lambda_.23}
  #allocation0 [shape = 'u32[]', space=smem, size = 0x4, offset = 0x4, fixed_abs, tag = 'smem constant byte address 0x4 - core index']
  #allocation1 [shape = 'u32[144,128]{1,0:T(1,128)}', space=vmem, size = 0x12000, scoped, tag = 'internal scratch']
  %s0 = inlined_call_operand.vmem [shape: bf16[8,216], index: 0, kind: input, shape index: {}]
  %s1 = inlined_call_operand.vmem [shape: bf16[216,128], index: 1, kind: input, shape index: {}]
  %s2 = inlined_call_operand.vmem [shape: f32[8,3], index: 2, kind: input, shape index: {}]
  %s3 = inlined_call_operand.vmem [shape: bf16[8,128], index: 3, kind: output, shape index: {}]
  %s4 = sld [smem:[#allocation0]]
  $region22: #{_lambda_.23} parent=0
    _
  %s6 = ssub.s32 1, %s4
  %s7 = scalar_select 0, %s6, %s4
  // Predicated region
  $region2: #{_lambda_.23} parent=0 // pred_check
    _
  $region3: #{_lambda_.23} parent=0 // pred_check_branch
    %9 = sbr.rel (0) target = $region5
  $region4: #{_lambda_.23} parent=0 // pred_region
    _
  $region5: #{_lambda_.23} parent=0 // pred_fallthru
    _
  // Predicated region
  $region6: #{_lambda_.23} parent=0 // pred_check
    _
  $region7: #{_lambda_.23} parent=0 // pred_check_branch
    %11 = sbr.rel (0) target = $region9
  $region8: #{_lambda_.23} parent=0 // pred_region
    _
  $region9: #{_lambda_.23} parent=0 // pred_fallthru
    _
  // Predicated region
  $region10: #{_lambda_.23} parent=0 // pred_check
    _
  $region11: #{_lambda_.23} parent=0 // pred_check_branch
    %13 = sbr.rel (0) target = $region13
  $region12: #{_lambda_.23} parent=0 // pred_region
    _
  $region13: #{_lambda_.23} parent=0 // pred_fallthru
    _
  %v15 = vld [vmem:[%s0] sm:$0xff]
  %v16 = vld [vmem:[%s1] sm:$0xf]
  %v17 = vld [vmem:[%s1 + $0x4] sm:$0xf]
  %v18 = vld [vmem:[%s1 + $0x8] sm:$0xf]
  %v19 = vld [vmem:[%s1 + $0xc] sm:$0xf]
  %v20 = vld [vmem:[%s1 + $0x10] sm:$0xf]
  %v21 = vld [vmem:[%s1 + $0x14] sm:$0xf]
  %v22 = vld [vmem:[%s1 + $0x18] sm:$0xf]
  %v23 = vld [vmem:[%s1 + $0x1c] sm:$0xf]
  %v24 = vld [vmem:[%s1 + $0x20] sm:$0xf]
  %v25 = vld [vmem:[%s1 + $0x24] sm:$0xf]
  %v26 = vld [vmem:[%s1 + $0x28] sm:$0xf]
  %v27 = vld [vmem:[%s1 + $0x2c] sm:$0xf]
  %v28 = vld [vmem:[%s1 + $0x30] sm:$0xf]
  %v29 = vld [vmem:[%s1 + $0x34] sm:$0xf]
  %v30 = vld [vmem:[%s1 + $0x38] sm:$0xf]
  %v31 = vld [vmem:[%s1 + $0x3c] sm:$0xf]
  %v32 = vld [vmem:[%s1 + $0x40] sm:$0xf]
  %v33 = vld [vmem:[%s1 + $0x44] sm:$0xf]
  %v34 = vld [vmem:[%s1 + $0x48] sm:$0xf]
  %v35 = vld [vmem:[%s1 + $0x4c] sm:$0xf]
  %v36 = vld [vmem:[%s1 + $0x50] sm:$0xf]
  %v37 = vld [vmem:[%s1 + $0x54] sm:$0xf]
  %v38 = vld [vmem:[%s1 + $0x58] sm:$0xf]
  %v39 = vld [vmem:[%s1 + $0x5c] sm:$0xf]
  %v40 = vld [vmem:[%s1 + $0x60] sm:$0xf]
  %v41 = vld [vmem:[%s1 + $0x64] sm:$0xf]
  %v42 = vld [vmem:[%s1 + $0x68] sm:$0xf]
  %v43 = vld [vmem:[%s2] sm:$0xff]
  %45 = vset.pattern.permute.xlu0 0
  %46 = vperm.xlu0 %45, %v43
  %v47 = vpop.permute.xlu0 %46
  %v50 = vunpack.c.l.b16 %v15
  %v51 = vunpack.c.h.b16 %v15
  %v52 = vpack.c.b16 %v50, %v50
  %v53 = vpack.c.b16 %v51, %v51
  %v82 = vunpack.c.l.b16 %v16
  %v83 = vunpack.c.l.b16 %v17
  %v84 = vunpack.c.l.b16 %v18
  %v85 = vunpack.c.l.b16 %v19
  %v86 = vunpack.c.l.b16 %v20
  %v87 = vunpack.c.l.b16 %v21
  %v88 = vunpack.c.l.b16 %v22
  %v89 = vunpack.c.l.b16 %v23
  %v90 = vunpack.c.l.b16 %v24
  %v91 = vunpack.c.l.b16 %v25
  %v92 = vunpack.c.l.b16 %v26
  %v93 = vunpack.c.l.b16 %v27
  %v94 = vunpack.c.l.b16 %v28
  %v95 = vunpack.c.l.b16 %v29
  %v96 = vunpack.c.l.b16 %v30
  %v97 = vunpack.c.l.b16 %v31
  %v98 = vunpack.c.l.b16 %v32
  %v99 = vunpack.c.l.b16 %v33
  %v100 = vunpack.c.l.b16 %v34
  %v101 = vunpack.c.l.b16 %v35
  %v102 = vunpack.c.l.b16 %v36
  %v103 = vunpack.c.l.b16 %v37
  %v104 = vunpack.c.l.b16 %v38
  %v105 = vunpack.c.l.b16 %v39
  %v106 = vunpack.c.l.b16 %v40
  %v107 = vunpack.c.l.b16 %v41
  %v108 = vunpack.c.l.b16 %v42
  %v109 = vpack.c.b16 %v83, %v82
  %v110 = vpack.c.b16 %v85, %v84
  %v111 = vpack.c.b16 %v87, %v86
  %v112 = vpack.c.b16 %v89, %v88
  %v113 = vpack.c.b16 %v91, %v90
  %v114 = vpack.c.b16 %v93, %v92
  %v115 = vpack.c.b16 %v95, %v94
  %v116 = vpack.c.b16 %v97, %v96
  %v117 = vpack.c.b16 %v99, %v98
  %v118 = vpack.c.b16 %v101, %v100
  %v119 = vpack.c.b16 %v103, %v102
  %v120 = vpack.c.b16 %v105, %v104
  %v121 = vpack.c.b16 %v107, %v106
  %v122 = vpack.c.b16 %v108, %v108
  %vm136 = vcmask 719872
  %v138 = vsel %vm136, %v53, 0
  %vm140 = vcmask 1043456
  %v142 = vsel %vm140, %v122, 0
  %144 = vmatprep.subr.bf16.mxu0 0
  %145 = vmatpush1.bf16.msra.mxu0 %v109
  %146 = vmatprep.subr.bf16.mxu0 0
  %147 = vmatpush1.bf16.msra.mxu0 %v110
  %148 = vmatprep.subr.bf16.mxu0 0
  %149 = vmatpush1.bf16.msra.mxu0 %v111
  %150 = vmatprep.subr.bf16.mxu0 0
  %151 = vmatpush1.bf16.msra.mxu0 %v112
  %152 = vmatprep.subr.bf16.mxu0 0
  %153 = vmatpush1.bf16.msra.mxu0 %v113
  %154 = vmatprep.subr.bf16.mxu0 0
  %155 = vmatpush1.bf16.msra.mxu0 %v114
  %156 = vmatprep.subr.bf16.mxu0 0
  %157 = vmatpush1.bf16.msra.mxu0 %v115
  %158 = vmatprep.subr.bf16.mxu0 0
  %159 = vmatpush1.bf16.msra.mxu0 %v116
  %160 = vmatprep.subr.bf16.mxu0 0
  %161 = vmatpush1.bf16.msra.mxu0 %v117
  %162 = vmatprep.subr.bf16.mxu0 0
  %163 = vmatpush1.bf16.msra.mxu0 %v118
  %164 = vmatprep.subr.bf16.mxu0 0
  %165 = vmatpush1.bf16.msra.mxu0 %v119
  %166 = vmatprep.subr.bf16.mxu0 0
  %167 = vmatpush1.bf16.msra.mxu0 %v120
  %168 = vmatprep.subr.bf16.mxu0 0
  %169 = vmatpush1.bf16.msra.mxu0 %v121
  %170 = vmatprep.subr.bf16.mxu0 0
  %171 = vmatpush1.bf16.msra.mxu0 %v142
  %172 = vmatprep.subr.bf16.mxu0 0
  %173 = vmatpush1.bf16.msra.mxu0 0
  %174 = vmatprep.subr.bf16.mxu0 0
  %175 = vmatpush1.bf16.msra.mxu0 0
  %176 = vmatprep.mubr.bf16.mxu0 %v138
  %177 = vmatmul.mubr.bf16.gmra.mrb[0].mxu0 %v52
  %v178 = vpop.f32.mrb[0].mxu0
  %v179 = vadd.f32 %v47, %v178
  %v180 = vpop.f32.mrb[0].mxu0
  %v181 = vpop.f32.mrb[0].mxu0
  %v182 = vpop.f32.mrb[0].mxu0
  %183 = vdwg.mxu0
  %vm184 = vcmp.ge.f32.partialorder %v179, 0.0
  %v185 = vmul.f32 %v179, 0.01
  %v186 = vsel %vm184, %v179, %v185
  %187 = vset.pattern.permute.xlu0 1
  %188 = vperm.xlu0 %187, %v43
  %v189 = vpop.permute.xlu0 %188
  %v191 = vmul.f32 %v186, %v189
  %192 = vset.pattern.permute.xlu0 2
  %193 = vperm.xlu0 %192, %v43
  %v194 = vpop.permute.xlu0 %193
  %v196 = vadd.f32 %v191, %v194
  %v197 = vpack.c.bf16 %v196, %v196
  %198 = vst [vmem:[%s3] sm:$0xf] %v197
  // Predicated region
  $region14: #{_lambda_.23} parent=0 // pred_check
    _
  $region15: #{_lambda_.23} parent=0 // pred_check_branch
    %200 = sbr.rel (0) target = $region17
  $region16: #{_lambda_.23} parent=0 // pred_region
    _
  $region17: #{_lambda_.23} parent=0 // pred_fallthru
    _
  // Predicated region
  $region18: #{_lambda_.23} parent=0 // pred_check
    _
  $region19: #{_lambda_.23} parent=0 // pred_check_branch
    %202 = sbr.rel (0) target = $region21
  $region20: #{_lambda_.23} parent=0 // pred_region
    _
  $region21: #{_lambda_.23} parent=0 // pred_fallthru
    _

// kernel: _lambda_.24
$region0: #{_lambda_.24}
  #allocation0 [shape = 'u32[]', space=smem, size = 0x4, offset = 0x4, fixed_abs, tag = 'smem constant byte address 0x4 - core index']
  #allocation1 [shape = 'u32[144,128]{1,0:T(1,128)}', space=vmem, size = 0x12000, scoped, tag = 'internal scratch']
  %s0 = inlined_call_operand.vmem [shape: bf16[8,216], index: 0, kind: input, shape index: {}]
  %s1 = inlined_call_operand.vmem [shape: bf16[216,128], index: 1, kind: input, shape index: {}]
  %s2 = inlined_call_operand.vmem [shape: f32[8,3], index: 2, kind: input, shape index: {}]
  %s3 = inlined_call_operand.vmem [shape: bf16[8,128], index: 3, kind: input, shape index: {}]
  %s4 = inlined_call_operand.vmem [shape: bf16[8,128], index: 4, kind: output, shape index: {}]
  %s5 = sld [smem:[#allocation0]]
  $region26: #{_lambda_.24} parent=0
    _
  %s7 = ssub.s32 1, %s5
  %s8 = scalar_select 0, %s7, %s5
  // Predicated region
  $region2: #{_lambda_.24} parent=0 // pred_check
    _
  $region3: #{_lambda_.24} parent=0 // pred_check_branch
    %10 = sbr.rel (0) target = $region5
  $region4: #{_lambda_.24} parent=0 // pred_region
    _
  $region5: #{_lambda_.24} parent=0 // pred_fallthru
    _
  // Predicated region
  $region6: #{_lambda_.24} parent=0 // pred_check
    _
  $region7: #{_lambda_.24} parent=0 // pred_check_branch
    %12 = sbr.rel (0) target = $region9
  $region8: #{_lambda_.24} parent=0 // pred_region
    _
  $region9: #{_lambda_.24} parent=0 // pred_fallthru
    _
  // Predicated region
  $region10: #{_lambda_.24} parent=0 // pred_check
    _
  $region11: #{_lambda_.24} parent=0 // pred_check_branch
    %14 = sbr.rel (0) target = $region13
  $region12: #{_lambda_.24} parent=0 // pred_region
    _
  $region13: #{_lambda_.24} parent=0 // pred_fallthru
    _
  // Predicated region
  $region14: #{_lambda_.24} parent=0 // pred_check
    _
  $region15: #{_lambda_.24} parent=0 // pred_check_branch
    %16 = sbr.rel (0) target = $region17
  $region16: #{_lambda_.24} parent=0 // pred_region
    _
  $region17: #{_lambda_.24} parent=0 // pred_fallthru
    _
  %v18 = vld [vmem:[%s0] sm:$0xff]
  %v19 = vld [vmem:[%s1] sm:$0xf]
  %v20 = vld [vmem:[%s1 + $0x4] sm:$0xf]
  %v21 = vld [vmem:[%s1 + $0x8] sm:$0xf]
  %v22 = vld [vmem:[%s1 + $0xc] sm:$0xf]
  %v23 = vld [vmem:[%s1 + $0x10] sm:$0xf]
  %v24 = vld [vmem:[%s1 + $0x14] sm:$0xf]
  %v25 = vld [vmem:[%s1 + $0x18] sm:$0xf]
  %v26 = vld [vmem:[%s1 + $0x1c] sm:$0xf]
  %v27 = vld [vmem:[%s1 + $0x20] sm:$0xf]
  %v28 = vld [vmem:[%s1 + $0x24] sm:$0xf]
  %v29 = vld [vmem:[%s1 + $0x28] sm:$0xf]
  %v30 = vld [vmem:[%s1 + $0x2c] sm:$0xf]
  %v31 = vld [vmem:[%s1 + $0x30] sm:$0xf]
  %v32 = vld [vmem:[%s1 + $0x34] sm:$0xf]
  %v33 = vld [vmem:[%s1 + $0x38] sm:$0xf]
  %v34 = vld [vmem:[%s1 + $0x3c] sm:$0xf]
  %v35 = vld [vmem:[%s1 + $0x40] sm:$0xf]
  %v36 = vld [vmem:[%s1 + $0x44] sm:$0xf]
  %v37 = vld [vmem:[%s1 + $0x48] sm:$0xf]
  %v38 = vld [vmem:[%s1 + $0x4c] sm:$0xf]
  %v39 = vld [vmem:[%s1 + $0x50] sm:$0xf]
  %v40 = vld [vmem:[%s1 + $0x54] sm:$0xf]
  %v41 = vld [vmem:[%s1 + $0x58] sm:$0xf]
  %v42 = vld [vmem:[%s1 + $0x5c] sm:$0xf]
  %v43 = vld [vmem:[%s1 + $0x60] sm:$0xf]
  %v44 = vld [vmem:[%s1 + $0x64] sm:$0xf]
  %v45 = vld [vmem:[%s1 + $0x68] sm:$0xf]
  %v47 = vunpack.c.l.b16 %v18
  %v48 = vunpack.c.h.b16 %v18
  %v49 = vpack.c.b16 %v47, %v47
  %v50 = vpack.c.b16 %v48, %v48
  %v79 = vunpack.c.l.b16 %v19
  %v80 = vunpack.c.l.b16 %v20
  %v81 = vunpack.c.l.b16 %v21
  %v82 = vunpack.c.l.b16 %v22
  %v83 = vunpack.c.l.b16 %v23
  %v84 = vunpack.c.l.b16 %v24
  %v85 = vunpack.c.l.b16 %v25
  %v86 = vunpack.c.l.b16 %v26
  %v87 = vunpack.c.l.b16 %v27
  %v88 = vunpack.c.l.b16 %v28
  %v89 = vunpack.c.l.b16 %v29
  %v90 = vunpack.c.l.b16 %v30
  %v91 = vunpack.c.l.b16 %v31
  %v92 = vunpack.c.l.b16 %v32
  %v93 = vunpack.c.l.b16 %v33
  %v94 = vunpack.c.l.b16 %v34
  %v95 = vunpack.c.l.b16 %v35
  %v96 = vunpack.c.l.b16 %v36
  %v97 = vunpack.c.l.b16 %v37
  %v98 = vunpack.c.l.b16 %v38
  %v99 = vunpack.c.l.b16 %v39
  %v100 = vunpack.c.l.b16 %v40
  %v101 = vunpack.c.l.b16 %v41
  %v102 = vunpack.c.l.b16 %v42
  %v103 = vunpack.c.l.b16 %v43
  %v104 = vunpack.c.l.b16 %v44
  %v105 = vunpack.c.l.b16 %v45
  %v106 = vpack.c.b16 %v80, %v79
  %v107 = vpack.c.b16 %v82, %v81
  %v108 = vpack.c.b16 %v84, %v83
  %v109 = vpack.c.b16 %v86, %v85
  %v110 = vpack.c.b16 %v88, %v87
  %v111 = vpack.c.b16 %v90, %v89
  %v112 = vpack.c.b16 %v92, %v91
  %v113 = vpack.c.b16 %v94, %v93
  %v114 = vpack.c.b16 %v96, %v95
  %v115 = vpack.c.b16 %v98, %v97
  %v116 = vpack.c.b16 %v100, %v99
  %v117 = vpack.c.b16 %v102, %v101
  %v118 = vpack.c.b16 %v104, %v103
  %v119 = vpack.c.b16 %v105, %v105
  %vm133 = vcmask 719872
  %v135 = vsel %vm133, %v50, 0
  %vm137 = vcmask 1043456
  %v139 = vsel %vm137, %v119, 0
  %141 = vmatprep.subr.bf16.mxu0 0
  %142 = vmatpush1.bf16.msra.mxu0 %v106
  %143 = vmatprep.subr.bf16.mxu0 0
  %144 = vmatpush1.bf16.msra.mxu0 %v107
  %145 = vmatprep.subr.bf16.mxu0 0
  %146 = vmatpush1.bf16.msra.mxu0 %v108
  %147 = vmatprep.subr.bf16.mxu0 0
  %148 = vmatpush1.bf16.msra.mxu0 %v109
  %149 = vmatprep.subr.bf16.mxu0 0
  %150 = vmatpush1.bf16.msra.mxu0 %v110
  %151 = vmatprep.subr.bf16.mxu0 0
  %152 = vmatpush1.bf16.msra.mxu0 %v111
  %153 = vmatprep.subr.bf16.mxu0 0
  %154 = vmatpush1.bf16.msra.mxu0 %v112
  %155 = vmatprep.subr.bf16.mxu0 0
  %156 = vmatpush1.bf16.msra.mxu0 %v113
  %157 = vmatprep.subr.bf16.mxu0 0
  %158 = vmatpush1.bf16.msra.mxu0 %v114
  %159 = vmatprep.subr.bf16.mxu0 0
  %160 = vmatpush1.bf16.msra.mxu0 %v115
  %161 = vmatprep.subr.bf16.mxu0 0
  %162 = vmatpush1.bf16.msra.mxu0 %v116
  %163 = vmatprep.subr.bf16.mxu0 0
  %164 = vmatpush1.bf16.msra.mxu0 %v117
  %165 = vmatprep.subr.bf16.mxu0 0
  %166 = vmatpush1.bf16.msra.mxu0 %v118
  %167 = vmatprep.subr.bf16.mxu0 0
  %168 = vmatpush1.bf16.msra.mxu0 %v139
  %169 = vmatprep.subr.bf16.mxu0 0
  %170 = vmatpush1.bf16.msra.mxu0 0
  %171 = vmatprep.subr.bf16.mxu0 0
  %172 = vmatpush1.bf16.msra.mxu0 0
  %173 = vmatprep.mubr.bf16.mxu0 %v135
  %174 = vmatmul.mubr.bf16.gmra.mrb[0].mxu0 %v49
  %v175 = vpop.f32.mrb[0].mxu0
  %v176 = vadd.f32 0.0, %v175
  %v177 = vpop.f32.mrb[0].mxu0
  %v178 = vpop.f32.mrb[0].mxu0
  %v179 = vpop.f32.mrb[0].mxu0
  %180 = vdwg.mxu0
  %v181 = vld [vmem:[%s2] sm:$0xff]
  %183 = vset.pattern.permute.xlu0 1
  %184 = vperm.xlu0 %183, %v181
  %v185 = vpop.permute.xlu0 %184
  %v187 = vmul.f32 %v176, %v185
  %188 = vset.pattern.permute.xlu0 2
  %189 = vperm.xlu0 %188, %v181
  %v190 = vpop.permute.xlu0 %189
  %v192 = vadd.f32 %v187, %v190
  %v193 = vld [vmem:[%s3] sm:$0xf]
  %v194 = vunpack.c.l.bf16 %v193
  %v195 = vadd.f32 %v192, %v194
  %v196 = vpack.c.bf16 %v195, %v195
  %197 = vst [vmem:[%s4] sm:$0xf] %v196
  // Predicated region
  $region18: #{_lambda_.24} parent=0 // pred_check
    _
  $region19: #{_lambda_.24} parent=0 // pred_check_branch
    %199 = sbr.rel (0) target = $region21
  $region20: #{_lambda_.24} parent=0 // pred_region
    _
  $region21: #{_lambda_.24} parent=0 // pred_fallthru
    _
  // Predicated region
  $region22: #{_lambda_.24} parent=0 // pred_check
    _
  $region23: #{_lambda_.24} parent=0 // pred_check_branch
    %201 = sbr.rel (0) target = $region25
  $region24: #{_lambda_.24} parent=0 // pred_region
    _
  $region25: #{_lambda_.24} parent=0 // pred_fallthru
    _

// kernel: _lambda_.25
$region0: #{_lambda_.25}
  #allocation0 [shape = 'u32[]', space=smem, size = 0x4, offset = 0x4, fixed_abs, tag = 'smem constant byte address 0x4 - core index']
  #allocation1 [shape = 'u32[144,128]{1,0:T(1,128)}', space=vmem, size = 0x12000, scoped, tag = 'internal scratch']
  %s0 = inlined_call_operand.vmem [shape: bf16[128,8], index: 0, kind: input, shape index: {}]
  %s1 = inlined_call_operand.vmem [shape: bf16[32,128], index: 1, kind: input, shape index: {}]
  %s2 = inlined_call_operand.vmem [shape: f32[32,3], index: 2, kind: input, shape index: {}]
  %s3 = inlined_call_operand.vmem [shape: bf16[128,32], index: 3, kind: input, shape index: {}]
  %s4 = inlined_call_operand.vmem [shape: f32[128,3], index: 4, kind: input, shape index: {}]
  %s5 = inlined_call_operand.vmem [shape: bf16[128,8], index: 5, kind: output, shape index: {}]
  %s6 = sld [smem:[#allocation0]]
  $region30: #{_lambda_.25} parent=0
    _
  %s8 = ssub.s32 1, %s6
  %s9 = scalar_select 0, %s8, %s6
  // Predicated region
  $region2: #{_lambda_.25} parent=0 // pred_check
    _
  $region3: #{_lambda_.25} parent=0 // pred_check_branch
    %11 = sbr.rel (0) target = $region5
  $region4: #{_lambda_.25} parent=0 // pred_region
    _
  $region5: #{_lambda_.25} parent=0 // pred_fallthru
    _
  // Predicated region
  $region6: #{_lambda_.25} parent=0 // pred_check
    _
  $region7: #{_lambda_.25} parent=0 // pred_check_branch
    %13 = sbr.rel (0) target = $region9
  $region8: #{_lambda_.25} parent=0 // pred_region
    _
  $region9: #{_lambda_.25} parent=0 // pred_fallthru
    _
  // Predicated region
  $region10: #{_lambda_.25} parent=0 // pred_check
    _
  $region11: #{_lambda_.25} parent=0 // pred_check_branch
    %15 = sbr.rel (0) target = $region13
  $region12: #{_lambda_.25} parent=0 // pred_region
    _
  $region13: #{_lambda_.25} parent=0 // pred_fallthru
    _
  // Predicated region
  $region14: #{_lambda_.25} parent=0 // pred_check
    _
  $region15: #{_lambda_.25} parent=0 // pred_check_branch
    %17 = sbr.rel (0) target = $region17
  $region16: #{_lambda_.25} parent=0 // pred_region
    _
  $region17: #{_lambda_.25} parent=0 // pred_fallthru
    _
  // Predicated region
  $region18: #{_lambda_.25} parent=0 // pred_check
    _
  $region19: #{_lambda_.25} parent=0 // pred_check_branch
    %19 = sbr.rel (0) target = $region21
  $region20: #{_lambda_.25} parent=0 // pred_region
    _
  $region21: #{_lambda_.25} parent=0 // pred_fallthru
    _
  %v21 = vld [vmem:[%s0] sm:$0xf]
  %v22 = vld [vmem:[%s0 + $0x4] sm:$0xf]
  %v23 = vld [vmem:[%s0 + $0x8] sm:$0xf]
  %v24 = vld [vmem:[%s0 + $0xc] sm:$0xf]
  %v25 = vld [vmem:[%s0 + $0x10] sm:$0xf]
  %v26 = vld [vmem:[%s0 + $0x14] sm:$0xf]
  %v27 = vld [vmem:[%s0 + $0x18] sm:$0xf]
  %v28 = vld [vmem:[%s0 + $0x1c] sm:$0xf]
  %v29 = vld [vmem:[%s0 + $0x20] sm:$0xf]
  %v30 = vld [vmem:[%s0 + $0x24] sm:$0xf]
  %v31 = vld [vmem:[%s0 + $0x28] sm:$0xf]
  %v32 = vld [vmem:[%s0 + $0x2c] sm:$0xf]
  %v33 = vld [vmem:[%s0 + $0x30] sm:$0xf]
  %v34 = vld [vmem:[%s0 + $0x34] sm:$0xf]
  %v35 = vld [vmem:[%s0 + $0x38] sm:$0xf]
  %v36 = vld [vmem:[%s0 + $0x3c] sm:$0xf]
  %v37 = vld [vmem:[%s1] sm:$0xf]
  %v38 = vld [vmem:[%s1 + $0x4] sm:$0xf]
  %v39 = vld [vmem:[%s1 + $0x8] sm:$0xf]
  %v40 = vld [vmem:[%s1 + $0xc] sm:$0xf]
  %v45 = vunpack.c.l.b16 %v37
  %v46 = vunpack.c.l.b16 %v38
  %v47 = vunpack.c.l.b16 %v39
  %v48 = vunpack.c.l.b16 %v40
  %v49 = vpack.c.b16 %v46, %v45
  %v50 = vpack.c.b16 %v48, %v47
  %v69 = vunpack.c.l.b16 %v21
  %v70 = vunpack.c.l.b16 %v22
  %v71 = vunpack.c.l.b16 %v23
  %v72 = vunpack.c.l.b16 %v24
  %v73 = vunpack.c.l.b16 %v25
  %v74 = vunpack.c.l.b16 %v26
  %v75 = vunpack.c.l.b16 %v27
  %v76 = vunpack.c.l.b16 %v28
  %v77 = vunpack.c.l.b16 %v29
  %v78 = vunpack.c.l.b16 %v30
  %v79 = vunpack.c.l.b16 %v31
  %v80 = vunpack.c.l.b16 %v32
  %v81 = vunpack.c.l.b16 %v33
  %v82 = vunpack.c.l.b16 %v34
  %v83 = vunpack.c.l.b16 %v35
  %v84 = vunpack.c.l.b16 %v36
  %v85 = vpack.c.b16 %v70, %v69
  %v86 = vpack.c.b16 %v72, %v71
  %v87 = vpack.c.b16 %v74, %v73
  %v88 = vpack.c.b16 %v76, %v75
  %v89 = vpack.c.b16 %v78, %v77
  %v90 = vpack.c.b16 %v80, %v79
  %v91 = vpack.c.b16 %v82, %v81
  %v92 = vpack.c.b16 %v84, %v83
  %101 = vmatprep.subr.bf16.mxu0 0
  %102 = vmatpush1.bf16.msra.mxu0 %v85
  %103 = vmatprep.subr.bf16.mxu0 0
  %104 = vmatpush1.bf16.msra.mxu0 %v86
  %105 = vmatprep.subr.bf16.mxu0 0
  %106 = vmatpush1.bf16.msra.mxu0 %v87
  %107 = vmatprep.subr.bf16.mxu0 0
  %108 = vmatpush1.bf16.msra.mxu0 %v88
  %109 = vmatprep.subr.bf16.mxu0 0
  %110 = vmatpush1.bf16.msra.mxu0 %v89
  %111 = vmatprep.subr.bf16.mxu0 0
  %112 = vmatpush1.bf16.msra.mxu0 %v90
  %113 = vmatprep.subr.bf16.mxu0 0
  %114 = vmatpush1.bf16.msra.mxu0 %v91
  %115 = vmatprep.subr.bf16.mxu0 0
  %116 = vmatpush1.bf16.msra.mxu0 %v92
  %117 = vmatprep.subr.bf16.mxu0 0
  %118 = vmatpush1.bf16.msra.mxu0 0
  %119 = vmatprep.subr.bf16.mxu0 0
  %120 = vmatpush1.bf16.msra.mxu0 0
  %121 = vmatprep.subr.bf16.mxu0 0
  %122 = vmatpush1.bf16.msra.mxu0 0
  %123 = vmatprep.subr.bf16.mxu0 0
  %124 = vmatpush1.bf16.msra.mxu0 0
  %125 = vmatprep.subr.bf16.mxu0 0
  %126 = vmatpush1.bf16.msra.mxu0 0
  %127 = vmatprep.subr.bf16.mxu0 0
  %128 = vmatpush1.bf16.msra.mxu0 0
  %129 = vmatprep.subr.bf16.mxu0 0
  %130 = vmatpush1.bf16.msra.mxu0 0
  %131 = vmatprep.subr.bf16.mxu0 0
  %132 = vmatpush1.bf16.msra.mxu0 0
  %133 = vmatprep.mubr.bf16.mxu0 0
  %134 = vmatmul.mubr.bf16.gmra.mrb[0].mxu0 %v49
  %v135 = vpop.f32.mrb[0].mxu0
  %v136 = vadd.f32 0.0, %v135
  %v137 = vpop.f32.mrb[0].mxu0
  %v138 = vpop.f32.mrb[0].mxu0
  %v139 = vadd.f32 0.0, %v138
  %v140 = vpop.f32.mrb[0].mxu0
  %141 = vmatprep.mubr.bf16.mxu0 0
  %142 = vmatmul.mubr.bf16.gmra.mrb[0].mxu0 %v50
  %v143 = vpop.f32.mrb[0].mxu0
  %v144 = vadd.f32 0.0, %v143
  %v145 = vpop.f32.mrb[0].mxu0
  %v146 = vpop.f32.mrb[0].mxu0
  %v147 = vadd.f32 0.0, %v146
  %v148 = vpop.f32.mrb[0].mxu0
  %149 = vdwg.mxu0
  %v150 = vld [vmem:[%s2] sm:$0xff]
  %v151 = vld [vmem:[%s2 + $0x8] sm:$0xff]
  %v152 = vld [vmem:[%s2 + $0x10] sm:$0xff]
  %v153 = vld [vmem:[%s2 + $0x18] sm:$0xff]
  %155 = vset.pattern.permute.xlu0 1
  %156 = vperm.xlu0 %155, %v150
  %v157 = vpop.permute.xlu0 %156
  %160 = vset.pattern.permute.xlu0 1
  %161 = vperm.xlu0 %160, %v151
  %v162 = vpop.permute.xlu0 %161
  %165 = vset.pattern.permute.xlu0 1
  %166 = vperm.xlu0 %165, %v152
  %v167 = vpop.permute.xlu0 %166
  %170 = vset.pattern.permute.xlu0 1
  %171 = vperm.xlu0 %170, %v153
  %v172 = vpop.permute.xlu0 %171
  %v174 = vmul.f32 %v136, %v157
  %v175 = vmul.f32 %v139, %v162
  %v176 = vmul.f32 %v144, %v167
  %v177 = vmul.f32 %v147, %v172
  %178 = vset.pattern.permute.xlu0 2
  %179 = vperm.xlu0 %178, %v150
  %v180 = vpop.permute.xlu0 %179
  %182 = vset.pattern.permute.xlu0 2
  %183 = vperm.xlu0 %182, %v151
  %v184 = vpop.permute.xlu0 %183
  %186 = vset.pattern.permute.xlu0 2
  %187 = vperm.xlu0 %186, %v152
  %v188 = vpop.permute.xlu0 %187
  %190 = vset.pattern.permute.xlu0 2
  %191 = vperm.xlu0 %190, %v153
  %v192 = vpop.permute.xlu0 %191
  %v194 = vadd.f32 %v174, %v180
  %v195 = vadd.f32 %v175, %v184
  %v196 = vadd.f32 %v176, %v188
  %v197 = vadd.f32 %v177, %v192
  %v198 = vld [vmem:[%s3] sm:$0xf]
  %v199 = vld [vmem:[%s3 + $0x4] sm:$0xf]
  %v200 = vld [vmem:[%s3 + $0x8] sm:$0xf]
  %v201 = vld [vmem:[%s3 + $0xc] sm:$0xf]
  %v202 = vld [vmem:[%s3 + $0x10] sm:$0xf]
  %v203 = vld [vmem:[%s3 + $0x14] sm:$0xf]
  %v204 = vld [vmem:[%s3 + $0x18] sm:$0xf]
  %v205 = vld [vmem:[%s3 + $0x1c] sm:$0xf]
  %v206 = vld [vmem:[%s3 + $0x20] sm:$0xf]
  %v207 = vld [vmem:[%s3 + $0x24] sm:$0xf]
  %v208 = vld [vmem:[%s3 + $0x28] sm:$0xf]
  %v209 = vld [vmem:[%s3 + $0x2c] sm:$0xf]
  %v210 = vld [vmem:[%s3 + $0x30] sm:$0xf]
  %v211 = vld [vmem:[%s3 + $0x34] sm:$0xf]
  %v212 = vld [vmem:[%s3 + $0x38] sm:$0xf]
  %v213 = vld [vmem:[%s3 + $0x3c] sm:$0xf]
  %v214 = vpack.c.bf16 %v195, %v194
  %v215 = vpack.c.bf16 %v197, %v196
  %v216 = vld [vmem:[%s4] sm:$0xff]
  %v217 = vld [vmem:[%s4 + $0x8] sm:$0xff]
  %v218 = vld [vmem:[%s4 + $0x10] sm:$0xff]
  %v219 = vld [vmem:[%s4 + $0x18] sm:$0xff]
  %v220 = vld [vmem:[%s4 + $0x20] sm:$0xff]
  %v221 = vld [vmem:[%s4 + $0x28] sm:$0xff]
  %v222 = vld [vmem:[%s4 + $0x30] sm:$0xff]
  %v223 = vld [vmem:[%s4 + $0x38] sm:$0xff]
  %v224 = vld [vmem:[%s4 + $0x40] sm:$0xff]
  %v225 = vld [vmem:[%s4 + $0x48] sm:$0xff]
  %v226 = vld [vmem:[%s4 + $0x50] sm:$0xff]
  %v227 = vld [vmem:[%s4 + $0x58] sm:$0xff]
  %v228 = vld [vmem:[%s4 + $0x60] sm:$0xff]
  %v229 = vld [vmem:[%s4 + $0x68] sm:$0xff]
  %v230 = vld [vmem:[%s4 + $0x70] sm:$0xff]
  %v231 = vld [vmem:[%s4 + $0x78] sm:$0xff]
  %233 = vset.pattern.permute.xlu0 0
  %234 = vperm.xlu0 %233, %v216
  %v235 = vpop.permute.xlu0 %234
  %238 = vset.pattern.permute.xlu0 0
  %239 = vperm.xlu0 %238, %v217
  %v240 = vpop.permute.xlu0 %239
  %243 = vset.pattern.permute.xlu0 0
  %244 = vperm.xlu0 %243, %v218
  %v245 = vpop.permute.xlu0 %244
  %248 = vset.pattern.permute.xlu0 0
  %249 = vperm.xlu0 %248, %v219
  %v250 = vpop.permute.xlu0 %249
  %253 = vset.pattern.permute.xlu0 0
  %254 = vperm.xlu0 %253, %v220
  %v255 = vpop.permute.xlu0 %254
  %258 = vset.pattern.permute.xlu0 0
  %259 = vperm.xlu0 %258, %v221
  %v260 = vpop.permute.xlu0 %259
  %263 = vset.pattern.permute.xlu0 0
  %264 = vperm.xlu0 %263, %v222
  %v265 = vpop.permute.xlu0 %264
  %268 = vset.pattern.permute.xlu0 0
  %269 = vperm.xlu0 %268, %v223
  %v270 = vpop.permute.xlu0 %269
  %273 = vset.pattern.permute.xlu0 0
  %274 = vperm.xlu0 %273, %v224
  %v275 = vpop.permute.xlu0 %274
  %278 = vset.pattern.permute.xlu0 0
  %279 = vperm.xlu0 %278, %v225
  %v280 = vpop.permute.xlu0 %279
  %283 = vset.pattern.permute.xlu0 0
  %284 = vperm.xlu0 %283, %v226
  %v285 = vpop.permute.xlu0 %284
  %288 = vset.pattern.permute.xlu0 0
  %289 = vperm.xlu0 %288, %v227
  %v290 = vpop.permute.xlu0 %289
  %293 = vset.pattern.permute.xlu0 0
  %294 = vperm.xlu0 %293, %v228
  %v295 = vpop.permute.xlu0 %294
  %298 = vset.pattern.permute.xlu0 0
  %299 = vperm.xlu0 %298, %v229
  %v300 = vpop.permute.xlu0 %299
  %303 = vset.pattern.permute.xlu0 0
  %304 = vperm.xlu0 %303, %v230
  %v305 = vpop.permute.xlu0 %304
  %308 = vset.pattern.permute.xlu0 0
  %309 = vperm.xlu0 %308, %v231
  %v310 = vpop.permute.xlu0 %309
  %v328 = vunpack.c.l.b16 %v198
  %v329 = vunpack.c.l.b16 %v199
  %v330 = vunpack.c.l.b16 %v200
  %v331 = vunpack.c.l.b16 %v201
  %v332 = vunpack.c.l.b16 %v202
  %v333 = vunpack.c.l.b16 %v203
  %v334 = vunpack.c.l.b16 %v204
  %v335 = vunpack.c.l.b16 %v205
  %v336 = vunpack.c.l.b16 %v206
  %v337 = vunpack.c.l.b16 %v207
  %v338 = vunpack.c.l.b16 %v208
  %v339 = vunpack.c.l.b16 %v209
  %v340 = vunpack.c.l.b16 %v210
  %v341 = vunpack.c.l.b16 %v211
  %v342 = vunpack.c.l.b16 %v212
  %v343 = vunpack.c.l.b16 %v213
  %v344 = vpack.c.b16 %v329, %v328
  %v345 = vpack.c.b16 %v331, %v330
  %v346 = vpack.c.b16 %v333, %v332
  %v347 = vpack.c.b16 %v335, %v334
  %v348 = vpack.c.b16 %v337, %v336
  %v349 = vpack.c.b16 %v339, %v338
  %v350 = vpack.c.b16 %v341, %v340
  %v351 = vpack.c.b16 %v343, %v342
  %vm352 = vcmask 261120
  %v354 = vsel %vm352, %v344, 0
  %v357 = vsel %vm352, %v345, 0
  %v360 = vsel %vm352, %v346, 0
  %v363 = vsel %vm352, %v347, 0
  %v366 = vsel %vm352, %v348, 0
  %v369 = vsel %vm352, %v349, 0
  %v372 = vsel %vm352, %v350, 0
  %v375 = vsel %vm352, %v351, 0
  %377 = vmatprep.subr.bf16.mxu0 0
  %378 = vmatpush1.bf16.msra.mxu0 %v214
  %379 = vmatprep.subr.bf16.mxu0 0
  %380 = vmatpush1.bf16.msra.mxu0 %v215
  %381 = vmatprep.subr.bf16.mxu0 0
  %382 = vmatpush1.bf16.msra.mxu0 0
  %383 = vmatprep.subr.bf16.mxu0 0
  %384 = vmatpush1.bf16.msra.mxu0 0
  %385 = vmatprep.subr.bf16.mxu0 0
  %386 = vmatpush1.bf16.msra.mxu0 0
  %387 = vmatprep.subr.bf16.mxu0 0
  %388 = vmatpush1.bf16.msra.mxu0 0
  %389 = vmatprep.subr.bf16.mxu0 0
  %390 = vmatpush1.bf16.msra.mxu0 0
  %391 = vmatprep.subr.bf16.mxu0 0
  %392 = vmatpush1.bf16.msra.mxu0 0
  %393 = vmatprep.subr.bf16.mxu0 0
  %394 = vmatpush1.bf16.msra.mxu0 0
  %395 = vmatprep.subr.bf16.mxu0 0
  %396 = vmatpush1.bf16.msra.mxu0 0
  %397 = vmatprep.subr.bf16.mxu0 0
  %398 = vmatpush1.bf16.msra.mxu0 0
  %399 = vmatprep.subr.bf16.mxu0 0
  %400 = vmatpush1.bf16.msra.mxu0 0
  %401 = vmatprep.subr.bf16.mxu0 0
  %402 = vmatpush1.bf16.msra.mxu0 0
  %403 = vmatprep.subr.bf16.mxu0 0
  %404 = vmatpush1.bf16.msra.mxu0 0
  %405 = vmatprep.subr.bf16.mxu0 0
  %406 = vmatpush1.bf16.msra.mxu0 0
  %407 = vmatprep.subr.bf16.mxu0 0
  %408 = vmatpush1.bf16.msra.mxu0 0
  %409 = vmatprep.mubr.bf16.mxu0 0
  %410 = vmatmul.mubr.bf16.gmra.mrb[0].mxu0 %v354
  %v411 = vpop.f32.mrb[0].mxu0
  %v412 = vadd.f32 %v235, %v411
  %v413 = vpop.f32.mrb[0].mxu0
  %v414 = vpop.f32.mrb[0].mxu0
  %v415 = vadd.f32 %v240, %v414
  %v416 = vpop.f32.mrb[0].mxu0
  %417 = vmatprep.mubr.bf16.mxu0 0
  %418 = vmatmul.mubr.bf16.gmra.mrb[0].mxu0 %v357
  %v419 = vpop.f32.mrb[0].mxu0
  %v420 = vadd.f32 %v245, %v419
  %v421 = vpop.f32.mrb[0].mxu0
  %v422 = vpop.f32.mrb[0].mxu0
  %v423 = vadd.f32 %v250, %v422
  %v424 = vpop.f32.mrb[0].mxu0
  %425 = vmatprep.mubr.bf16.mxu0 0
  %426 = vmatmul.mubr.bf16.gmra.mrb[0].mxu0 %v360
  %v427 = vpop.f32.mrb[0].mxu0
  %v428 = vadd.f32 %v255, %v427
  %v429 = vpop.f32.mrb[0].mxu0
  %v430 = vpop.f32.mrb[0].mxu0
  %v431 = vadd.f32 %v260, %v430
  %v432 = vpop.f32.mrb[0].mxu0
  %433 = vmatprep.mubr.bf16.mxu0 0
  %434 = vmatmul.mubr.bf16.gmra.mrb[0].mxu0 %v363
  %v435 = vpop.f32.mrb[0].mxu0
  %v436 = vadd.f32 %v265, %v435
  %v437 = vpop.f32.mrb[0].mxu0
  %v438 = vpop.f32.mrb[0].mxu0
  %v439 = vadd.f32 %v270, %v438
  %v440 = vpop.f32.mrb[0].mxu0
  %441 = vmatprep.mubr.bf16.mxu0 0
  %442 = vmatmul.mubr.bf16.gmra.mrb[0].mxu0 %v366
  %v443 = vpop.f32.mrb[0].mxu0
  %v444 = vadd.f32 %v275, %v443
  %v445 = vpop.f32.mrb[0].mxu0
  %v446 = vpop.f32.mrb[0].mxu0
  %v447 = vadd.f32 %v280, %v446
  %v448 = vpop.f32.mrb[0].mxu0
  %449 = vmatprep.mubr.bf16.mxu0 0
  %450 = vmatmul.mubr.bf16.gmra.mrb[0].mxu0 %v369
  %v451 = vpop.f32.mrb[0].mxu0
  %v452 = vadd.f32 %v285, %v451
  %v453 = vpop.f32.mrb[0].mxu0
  %v454 = vpop.f32.mrb[0].mxu0
  %v455 = vadd.f32 %v290, %v454
  %v456 = vpop.f32.mrb[0].mxu0
  %457 = vmatprep.mubr.bf16.mxu0 0
  %458 = vmatmul.mubr.bf16.gmra.mrb[0].mxu0 %v372
  %v459 = vpop.f32.mrb[0].mxu0
  %v460 = vadd.f32 %v295, %v459
  %v461 = vpop.f32.mrb[0].mxu0
  %v462 = vpop.f32.mrb[0].mxu0
  %v463 = vadd.f32 %v300, %v462
  %v464 = vpop.f32.mrb[0].mxu0
  %465 = vmatprep.mubr.bf16.mxu0 0
  %466 = vmatmul.mubr.bf16.gmra.mrb[0].mxu0 %v375
  %v467 = vpop.f32.mrb[0].mxu0
  %v468 = vadd.f32 %v305, %v467
  %v469 = vpop.f32.mrb[0].mxu0
  %v470 = vpop.f32.mrb[0].mxu0
  %v471 = vadd.f32 %v310, %v470
  %v472 = vpop.f32.mrb[0].mxu0
  %473 = vdwg.mxu0
  %vm474 = vcmp.ge.f32.partialorder %v412, 0.0
  %vm475 = vcmp.ge.f32.partialorder %v415, 0.0
  %vm476 = vcmp.ge.f32.partialorder %v420, 0.0
  %vm477 = vcmp.ge.f32.partialorder %v423, 0.0
  %vm478 = vcmp.ge.f32.partialorder %v428, 0.0
  %vm479 = vcmp.ge.f32.partialorder %v431, 0.0
  %vm480 = vcmp.ge.f32.partialorder %v436, 0.0
  %vm481 = vcmp.ge.f32.partialorder %v439, 0.0
  %vm482 = vcmp.ge.f32.partialorder %v444, 0.0
  %vm483 = vcmp.ge.f32.partialorder %v447, 0.0
  %vm484 = vcmp.ge.f32.partialorder %v452, 0.0
  %vm485 = vcmp.ge.f32.partialorder %v455, 0.0
  %vm486 = vcmp.ge.f32.partialorder %v460, 0.0
  %vm487 = vcmp.ge.f32.partialorder %v463, 0.0
  %vm488 = vcmp.ge.f32.partialorder %v468, 0.0
  %vm489 = vcmp.ge.f32.partialorder %v471, 0.0
  %v490 = vmul.f32 %v412, 0.01
  %v491 = vmul.f32 %v415, 0.01
  %v492 = vmul.f32 %v420, 0.01
  %v493 = vmul.f32 %v423, 0.01
  %v494 = vmul.f32 %v428, 0.01
  %v495 = vmul.f32 %v431, 0.01
  %v496 = vmul.f32 %v436, 0.01
  %v497 = vmul.f32 %v439, 0.01
  %v498 = vmul.f32 %v444, 0.01
  %v499 = vmul.f32 %v447, 0.01
  %v500 = vmul.f32 %v452, 0.01
  %v501 = vmul.f32 %v455, 0.01
  %v502 = vmul.f32 %v460, 0.01
  %v503 = vmul.f32 %v463, 0.01
  %v504 = vmul.f32 %v468, 0.01
  %v505 = vmul.f32 %v471, 0.01
  %v506 = vsel %vm474, %v412, %v490
  %v507 = vsel %vm475, %v415, %v491
  %v508 = vsel %vm476, %v420, %v492
  %v509 = vsel %vm477, %v423, %v493
  %v510 = vsel %vm478, %v428, %v494
  %v511 = vsel %vm479, %v431, %v495
  %v512 = vsel %vm480, %v436, %v496
  %v513 = vsel %vm481, %v439, %v497
  %v514 = vsel %vm482, %v444, %v498
  %v515 = vsel %vm483, %v447, %v499
  %v516 = vsel %vm484, %v452, %v500
  %v517 = vsel %vm485, %v455, %v501
  %v518 = vsel %vm486, %v460, %v502
  %v519 = vsel %vm487, %v463, %v503
  %v520 = vsel %vm488, %v468, %v504
  %v521 = vsel %vm489, %v471, %v505
  %522 = vset.pattern.permute.xlu0 1
  %523 = vperm.xlu0 %522, %v216
  %v524 = vpop.permute.xlu0 %523
  %526 = vset.pattern.permute.xlu0 1
  %527 = vperm.xlu0 %526, %v217
  %v528 = vpop.permute.xlu0 %527
  %530 = vset.pattern.permute.xlu0 1
  %531 = vperm.xlu0 %530, %v218
  %v532 = vpop.permute.xlu0 %531
  %534 = vset.pattern.permute.xlu0 1
  %535 = vperm.xlu0 %534, %v219
  %v536 = vpop.permute.xlu0 %535
  %538 = vset.pattern.permute.xlu0 1
  %539 = vperm.xlu0 %538, %v220
  %v540 = vpop.permute.xlu0 %539
  %542 = vset.pattern.permute.xlu0 1
  %543 = vperm.xlu0 %542, %v221
  %v544 = vpop.permute.xlu0 %543
  %546 = vset.pattern.permute.xlu0 1
  %547 = vperm.xlu0 %546, %v222
  %v548 = vpop.permute.xlu0 %547
  %550 = vset.pattern.permute.xlu0 1
  %551 = vperm.xlu0 %550, %v223
  %v552 = vpop.permute.xlu0 %551
  %554 = vset.pattern.permute.xlu0 1
  %555 = vperm.xlu0 %554, %v224
  %v556 = vpop.permute.xlu0 %555
  %558 = vset.pattern.permute.xlu0 1
  %559 = vperm.xlu0 %558, %v225
  %v560 = vpop.permute.xlu0 %559
  %562 = vset.pattern.permute.xlu0 1
  %563 = vperm.xlu0 %562, %v226
  %v564 = vpop.permute.xlu0 %563
  %566 = vset.pattern.permute.xlu0 1
  %567 = vperm.xlu0 %566, %v227
  %v568 = vpop.permute.xlu0 %567
  %570 = vset.pattern.permute.xlu0 1
  %571 = vperm.xlu0 %570, %v228
  %v572 = vpop.permute.xlu0 %571
  %574 = vset.pattern.permute.xlu0 1
  %575 = vperm.xlu0 %574, %v229
  %v576 = vpop.permute.xlu0 %575
  %578 = vset.pattern.permute.xlu0 1
  %579 = vperm.xlu0 %578, %v230
  %v580 = vpop.permute.xlu0 %579
  %582 = vset.pattern.permute.xlu0 1
  %583 = vperm.xlu0 %582, %v231
  %v584 = vpop.permute.xlu0 %583
  %v586 = vmul.f32 %v506, %v524
  %v587 = vmul.f32 %v507, %v528
  %v588 = vmul.f32 %v508, %v532
  %v589 = vmul.f32 %v509, %v536
  %v590 = vmul.f32 %v510, %v540
  %v591 = vmul.f32 %v511, %v544
  %v592 = vmul.f32 %v512, %v548
  %v593 = vmul.f32 %v513, %v552
  %v594 = vmul.f32 %v514, %v556
  %v595 = vmul.f32 %v515, %v560
  %v596 = vmul.f32 %v516, %v564
  %v597 = vmul.f32 %v517, %v568
  %v598 = vmul.f32 %v518, %v572
  %v599 = vmul.f32 %v519, %v576
  %v600 = vmul.f32 %v520, %v580
  %v601 = vmul.f32 %v521, %v584
  %602 = vset.pattern.permute.xlu0 2
  %603 = vperm.xlu0 %602, %v216
  %v604 = vpop.permute.xlu0 %603
  %606 = vset.pattern.permute.xlu0 2
  %607 = vperm.xlu0 %606, %v217
  %v608 = vpop.permute.xlu0 %607
  %610 = vset.pattern.permute.xlu0 2
  %611 = vperm.xlu0 %610, %v218
  %v612 = vpop.permute.xlu0 %611
  %614 = vset.pattern.permute.xlu0 2
  %615 = vperm.xlu0 %614, %v219
  %v616 = vpop.permute.xlu0 %615
  %618 = vset.pattern.permute.xlu0 2
  %619 = vperm.xlu0 %618, %v220
  %v620 = vpop.permute.xlu0 %619
  %622 = vset.pattern.permute.xlu0 2
  %623 = vperm.xlu0 %622, %v221
  %v624 = vpop.permute.xlu0 %623
  %626 = vset.pattern.permute.xlu0 2
  %627 = vperm.xlu0 %626, %v222
  %v628 = vpop.permute.xlu0 %627
  %630 = vset.pattern.permute.xlu0 2
  %631 = vperm.xlu0 %630, %v223
  %v632 = vpop.permute.xlu0 %631
  %634 = vset.pattern.permute.xlu0 2
  %635 = vperm.xlu0 %634, %v224
  %v636 = vpop.permute.xlu0 %635
  %638 = vset.pattern.permute.xlu0 2
  %639 = vperm.xlu0 %638, %v225
  %v640 = vpop.permute.xlu0 %639
  %642 = vset.pattern.permute.xlu0 2
  %643 = vperm.xlu0 %642, %v226
  %v644 = vpop.permute.xlu0 %643
  %646 = vset.pattern.permute.xlu0 2
  %647 = vperm.xlu0 %646, %v227
  %v648 = vpop.permute.xlu0 %647
  %650 = vset.pattern.permute.xlu0 2
  %651 = vperm.xlu0 %650, %v228
  %v652 = vpop.permute.xlu0 %651
  %654 = vset.pattern.permute.xlu0 2
  %655 = vperm.xlu0 %654, %v229
  %v656 = vpop.permute.xlu0 %655
  %658 = vset.pattern.permute.xlu0 2
  %659 = vperm.xlu0 %658, %v230
  %v660 = vpop.permute.xlu0 %659
  %662 = vset.pattern.permute.xlu0 2
  %663 = vperm.xlu0 %662, %v231
  %v664 = vpop.permute.xlu0 %663
  %v666 = vadd.f32 %v586, %v604
  %v667 = vadd.f32 %v587, %v608
  %v668 = vadd.f32 %v588, %v612
  %v669 = vadd.f32 %v589, %v616
  %v670 = vadd.f32 %v590, %v620
  %v671 = vadd.f32 %v591, %v624
  %v672 = vadd.f32 %v592, %v628
  %v673 = vadd.f32 %v593, %v632
  %v674 = vadd.f32 %v594, %v636
  %v675 = vadd.f32 %v595, %v640
  %v676 = vadd.f32 %v596, %v644
  %v677 = vadd.f32 %v597, %v648
  %v678 = vadd.f32 %v598, %v652
  %v679 = vadd.f32 %v599, %v656
  %v680 = vadd.f32 %v600, %v660
  %v681 = vadd.f32 %v601, %v664
  %v682 = vpack.c.bf16 %v667, %v666
  %v683 = vpack.c.bf16 %v669, %v668
  %v684 = vpack.c.bf16 %v671, %v670
  %v685 = vpack.c.bf16 %v673, %v672
  %v686 = vpack.c.bf16 %v675, %v674
  %v687 = vpack.c.bf16 %v677, %v676
  %v688 = vpack.c.bf16 %v679, %v678
  %v689 = vpack.c.bf16 %v681, %v680
  %v698 = vunpack.c.l.b16 %v682
  %v699 = vunpack.c.h.b16 %v682
  %v700 = vunpack.c.l.b16 %v683
  %v701 = vunpack.c.h.b16 %v683
  %v702 = vunpack.c.l.b16 %v684
  %v703 = vunpack.c.h.b16 %v684
  %v704 = vunpack.c.l.b16 %v685
  %v705 = vunpack.c.h.b16 %v685
  %v706 = vunpack.c.l.b16 %v686
  %v707 = vunpack.c.h.b16 %v686
  %v708 = vunpack.c.l.b16 %v687
  %v709 = vunpack.c.h.b16 %v687
  %v710 = vunpack.c.l.b16 %v688
  %v711 = vunpack.c.h.b16 %v688
  %v712 = vunpack.c.l.b16 %v689
  %v713 = vunpack.c.h.b16 %v689
  %v714 = vpack.c.b16 %v698, %v698
  %v715 = vpack.c.b16 %v699, %v699
  %v716 = vpack.c.b16 %v700, %v700
  %v717 = vpack.c.b16 %v701, %v701
  %v718 = vpack.c.b16 %v702, %v702
  %v719 = vpack.c.b16 %v703, %v703
  %v720 = vpack.c.b16 %v704, %v704
  %v721 = vpack.c.b16 %v705, %v705
  %v722 = vpack.c.b16 %v706, %v706
  %v723 = vpack.c.b16 %v707, %v707
  %v724 = vpack.c.b16 %v708, %v708
  %v725 = vpack.c.b16 %v709, %v709
  %v726 = vpack.c.b16 %v710, %v710
  %v727 = vpack.c.b16 %v711, %v711
  %v728 = vpack.c.b16 %v712, %v712
  %v729 = vpack.c.b16 %v713, %v713
  %vm746 = vcmask 60416
  %747 = vst.msk [vmem:[%s5] sm:$0xf] %vm746, %v714
  %748 = vst.msk [vmem:[%s5 + $0x4] sm:$0xf] %vm746, %v715
  %749 = vst.msk [vmem:[%s5 + $0x8] sm:$0xf] %vm746, %v716
  %750 = vst.msk [vmem:[%s5 + $0xc] sm:$0xf] %vm746, %v717
  %751 = vst.msk [vmem:[%s5 + $0x10] sm:$0xf] %vm746, %v718
  %752 = vst.msk [vmem:[%s5 + $0x14] sm:$0xf] %vm746, %v719
  %753 = vst.msk [vmem:[%s5 + $0x18] sm:$0xf] %vm746, %v720
  %754 = vst.msk [vmem:[%s5 + $0x1c] sm:$0xf] %vm746, %v721
  %755 = vst.msk [vmem:[%s5 + $0x20] sm:$0xf] %vm746, %v722
  %756 = vst.msk [vmem:[%s5 + $0x24] sm:$0xf] %vm746, %v723
  %757 = vst.msk [vmem:[%s5 + $0x28] sm:$0xf] %vm746, %v724
  %758 = vst.msk [vmem:[%s5 + $0x2c] sm:$0xf] %vm746, %v725
  %759 = vst.msk [vmem:[%s5 + $0x30] sm:$0xf] %vm746, %v726
  %760 = vst.msk [vmem:[%s5 + $0x34] sm:$0xf] %vm746, %v727
  %761 = vst.msk [vmem:[%s5 + $0x38] sm:$0xf] %vm746, %v728
  %762 = vst.msk [vmem:[%s5 + $0x3c] sm:$0xf] %vm746, %v729
  // Predicated region
  $region22: #{_lambda_.25} parent=0 // pred_check
    _
  $region23: #{_lambda_.25} parent=0 // pred_check_branch
    %764 = sbr.rel (0) target = $region25
  $region24: #{_lambda_.25} parent=0 // pred_region
    _
  $region25: #{_lambda_.25} parent=0 // pred_fallthru
    _
  // Predicated region
  $region26: #{_lambda_.25} parent=0 // pred_check
    _
  $region27: #{_lambda_.25} parent=0 // pred_check_branch
    %766 = sbr.rel (0) target = $region29
  $region28: #{_lambda_.25} parent=0 // pred_region
    _
  $region29: #{_lambda_.25} parent=0 // pred_fallthru
    _

// kernel: _lambda_.26
$region0: #{_lambda_.26}
  #allocation0 [shape = 'u32[]', space=smem, size = 0x4, offset = 0x4, fixed_abs, tag = 'smem constant byte address 0x4 - core index']
  #allocation1 [shape = 'u32[144,128]{1,0:T(1,128)}', space=vmem, size = 0x12000, scoped, tag = 'internal scratch']
  %s0 = inlined_call_operand.vmem [shape: bf16[8,8], index: 0, kind: input, shape index: {}]
  %s1 = inlined_call_operand.vmem [shape: bf16[8,128], index: 1, kind: input, shape index: {}]
  %s2 = inlined_call_operand.vmem [shape: f32[8,3], index: 2, kind: input, shape index: {}]
  %s3 = inlined_call_operand.vmem [shape: bf16[8,128], index: 3, kind: output, shape index: {}]
  %s4 = sld [smem:[#allocation0]]
  $region22: #{_lambda_.26} parent=0
    _
  %s6 = ssub.s32 1, %s4
  %s7 = scalar_select 0, %s6, %s4
  // Predicated region
  $region2: #{_lambda_.26} parent=0 // pred_check
    _
  $region3: #{_lambda_.26} parent=0 // pred_check_branch
    %9 = sbr.rel (0) target = $region5
  $region4: #{_lambda_.26} parent=0 // pred_region
    _
  $region5: #{_lambda_.26} parent=0 // pred_fallthru
    _
  // Predicated region
  $region6: #{_lambda_.26} parent=0 // pred_check
    _
  $region7: #{_lambda_.26} parent=0 // pred_check_branch
    %11 = sbr.rel (0) target = $region9
  $region8: #{_lambda_.26} parent=0 // pred_region
    _
  $region9: #{_lambda_.26} parent=0 // pred_fallthru
    _
  // Predicated region
  $region10: #{_lambda_.26} parent=0 // pred_check
    _
  $region11: #{_lambda_.26} parent=0 // pred_check_branch
    %13 = sbr.rel (0) target = $region13
  $region12: #{_lambda_.26} parent=0 // pred_region
    _
  $region13: #{_lambda_.26} parent=0 // pred_fallthru
    _
  %v15 = vld [vmem:[%s0] sm:$0xf]
  %v16 = vld [vmem:[%s1] sm:$0xf]
  %vm17 = vcmask 64512
  %v19 = vsel %vm17, %v15, 0
  %vm21 = vcmask 1043456
  %v23 = vsel %vm21, %v16, 0
  %25 = vmatprep.subr.bf16.mxu0 0
  %26 = vmatpush1.bf16.msra.mxu0 %v23
  %27 = vmatprep.subr.bf16.mxu0 0
  %28 = vmatpush1.bf16.msra.mxu0 0
  %29 = vmatprep.subr.bf16.mxu0 0
  %30 = vmatpush1.bf16.msra.mxu0 0
  %31 = vmatprep.subr.bf16.mxu0 0
  %32 = vmatpush1.bf16.msra.mxu0 0
  %33 = vmatprep.subr.bf16.mxu0 0
  %34 = vmatpush1.bf16.msra.mxu0 0
  %35 = vmatprep.subr.bf16.mxu0 0
  %36 = vmatpush1.bf16.msra.mxu0 0
  %37 = vmatprep.subr.bf16.mxu0 0
  %38 = vmatpush1.bf16.msra.mxu0 0
  %39 = vmatprep.subr.bf16.mxu0 0
  %40 = vmatpush1.bf16.msra.mxu0 0
  %41 = vmatprep.subr.bf16.mxu0 0
  %42 = vmatpush1.bf16.msra.mxu0 0
  %43 = vmatprep.subr.bf16.mxu0 0
  %44 = vmatpush1.bf16.msra.mxu0 0
  %45 = vmatprep.subr.bf16.mxu0 0
  %46 = vmatpush1.bf16.msra.mxu0 0
  %47 = vmatprep.subr.bf16.mxu0 0
  %48 = vmatpush1.bf16.msra.mxu0 0
  %49 = vmatprep.subr.bf16.mxu0 0
  %50 = vmatpush1.bf16.msra.mxu0 0
  %51 = vmatprep.subr.bf16.mxu0 0
  %52 = vmatpush1.bf16.msra.mxu0 0
  %53 = vmatprep.subr.bf16.mxu0 0
  %54 = vmatpush1.bf16.msra.mxu0 0
  %55 = vmatprep.subr.bf16.mxu0 0
  %56 = vmatpush1.bf16.msra.mxu0 0
  %57 = vmatprep.mubr.bf16.mxu0 0
  %58 = vmatmul.mubr.bf16.gmra.mrb[0].mxu0 %v19
  %v59 = vpop.f32.mrb[0].mxu0
  %v60 = vadd.f32 0.0, %v59
  %v61 = vpop.f32.mrb[0].mxu0
  %v62 = vpop.f32.mrb[0].mxu0
  %v63 = vpop.f32.mrb[0].mxu0
  %64 = vdwg.mxu0
  %v65 = vld [vmem:[%s2] sm:$0xff]
  %67 = vset.pattern.permute.xlu0 1
  %68 = vperm.xlu0 %67, %v65
  %v69 = vpop.permute.xlu0 %68
  %v71 = vmul.f32 %v60, %v69
  %72 = vset.pattern.permute.xlu0 2
  %73 = vperm.xlu0 %72, %v65
  %v74 = vpop.permute.xlu0 %73
  %v76 = vadd.f32 %v71, %v74
  %v77 = vpack.c.bf16 %v76, %v76
  %78 = vst [vmem:[%s3] sm:$0xf] %v77
  // Predicated region
  $region14: #{_lambda_.26} parent=0 // pred_check
    _
  $region15: #{_lambda_.26} parent=0 // pred_check_branch
    %80 = sbr.rel (0) target = $region17
  $region16: #{_lambda_.26} parent=0 // pred_region
    _
  $region17: #{_lambda_.26} parent=0 // pred_fallthru
    _
  // Predicated region
  $region18: #{_lambda_.26} parent=0 // pred_check
    _
  $region19: #{_lambda_.26} parent=0 // pred_check_branch
    %82 = sbr.rel (0) target = $region21
  $region20: #{_lambda_.26} parent=0 // pred_region
    _
  $region21: #{_lambda_.26} parent=0 // pred_fallthru
    _

// kernel: _lambda_.27
$region0: #{_lambda_.27}
  #allocation0 [shape = 'u32[]', space=smem, size = 0x4, offset = 0x4, fixed_abs, tag = 'smem constant byte address 0x4 - core index']
  #allocation1 [shape = 'u32[144,128]{1,0:T(1,128)}', space=vmem, size = 0x12000, scoped, tag = 'internal scratch']
  %s0 = inlined_call_operand.vmem [shape: bf16[64,64], index: 0, kind: input, shape index: {}]
  %s1 = inlined_call_operand.vmem [shape: bf16[64,128], index: 1, kind: input, shape index: {}]
  %s2 = inlined_call_operand.vmem [shape: f32[64,3], index: 2, kind: input, shape index: {}]
  %s3 = inlined_call_operand.vmem [shape: bf16[64,128], index: 3, kind: output, shape index: {}]
  %s4 = sld [smem:[#allocation0]]
  $region22: #{_lambda_.27} parent=0
    _
  %s6 = ssub.s32 1, %s4
  %s7 = scalar_select 0, %s6, %s4
  // Predicated region
  $region2: #{_lambda_.27} parent=0 // pred_check
    _
  $region3: #{_lambda_.27} parent=0 // pred_check_branch
    %9 = sbr.rel (0) target = $region5
  $region4: #{_lambda_.27} parent=0 // pred_region
    _
  $region5: #{_lambda_.27} parent=0 // pred_fallthru
    _
  // Predicated region
  $region6: #{_lambda_.27} parent=0 // pred_check
    _
  $region7: #{_lambda_.27} parent=0 // pred_check_branch
    %11 = sbr.rel (0) target = $region9
  $region8: #{_lambda_.27} parent=0 // pred_region
    _
  $region9: #{_lambda_.27} parent=0 // pred_fallthru
    _
  // Predicated region
  $region10: #{_lambda_.27} parent=0 // pred_check
    _
  $region11: #{_lambda_.27} parent=0 // pred_check_branch
    %13 = sbr.rel (0) target = $region13
  $region12: #{_lambda_.27} parent=0 // pred_region
    _
  $region13: #{_lambda_.27} parent=0 // pred_fallthru
    _
  %v15 = vld [vmem:[%s0] sm:$0xf]
  %v16 = vld [vmem:[%s0 + $0x4] sm:$0xf]
  %v17 = vld [vmem:[%s0 + $0x8] sm:$0xf]
  %v18 = vld [vmem:[%s0 + $0xc] sm:$0xf]
  %v19 = vld [vmem:[%s0 + $0x10] sm:$0xf]
  %v20 = vld [vmem:[%s0 + $0x14] sm:$0xf]
  %v21 = vld [vmem:[%s0 + $0x18] sm:$0xf]
  %v22 = vld [vmem:[%s0 + $0x1c] sm:$0xf]
  %v23 = vld [vmem:[%s1] sm:$0xf]
  %v24 = vld [vmem:[%s1 + $0x4] sm:$0xf]
  %v25 = vld [vmem:[%s1 + $0x8] sm:$0xf]
  %v26 = vld [vmem:[%s1 + $0xc] sm:$0xf]
  %v27 = vld [vmem:[%s1 + $0x10] sm:$0xf]
  %v28 = vld [vmem:[%s1 + $0x14] sm:$0xf]
  %v29 = vld [vmem:[%s1 + $0x18] sm:$0xf]
  %v30 = vld [vmem:[%s1 + $0x1c] sm:$0xf]
  %v31 = vld [vmem:[%s2] sm:$0xff]
  %v32 = vld [vmem:[%s2 + $0x8] sm:$0xff]
  %v33 = vld [vmem:[%s2 + $0x10] sm:$0xff]
  %v34 = vld [vmem:[%s2 + $0x18] sm:$0xff]
  %v35 = vld [vmem:[%s2 + $0x20] sm:$0xff]
  %v36 = vld [vmem:[%s2 + $0x28] sm:$0xff]
  %v37 = vld [vmem:[%s2 + $0x30] sm:$0xff]
  %v38 = vld [vmem:[%s2 + $0x38] sm:$0xff]
  %40 = vset.pattern.permute.xlu0 0
  %41 = vperm.xlu0 %40, %v31
  %v42 = vpop.permute.xlu0 %41
  %45 = vset.pattern.permute.xlu0 0
  %46 = vperm.xlu0 %45, %v32
  %v47 = vpop.permute.xlu0 %46
  %50 = vset.pattern.permute.xlu0 0
  %51 = vperm.xlu0 %50, %v33
  %v52 = vpop.permute.xlu0 %51
  %55 = vset.pattern.permute.xlu0 0
  %56 = vperm.xlu0 %55, %v34
  %v57 = vpop.permute.xlu0 %56
  %60 = vset.pattern.permute.xlu0 0
  %61 = vperm.xlu0 %60, %v35
  %v62 = vpop.permute.xlu0 %61
  %65 = vset.pattern.permute.xlu0 0
  %66 = vperm.xlu0 %65, %v36
  %v67 = vpop.permute.xlu0 %66
  %70 = vset.pattern.permute.xlu0 0
  %71 = vperm.xlu0 %70, %v37
  %v72 = vpop.permute.xlu0 %71
  %75 = vset.pattern.permute.xlu0 0
  %76 = vperm.xlu0 %75, %v38
  %v77 = vpop.permute.xlu0 %76
  %v87 = vunpack.c.l.b16 %v15
  %v88 = vunpack.c.l.b16 %v16
  %v89 = vunpack.c.l.b16 %v17
  %v90 = vunpack.c.l.b16 %v18
  %v91 = vunpack.c.l.b16 %v19
  %v92 = vunpack.c.l.b16 %v20
  %v93 = vunpack.c.l.b16 %v21
  %v94 = vunpack.c.l.b16 %v22
  %v95 = vpack.c.b16 %v88, %v87
  %v96 = vpack.c.b16 %v90, %v89
  %v97 = vpack.c.b16 %v92, %v91
  %v98 = vpack.c.b16 %v94, %v93
  %v107 = vunpack.c.l.b16 %v23
  %v108 = vunpack.c.l.b16 %v24
  %v109 = vunpack.c.l.b16 %v25
  %v110 = vunpack.c.l.b16 %v26
  %v111 = vunpack.c.l.b16 %v27
  %v112 = vunpack.c.l.b16 %v28
  %v113 = vunpack.c.l.b16 %v29
  %v114 = vunpack.c.l.b16 %v30
  %v115 = vpack.c.b16 %v108, %v107
  %v116 = vpack.c.b16 %v110, %v109
  %v117 = vpack.c.b16 %v112, %v111
  %v118 = vpack.c.b16 %v114, %v113
  %vm123 = vcmask 523264
  %v125 = vsel %vm123, %v95, 0
  %v128 = vsel %vm123, %v96, 0
  %v131 = vsel %vm123, %v97, 0
  %v134 = vsel %vm123, %v98, 0
  %136 = vmatprep.subr.bf16.mxu0 0
  %137 = vmatpush1.bf16.msra.mxu0 %v115
  %138 = vmatprep.subr.bf16.mxu0 0
  %139 = vmatpush1.bf16.msra.mxu0 %v116
  %140 = vmatprep.subr.bf16.mxu0 0
  %141 = vmatpush1.bf16.msra.mxu0 %v117
  %142 = vmatprep.subr.bf16.mxu0 0
  %143 = vmatpush1.bf16.msra.mxu0 %v118
  %144 = vmatprep.subr.bf16.mxu0 0
  %145 = vmatpush1.bf16.msra.mxu0 0
  %146 = vmatprep.subr.bf16.mxu0 0
  %147 = vmatpush1.bf16.msra.mxu0 0
  %148 = vmatprep.subr.bf16.mxu0 0
  %149 = vmatpush1.bf16.msra.mxu0 0
  %150 = vmatprep.subr.bf16.mxu0 0
  %151 = vmatpush1.bf16.msra.mxu0 0
  %152 = vmatprep.subr.bf16.mxu0 0
  %153 = vmatpush1.bf16.msra.mxu0 0
  %154 = vmatprep.subr.bf16.mxu0 0
  %155 = vmatpush1.bf16.msra.mxu0 0
  %156 = vmatprep.subr.bf16.mxu0 0
  %157 = vmatpush1.bf16.msra.mxu0 0
  %158 = vmatprep.subr.bf16.mxu0 0
  %159 = vmatpush1.bf16.msra.mxu0 0
  %160 = vmatprep.subr.bf16.mxu0 0
  %161 = vmatpush1.bf16.msra.mxu0 0
  %162 = vmatprep.subr.bf16.mxu0 0
  %163 = vmatpush1.bf16.msra.mxu0 0
  %164 = vmatprep.subr.bf16.mxu0 0
  %165 = vmatpush1.bf16.msra.mxu0 0
  %166 = vmatprep.subr.bf16.mxu0 0
  %167 = vmatpush1.bf16.msra.mxu0 0
  %168 = vmatprep.mubr.bf16.mxu0 0
  %169 = vmatmul.mubr.bf16.gmra.mrb[0].mxu0 %v125
  %v170 = vpop.f32.mrb[0].mxu0
  %v171 = vadd.f32 %v42, %v170
  %v172 = vpop.f32.mrb[0].mxu0
  %v173 = vpop.f32.mrb[0].mxu0
  %v174 = vadd.f32 %v47, %v173
  %v175 = vpop.f32.mrb[0].mxu0
  %176 = vmatprep.mubr.bf16.mxu0 0
  %177 = vmatmul.mubr.bf16.gmra.mrb[0].mxu0 %v128
  %v178 = vpop.f32.mrb[0].mxu0
  %v179 = vadd.f32 %v52, %v178
  %v180 = vpop.f32.mrb[0].mxu0
  %v181 = vpop.f32.mrb[0].mxu0
  %v182 = vadd.f32 %v57, %v181
  %v183 = vpop.f32.mrb[0].mxu0
  %184 = vmatprep.mubr.bf16.mxu0 0
  %185 = vmatmul.mubr.bf16.gmra.mrb[0].mxu0 %v131
  %v186 = vpop.f32.mrb[0].mxu0
  %v187 = vadd.f32 %v62, %v186
  %v188 = vpop.f32.mrb[0].mxu0
  %v189 = vpop.f32.mrb[0].mxu0
  %v190 = vadd.f32 %v67, %v189
  %v191 = vpop.f32.mrb[0].mxu0
  %192 = vmatprep.mubr.bf16.mxu0 0
  %193 = vmatmul.mubr.bf16.gmra.mrb[0].mxu0 %v134
  %v194 = vpop.f32.mrb[0].mxu0
  %v195 = vadd.f32 %v72, %v194
  %v196 = vpop.f32.mrb[0].mxu0
  %v197 = vpop.f32.mrb[0].mxu0
  %v198 = vadd.f32 %v77, %v197
  %v199 = vpop.f32.mrb[0].mxu0
  %200 = vdwg.mxu0
  %vm201 = vcmp.ge.f32.partialorder %v171, 0.0
  %vm202 = vcmp.ge.f32.partialorder %v174, 0.0
  %vm203 = vcmp.ge.f32.partialorder %v179, 0.0
  %vm204 = vcmp.ge.f32.partialorder %v182, 0.0
  %vm205 = vcmp.ge.f32.partialorder %v187, 0.0
  %vm206 = vcmp.ge.f32.partialorder %v190, 0.0
  %vm207 = vcmp.ge.f32.partialorder %v195, 0.0
  %vm208 = vcmp.ge.f32.partialorder %v198, 0.0
  %v209 = vmul.f32 %v171, 0.01
  %v210 = vmul.f32 %v174, 0.01
  %v211 = vmul.f32 %v179, 0.01
  %v212 = vmul.f32 %v182, 0.01
  %v213 = vmul.f32 %v187, 0.01
  %v214 = vmul.f32 %v190, 0.01
  %v215 = vmul.f32 %v195, 0.01
  %v216 = vmul.f32 %v198, 0.01
  %v217 = vsel %vm201, %v171, %v209
  %v218 = vsel %vm202, %v174, %v210
  %v219 = vsel %vm203, %v179, %v211
  %v220 = vsel %vm204, %v182, %v212
  %v221 = vsel %vm205, %v187, %v213
  %v222 = vsel %vm206, %v190, %v214
  %v223 = vsel %vm207, %v195, %v215
  %v224 = vsel %vm208, %v198, %v216
  %225 = vset.pattern.permute.xlu0 1
  %226 = vperm.xlu0 %225, %v31
  %v227 = vpop.permute.xlu0 %226
  %229 = vset.pattern.permute.xlu0 1
  %230 = vperm.xlu0 %229, %v32
  %v231 = vpop.permute.xlu0 %230
  %233 = vset.pattern.permute.xlu0 1
  %234 = vperm.xlu0 %233, %v33
  %v235 = vpop.permute.xlu0 %234
  %237 = vset.pattern.permute.xlu0 1
  %238 = vperm.xlu0 %237, %v34
  %v239 = vpop.permute.xlu0 %238
  %241 = vset.pattern.permute.xlu0 1
  %242 = vperm.xlu0 %241, %v35
  %v243 = vpop.permute.xlu0 %242
  %245 = vset.pattern.permute.xlu0 1
  %246 = vperm.xlu0 %245, %v36
  %v247 = vpop.permute.xlu0 %246
  %249 = vset.pattern.permute.xlu0 1
  %250 = vperm.xlu0 %249, %v37
  %v251 = vpop.permute.xlu0 %250
  %253 = vset.pattern.permute.xlu0 1
  %254 = vperm.xlu0 %253, %v38
  %v255 = vpop.permute.xlu0 %254
  %v257 = vmul.f32 %v217, %v227
  %v258 = vmul.f32 %v218, %v231
  %v259 = vmul.f32 %v219, %v235
  %v260 = vmul.f32 %v220, %v239
  %v261 = vmul.f32 %v221, %v243
  %v262 = vmul.f32 %v222, %v247
  %v263 = vmul.f32 %v223, %v251
  %v264 = vmul.f32 %v224, %v255
  %265 = vset.pattern.permute.xlu0 2
  %266 = vperm.xlu0 %265, %v31
  %v267 = vpop.permute.xlu0 %266
  %269 = vset.pattern.permute.xlu0 2
  %270 = vperm.xlu0 %269, %v32
  %v271 = vpop.permute.xlu0 %270
  %273 = vset.pattern.permute.xlu0 2
  %274 = vperm.xlu0 %273, %v33
  %v275 = vpop.permute.xlu0 %274
  %277 = vset.pattern.permute.xlu0 2
  %278 = vperm.xlu0 %277, %v34
  %v279 = vpop.permute.xlu0 %278
  %281 = vset.pattern.permute.xlu0 2
  %282 = vperm.xlu0 %281, %v35
  %v283 = vpop.permute.xlu0 %282
  %285 = vset.pattern.permute.xlu0 2
  %286 = vperm.xlu0 %285, %v36
  %v287 = vpop.permute.xlu0 %286
  %289 = vset.pattern.permute.xlu0 2
  %290 = vperm.xlu0 %289, %v37
  %v291 = vpop.permute.xlu0 %290
  %293 = vset.pattern.permute.xlu0 2
  %294 = vperm.xlu0 %293, %v38
  %v295 = vpop.permute.xlu0 %294
  %v297 = vadd.f32 %v257, %v267
  %v298 = vadd.f32 %v258, %v271
  %v299 = vadd.f32 %v259, %v275
  %v300 = vadd.f32 %v260, %v279
  %v301 = vadd.f32 %v261, %v283
  %v302 = vadd.f32 %v262, %v287
  %v303 = vadd.f32 %v263, %v291
  %v304 = vadd.f32 %v264, %v295
  %v305 = vpack.c.bf16 %v298, %v297
  %v306 = vpack.c.bf16 %v300, %v299
  %v307 = vpack.c.bf16 %v302, %v301
  %v308 = vpack.c.bf16 %v304, %v303
  %v313 = vunpack.c.l.b16 %v305
  %v314 = vunpack.c.h.b16 %v305
  %v315 = vunpack.c.l.b16 %v306
  %v316 = vunpack.c.h.b16 %v306
  %v317 = vunpack.c.l.b16 %v307
  %v318 = vunpack.c.h.b16 %v307
  %v319 = vunpack.c.l.b16 %v308
  %v320 = vunpack.c.h.b16 %v308
  %v321 = vpack.c.b16 %v313, %v313
  %v322 = vpack.c.b16 %v314, %v314
  %v323 = vpack.c.b16 %v315, %v315
  %v324 = vpack.c.b16 %v316, %v316
  %v325 = vpack.c.b16 %v317, %v317
  %v326 = vpack.c.b16 %v318, %v318
  %v327 = vpack.c.b16 %v319, %v319
  %v328 = vpack.c.b16 %v320, %v320
  %337 = vst [vmem:[%s3] sm:$0xf] %v321
  %338 = vst [vmem:[%s3 + $0x4] sm:$0xf] %v322
  %339 = vst [vmem:[%s3 + $0x8] sm:$0xf] %v323
  %340 = vst [vmem:[%s3 + $0xc] sm:$0xf] %v324
  %341 = vst [vmem:[%s3 + $0x10] sm:$0xf] %v325
  %342 = vst [vmem:[%s3 + $0x14] sm:$0xf] %v326
  %343 = vst [vmem:[%s3 + $0x18] sm:$0xf] %v327
  %344 = vst [vmem:[%s3 + $0x1c] sm:$0xf] %v328
  // Predicated region
  $region14: #{_lambda_.27} parent=0 // pred_check
    _
  $region15: #{_lambda_.27} parent=0 // pred_check_branch
    %346 = sbr.rel (0) target = $region17
  $region16: #{_lambda_.27} parent=0 // pred_region
    _
  $region17: #{_lambda_.27} parent=0 // pred_fallthru
    _
  // Predicated region
  $region18: #{_lambda_.27} parent=0 // pred_check
    _
  $region19: #{_lambda_.27} parent=0 // pred_check_branch
    %348 = sbr.rel (0) target = $region21
  $region20: #{_lambda_.27} parent=0 // pred_region
    _
  $region21: #{_lambda_.27} parent=0 // pred_fallthru
    _

// kernel: _lambda_.30
$region0: #{_lambda_.30}
  #allocation0 [shape = 'u32[]', space=smem, size = 0x4, offset = 0x4, fixed_abs, tag = 'smem constant byte address 0x4 - core index']
  #allocation1 [shape = 'u32[144,128]{1,0:T(1,128)}', space=vmem, size = 0x12000, scoped, tag = 'internal scratch']
  %s0 = inlined_call_operand.vmem [shape: bf16[8,6], index: 0, kind: input, shape index: {}]
  %s1 = inlined_call_operand.vmem [shape: bf16[6,1024], index: 1, kind: input, shape index: {}]
  %s2 = inlined_call_operand.vmem [shape: f32[8,3], index: 2, kind: input, shape index: {}]
  %s3 = inlined_call_operand.vmem [shape: bf16[8,1024], index: 3, kind: output, shape index: {}]
  %s4 = sld [smem:[#allocation0]]
  $region45: #{_lambda_.30} parent=0
    _
  %s6 = ssub.s32 1, %s4
  %s7 = scalar_select 0, %s6, %s4
  loop: start=0, step=1, limit=4
  $region2: #{_lambda_.30} parent=0 // loop_pre_header
    _
  $region3: #{_lambda_.30} parent=0 // loop_header
    %s9 = sphi 0, %s13
    %p10 = scmp.ge.s32.totalorder %s9, 4
    %s17 = sphi 0, %s17
    %s19 = sphi 0, %s17
    %s20 = sphi 0, %s19
    %s34 = sphi 0, %s20
    %s40 = sphi 0, %s42
    %s43 = sphi 0, %s40
    %s44 = sphi 0, %s43
    %s60 = sphi 0, %s44
    %s64 = sphi 0, %s64
    %s66 = sphi 0, %s64
    %s67 = sphi 0, %s66
    %s81 = sphi 0, %s67
    %s87 = sphi 0, %s89
    %s90 = sphi 0, %s87
    %s91 = sphi 0, %s90
    %s107 = sphi 0, %s91
  $region4: #{_lambda_.30} parent=0 // loop_header_branch
    %12 = sbr.rel (%p10) target = $region8
  $region5: #{_lambda_.30} parent=0 // loop_body
    %s14 = ssub.s32 %s9, 1
    %s15 = ssub.s32 %s9, 2
    %s16 = sadd.s32 %s9, 1
    %s18 = sadd.s32 %s17, 1
    %p21 = scmp.eq.s32.totalorder %s9, 1
    %p22 = scmp.ne.s32.totalorder %s17, %s19
    %p23 = scmp.eq.s32.totalorder %s9, 0
    %p24 = por %p22, %p23
    %p25 = scmp.ne.s32.totalorder %s17, %s19
    %p26 = scmp.eq.s32.totalorder %s14, 1
    %p27 = por %p25, %p26
    %p28 = scmp.ne.s32.totalorder %s19, %s20
    %p29 = scmp.eq.s32.totalorder %s14, 0
    %p30 = por %p28, %p29
    %p31 = scmp.ne.s32.totalorder %s19, %s20
    %p32 = scmp.eq.s32.totalorder %s15, 1
    %p33 = por %p31, %p32
    %p35 = scmp.ne.s32.totalorder %s20, %s34
    %p36 = scmp.eq.s32.totalorder %s15, 0
    %p37 = por %p35, %p36
    %s38 = ssub.s32 %s9, %s16
    %p39 = scmp.eq.s32.totalorder %s38, 0
    %s41 = sadd.s32 %s40, 1
    %s42 = scalar_select %p39, %s40, %s41
    %p45 = pneg %p39
    %p46 = scmp.eq.s32.totalorder %s9, 1
    %p47 = por %p45, %p46
    %p48 = scmp.ne.s32.totalorder %s40, %s43
    %p49 = scmp.eq.s32.totalorder %s9, 0
    %p50 = por %p48, %p49
    %p51 = scmp.ne.s32.totalorder %s40, %s43
    %p52 = scmp.eq.s32.totalorder %s14, 1
    %p53 = por %p51, %p52
    %p54 = scmp.ne.s32.totalorder %s43, %s44
    %p55 = scmp.eq.s32.totalorder %s14, 0
    %p56 = por %p54, %p55
    %p57 = scmp.ne.s32.totalorder %s43, %s44
    %p58 = scmp.eq.s32.totalorder %s15, 1
    %p59 = por %p57, %p58
    %p61 = scmp.ne.s32.totalorder %s44, %s60
    %p62 = scmp.eq.s32.totalorder %s15, 0
    %p63 = por %p61, %p62
    %s65 = sadd.s32 %s64, 1
    %p68 = scmp.eq.s32.totalorder %s9, 1
    %p69 = scmp.ne.s32.totalorder %s64, %s66
    %p70 = scmp.eq.s32.totalorder %s9, 0
    %p71 = por %p69, %p70
    %p72 = scmp.ne.s32.totalorder %s64, %s66
    %p73 = scmp.eq.s32.totalorder %s14, 1
    %p74 = por %p72, %p73
    %p75 = scmp.ne.s32.totalorder %s66, %s67
    %p76 = scmp.eq.s32.totalorder %s14, 0
    %p77 = por %p75, %p76
    %p78 = scmp.ne.s32.totalorder %s66, %s67
    %p79 = scmp.eq.s32.totalorder %s15, 1
    %p80 = por %p78, %p79
    %p82 = scmp.ne.s32.totalorder %s67, %s81
    %p83 = scmp.eq.s32.totalorder %s15, 0
    %p84 = por %p82, %p83
    %s85 = ssub.s32 %s9, %s16
    %p86 = scmp.eq.s32.totalorder %s85, 0
    %s88 = sadd.s32 %s87, 1
    %s89 = scalar_select %p86, %s87, %s88
    %p92 = pneg %p86
    %p93 = scmp.eq.s32.totalorder %s9, 1
    %p94 = por %p92, %p93
    %p95 = scmp.ne.s32.totalorder %s87, %s90
    %p96 = scmp.eq.s32.totalorder %s9, 0
    %p97 = por %p95, %p96
    %p98 = scmp.ne.s32.totalorder %s87, %s90
    %p99 = scmp.eq.s32.totalorder %s14, 1
    %p100 = por %p98, %p99
    %p101 = scmp.ne.s32.totalorder %s90, %s91
    %p102 = scmp.eq.s32.totalorder %s14, 0
    %p103 = por %p101, %p102
    %p104 = scmp.ne.s32.totalorder %s90, %s91
    %p105 = scmp.eq.s32.totalorder %s15, 1
    %p106 = por %p104, %p105
    %p108 = scmp.ne.s32.totalorder %s91, %s107
    %p109 = scmp.eq.s32.totalorder %s15, 0
    %p110 = por %p108, %p109
    %p111 = scmp.le.s32.totalorder 1, %s9
    %p112 = scmp.lt.s32.totalorder %s9, 3
    %p113 = pnand %p111, %p112
    %p114 = pneg %p113
    // Predicated region
    $region9: #{_lambda_.30} parent=5 // pred_check
      _
    $region10: #{_lambda_.30} parent=5 // pred_check_branch
      %116 = sbr.rel (%p113) target = $region12
    $region11: #{_lambda_.30} parent=5 // pred_region
      %s117 = ssub.s32 %s9, 1
      // Predicated region
      $region13: #{_lambda_.30} parent=11 // pred_check
        %p118 = pneg %p30
      $region14: #{_lambda_.30} parent=11 // pred_check_branch
        %120 = sbr.rel (%p118) target = $region16
      $region15: #{_lambda_.30} parent=11 // pred_region
        _
      $region16: #{_lambda_.30} parent=11 // pred_fallthru
        _
      // Predicated region
      $region17: #{_lambda_.30} parent=11 // pred_check
        %p121 = pneg %p77
      $region18: #{_lambda_.30} parent=11 // pred_check_branch
        %123 = sbr.rel (%p121) target = $region20
      $region19: #{_lambda_.30} parent=11 // pred_region
        _
      $region20: #{_lambda_.30} parent=11 // pred_fallthru
        _
    $region12: #{_lambda_.30} parent=5 // pred_fallthru
      _
    %p124 = scmp.lt.s32.totalorder %s9, 2
    // Predicated region
    $region21: #{_lambda_.30} parent=5 // pred_check
      %p125 = pneg %p124
    $region22: #{_lambda_.30} parent=5 // pred_check_branch
      %127 = sbr.rel (%p125) target = $region24
    $region23: #{_lambda_.30} parent=5 // pred_region
      // Predicated region
      $region25: #{_lambda_.30} parent=23 // pred_check
        %p128 = pneg %p50
      $region26: #{_lambda_.30} parent=23 // pred_check_branch
        %130 = sbr.rel (%p128) target = $region28
      $region27: #{_lambda_.30} parent=23 // pred_region
        %s131 = smul.u32 4, %s9
        %p132 = scmp.lt.s32.totalorder %s131, 7
        %s133 = scalar_select %p132, %s131, 7
        %s134 = smul.addr %s133, 4
        %s135 = scalar_lea.vmem %s1, %s134
        %s136 = smul.u32 4, %s9
      $region28: #{_lambda_.30} parent=23 // pred_fallthru
        _
    $region24: #{_lambda_.30} parent=5 // pred_fallthru
      _
    %p137 = scmp.le.s32.totalorder 1, %s9
    %p138 = scmp.lt.s32.totalorder %s9, 3
    %p139 = pnand %p137, %p138
    %p140 = pneg %p139
    // Predicated region
    $region29: #{_lambda_.30} parent=5 // pred_check
      _
    $region30: #{_lambda_.30} parent=5 // pred_check_branch
      %142 = sbr.rel (%p139) target = $region32
    $region31: #{_lambda_.30} parent=5 // pred_region
      %s143 = ssub.s32 %s9, 1
      %p144 = pneg %p30
      %p145 = pneg %p27
      %s146 = smul.u32 4, %s14
      %p147 = scmp.lt.s32.totalorder %s146, 7
      %s148 = scalar_select %p147, %s146, 7
      %s149 = smul.addr %s148, 4
      %s150 = scalar_lea.vmem %s1, %s149
      %p151 = pneg %p56
      %p152 = pneg %p53
      %p153 = pneg %p77
      %p154 = pneg %p74
      %p155 = pneg %p103
      %p156 = pneg %p100
      %s157 = smul.u32 4, %s14
      %p158 = scmp.lt.s32.totalorder %s157, 7
      %s159 = scalar_select %p158, %s157, 7
      %s160 = smul.addr %s159, 4
      %s161 = scalar_lea.vmem %s3, %s160
      %s162 = smul.u32 4, %s14
      %p163 = scmp.lt.s32.totalorder %s162, 7
      %s164 = scalar_select %p163, %s162, 7
      %s165 = smul.addr %s164, 4
      %s166 = scalar_lea.vmem %s1, %s165
      %s167 = smul.u32 4, %s14
      %s168 = smul.u32 4, %s14
      %p169 = scmp.lt.s32.totalorder %s168, 7
      %s170 = scalar_select %p169, %s168, 7
      %s171 = smul.addr %s170, 4
      %s172 = scalar_lea.vmem %s3, %s171
      %s173 = smul.u32 4, %s14
      %v175 = vld [vmem:[%s0] sm:$0xf]
      %v176 = vld [vmem:[%s166] sm:$0x77]
      %v177 = vld [vmem:[%s166 + $0x8] sm:$0x77]
      %v180 = vunpack.c.l.b16 %v176
      %v181 = vunpack.c.h.b16 %v176
      %v182 = vunpack.c.l.b16 %v177
      %v183 = vunpack.c.h.b16 %v177
      %v184 = vpack.c.b16 %v180, %v180
      %v185 = vpack.c.b16 %v181, %v181
      %v186 = vpack.c.b16 %v182, %v182
      %v187 = vpack.c.b16 %v183, %v183
      %vm188 = vcmask 48128
      %v190 = vsel %vm188, %v175, 0
      %vm192 = vcmask 1042432
      %v194 = vsel %vm192, %v184, 0
      %v197 = vsel %vm192, %v185, 0
      %v200 = vsel %vm192, %v186, 0
      %v203 = vsel %vm192, %v187, 0
      %205 = vmatprep.subr.bf16.mxu0 %v197
      %206 = vmatpush1.bf16.msra.mxu0 %v194
      %207 = vmatprep.subr.bf16.mxu0 0
      %208 = vmatpush1.bf16.msra.mxu0 0
      %209 = vmatprep.subr.bf16.mxu0 0
      %210 = vmatpush1.bf16.msra.mxu0 0
      %211 = vmatprep.subr.bf16.mxu0 0
      %212 = vmatpush1.bf16.msra.mxu0 0
      %213 = vmatprep.subr.bf16.mxu0 0
      %214 = vmatpush1.bf16.msra.mxu0 0
      %215 = vmatprep.subr.bf16.mxu0 0
      %216 = vmatpush1.bf16.msra.mxu0 0
      %217 = vmatprep.subr.bf16.mxu0 0
      %218 = vmatpush1.bf16.msra.mxu0 0
      %219 = vmatprep.subr.bf16.mxu0 0
      %220 = vmatpush1.bf16.msra.mxu0 0
      %221 = vmatprep.subr.bf16.mxu0 0
      %222 = vmatpush1.bf16.msra.mxu0 0
      %223 = vmatprep.subr.bf16.mxu0 0
      %224 = vmatpush1.bf16.msra.mxu0 0
      %225 = vmatprep.subr.bf16.mxu0 0
      %226 = vmatpush1.bf16.msra.mxu0 0
      %227 = vmatprep.subr.bf16.mxu0 0
      %228 = vmatpush1.bf16.msra.mxu0 0
      %229 = vmatprep.subr.bf16.mxu0 0
      %230 = vmatpush1.bf16.msra.mxu0 0
      %231 = vmatprep.subr.bf16.mxu0 0
      %232 = vmatpush1.bf16.msra.mxu0 0
      %233 = vmatprep.subr.bf16.mxu0 0
      %234 = vmatpush1.bf16.msra.mxu0 0
      %235 = vmatprep.subr.bf16.mxu0 0
      %236 = vmatpush1.bf16.msra.mxu0 0
      %237 = vmatprep.mubr.bf16.mxu0 0
      %238 = vmatmul.mubr.bf16.gmra.mrb[0].mxu0 %v190
      %v239 = vpop.f32.mrb[0].mxu0
      %v240 = vadd.f32 0.0, %v239
      %v241 = vpop.f32.mrb[0].mxu0
      %v242 = vadd.f32 0.0, %v241
      %v243 = vpop.f32.mrb[0].mxu0
      %v244 = vpop.f32.mrb[0].mxu0
      %245 = vdwg.mxu0
      %246 = vmatprep.subr.bf16.mxu0 %v203
      %247 = vmatpush1.bf16.msra.mxu0 %v200
      %248 = vmatprep.subr.bf16.mxu0 0
      %249 = vmatpush1.bf16.msra.mxu0 0
      %250 = vmatprep.subr.bf16.mxu0 0
      %251 = vmatpush1.bf16.msra.mxu0 0
      %252 = vmatprep.subr.bf16.mxu0 0
      %253 = vmatpush1.bf16.msra.mxu0 0
      %254 = vmatprep.subr.bf16.mxu0 0
      %255 = vmatpush1.bf16.msra.mxu0 0
      %256 = vmatprep.subr.bf16.mxu0 0
      %257 = vmatpush1.bf16.msra.mxu0 0
      %258 = vmatprep.subr.bf16.mxu0 0
      %259 = vmatpush1.bf16.msra.mxu0 0
      %260 = vmatprep.subr.bf16.mxu0 0
      %261 = vmatpush1.bf16.msra.mxu0 0
      %262 = vmatprep.subr.bf16.mxu0 0
      %263 = vmatpush1.bf16.msra.mxu0 0
      %264 = vmatprep.subr.bf16.mxu0 0
      %265 = vmatpush1.bf16.msra.mxu0 0
      %266 = vmatprep.subr.bf16.mxu0 0
      %267 = vmatpush1.bf16.msra.mxu0 0
      %268 = vmatprep.subr.bf16.mxu0 0
      %269 = vmatpush1.bf16.msra.mxu0 0
      %270 = vmatprep.subr.bf16.mxu0 0
      %271 = vmatpush1.bf16.msra.mxu0 0
      %272 = vmatprep.subr.bf16.mxu0 0
      %273 = vmatpush1.bf16.msra.mxu0 0
      %274 = vmatprep.subr.bf16.mxu0 0
      %275 = vmatpush1.bf16.msra.mxu0 0
      %276 = vmatprep.subr.bf16.mxu0 0
      %277 = vmatpush1.bf16.msra.mxu0 0
      %278 = vmatprep.mubr.bf16.mxu0 0
      %279 = vmatmul.mubr.bf16.gmra.mrb[0].mxu0 %v190
      %v280 = vpop.f32.mrb[0].mxu0
      %v281 = vadd.f32 0.0, %v280
      %v282 = vpop.f32.mrb[0].mxu0
      %v283 = vadd.f32 0.0, %v282
      %v284 = vpop.f32.mrb[0].mxu0
      %v285 = vpop.f32.mrb[0].mxu0
      %286 = vdwg.mxu0
      %v287 = vld [vmem:[%s2] sm:$0xff]
      %289 = vset.pattern.permute.xlu0 1
      %290 = vperm.xlu0 %289, %v287
      %v291 = vpop.permute.xlu0 %290
      %v293 = vmul.f32 %v240, %v291
      %v294 = vmul.f32 %v242, %v291
      %v295 = vmul.f32 %v281, %v291
      %v296 = vmul.f32 %v283, %v291
      %297 = vset.pattern.permute.xlu0 2
      %298 = vperm.xlu0 %297, %v287
      %v299 = vpop.permute.xlu0 %298
      %v301 = vadd.f32 %v293, %v299
      %v302 = vadd.f32 %v294, %v299
      %v303 = vadd.f32 %v295, %v299
      %v304 = vadd.f32 %v296, %v299
      %v305 = vpack.c.bf16 %v301, %v301
      %v306 = vpack.c.bf16 %v302, %v302
      %v307 = vpack.c.bf16 %v303, %v303
      %v308 = vpack.c.bf16 %v304, %v304
      %v313 = vunpack.c.l.b16 %v305
      %v314 = vunpack.c.l.b16 %v306
      %v315 = vunpack.c.l.b16 %v307
      %v316 = vunpack.c.l.b16 %v308
      %v317 = vpack.c.b16 %v314, %v313
      %v318 = vpack.c.b16 %v316, %v315
      %321 = vst [vmem:[%s172] sm:$0xff] %v317
      %322 = vst [vmem:[%s172 + $0x8] sm:$0xff] %v318
      %s323 = smul.u32 4, %s14
      %p324 = scmp.lt.s32.totalorder %s323, 7
      %s325 = scalar_select %p324, %s323, 7
      %s326 = smul.addr %s325, 4
      %s327 = scalar_lea.vmem %s3, %s326
      // Predicated region
      $region33: #{_lambda_.30} parent=31 // pred_check
        %p328 = pneg %p100
      $region34: #{_lambda_.30} parent=31 // pred_check_branch
        %330 = sbr.rel (%p328) target = $region36
      $region35: #{_lambda_.30} parent=31 // pred_region
        %s331 = smul.u32 4, %s14
      $region36: #{_lambda_.30} parent=31 // pred_fallthru
        _
    $region32: #{_lambda_.30} parent=5 // pred_fallthru
      _
    %p332 = scmp.le.s32.totalorder 2, %s9
    // Predicated region
    $region37: #{_lambda_.30} parent=5 // pred_check
      %p333 = pneg %p332
    $region38: #{_lambda_.30} parent=5 // pred_check_branch
      %335 = sbr.rel (%p333) target = $region40
    $region39: #{_lambda_.30} parent=5 // pred_region
      %s336 = ssub.s32 %s9, 2
      // Predicated region
      $region41: #{_lambda_.30} parent=39 // pred_check
        %p337 = pneg %p106
      $region42: #{_lambda_.30} parent=39 // pred_check_branch
        %339 = sbr.rel (%p337) target = $region44
      $region43: #{_lambda_.30} parent=39 // pred_region
        %s340 = smul.u32 4, %s15
        %p341 = scmp.lt.s32.totalorder %s340, 7
        %s342 = scalar_select %p341, %s340, 7
        %s343 = smul.addr %s342, 4
        %s344 = scalar_lea.vmem %s3, %s343
      $region44: #{_lambda_.30} parent=39 // pred_fallthru
        _
    $region40: #{_lambda_.30} parent=5 // pred_fallthru
      _
  $region6: #{_lambda_.30} parent=0 // loop_footer
    %s13 = sadd.s32 1, %s9
  $region7: #{_lambda_.30} parent=0 // loop_footer_branch
    %8 = sbr.rel target = $region3
  $region8: #{_lambda_.30} parent=0 // loop_exit
    _

// kernel: _lambda_.31
$region0: #{_lambda_.31}
  #allocation0 [shape = 'u32[]', space=smem, size = 0x4, offset = 0x4, fixed_abs, tag = 'smem constant byte address 0x4 - core index']
  #allocation1 [shape = 'u32[144,128]{1,0:T(1,128)}', space=vmem, size = 0x12000, scoped, tag = 'internal scratch']
  %s0 = inlined_call_operand.vmem [shape: bf16[32,72], index: 0, kind: input, shape index: {}]
  %s1 = inlined_call_operand.vmem [shape: bf16[72,1024], index: 1, kind: input, shape index: {}]
  %s2 = inlined_call_operand.vmem [shape: f32[32,3], index: 2, kind: input, shape index: {}]
  %s3 = inlined_call_operand.vmem [shape: bf16[32,1024], index: 3, kind: output, shape index: {}]
  %s4 = sld [smem:[#allocation0]]
  $region87: #{_lambda_.31} parent=0
    _
  %s6 = ssub.s32 1, %s4
  %s7 = scalar_select 0, %s6, %s4
  $region1: #{_lambda_.31} parent=0
    #allocation2 [shape = 'u8[147456]{0}', space=vmem, size = 0x24000, scoped, tag = 'input window, operand 1']
    #allocation3 [shape = 'u8[65536]{0}', space=vmem, size = 0x10000, scoped, tag = 'output window, operand 0']
    loop: start=0, step=1, limit=4
    $region2: #{_lambda_.31} parent=1 // loop_pre_header
      _
    $region3: #{_lambda_.31} parent=1 // loop_header
      %s9 = sphi 0, %s13
      %p10 = scmp.ge.s32.totalorder %s9, 4
      %s17 = sphi 0, %s17
      %s19 = sphi 0, %s17
      %s20 = sphi 0, %s19
      %s34 = sphi 0, %s20
      %s40 = sphi 0, %s42
      %s43 = sphi 0, %s40
      %s44 = sphi 0, %s43
      %s60 = sphi 0, %s44
      %s64 = sphi 0, %s64
      %s66 = sphi 0, %s64
      %s67 = sphi 0, %s66
      %s81 = sphi 0, %s67
      %s87 = sphi 0, %s89
      %s90 = sphi 0, %s87
      %s91 = sphi 0, %s90
      %s107 = sphi 0, %s91
    $region4: #{_lambda_.31} parent=1 // loop_header_branch
      %12 = sbr.rel (%p10) target = $region8
    $region5: #{_lambda_.31} parent=1 // loop_body
      %s14 = ssub.s32 %s9, 1
      %s15 = ssub.s32 %s9, 2
      %s16 = sadd.s32 %s9, 1
      %s18 = sadd.s32 %s17, 1
      %p21 = scmp.eq.s32.totalorder %s9, 1
      %p22 = scmp.ne.s32.totalorder %s17, %s19
      %p23 = scmp.eq.s32.totalorder %s9, 0
      %p24 = por %p22, %p23
      %p25 = scmp.ne.s32.totalorder %s17, %s19
      %p26 = scmp.eq.s32.totalorder %s14, 1
      %p27 = por %p25, %p26
      %p28 = scmp.ne.s32.totalorder %s19, %s20
      %p29 = scmp.eq.s32.totalorder %s14, 0
      %p30 = por %p28, %p29
      %p31 = scmp.ne.s32.totalorder %s19, %s20
      %p32 = scmp.eq.s32.totalorder %s15, 1
      %p33 = por %p31, %p32
      %p35 = scmp.ne.s32.totalorder %s20, %s34
      %p36 = scmp.eq.s32.totalorder %s15, 0
      %p37 = por %p35, %p36
      %s38 = ssub.s32 %s9, %s16
      %p39 = scmp.eq.s32.totalorder %s38, 0
      %s41 = sadd.s32 %s40, 1
      %s42 = scalar_select %p39, %s40, %s41
      %p45 = pneg %p39
      %p46 = scmp.eq.s32.totalorder %s9, 1
      %p47 = por %p45, %p46
      %p48 = scmp.ne.s32.totalorder %s40, %s43
      %p49 = scmp.eq.s32.totalorder %s9, 0
      %p50 = por %p48, %p49
      %p51 = scmp.ne.s32.totalorder %s40, %s43
      %p52 = scmp.eq.s32.totalorder %s14, 1
      %p53 = por %p51, %p52
      %p54 = scmp.ne.s32.totalorder %s43, %s44
      %p55 = scmp.eq.s32.totalorder %s14, 0
      %p56 = por %p54, %p55
      %p57 = scmp.ne.s32.totalorder %s43, %s44
      %p58 = scmp.eq.s32.totalorder %s15, 1
      %p59 = por %p57, %p58
      %p61 = scmp.ne.s32.totalorder %s44, %s60
      %p62 = scmp.eq.s32.totalorder %s15, 0
      %p63 = por %p61, %p62
      %s65 = sadd.s32 %s64, 1
      %p68 = scmp.eq.s32.totalorder %s9, 1
      %p69 = scmp.ne.s32.totalorder %s64, %s66
      %p70 = scmp.eq.s32.totalorder %s9, 0
      %p71 = por %p69, %p70
      %p72 = scmp.ne.s32.totalorder %s64, %s66
      %p73 = scmp.eq.s32.totalorder %s14, 1
      %p74 = por %p72, %p73
      %p75 = scmp.ne.s32.totalorder %s66, %s67
      %p76 = scmp.eq.s32.totalorder %s14, 0
      %p77 = por %p75, %p76
      %p78 = scmp.ne.s32.totalorder %s66, %s67
      %p79 = scmp.eq.s32.totalorder %s15, 1
      %p80 = por %p78, %p79
      %p82 = scmp.ne.s32.totalorder %s67, %s81
      %p83 = scmp.eq.s32.totalorder %s15, 0
      %p84 = por %p82, %p83
      %s85 = ssub.s32 %s9, %s16
      %p86 = scmp.eq.s32.totalorder %s85, 0
      %s88 = sadd.s32 %s87, 1
      %s89 = scalar_select %p86, %s87, %s88
      %p92 = pneg %p86
      %p93 = scmp.eq.s32.totalorder %s9, 1
      %p94 = por %p92, %p93
      %p95 = scmp.ne.s32.totalorder %s87, %s90
      %p96 = scmp.eq.s32.totalorder %s9, 0
      %p97 = por %p95, %p96
      %p98 = scmp.ne.s32.totalorder %s87, %s90
      %p99 = scmp.eq.s32.totalorder %s14, 1
      %p100 = por %p98, %p99
      %p101 = scmp.ne.s32.totalorder %s90, %s91
      %p102 = scmp.eq.s32.totalorder %s14, 0
      %p103 = por %p101, %p102
      %p104 = scmp.ne.s32.totalorder %s90, %s91
      %p105 = scmp.eq.s32.totalorder %s15, 1
      %p106 = por %p104, %p105
      %p108 = scmp.ne.s32.totalorder %s91, %s107
      %p109 = scmp.eq.s32.totalorder %s15, 0
      %p110 = por %p108, %p109
      %p111 = scmp.le.s32.totalorder 1, %s9
      %p112 = scmp.lt.s32.totalorder %s9, 3
      %p113 = pnand %p111, %p112
      %p114 = pneg %p113
      // Predicated region
      $region9: #{_lambda_.31} parent=5 // pred_check
        _
      $region10: #{_lambda_.31} parent=5 // pred_check_branch
        %116 = sbr.rel (%p113) target = $region12
      $region11: #{_lambda_.31} parent=5 // pred_region
        %s117 = ssub.s32 %s9, 1
        // Predicated region
        $region13: #{_lambda_.31} parent=11 // pred_check
          %p118 = pneg %p30
        $region14: #{_lambda_.31} parent=11 // pred_check_branch
          %120 = sbr.rel (%p118) target = $region16
        $region15: #{_lambda_.31} parent=11 // pred_region
          _
        $region16: #{_lambda_.31} parent=11 // pred_fallthru
          _
        // Predicated region
        $region17: #{_lambda_.31} parent=11 // pred_check
          %p121 = pneg %p77
        $region18: #{_lambda_.31} parent=11 // pred_check_branch
          %123 = sbr.rel (%p121) target = $region20
        $region19: #{_lambda_.31} parent=11 // pred_region
          _
        $region20: #{_lambda_.31} parent=11 // pred_fallthru
          _
      $region12: #{_lambda_.31} parent=5 // pred_fallthru
        _
      %p124 = scmp.lt.s32.totalorder %s9, 2
      // Predicated region
      $region21: #{_lambda_.31} parent=5 // pred_check
        %p125 = pneg %p124
      $region22: #{_lambda_.31} parent=5 // pred_check_branch
        %127 = sbr.rel (%p125) target = $region24
      $region23: #{_lambda_.31} parent=5 // pred_region
        // Predicated region
        $region25: #{_lambda_.31} parent=23 // pred_check
          %p128 = pneg %p50
        $region26: #{_lambda_.31} parent=23 // pred_check_branch
          %130 = sbr.rel (%p128) target = $region28
        $region27: #{_lambda_.31} parent=23 // pred_region
          %s131 = sand.u32 %s40, 1
          %s132 = sand.u32 %s40, 1
          %s133 = smul.addr %s132, 144
          %s134 = scalar_lea.vmem [#allocation2], %s133
          %s135 = smul.u32 4, %s9
          %s136 = smul.addr %s135, 4
          %s137 = scalar_lea.vmem %s1, %s136
          // Predicated region
          $region29: #{_lambda_.31} parent=27 // pred_check
            _
          $region30: #{_lambda_.31} parent=27 // pred_check_branch
            %139 = sbr.rel (0) target = $region32
          $region31: #{_lambda_.31} parent=27 // pred_region
            // Predicated region
            $region33: #{_lambda_.31} parent=31 // pred_check
              _
            $region34: #{_lambda_.31} parent=31 // pred_check_branch
              %141 = sbr.rel (0) target = $region36
            $region35: #{_lambda_.31} parent=31 // pred_region
              loop: start=0, step=1, limit=1
              $region37: #{_lambda_.31} parent=35 // loop_pre_header
                _
              $region38: #{_lambda_.31} parent=35 // loop_header
                %s143 = sphi 0, %s147
                %p144 = scmp.ge.s32.totalorder %s143, 1
                %s148 = sphi %s137, %s137
                %s149 = sphi %s134, %s134
              $region39: #{_lambda_.31} parent=35 // loop_header_branch
                %146 = sbr.rel (%p144) target = $region43
              $region40: #{_lambda_.31} parent=35 // loop_body
                %v150 = vld [vmem:[%s148] sm:$0xff]
                %151 = vst [vmem:[%s149] sm:$0xff] %v150
                %v152 = vld [vmem:[%s148 + $0x8] sm:$0xff]
                %153 = vst [vmem:[%s149 + $0x8] sm:$0xff] %v152
                %v154 = vld [vmem:[%s148 + $0x20] sm:$0xff]
                %155 = vst [vmem:[%s149 + $0x10] sm:$0xff] %v154
                %v156 = vld [vmem:[%s148 + $0x28] sm:$0xff]
                %157 = vst [vmem:[%s149 + $0x18] sm:$0xff] %v156
                %v158 = vld [vmem:[%s148 + $0x40] sm:$0xff]
                %159 = vst [vmem:[%s149 + $0x20] sm:$0xff] %v158
                %v160 = vld [vmem:[%s148 + $0x48] sm:$0xff]
                %161 = vst [vmem:[%s149 + $0x28] sm:$0xff] %v160
                %v162 = vld [vmem:[%s148 + $0x60] sm:$0xff]
                %163 = vst [vmem:[%s149 + $0x30] sm:$0xff] %v162
                %v164 = vld [vmem:[%s148 + $0x68] sm:$0xff]
                %165 = vst [vmem:[%s149 + $0x38] sm:$0xff] %v164
                %v166 = vld [vmem:[%s148 + $0x80] sm:$0xff]
                %167 = vst [vmem:[%s149 + $0x40] sm:$0xff] %v166
                %v168 = vld [vmem:[%s148 + $0x88] sm:$0xff]
                %169 = vst [vmem:[%s149 + $0x48] sm:$0xff] %v168
                %v170 = vld [vmem:[%s148 + $0xa0] sm:$0xff]
                %171 = vst [vmem:[%s149 + $0x50] sm:$0xff] %v170
                %v172 = vld [vmem:[%s148 + $0xa8] sm:$0xff]
                %173 = vst [vmem:[%s149 + $0x58] sm:$0xff] %v172
                %v174 = vld [vmem:[%s148 + $0xc0] sm:$0xff]
                %175 = vst [vmem:[%s149 + $0x60] sm:$0xff] %v174
                %v176 = vld [vmem:[%s148 + $0xc8] sm:$0xff]
                %177 = vst [vmem:[%s149 + $0x68] sm:$0xff] %v176
                %v178 = vld [vmem:[%s148 + $0xe0] sm:$0xff]
                %179 = vst [vmem:[%s149 + $0x70] sm:$0xff] %v178
                %v180 = vld [vmem:[%s148 + $0xe8] sm:$0xff]
                %181 = vst [vmem:[%s149 + $0x78] sm:$0xff] %v180
                %v182 = vld [vmem:[%s148 + $0x100] sm:$0xff]
                %183 = vst [vmem:[%s149 + $0x80] sm:$0xff] %v182
                %v184 = vld [vmem:[%s148 + $0x108] sm:$0xff]
                %185 = vst [vmem:[%s149 + $0x88] sm:$0xff] %v184
              $region41: #{_lambda_.31} parent=35 // loop_footer
                %s147 = sadd.s32 1, %s143
              $region42: #{_lambda_.31} parent=35 // loop_footer_branch
                %142 = sbr.rel target = $region38
              $region43: #{_lambda_.31} parent=35 // loop_exit
                _
            $region36: #{_lambda_.31} parent=31 // pred_fallthru
              _
            // Predicated region
            $region44: #{_lambda_.31} parent=31 // pred_check
              _
            $region45: #{_lambda_.31} parent=31 // pred_check_branch
              %187 = sbr.rel target = $region47
            $region46: #{_lambda_.31} parent=31 // pred_region
              _
            $region47: #{_lambda_.31} parent=31 // pred_fallthru
              _
          $region32: #{_lambda_.31} parent=27 // pred_fallthru
            _
          %188 = vnop
        $region28: #{_lambda_.31} parent=23 // pred_fallthru
          _
      $region24: #{_lambda_.31} parent=5 // pred_fallthru
        _
      %p189 = scmp.le.s32.totalorder 1, %s9
      %p190 = scmp.lt.s32.totalorder %s9, 3
      %p191 = pnand %p189, %p190
      %p192 = pneg %p191
      // Predicated region
      $region48: #{_lambda_.31} parent=5 // pred_check
        _
      $region49: #{_lambda_.31} parent=5 // pred_check_branch
        %194 = sbr.rel (%p191) target = $region51
      $region50: #{_lambda_.31} parent=5 // pred_region
        %s195 = ssub.s32 %s9, 1
        %s196 = sand.u32 %s43, 1
        %s197 = sand.u32 %s43, 1
        %s198 = smul.addr %s197, 144
        %s199 = scalar_lea.vmem [#allocation2], %s198
        // Predicated region
        $region52: #{_lambda_.31} parent=50 // pred_check
          %p200 = pneg %p56
        $region53: #{_lambda_.31} parent=50 // pred_check_branch
          %202 = sbr.rel (%p200) target = $region55
        $region54: #{_lambda_.31} parent=50 // pred_region
          _
        $region55: #{_lambda_.31} parent=50 // pred_fallthru
          _
        %p203 = pneg %p30
        %p204 = pneg %p27
        %s205 = sand.u32 %s43, 1
        %s206 = sand.u32 %s43, 1
        %s207 = smul.addr %s206, 144
        %s208 = scalar_lea.vmem [#allocation2], %s207
        %p209 = pneg %p56
        %p210 = pneg %p53
        %p211 = pneg %p77
        %p212 = pneg %p74
        %p213 = pneg %p103
        %p214 = pneg %p100
        %s215 = sand.u32 %s90, 1
        %s216 = sand.u32 %s90, 1
        %s217 = smul.addr %s216, 64
        %s218 = scalar_lea.vmem [#allocation3], %s217
        %s219 = smul.u32 4, %s14
        %s220 = smul.u32 4, %s14
        %v222 = vld [vmem:[%s0] sm:$0xf]
        %v223 = vld [vmem:[%s0 + $0x4] sm:$0xf]
        %v224 = vld [vmem:[%s0 + $0x8] sm:$0xf]
        %v225 = vld [vmem:[%s0 + $0xc] sm:$0xf]
        %v226 = vld [vmem:[%s199] sm:$0xff]
        %v227 = vld [vmem:[%s199 + $0x8] sm:$0xff]
        %v228 = vld [vmem:[%s199 + $0x10] sm:$0xff]
        %v229 = vld [vmem:[%s199 + $0x18] sm:$0xff]
        %v230 = vld [vmem:[%s199 + $0x20] sm:$0xff]
        %v231 = vld [vmem:[%s199 + $0x28] sm:$0xff]
        %v232 = vld [vmem:[%s199 + $0x30] sm:$0xff]
        %v233 = vld [vmem:[%s199 + $0x38] sm:$0xff]
        %v234 = vld [vmem:[%s199 + $0x40] sm:$0xff]
        %v235 = vld [vmem:[%s199 + $0x48] sm:$0xff]
        %v236 = vld [vmem:[%s199 + $0x50] sm:$0xff]
        %v237 = vld [vmem:[%s199 + $0x58] sm:$0xff]
        %v238 = vld [vmem:[%s199 + $0x60] sm:$0xff]
        %v239 = vld [vmem:[%s199 + $0x68] sm:$0xff]
        %v240 = vld [vmem:[%s199 + $0x70] sm:$0xff]
        %v241 = vld [vmem:[%s199 + $0x78] sm:$0xff]
        %v242 = vld [vmem:[%s199 + $0x80] sm:$0xff]
        %v243 = vld [vmem:[%s199 + $0x88] sm:$0xff]
        %v244 = vld [vmem:[%s2] sm:$0xff]
        %v245 = vld [vmem:[%s2 + $0x8] sm:$0xff]
        %v246 = vld [vmem:[%s2 + $0x10] sm:$0xff]
        %v247 = vld [vmem:[%s2 + $0x18] sm:$0xff]
        %249 = vset.pattern.permute.xlu0 0
        %250 = vperm.xlu0 %249, %v244
        %v251 = vpop.permute.xlu0 %250
        %254 = vset.pattern.permute.xlu0 0
        %255 = vperm.xlu0 %254, %v245
        %v256 = vpop.permute.xlu0 %255
        %259 = vset.pattern.permute.xlu0 0
        %260 = vperm.xlu0 %259, %v246
        %v261 = vpop.permute.xlu0 %260
        %264 = vset.pattern.permute.xlu0 0
        %265 = vperm.xlu0 %264, %v247
        %v266 = vpop.permute.xlu0 %265
        %v272 = vunpack.c.l.b16 %v222
        %v273 = vunpack.c.l.b16 %v223
        %v274 = vunpack.c.l.b16 %v224
        %v275 = vunpack.c.l.b16 %v225
        %v276 = vpack.c.b16 %v273, %v272
        %v277 = vpack.c.b16 %v275, %v274
        %v296 = vunpack.c.l.b16 %v226
        %v297 = vunpack.c.h.b16 %v226
        %v298 = vunpack.c.l.b16 %v227
        %v299 = vunpack.c.h.b16 %v227
        %v300 = vunpack.c.l.b16 %v228
        %v301 = vunpack.c.h.b16 %v228
        %v302 = vunpack.c.l.b16 %v229
        %v303 = vunpack.c.h.b16 %v229
        %v304 = vunpack.c.l.b16 %v230
        %v305 = vunpack.c.h.b16 %v230
        %v306 = vunpack.c.l.b16 %v231
        %v307 = vunpack.c.h.b16 %v231
        %v308 = vunpack.c.l.b16 %v232
        %v309 = vunpack.c.h.b16 %v232
        %v310 = vunpack.c.l.b16 %v233
        %v311 = vunpack.c.h.b16 %v233
        %v312 = vunpack.c.l.b16 %v234
        %v313 = vunpack.c.h.b16 %v234
        %v314 = vunpack.c.l.b16 %v235
        %v315 = vunpack.c.h.b16 %v235
        %v316 = vunpack.c.l.b16 %v236
        %v317 = vunpack.c.h.b16 %v236
        %v318 = vunpack.c.l.b16 %v237
        %v319 = vunpack.c.h.b16 %v237
        %v320 = vunpack.c.l.b16 %v238
        %v321 = vunpack.c.h.b16 %v238
        %v322 = vunpack.c.l.b16 %v239
        %v323 = vunpack.c.h.b16 %v239
        %v324 = vunpack.c.l.b16 %v240
        %v325 = vunpack.c.h.b16 %v240
        %v326 = vunpack.c.l.b16 %v241
        %v327 = vunpack.c.h.b16 %v241
        %v328 = vunpack.c.l.b16 %v242
        %v329 = vunpack.c.h.b16 %v242
        %v330 = vunpack.c.l.b16 %v243
        %v331 = vunpack.c.h.b16 %v243
        %v332 = vpack.c.b16 %v300, %v296
        %v333 = vpack.c.b16 %v301, %v297
        %v334 = vpack.c.b16 %v302, %v298
        %v335 = vpack.c.b16 %v303, %v299
        %v336 = vpack.c.b16 %v308, %v304
        %v337 = vpack.c.b16 %v309, %v305
        %v338 = vpack.c.b16 %v310, %v306
        %v339 = vpack.c.b16 %v311, %v307
        %v340 = vpack.c.b16 %v316, %v312
        %v341 = vpack.c.b16 %v317, %v313
        %v342 = vpack.c.b16 %v318, %v314
        %v343 = vpack.c.b16 %v319, %v315
        %v344 = vpack.c.b16 %v324, %v320
        %v345 = vpack.c.b16 %v325, %v321
        %v346 = vpack.c.b16 %v326, %v322
        %v347 = vpack.c.b16 %v327, %v323
        %v348 = vpack.c.b16 %v328, %v328
        %v349 = vpack.c.b16 %v329, %v329
        %v350 = vpack.c.b16 %v330, %v330
        %v351 = vpack.c.b16 %v331, %v331
        %vm368 = vcmask 588800
        %v370 = vsel %vm368, %v276, 0
        %v373 = vsel %vm368, %v277, 0
        %vm375 = vcmask 1043456
        %v377 = vsel %vm375, %v348, 0
        %v380 = vsel %vm375, %v349, 0
        %v383 = vsel %vm375, %v350, 0
        %v386 = vsel %vm375, %v351, 0
        %388 = vmatprep.subr.bf16.mxu0 %v333
        %389 = vmatpush1.bf16.msra.mxu0 %v332
        %390 = vmatprep.subr.bf16.mxu0 %v337
        %391 = vmatpush1.bf16.msra.mxu0 %v336
        %392 = vmatprep.subr.bf16.mxu0 %v341
        %393 = vmatpush1.bf16.msra.mxu0 %v340
        %394 = vmatprep.subr.bf16.mxu0 %v345
        %395 = vmatpush1.bf16.msra.mxu0 %v344
        %396 = vmatprep.subr.bf16.mxu0 %v380
        %397 = vmatpush1.bf16.msra.mxu0 %v377
        %398 = vmatprep.subr.bf16.mxu0 0
        %399 = vmatpush1.bf16.msra.mxu0 0
        %400 = vmatprep.subr.bf16.mxu0 0
        %401 = vmatpush1.bf16.msra.mxu0 0
        %402 = vmatprep.subr.bf16.mxu0 0
        %403 = vmatpush1.bf16.msra.mxu0 0
        %404 = vmatprep.subr.bf16.mxu0 0
        %405 = vmatpush1.bf16.msra.mxu0 0
        %406 = vmatprep.subr.bf16.mxu0 0
        %407 = vmatpush1.bf16.msra.mxu0 0
        %408 = vmatprep.subr.bf16.mxu0 0
        %409 = vmatpush1.bf16.msra.mxu0 0
        %410 = vmatprep.subr.bf16.mxu0 0
        %411 = vmatpush1.bf16.msra.mxu0 0
        %412 = vmatprep.subr.bf16.mxu0 0
        %413 = vmatpush1.bf16.msra.mxu0 0
        %414 = vmatprep.subr.bf16.mxu0 0
        %415 = vmatpush1.bf16.msra.mxu0 0
        %416 = vmatprep.subr.bf16.mxu0 0
        %417 = vmatpush1.bf16.msra.mxu0 0
        %418 = vmatprep.subr.bf16.mxu0 0
        %419 = vmatpush1.bf16.msra.mxu0 0
        %420 = vmatprep.mubr.bf16.mxu0 0
        %421 = vmatmul.mubr.bf16.gmra.mrb[0].mxu0 %v370
        %v422 = vpop.f32.mrb[0].mxu0
        %v423 = vadd.f32 %v251, %v422
        %v424 = vpop.f32.mrb[0].mxu0
        %v425 = vadd.f32 %v251, %v424
        %v426 = vpop.f32.mrb[0].mxu0
        %v427 = vadd.f32 %v256, %v426
        %v428 = vpop.f32.mrb[0].mxu0
        %v429 = vadd.f32 %v256, %v428
        %430 = vmatprep.mubr.bf16.mxu0 0
        %431 = vmatmul.mubr.bf16.gmra.mrb[0].mxu0 %v373
        %v432 = vpop.f32.mrb[0].mxu0
        %v433 = vadd.f32 %v261, %v432
        %v434 = vpop.f32.mrb[0].mxu0
        %v435 = vadd.f32 %v261, %v434
        %v436 = vpop.f32.mrb[0].mxu0
        %v437 = vadd.f32 %v266, %v436
        %v438 = vpop.f32.mrb[0].mxu0
        %v439 = vadd.f32 %v266, %v438
        %440 = vdwg.mxu0
        %441 = vmatprep.subr.bf16.mxu0 %v335
        %442 = vmatpush1.bf16.msra.mxu0 %v334
        %443 = vmatprep.subr.bf16.mxu0 %v339
        %444 = vmatpush1.bf16.msra.mxu0 %v338
        %445 = vmatprep.subr.bf16.mxu0 %v343
        %446 = vmatpush1.bf16.msra.mxu0 %v342
        %447 = vmatprep.subr.bf16.mxu0 %v347
        %448 = vmatpush1.bf16.msra.mxu0 %v346
        %449 = vmatprep.subr.bf16.mxu0 %v386
        %450 = vmatpush1.bf16.msra.mxu0 %v383
        %451 = vmatprep.subr.bf16.mxu0 0
        %452 = vmatpush1.bf16.msra.mxu0 0
        %453 = vmatprep.subr.bf16.mxu0 0
        %454 = vmatpush1.bf16.msra.mxu0 0
        %455 = vmatprep.subr.bf16.mxu0 0
        %456 = vmatpush1.bf16.msra.mxu0 0
        %457 = vmatprep.subr.bf16.mxu0 0
        %458 = vmatpush1.bf16.msra.mxu0 0
        %459 = vmatprep.subr.bf16.mxu0 0
        %460 = vmatpush1.bf16.msra.mxu0 0
        %461 = vmatprep.subr.bf16.mxu0 0
        %462 = vmatpush1.bf16.msra.mxu0 0
        %463 = vmatprep.subr.bf16.mxu0 0
        %464 = vmatpush1.bf16.msra.mxu0 0
        %465 = vmatprep.subr.bf16.mxu0 0
        %466 = vmatpush1.bf16.msra.mxu0 0
        %467 = vmatprep.subr.bf16.mxu0 0
        %468 = vmatpush1.bf16.msra.mxu0 0
        %469 = vmatprep.subr.bf16.mxu0 0
        %470 = vmatpush1.bf16.msra.mxu0 0
        %471 = vmatprep.subr.bf16.mxu0 0
        %472 = vmatpush1.bf16.msra.mxu0 0
        %473 = vmatprep.mubr.bf16.mxu0 0
        %474 = vmatmul.mubr.bf16.gmra.mrb[0].mxu0 %v370
        %v475 = vpop.f32.mrb[0].mxu0
        %v476 = vadd.f32 %v251, %v475
        %v477 = vpop.f32.mrb[0].mxu0
        %v478 = vadd.f32 %v251, %v477
        %v479 = vpop.f32.mrb[0].mxu0
        %v480 = vadd.f32 %v256, %v479
        %v481 = vpop.f32.mrb[0].mxu0
        %v482 = vadd.f32 %v256, %v481
        %483 = vmatprep.mubr.bf16.mxu0 0
        %484 = vmatmul.mubr.bf16.gmra.mrb[0].mxu0 %v373
        %v485 = vpop.f32.mrb[0].mxu0
        %v486 = vadd.f32 %v261, %v485
        %v487 = vpop.f32.mrb[0].mxu0
        %v488 = vadd.f32 %v261, %v487
        %v489 = vpop.f32.mrb[0].mxu0
        %v490 = vadd.f32 %v266, %v489
        %v491 = vpop.f32.mrb[0].mxu0
        %v492 = vadd.f32 %v266, %v491
        %493 = vdwg.mxu0
        %vm494 = vcmp.ge.f32.partialorder %v423, 0.0
        %vm495 = vcmp.ge.f32.partialorder %v425, 0.0
        %vm496 = vcmp.ge.f32.partialorder %v476, 0.0
        %vm497 = vcmp.ge.f32.partialorder %v478, 0.0
        %vm498 = vcmp.ge.f32.partialorder %v427, 0.0
        %vm499 = vcmp.ge.f32.partialorder %v429, 0.0
        %vm500 = vcmp.ge.f32.partialorder %v480, 0.0
        %vm501 = vcmp.ge.f32.partialorder %v482, 0.0
        %vm502 = vcmp.ge.f32.partialorder %v433, 0.0
        %vm503 = vcmp.ge.f32.partialorder %v435, 0.0
        %vm504 = vcmp.ge.f32.partialorder %v486, 0.0
        %vm505 = vcmp.ge.f32.partialorder %v488, 0.0
        %vm506 = vcmp.ge.f32.partialorder %v437, 0.0
        %vm507 = vcmp.ge.f32.partialorder %v439, 0.0
        %vm508 = vcmp.ge.f32.partialorder %v490, 0.0
        %vm509 = vcmp.ge.f32.partialorder %v492, 0.0
        %v510 = vmul.f32 %v423, 0.01
        %v511 = vmul.f32 %v425, 0.01
        %v512 = vmul.f32 %v476, 0.01
        %v513 = vmul.f32 %v478, 0.01
        %v514 = vmul.f32 %v427, 0.01
        %v515 = vmul.f32 %v429, 0.01
        %v516 = vmul.f32 %v480, 0.01
        %v517 = vmul.f32 %v482, 0.01
        %v518 = vmul.f32 %v433, 0.01
        %v519 = vmul.f32 %v435, 0.01
        %v520 = vmul.f32 %v486, 0.01
        %v521 = vmul.f32 %v488, 0.01
        %v522 = vmul.f32 %v437, 0.01
        %v523 = vmul.f32 %v439, 0.01
        %v524 = vmul.f32 %v490, 0.01
        %v525 = vmul.f32 %v492, 0.01
        %v526 = vsel %vm494, %v423, %v510
        %v527 = vsel %vm495, %v425, %v511
        %v528 = vsel %vm496, %v476, %v512
        %v529 = vsel %vm497, %v478, %v513
        %v530 = vsel %vm498, %v427, %v514
        %v531 = vsel %vm499, %v429, %v515
        %v532 = vsel %vm500, %v480, %v516
        %v533 = vsel %vm501, %v482, %v517
        %v534 = vsel %vm502, %v433, %v518
        %v535 = vsel %vm503, %v435, %v519
        %v536 = vsel %vm504, %v486, %v520
        %v537 = vsel %vm505, %v488, %v521
        %v538 = vsel %vm506, %v437, %v522
        %v539 = vsel %vm507, %v439, %v523
        %v540 = vsel %vm508, %v490, %v524
        %v541 = vsel %vm509, %v492, %v525
        %542 = vset.pattern.permute.xlu0 1
        %543 = vperm.xlu0 %542, %v244
        %v544 = vpop.permute.xlu0 %543
        %546 = vset.pattern.permute.xlu0 1
        %547 = vperm.xlu0 %546, %v245
        %v548 = vpop.permute.xlu0 %547
        %550 = vset.pattern.permute.xlu0 1
        %551 = vperm.xlu0 %550, %v246
        %v552 = vpop.permute.xlu0 %551
        %554 = vset.pattern.permute.xlu0 1
        %555 = vperm.xlu0 %554, %v247
        %v556 = vpop.permute.xlu0 %555
        %v558 = vmul.f32 %v526, %v544
        %v559 = vmul.f32 %v527, %v544
        %v560 = vmul.f32 %v528, %v544
        %v561 = vmul.f32 %v529, %v544
        %v562 = vmul.f32 %v530, %v548
        %v563 = vmul.f32 %v531, %v548
        %v564 = vmul.f32 %v532, %v548
        %v565 = vmul.f32 %v533, %v548
        %v566 = vmul.f32 %v534, %v552
        %v567 = vmul.f32 %v535, %v552
        %v568 = vmul.f32 %v536, %v552
        %v569 = vmul.f32 %v537, %v552
        %v570 = vmul.f32 %v538, %v556
        %v571 = vmul.f32 %v539, %v556
        %v572 = vmul.f32 %v540, %v556
        %v573 = vmul.f32 %v541, %v556
        %574 = vset.pattern.permute.xlu0 2
        %575 = vperm.xlu0 %574, %v244
        %v576 = vpop.permute.xlu0 %575
        %578 = vset.pattern.permute.xlu0 2
        %579 = vperm.xlu0 %578, %v245
        %v580 = vpop.permute.xlu0 %579
        %582 = vset.pattern.permute.xlu0 2
        %583 = vperm.xlu0 %582, %v246
        %v584 = vpop.permute.xlu0 %583
        %586 = vset.pattern.permute.xlu0 2
        %587 = vperm.xlu0 %586, %v247
        %v588 = vpop.permute.xlu0 %587
        %v590 = vadd.f32 %v558, %v576
        %v591 = vadd.f32 %v559, %v576
        %v592 = vadd.f32 %v560, %v576
        %v593 = vadd.f32 %v561, %v576
        %v594 = vadd.f32 %v562, %v580
        %v595 = vadd.f32 %v563, %v580
        %v596 = vadd.f32 %v564, %v580
        %v597 = vadd.f32 %v565, %v580
        %v598 = vadd.f32 %v566, %v584
        %v599 = vadd.f32 %v567, %v584
        %v600 = vadd.f32 %v568, %v584
        %v601 = vadd.f32 %v569, %v584
        %v602 = vadd.f32 %v570, %v588
        %v603 = vadd.f32 %v571, %v588
        %v604 = vadd.f32 %v572, %v588
        %v605 = vadd.f32 %v573, %v588
        %v606 = vpack.c.bf16 %v594, %v590
        %v607 = vpack.c.bf16 %v595, %v591
        %v608 = vpack.c.bf16 %v596, %v592
        %v609 = vpack.c.bf16 %v597, %v593
        %v610 = vpack.c.bf16 %v602, %v598
        %v611 = vpack.c.bf16 %v603, %v599
        %v612 = vpack.c.bf16 %v604, %v600
        %v613 = vpack.c.bf16 %v605, %v601
        %v622 = vunpack.c.l.b16 %v606
        %v623 = vunpack.c.l.b16 %v607
        %v624 = vunpack.c.l.b16 %v608
        %v625 = vunpack.c.l.b16 %v609
        %v626 = vunpack.c.h.b16 %v606
        %v627 = vunpack.c.h.b16 %v607
        %v628 = vunpack.c.h.b16 %v608
        %v629 = vunpack.c.h.b16 %v609
        %v630 = vunpack.c.l.b16 %v610
        %v631 = vunpack.c.l.b16 %v611
        %v632 = vunpack.c.l.b16 %v612
        %v633 = vunpack.c.l.b16 %v613
        %v634 = vunpack.c.h.b16 %v610
        %v635 = vunpack.c.h.b16 %v611
        %v636 = vunpack.c.h.b16 %v612
        %v637 = vunpack.c.h.b16 %v613
        %v638 = vpack.c.b16 %v623, %v622
        %v639 = vpack.c.b16 %v625, %v624
        %v640 = vpack.c.b16 %v627, %v626
        %v641 = vpack.c.b16 %v629, %v628
        %v642 = vpack.c.b16 %v631, %v630
        %v643 = vpack.c.b16 %v633, %v632
        %v644 = vpack.c.b16 %v635, %v634
        %v645 = vpack.c.b16 %v637, %v636
        %654 = vst [vmem:[%s218] sm:$0xff] %v638
        %655 = vst [vmem:[%s218 + $0x8] sm:$0xff] %v639
        %656 = vst [vmem:[%s218 + $0x10] sm:$0xff] %v640
        %657 = vst [vmem:[%s218 + $0x18] sm:$0xff] %v641
        %658 = vst [vmem:[%s218 + $0x20] sm:$0xff] %v642
        %659 = vst [vmem:[%s218 + $0x28] sm:$0xff] %v643
        %660 = vst [vmem:[%s218 + $0x30] sm:$0xff] %v644
        %661 = vst [vmem:[%s218 + $0x38] sm:$0xff] %v645
        %s662 = sand.u32 %s90, 1
        %s663 = sand.u32 %s90, 1
        %s664 = smul.addr %s663, 64
        %s665 = scalar_lea.vmem [#allocation3], %s664
        // Predicated region
        $region56: #{_lambda_.31} parent=50 // pred_check
          %p666 = pneg %p100
        $region57: #{_lambda_.31} parent=50 // pred_check_branch
          %668 = sbr.rel (%p666) target = $region59
        $region58: #{_lambda_.31} parent=50 // pred_region
          %s669 = smul.u32 4, %s14
          %s670 = smul.addr %s669, 4
          %s671 = scalar_lea.vmem %s3, %s670
          // Predicated region
          $region60: #{_lambda_.31} parent=58 // pred_check
            _
          $region61: #{_lambda_.31} parent=58 // pred_check_branch
            %673 = sbr.rel (0) target = $region63
          $region62: #{_lambda_.31} parent=58 // pred_region
            // Predicated region
            $region64: #{_lambda_.31} parent=62 // pred_check
              _
            $region65: #{_lambda_.31} parent=62 // pred_check_branch
              %675 = sbr.rel (0) target = $region67
            $region66: #{_lambda_.31} parent=62 // pred_region
              loop: start=0, step=1, limit=1
              $region68: #{_lambda_.31} parent=66 // loop_pre_header
                _
              $region69: #{_lambda_.31} parent=66 // loop_header
                %s677 = sphi 0, %s681
                %p678 = scmp.ge.s32.totalorder %s677, 1
                %s682 = sphi %s665, %s665
                %s683 = sphi %s671, %s671
              $region70: #{_lambda_.31} parent=66 // loop_header_branch
                %680 = sbr.rel (%p678) target = $region74
              $region71: #{_lambda_.31} parent=66 // loop_body
                %v684 = vld [vmem:[%s682] sm:$0xff]
                %685 = vst [vmem:[%s683] sm:$0xff] %v684
                %v686 = vld [vmem:[%s682 + $0x8] sm:$0xff]
                %687 = vst [vmem:[%s683 + $0x8] sm:$0xff] %v686
                %v688 = vld [vmem:[%s682 + $0x10] sm:$0xff]
                %689 = vst [vmem:[%s683 + $0x20] sm:$0xff] %v688
                %v690 = vld [vmem:[%s682 + $0x18] sm:$0xff]
                %691 = vst [vmem:[%s683 + $0x28] sm:$0xff] %v690
                %v692 = vld [vmem:[%s682 + $0x20] sm:$0xff]
                %693 = vst [vmem:[%s683 + $0x40] sm:$0xff] %v692
                %v694 = vld [vmem:[%s682 + $0x28] sm:$0xff]
                %695 = vst [vmem:[%s683 + $0x48] sm:$0xff] %v694
                %v696 = vld [vmem:[%s682 + $0x30] sm:$0xff]
                %697 = vst [vmem:[%s683 + $0x60] sm:$0xff] %v696
                %v698 = vld [vmem:[%s682 + $0x38] sm:$0xff]
                %699 = vst [vmem:[%s683 + $0x68] sm:$0xff] %v698
              $region72: #{_lambda_.31} parent=66 // loop_footer
                %s681 = sadd.s32 1, %s677
              $region73: #{_lambda_.31} parent=66 // loop_footer_branch
                %676 = sbr.rel target = $region69
              $region74: #{_lambda_.31} parent=66 // loop_exit
                _
            $region67: #{_lambda_.31} parent=62 // pred_fallthru
              _
            // Predicated region
            $region75: #{_lambda_.31} parent=62 // pred_check
              _
            $region76: #{_lambda_.31} parent=62 // pred_check_branch
              %701 = sbr.rel target = $region78
            $region77: #{_lambda_.31} parent=62 // pred_region
              _
            $region78: #{_lambda_.31} parent=62 // pred_fallthru
              _
          $region63: #{_lambda_.31} parent=58 // pred_fallthru
            _
          %702 = vnop
        $region59: #{_lambda_.31} parent=50 // pred_fallthru
          _
      $region51: #{_lambda_.31} parent=5 // pred_fallthru
        _
      %p703 = scmp.le.s32.totalorder 2, %s9
      // Predicated region
      $region79: #{_lambda_.31} parent=5 // pred_check
        %p704 = pneg %p703
      $region80: #{_lambda_.31} parent=5 // pred_check_branch
        %706 = sbr.rel (%p704) target = $region82
      $region81: #{_lambda_.31} parent=5 // pred_region
        %s707 = ssub.s32 %s9, 2
        // Predicated region
        $region83: #{_lambda_.31} parent=81 // pred_check
          %p708 = pneg %p106
        $region84: #{_lambda_.31} parent=81 // pred_check_branch
          %710 = sbr.rel (%p708) target = $region86
        $region85: #{_lambda_.31} parent=81 // pred_region
          %s711 = sand.u32 %s91, 1
          %s712 = sand.u32 %s91, 1
          %s713 = smul.addr %s712, 64
          %s714 = scalar_lea.vmem [#allocation3], %s713
        $region86: #{_lambda_.31} parent=81 // pred_fallthru
          _
      $region82: #{_lambda_.31} parent=5 // pred_fallthru
        _
    $region6: #{_lambda_.31} parent=1 // loop_footer
      %s13 = sadd.s32 1, %s9
    $region7: #{_lambda_.31} parent=1 // loop_footer_branch
      %8 = sbr.rel target = $region3
    $region8: #{_lambda_.31} parent=1 // loop_exit
      _

// kernel: _lambda_.32
$region0: #{_lambda_.32}
  #allocation0 [shape = 'u32[]', space=smem, size = 0x4, offset = 0x4, fixed_abs, tag = 'smem constant byte address 0x4 - core index']
  #allocation1 [shape = 'u32[144,128]{1,0:T(1,128)}', space=vmem, size = 0x12000, scoped, tag = 'internal scratch']
  %s0 = inlined_call_operand.vmem [shape: bf16[8,81], index: 0, kind: input, shape index: {}]
  %s1 = inlined_call_operand.vmem [shape: bf16[81,4096], index: 1, kind: input, shape index: {}]
  %s2 = inlined_call_operand.vmem [shape: f32[8,3], index: 2, kind: input, shape index: {}]
  %s3 = inlined_call_operand.vmem [shape: bf16[8,4096], index: 3, kind: output, shape index: {}]
  %s4 = sld [smem:[#allocation0]]
  $region68: #{_lambda_.32} parent=0
    _
  %s6 = ssub.s32 1, %s4
  %s7 = scalar_select 0, %s6, %s4
  $region1: #{_lambda_.32} parent=0
    #allocation2 [shape = 'u8[720896]{0}', space=vmem, size = 0xb0000, scoped, tag = 'input window, operand 1']
    loop: start=0, step=1, limit=4
    $region2: #{_lambda_.32} parent=1 // loop_pre_header
      _
    $region3: #{_lambda_.32} parent=1 // loop_header
      %s9 = sphi 0, %s13
      %p10 = scmp.ge.s32.totalorder %s9, 4
      %s17 = sphi 0, %s17
      %s19 = sphi 0, %s17
      %s20 = sphi 0, %s19
      %s34 = sphi 0, %s20
      %s40 = sphi 0, %s42
      %s43 = sphi 0, %s40
      %s44 = sphi 0, %s43
      %s60 = sphi 0, %s44
      %s64 = sphi 0, %s64
      %s66 = sphi 0, %s64
      %s67 = sphi 0, %s66
      %s81 = sphi 0, %s67
      %s87 = sphi 0, %s89
      %s90 = sphi 0, %s87
      %s91 = sphi 0, %s90
      %s107 = sphi 0, %s91
    $region4: #{_lambda_.32} parent=1 // loop_header_branch
      %12 = sbr.rel (%p10) target = $region8
    $region5: #{_lambda_.32} parent=1 // loop_body
      %s14 = ssub.s32 %s9, 1
      %s15 = ssub.s32 %s9, 2
      %s16 = sadd.s32 %s9, 1
      %s18 = sadd.s32 %s17, 1
      %p21 = scmp.eq.s32.totalorder %s9, 1
      %p22 = scmp.ne.s32.totalorder %s17, %s19
      %p23 = scmp.eq.s32.totalorder %s9, 0
      %p24 = por %p22, %p23
      %p25 = scmp.ne.s32.totalorder %s17, %s19
      %p26 = scmp.eq.s32.totalorder %s14, 1
      %p27 = por %p25, %p26
      %p28 = scmp.ne.s32.totalorder %s19, %s20
      %p29 = scmp.eq.s32.totalorder %s14, 0
      %p30 = por %p28, %p29
      %p31 = scmp.ne.s32.totalorder %s19, %s20
      %p32 = scmp.eq.s32.totalorder %s15, 1
      %p33 = por %p31, %p32
      %p35 = scmp.ne.s32.totalorder %s20, %s34
      %p36 = scmp.eq.s32.totalorder %s15, 0
      %p37 = por %p35, %p36
      %s38 = ssub.s32 %s9, %s16
      %p39 = scmp.eq.s32.totalorder %s38, 0
      %s41 = sadd.s32 %s40, 1
      %s42 = scalar_select %p39, %s40, %s41
      %p45 = pneg %p39
      %p46 = scmp.eq.s32.totalorder %s9, 1
      %p47 = por %p45, %p46
      %p48 = scmp.ne.s32.totalorder %s40, %s43
      %p49 = scmp.eq.s32.totalorder %s9, 0
      %p50 = por %p48, %p49
      %p51 = scmp.ne.s32.totalorder %s40, %s43
      %p52 = scmp.eq.s32.totalorder %s14, 1
      %p53 = por %p51, %p52
      %p54 = scmp.ne.s32.totalorder %s43, %s44
      %p55 = scmp.eq.s32.totalorder %s14, 0
      %p56 = por %p54, %p55
      %p57 = scmp.ne.s32.totalorder %s43, %s44
      %p58 = scmp.eq.s32.totalorder %s15, 1
      %p59 = por %p57, %p58
      %p61 = scmp.ne.s32.totalorder %s44, %s60
      %p62 = scmp.eq.s32.totalorder %s15, 0
      %p63 = por %p61, %p62
      %s65 = sadd.s32 %s64, 1
      %p68 = scmp.eq.s32.totalorder %s9, 1
      %p69 = scmp.ne.s32.totalorder %s64, %s66
      %p70 = scmp.eq.s32.totalorder %s9, 0
      %p71 = por %p69, %p70
      %p72 = scmp.ne.s32.totalorder %s64, %s66
      %p73 = scmp.eq.s32.totalorder %s14, 1
      %p74 = por %p72, %p73
      %p75 = scmp.ne.s32.totalorder %s66, %s67
      %p76 = scmp.eq.s32.totalorder %s14, 0
      %p77 = por %p75, %p76
      %p78 = scmp.ne.s32.totalorder %s66, %s67
      %p79 = scmp.eq.s32.totalorder %s15, 1
      %p80 = por %p78, %p79
      %p82 = scmp.ne.s32.totalorder %s67, %s81
      %p83 = scmp.eq.s32.totalorder %s15, 0
      %p84 = por %p82, %p83
      %s85 = ssub.s32 %s9, %s16
      %p86 = scmp.eq.s32.totalorder %s85, 0
      %s88 = sadd.s32 %s87, 1
      %s89 = scalar_select %p86, %s87, %s88
      %p92 = pneg %p86
      %p93 = scmp.eq.s32.totalorder %s9, 1
      %p94 = por %p92, %p93
      %p95 = scmp.ne.s32.totalorder %s87, %s90
      %p96 = scmp.eq.s32.totalorder %s9, 0
      %p97 = por %p95, %p96
      %p98 = scmp.ne.s32.totalorder %s87, %s90
      %p99 = scmp.eq.s32.totalorder %s14, 1
      %p100 = por %p98, %p99
      %p101 = scmp.ne.s32.totalorder %s90, %s91
      %p102 = scmp.eq.s32.totalorder %s14, 0
      %p103 = por %p101, %p102
      %p104 = scmp.ne.s32.totalorder %s90, %s91
      %p105 = scmp.eq.s32.totalorder %s15, 1
      %p106 = por %p104, %p105
      %p108 = scmp.ne.s32.totalorder %s91, %s107
      %p109 = scmp.eq.s32.totalorder %s15, 0
      %p110 = por %p108, %p109
      %p111 = scmp.le.s32.totalorder 1, %s9
      %p112 = scmp.lt.s32.totalorder %s9, 3
      %p113 = pnand %p111, %p112
      %p114 = pneg %p113
      // Predicated region
      $region9: #{_lambda_.32} parent=5 // pred_check
        _
      $region10: #{_lambda_.32} parent=5 // pred_check_branch
        %116 = sbr.rel (%p113) target = $region12
      $region11: #{_lambda_.32} parent=5 // pred_region
        %s117 = ssub.s32 %s9, 1
        // Predicated region
        $region13: #{_lambda_.32} parent=11 // pred_check
          %p118 = pneg %p30
        $region14: #{_lambda_.32} parent=11 // pred_check_branch
          %120 = sbr.rel (%p118) target = $region16
        $region15: #{_lambda_.32} parent=11 // pred_region
          _
        $region16: #{_lambda_.32} parent=11 // pred_fallthru
          _
        // Predicated region
        $region17: #{_lambda_.32} parent=11 // pred_check
          %p121 = pneg %p77
        $region18: #{_lambda_.32} parent=11 // pred_check_branch
          %123 = sbr.rel (%p121) target = $region20
        $region19: #{_lambda_.32} parent=11 // pred_region
          _
        $region20: #{_lambda_.32} parent=11 // pred_fallthru
          _
      $region12: #{_lambda_.32} parent=5 // pred_fallthru
        _
      %p124 = scmp.lt.s32.totalorder %s9, 2
      // Predicated region
      $region21: #{_lambda_.32} parent=5 // pred_check
        %p125 = pneg %p124
      $region22: #{_lambda_.32} parent=5 // pred_check_branch
        %127 = sbr.rel (%p125) target = $region24
      $region23: #{_lambda_.32} parent=5 // pred_region
        // Predicated region
        $region25: #{_lambda_.32} parent=23 // pred_check
          %p128 = pneg %p50
        $region26: #{_lambda_.32} parent=23 // pred_check_branch
          %130 = sbr.rel (%p128) target = $region28
        $region27: #{_lambda_.32} parent=23 // pred_region
          %s131 = sand.u32 %s40, 1
          %s132 = sand.u32 %s40, 1
          %s133 = smul.addr %s132, 704
          %s134 = scalar_lea.vmem [#allocation2], %s133
          %s135 = smul.u32 16, %s9
          %s136 = smul.addr %s135, 4
          %s137 = scalar_lea.vmem %s1, %s136
          // Predicated region
          $region29: #{_lambda_.32} parent=27 // pred_check
            _
          $region30: #{_lambda_.32} parent=27 // pred_check_branch
            %139 = sbr.rel (0) target = $region32
          $region31: #{_lambda_.32} parent=27 // pred_region
            // Predicated region
            $region33: #{_lambda_.32} parent=31 // pred_check
              _
            $region34: #{_lambda_.32} parent=31 // pred_check_branch
              %141 = sbr.rel (0) target = $region36
            $region35: #{_lambda_.32} parent=31 // pred_region
              loop: start=0, step=1, limit=1
              $region37: #{_lambda_.32} parent=35 // loop_pre_header
                _
              $region38: #{_lambda_.32} parent=35 // loop_header
                %s143 = sphi 0, %s147
                %p144 = scmp.ge.s32.totalorder %s143, 1
                %s148 = sphi %s137, %s137
                %s149 = sphi %s134, %s134
              $region39: #{_lambda_.32} parent=35 // loop_header_branch
                %146 = sbr.rel (%p144) target = $region43
              $region40: #{_lambda_.32} parent=35 // loop_body
                %v150 = vld [vmem:[%s148] sm:$0xff]
                %151 = vst [vmem:[%s149] sm:$0xff] %v150
                %v152 = vld [vmem:[%s148 + $0x8] sm:$0xff]
                %153 = vst [vmem:[%s149 + $0x8] sm:$0xff] %v152
                %v154 = vld [vmem:[%s148 + $0x10] sm:$0xff]
                %155 = vst [vmem:[%s149 + $0x10] sm:$0xff] %v154
                %v156 = vld [vmem:[%s148 + $0x18] sm:$0xff]
                %157 = vst [vmem:[%s149 + $0x18] sm:$0xff] %v156
                %v158 = vld [vmem:[%s148 + $0x20] sm:$0xff]
                %159 = vst [vmem:[%s149 + $0x20] sm:$0xff] %v158
                %v160 = vld [vmem:[%s148 + $0x28] sm:$0xff]
                %161 = vst [vmem:[%s149 + $0x28] sm:$0xff] %v160
                %v162 = vld [vmem:[%s148 + $0x30] sm:$0xff]
                %163 = vst [vmem:[%s149 + $0x30] sm:$0xff] %v162
                %v164 = vld [vmem:[%s148 + $0x38] sm:$0xff]
                %165 = vst [vmem:[%s149 + $0x38] sm:$0xff] %v164
                %v166 = vld [vmem:[%s148 + $0x80] sm:$0xff]
                %167 = vst [vmem:[%s149 + $0x40] sm:$0xff] %v166
                %v168 = vld [vmem:[%s148 + $0x88] sm:$0xff]
                %169 = vst [vmem:[%s149 + $0x48] sm:$0xff] %v168
                %v170 = vld [vmem:[%s148 + $0x90] sm:$0xff]
                %171 = vst [vmem:[%s149 + $0x50] sm:$0xff] %v170
                %v172 = vld [vmem:[%s148 + $0x98] sm:$0xff]
                %173 = vst [vmem:[%s149 + $0x58] sm:$0xff] %v172
                %v174 = vld [vmem:[%s148 + $0xa0] sm:$0xff]
                %175 = vst [vmem:[%s149 + $0x60] sm:$0xff] %v174
                %v176 = vld [vmem:[%s148 + $0xa8] sm:$0xff]
                %177 = vst [vmem:[%s149 + $0x68] sm:$0xff] %v176
                %v178 = vld [vmem:[%s148 + $0xb0] sm:$0xff]
                %179 = vst [vmem:[%s149 + $0x70] sm:$0xff] %v178
                %v180 = vld [vmem:[%s148 + $0xb8] sm:$0xff]
                %181 = vst [vmem:[%s149 + $0x78] sm:$0xff] %v180
                %v182 = vld [vmem:[%s148 + $0x100] sm:$0xff]
                %183 = vst [vmem:[%s149 + $0x80] sm:$0xff] %v182
                %v184 = vld [vmem:[%s148 + $0x108] sm:$0xff]
                %185 = vst [vmem:[%s149 + $0x88] sm:$0xff] %v184
                %v186 = vld [vmem:[%s148 + $0x110] sm:$0xff]
                %187 = vst [vmem:[%s149 + $0x90] sm:$0xff] %v186
                %v188 = vld [vmem:[%s148 + $0x118] sm:$0xff]
                %189 = vst [vmem:[%s149 + $0x98] sm:$0xff] %v188
                %v190 = vld [vmem:[%s148 + $0x120] sm:$0xff]
                %191 = vst [vmem:[%s149 + $0xa0] sm:$0xff] %v190
                %v192 = vld [vmem:[%s148 + $0x128] sm:$0xff]
                %193 = vst [vmem:[%s149 + $0xa8] sm:$0xff] %v192
                %v194 = vld [vmem:[%s148 + $0x130] sm:$0xff]
                %195 = vst [vmem:[%s149 + $0xb0] sm:$0xff] %v194
                %v196 = vld [vmem:[%s148 + $0x138] sm:$0xff]
                %197 = vst [vmem:[%s149 + $0xb8] sm:$0xff] %v196
                %v198 = vld [vmem:[%s148 + $0x180] sm:$0xff]
                %199 = vst [vmem:[%s149 + $0xc0] sm:$0xff] %v198
                %v200 = vld [vmem:[%s148 + $0x188] sm:$0xff]
                %201 = vst [vmem:[%s149 + $0xc8] sm:$0xff] %v200
                %v202 = vld [vmem:[%s148 + $0x190] sm:$0xff]
                %203 = vst [vmem:[%s149 + $0xd0] sm:$0xff] %v202
                %v204 = vld [vmem:[%s148 + $0x198] sm:$0xff]
                %205 = vst [vmem:[%s149 + $0xd8] sm:$0xff] %v204
                %v206 = vld [vmem:[%s148 + $0x1a0] sm:$0xff]
                %207 = vst [vmem:[%s149 + $0xe0] sm:$0xff] %v206
                %v208 = vld [vmem:[%s148 + $0x1a8] sm:$0xff]
                %209 = vst [vmem:[%s149 + $0xe8] sm:$0xff] %v208
                %v210 = vld [vmem:[%s148 + $0x1b0] sm:$0xff]
                %211 = vst [vmem:[%s149 + $0xf0] sm:$0xff] %v210
                %v212 = vld [vmem:[%s148 + $0x1b8] sm:$0xff]
                %213 = vst [vmem:[%s149 + $0xf8] sm:$0xff] %v212
                %v214 = vld [vmem:[%s148 + $0x200] sm:$0xff]
                %215 = vst [vmem:[%s149 + $0x100] sm:$0xff] %v214
                %v216 = vld [vmem:[%s148 + $0x208] sm:$0xff]
                %217 = vst [vmem:[%s149 + $0x108] sm:$0xff] %v216
                %v218 = vld [vmem:[%s148 + $0x210] sm:$0xff]
                %219 = vst [vmem:[%s149 + $0x110] sm:$0xff] %v218
                %v220 = vld [vmem:[%s148 + $0x218] sm:$0xff]
                %221 = vst [vmem:[%s149 + $0x118] sm:$0xff] %v220
                %v222 = vld [vmem:[%s148 + $0x220] sm:$0xff]
                %223 = vst [vmem:[%s149 + $0x120] sm:$0xff] %v222
                %v224 = vld [vmem:[%s148 + $0x228] sm:$0xff]
                %225 = vst [vmem:[%s149 + $0x128] sm:$0xff] %v224
                %v226 = vld [vmem:[%s148 + $0x230] sm:$0xff]
                %227 = vst [vmem:[%s149 + $0x130] sm:$0xff] %v226
                %v228 = vld [vmem:[%s148 + $0x238] sm:$0xff]
                %229 = vst [vmem:[%s149 + $0x138] sm:$0xff] %v228
                %v230 = vld [vmem:[%s148 + $0x280] sm:$0xff]
                %231 = vst [vmem:[%s149 + $0x140] sm:$0xff] %v230
                %v232 = vld [vmem:[%s148 + $0x288] sm:$0xff]
                %233 = vst [vmem:[%s149 + $0x148] sm:$0xff] %v232
                %v234 = vld [vmem:[%s148 + $0x290] sm:$0xff]
                %235 = vst [vmem:[%s149 + $0x150] sm:$0xff] %v234
                %v236 = vld [vmem:[%s148 + $0x298] sm:$0xff]
                %237 = vst [vmem:[%s149 + $0x158] sm:$0xff] %v236
                %v238 = vld [vmem:[%s148 + $0x2a0] sm:$0xff]
                %239 = vst [vmem:[%s149 + $0x160] sm:$0xff] %v238
                %v240 = vld [vmem:[%s148 + $0x2a8] sm:$0xff]
                %241 = vst [vmem:[%s149 + $0x168] sm:$0xff] %v240
                %v242 = vld [vmem:[%s148 + $0x2b0] sm:$0xff]
                %243 = vst [vmem:[%s149 + $0x170] sm:$0xff] %v242
                %v244 = vld [vmem:[%s148 + $0x2b8] sm:$0xff]
                %245 = vst [vmem:[%s149 + $0x178] sm:$0xff] %v244
                %v246 = vld [vmem:[%s148 + $0x300] sm:$0xff]
                %247 = vst [vmem:[%s149 + $0x180] sm:$0xff] %v246
                %v248 = vld [vmem:[%s148 + $0x308] sm:$0xff]
                %249 = vst [vmem:[%s149 + $0x188] sm:$0xff] %v248
                %v250 = vld [vmem:[%s148 + $0x310] sm:$0xff]
                %251 = vst [vmem:[%s149 + $0x190] sm:$0xff] %v250
                %v252 = vld [vmem:[%s148 + $0x318] sm:$0xff]
                %253 = vst [vmem:[%s149 + $0x198] sm:$0xff] %v252
                %v254 = vld [vmem:[%s148 + $0x320] sm:$0xff]
                %255 = vst [vmem:[%s149 + $0x1a0] sm:$0xff] %v254
                %v256 = vld [vmem:[%s148 + $0x328] sm:$0xff]
                %257 = vst [vmem:[%s149 + $0x1a8] sm:$0xff] %v256
                %v258 = vld [vmem:[%s148 + $0x330] sm:$0xff]
                %259 = vst [vmem:[%s149 + $0x1b0] sm:$0xff] %v258
                %v260 = vld [vmem:[%s148 + $0x338] sm:$0xff]
                %261 = vst [vmem:[%s149 + $0x1b8] sm:$0xff] %v260
                %v262 = vld [vmem:[%s148 + $0x380] sm:$0xff]
                %263 = vst [vmem:[%s149 + $0x1c0] sm:$0xff] %v262
                %v264 = vld [vmem:[%s148 + $0x388] sm:$0xff]
                %265 = vst [vmem:[%s149 + $0x1c8] sm:$0xff] %v264
                %v266 = vld [vmem:[%s148 + $0x390] sm:$0xff]
                %267 = vst [vmem:[%s149 + $0x1d0] sm:$0xff] %v266
                %v268 = vld [vmem:[%s148 + $0x398] sm:$0xff]
                %269 = vst [vmem:[%s149 + $0x1d8] sm:$0xff] %v268
                %v270 = vld [vmem:[%s148 + $0x3a0] sm:$0xff]
                %271 = vst [vmem:[%s149 + $0x1e0] sm:$0xff] %v270
                %v272 = vld [vmem:[%s148 + $0x3a8] sm:$0xff]
                %273 = vst [vmem:[%s149 + $0x1e8] sm:$0xff] %v272
                %v274 = vld [vmem:[%s148 + $0x3b0] sm:$0xff]
                %275 = vst [vmem:[%s149 + $0x1f0] sm:$0xff] %v274
                %v276 = vld [vmem:[%s148 + $0x3b8] sm:$0xff]
                %277 = vst [vmem:[%s149 + $0x1f8] sm:$0xff] %v276
                %v278 = vld [vmem:[%s148 + $0x400] sm:$0xff]
                %279 = vst [vmem:[%s149 + $0x200] sm:$0xff] %v278
                %v280 = vld [vmem:[%s148 + $0x408] sm:$0xff]
                %281 = vst [vmem:[%s149 + $0x208] sm:$0xff] %v280
                %v282 = vld [vmem:[%s148 + $0x410] sm:$0xff]
                %283 = vst [vmem:[%s149 + $0x210] sm:$0xff] %v282
                %v284 = vld [vmem:[%s148 + $0x418] sm:$0xff]
                %285 = vst [vmem:[%s149 + $0x218] sm:$0xff] %v284
                %v286 = vld [vmem:[%s148 + $0x420] sm:$0xff]
                %287 = vst [vmem:[%s149 + $0x220] sm:$0xff] %v286
                %v288 = vld [vmem:[%s148 + $0x428] sm:$0xff]
                %289 = vst [vmem:[%s149 + $0x228] sm:$0xff] %v288
                %v290 = vld [vmem:[%s148 + $0x430] sm:$0xff]
                %291 = vst [vmem:[%s149 + $0x230] sm:$0xff] %v290
                %v292 = vld [vmem:[%s148 + $0x438] sm:$0xff]
                %293 = vst [vmem:[%s149 + $0x238] sm:$0xff] %v292
                %v294 = vld [vmem:[%s148 + $0x480] sm:$0xff]
                %295 = vst [vmem:[%s149 + $0x240] sm:$0xff] %v294
                %v296 = vld [vmem:[%s148 + $0x488] sm:$0xff]
                %297 = vst [vmem:[%s149 + $0x248] sm:$0xff] %v296
                %v298 = vld [vmem:[%s148 + $0x490] sm:$0xff]
                %299 = vst [vmem:[%s149 + $0x250] sm:$0xff] %v298
                %v300 = vld [vmem:[%s148 + $0x498] sm:$0xff]
                %301 = vst [vmem:[%s149 + $0x258] sm:$0xff] %v300
                %v302 = vld [vmem:[%s148 + $0x4a0] sm:$0xff]
                %303 = vst [vmem:[%s149 + $0x260] sm:$0xff] %v302
                %v304 = vld [vmem:[%s148 + $0x4a8] sm:$0xff]
                %305 = vst [vmem:[%s149 + $0x268] sm:$0xff] %v304
                %v306 = vld [vmem:[%s148 + $0x4b0] sm:$0xff]
                %307 = vst [vmem:[%s149 + $0x270] sm:$0xff] %v306
                %v308 = vld [vmem:[%s148 + $0x4b8] sm:$0xff]
                %309 = vst [vmem:[%s149 + $0x278] sm:$0xff] %v308
                %v310 = vld [vmem:[%s148 + $0x500] sm:$0xff]
                %311 = vst [vmem:[%s149 + $0x280] sm:$0xff] %v310
                %v312 = vld [vmem:[%s148 + $0x508] sm:$0xff]
                %313 = vst [vmem:[%s149 + $0x288] sm:$0xff] %v312
                %v314 = vld [vmem:[%s148 + $0x510] sm:$0xff]
                %315 = vst [vmem:[%s149 + $0x290] sm:$0xff] %v314
                %v316 = vld [vmem:[%s148 + $0x518] sm:$0xff]
                %317 = vst [vmem:[%s149 + $0x298] sm:$0xff] %v316
                %v318 = vld [vmem:[%s148 + $0x520] sm:$0xff]
                %319 = vst [vmem:[%s149 + $0x2a0] sm:$0xff] %v318
                %v320 = vld [vmem:[%s148 + $0x528] sm:$0xff]
                %321 = vst [vmem:[%s149 + $0x2a8] sm:$0xff] %v320
                %v322 = vld [vmem:[%s148 + $0x530] sm:$0xff]
                %323 = vst [vmem:[%s149 + $0x2b0] sm:$0xff] %v322
                %v324 = vld [vmem:[%s148 + $0x538] sm:$0xff]
                %325 = vst [vmem:[%s149 + $0x2b8] sm:$0xff] %v324
              $region41: #{_lambda_.32} parent=35 // loop_footer
                %s147 = sadd.s32 1, %s143
              $region42: #{_lambda_.32} parent=35 // loop_footer_branch
                %142 = sbr.rel target = $region38
              $region43: #{_lambda_.32} parent=35 // loop_exit
                _
            $region36: #{_lambda_.32} parent=31 // pred_fallthru
              _
            // Predicated region
            $region44: #{_lambda_.32} parent=31 // pred_check
              _
            $region45: #{_lambda_.32} parent=31 // pred_check_branch
              %327 = sbr.rel target = $region47
            $region46: #{_lambda_.32} parent=31 // pred_region
              _
            $region47: #{_lambda_.32} parent=31 // pred_fallthru
              _
          $region32: #{_lambda_.32} parent=27 // pred_fallthru
            _
          %328 = vnop
        $region28: #{_lambda_.32} parent=23 // pred_fallthru
          _
      $region24: #{_lambda_.32} parent=5 // pred_fallthru
        _
      %p329 = scmp.le.s32.totalorder 1, %s9
      %p330 = scmp.lt.s32.totalorder %s9, 3
      %p331 = pnand %p329, %p330
      %p332 = pneg %p331
      // Predicated region
      $region48: #{_lambda_.32} parent=5 // pred_check
        _
      $region49: #{_lambda_.32} parent=5 // pred_check_branch
        %334 = sbr.rel (%p331) target = $region51
      $region50: #{_lambda_.32} parent=5 // pred_region
        %s335 = ssub.s32 %s9, 1
        %s336 = sand.u32 %s43, 1
        %s337 = sand.u32 %s43, 1
        %s338 = smul.addr %s337, 704
        %s339 = scalar_lea.vmem [#allocation2], %s338
        // Predicated region
        $region52: #{_lambda_.32} parent=50 // pred_check
          %p340 = pneg %p56
        $region53: #{_lambda_.32} parent=50 // pred_check_branch
          %342 = sbr.rel (%p340) target = $region55
        $region54: #{_lambda_.32} parent=50 // pred_region
          _
        $region55: #{_lambda_.32} parent=50 // pred_fallthru
          _
        %p343 = pneg %p30
        %p344 = pneg %p27
        %s345 = sand.u32 %s43, 1
        %s346 = sand.u32 %s43, 1
        %s347 = smul.addr %s346, 704
        %s348 = scalar_lea.vmem [#allocation2], %s347
        %p349 = pneg %p56
        %p350 = pneg %p53
        %p351 = pneg %p77
        %p352 = pneg %p74
        %p353 = pneg %p103
        %p354 = pneg %p100
        %s355 = smul.u32 16, %s14
        %p356 = scmp.lt.s32.totalorder %s355, 31
        %s357 = scalar_select %p356, %s355, 31
        %s358 = smul.addr %s357, 4
        %s359 = scalar_lea.vmem %s3, %s358
        %s360 = smul.u32 16, %s14
        %s361 = smul.u32 16, %s14
        %p362 = scmp.lt.s32.totalorder %s361, 31
        %s363 = scalar_select %p362, %s361, 31
        %s364 = smul.addr %s363, 4
        %s365 = scalar_lea.vmem %s3, %s364
        %s366 = smul.u32 16, %s14
        %v368 = vld [vmem:[%s0] sm:$0xf]
        %v369 = vld [vmem:[%s339] sm:$0xff]
        %v370 = vld [vmem:[%s339 + $0x8] sm:$0xff]
        %v371 = vld [vmem:[%s339 + $0x10] sm:$0xff]
        %v372 = vld [vmem:[%s339 + $0x18] sm:$0xff]
        %v373 = vld [vmem:[%s339 + $0x20] sm:$0xff]
        %v374 = vld [vmem:[%s339 + $0x28] sm:$0xff]
        %v375 = vld [vmem:[%s339 + $0x30] sm:$0xff]
        %v376 = vld [vmem:[%s339 + $0x38] sm:$0xff]
        %v377 = vld [vmem:[%s339 + $0x40] sm:$0xff]
        %v378 = vld [vmem:[%s339 + $0x48] sm:$0xff]
        %v379 = vld [vmem:[%s339 + $0x50] sm:$0xff]
        %v380 = vld [vmem:[%s339 + $0x58] sm:$0xff]
        %v381 = vld [vmem:[%s339 + $0x60] sm:$0xff]
        %v382 = vld [vmem:[%s339 + $0x68] sm:$0xff]
        %v383 = vld [vmem:[%s339 + $0x70] sm:$0xff]
        %v384 = vld [vmem:[%s339 + $0x78] sm:$0xff]
        %v385 = vld [vmem:[%s339 + $0x80] sm:$0xff]
        %v386 = vld [vmem:[%s339 + $0x88] sm:$0xff]
        %v387 = vld [vmem:[%s339 + $0x90] sm:$0xff]
        %v388 = vld [vmem:[%s339 + $0x98] sm:$0xff]
        %v389 = vld [vmem:[%s339 + $0xa0] sm:$0xff]
        %v390 = vld [vmem:[%s339 + $0xa8] sm:$0xff]
        %v391 = vld [vmem:[%s339 + $0xb0] sm:$0xff]
        %v392 = vld [vmem:[%s339 + $0xb8] sm:$0xff]
        %v393 = vld [vmem:[%s339 + $0xc0] sm:$0xff]
        %v394 = vld [vmem:[%s339 + $0xc8] sm:$0xff]
        %v395 = vld [vmem:[%s339 + $0xd0] sm:$0xff]
        %v396 = vld [vmem:[%s339 + $0xd8] sm:$0xff]
        %v397 = vld [vmem:[%s339 + $0xe0] sm:$0xff]
        %v398 = vld [vmem:[%s339 + $0xe8] sm:$0xff]
        %v399 = vld [vmem:[%s339 + $0xf0] sm:$0xff]
        %v400 = vld [vmem:[%s339 + $0xf8] sm:$0xff]
        %v401 = vld [vmem:[%s339 + $0x100] sm:$0xff]
        %v402 = vld [vmem:[%s339 + $0x108] sm:$0xff]
        %v403 = vld [vmem:[%s339 + $0x110] sm:$0xff]
        %v404 = vld [vmem:[%s339 + $0x118] sm:$0xff]
        %v405 = vld [vmem:[%s339 + $0x120] sm:$0xff]
        %v406 = vld [vmem:[%s339 + $0x128] sm:$0xff]
        %v407 = vld [vmem:[%s339 + $0x130] sm:$0xff]
        %v408 = vld [vmem:[%s339 + $0x138] sm:$0xff]
        %v409 = vld [vmem:[%s339 + $0x140] sm:$0xff]
        %v410 = vld [vmem:[%s339 + $0x148] sm:$0xff]
        %v411 = vld [vmem:[%s339 + $0x150] sm:$0xff]
        %v412 = vld [vmem:[%s339 + $0x158] sm:$0xff]
        %v413 = vld [vmem:[%s339 + $0x160] sm:$0xff]
        %v414 = vld [vmem:[%s339 + $0x168] sm:$0xff]
        %v415 = vld [vmem:[%s339 + $0x170] sm:$0xff]
        %v416 = vld [vmem:[%s339 + $0x178] sm:$0xff]
        %v417 = vld [vmem:[%s339 + $0x180] sm:$0xff]
        %v418 = vld [vmem:[%s339 + $0x188] sm:$0xff]
        %v419 = vld [vmem:[%s339 + $0x190] sm:$0xff]
        %v420 = vld [vmem:[%s339 + $0x198] sm:$0xff]
        %v421 = vld [vmem:[%s339 + $0x1a0] sm:$0xff]
        %v422 = vld [vmem:[%s339 + $0x1a8] sm:$0xff]
        %v423 = vld [vmem:[%s339 + $0x1b0] sm:$0xff]
        %v424 = vld [vmem:[%s339 + $0x1b8] sm:$0xff]
        %v425 = vld [vmem:[%s339 + $0x1c0] sm:$0xff]
        %v426 = vld [vmem:[%s339 + $0x1c8] sm:$0xff]
        %v427 = vld [vmem:[%s339 + $0x1d0] sm:$0xff]
        %v428 = vld [vmem:[%s339 + $0x1d8] sm:$0xff]
        %v429 = vld [vmem:[%s339 + $0x1e0] sm:$0xff]
        %v430 = vld [vmem:[%s339 + $0x1e8] sm:$0xff]
        %v431 = vld [vmem:[%s339 + $0x1f0] sm:$0xff]
        %v432 = vld [vmem:[%s339 + $0x1f8] sm:$0xff]
        %v433 = vld [vmem:[%s339 + $0x200] sm:$0xff]
        %v434 = vld [vmem:[%s339 + $0x208] sm:$0xff]
        %v435 = vld [vmem:[%s339 + $0x210] sm:$0xff]
        %v436 = vld [vmem:[%s339 + $0x218] sm:$0xff]
        %v437 = vld [vmem:[%s339 + $0x220] sm:$0xff]
        %v438 = vld [vmem:[%s339 + $0x228] sm:$0xff]
        %v439 = vld [vmem:[%s339 + $0x230] sm:$0xff]
        %v440 = vld [vmem:[%s339 + $0x238] sm:$0xff]
        %v441 = vld [vmem:[%s339 + $0x240] sm:$0xff]
        %v442 = vld [vmem:[%s339 + $0x248] sm:$0xff]
        %v443 = vld [vmem:[%s339 + $0x250] sm:$0xff]
        %v444 = vld [vmem:[%s339 + $0x258] sm:$0xff]
        %v445 = vld [vmem:[%s339 + $0x260] sm:$0xff]
        %v446 = vld [vmem:[%s339 + $0x268] sm:$0xff]
        %v447 = vld [vmem:[%s339 + $0x270] sm:$0xff]
        %v448 = vld [vmem:[%s339 + $0x278] sm:$0xff]
        %v449 = vld [vmem:[%s339 + $0x280] sm:$0x11]
        %v450 = vld [vmem:[%s339 + $0x288] sm:$0x11]
        %v451 = vld [vmem:[%s339 + $0x290] sm:$0x11]
        %v452 = vld [vmem:[%s339 + $0x298] sm:$0x11]
        %v453 = vld [vmem:[%s339 + $0x2a0] sm:$0x11]
        %v454 = vld [vmem:[%s339 + $0x2a8] sm:$0x11]
        %v455 = vld [vmem:[%s339 + $0x2b0] sm:$0x11]
        %v456 = vld [vmem:[%s339 + $0x2b8] sm:$0x11]
        %v457 = vld [vmem:[%s2] sm:$0xff]
        %459 = vset.pattern.permute.xlu0 0
        %460 = vperm.xlu0 %459, %v457
        %v461 = vpop.permute.xlu0 %460
        %v551 = vunpack.c.l.b16 %v369
        %v552 = vunpack.c.h.b16 %v369
        %v553 = vunpack.c.l.b16 %v370
        %v554 = vunpack.c.h.b16 %v370
        %v555 = vunpack.c.l.b16 %v371
        %v556 = vunpack.c.h.b16 %v371
        %v557 = vunpack.c.l.b16 %v372
        %v558 = vunpack.c.h.b16 %v372
        %v559 = vunpack.c.l.b16 %v373
        %v560 = vunpack.c.h.b16 %v373
        %v561 = vunpack.c.l.b16 %v374
        %v562 = vunpack.c.h.b16 %v374
        %v563 = vunpack.c.l.b16 %v375
        %v564 = vunpack.c.h.b16 %v375
        %v565 = vunpack.c.l.b16 %v376
        %v566 = vunpack.c.h.b16 %v376
        %v567 = vunpack.c.l.b16 %v377
        %v568 = vunpack.c.h.b16 %v377
        %v569 = vunpack.c.l.b16 %v378
        %v570 = vunpack.c.h.b16 %v378
        %v571 = vunpack.c.l.b16 %v379
        %v572 = vunpack.c.h.b16 %v379
        %v573 = vunpack.c.l.b16 %v380
        %v574 = vunpack.c.h.b16 %v380
        %v575 = vunpack.c.l.b16 %v381
        %v576 = vunpack.c.h.b16 %v381
        %v577 = vunpack.c.l.b16 %v382
        %v578 = vunpack.c.h.b16 %v382
        %v579 = vunpack.c.l.b16 %v383
        %v580 = vunpack.c.h.b16 %v383
        %v581 = vunpack.c.l.b16 %v384
        %v582 = vunpack.c.h.b16 %v384
        %v583 = vunpack.c.l.b16 %v385
        %v584 = vunpack.c.h.b16 %v385
        %v585 = vunpack.c.l.b16 %v386
        %v586 = vunpack.c.h.b16 %v386
        %v587 = vunpack.c.l.b16 %v387
        %v588 = vunpack.c.h.b16 %v387
        %v589 = vunpack.c.l.b16 %v388
        %v590 = vunpack.c.h.b16 %v388
        %v591 = vunpack.c.l.b16 %v389
        %v592 = vunpack.c.h.b16 %v389
        %v593 = vunpack.c.l.b16 %v390
        %v594 = vunpack.c.h.b16 %v390
        %v595 = vunpack.c.l.b16 %v391
        %v596 = vunpack.c.h.b16 %v391
        %v597 = vunpack.c.l.b16 %v392
        %v598 = vunpack.c.h.b16 %v392
        %v599 = vunpack.c.l.b16 %v393
        %v600 = vunpack.c.h.b16 %v393
        %v601 = vunpack.c.l.b16 %v394
        %v602 = vunpack.c.h.b16 %v394
        %v603 = vunpack.c.l.b16 %v395
        %v604 = vunpack.c.h.b16 %v395
        %v605 = vunpack.c.l.b16 %v396
        %v606 = vunpack.c.h.b16 %v396
        %v607 = vunpack.c.l.b16 %v397
        %v608 = vunpack.c.h.b16 %v397
        %v609 = vunpack.c.l.b16 %v398
        %v610 = vunpack.c.h.b16 %v398
        %v611 = vunpack.c.l.b16 %v399
        %v612 = vunpack.c.h.b16 %v399
        %v613 = vunpack.c.l.b16 %v400
        %v614 = vunpack.c.h.b16 %v400
        %v615 = vunpack.c.l.b16 %v401
        %v616 = vunpack.c.h.b16 %v401
        %v617 = vunpack.c.l.b16 %v402
        %v618 = vunpack.c.h.b16 %v402
        %v619 = vunpack.c.l.b16 %v403
        %v620 = vunpack.c.h.b16 %v403
        %v621 = vunpack.c.l.b16 %v404
        %v622 = vunpack.c.h.b16 %v404
        %v623 = vunpack.c.l.b16 %v405
        %v624 = vunpack.c.h.b16 %v405
        %v625 = vunpack.c.l.b16 %v406
        %v626 = vunpack.c.h.b16 %v406
        %v627 = vunpack.c.l.b16 %v407
        %v628 = vunpack.c.h.b16 %v407
        %v629 = vunpack.c.l.b16 %v408
        %v630 = vunpack.c.h.b16 %v408
        %v631 = vunpack.c.l.b16 %v409
        %v632 = vunpack.c.h.b16 %v409
        %v633 = vunpack.c.l.b16 %v410
        %v634 = vunpack.c.h.b16 %v410
        %v635 = vunpack.c.l.b16 %v411
        %v636 = vunpack.c.h.b16 %v411
        %v637 = vunpack.c.l.b16 %v412
        %v638 = vunpack.c.h.b16 %v412
        %v639 = vunpack.c.l.b16 %v413
        %v640 = vunpack.c.h.b16 %v413
        %v641 = vunpack.c.l.b16 %v414
        %v642 = vunpack.c.h.b16 %v414
        %v643 = vunpack.c.l.b16 %v415
        %v644 = vunpack.c.h.b16 %v415
        %v645 = vunpack.c.l.b16 %v416
        %v646 = vunpack.c.h.b16 %v416
        %v647 = vunpack.c.l.b16 %v417
        %v648 = vunpack.c.h.b16 %v417
        %v649 = vunpack.c.l.b16 %v418
        %v650 = vunpack.c.h.b16 %v418
        %v651 = vunpack.c.l.b16 %v419
        %v652 = vunpack.c.h.b16 %v419
        %v653 = vunpack.c.l.b16 %v420
        %v654 = vunpack.c.h.b16 %v420
        %v655 = vunpack.c.l.b16 %v421
        %v656 = vunpack.c.h.b16 %v421
        %v657 = vunpack.c.l.b16 %v422
        %v658 = vunpack.c.h.b16 %v422
        %v659 = vunpack.c.l.b16 %v423
        %v660 = vunpack.c.h.b16 %v423
        %v661 = vunpack.c.l.b16 %v424
        %v662 = vunpack.c.h.b16 %v424
        %v663 = vunpack.c.l.b16 %v425
        %v664 = vunpack.c.h.b16 %v425
        %v665 = vunpack.c.l.b16 %v426
        %v666 = vunpack.c.h.b16 %v426
        %v667 = vunpack.c.l.b16 %v427
        %v668 = vunpack.c.h.b16 %v427
        %v669 = vunpack.c.l.b16 %v428
        %v670 = vunpack.c.h.b16 %v428
        %v671 = vunpack.c.l.b16 %v429
        %v672 = vunpack.c.h.b16 %v429
        %v673 = vunpack.c.l.b16 %v430
        %v674 = vunpack.c.h.b16 %v430
        %v675 = vunpack.c.l.b16 %v431
        %v676 = vunpack.c.h.b16 %v431
        %v677 = vunpack.c.l.b16 %v432
        %v678 = vunpack.c.h.b16 %v432
        %v679 = vunpack.c.l.b16 %v433
        %v680 = vunpack.c.h.b16 %v433
        %v681 = vunpack.c.l.b16 %v434
        %v682 = vunpack.c.h.b16 %v434
        %v683 = vunpack.c.l.b16 %v435
        %v684 = vunpack.c.h.b16 %v435
        %v685 = vunpack.c.l.b16 %v436
        %v686 = vunpack.c.h.b16 %v436
        %v687 = vunpack.c.l.b16 %v437
        %v688 = vunpack.c.h.b16 %v437
        %v689 = vunpack.c.l.b16 %v438
        %v690 = vunpack.c.h.b16 %v438
        %v691 = vunpack.c.l.b16 %v439
        %v692 = vunpack.c.h.b16 %v439
        %v693 = vunpack.c.l.b16 %v440
        %v694 = vunpack.c.h.b16 %v440
        %v695 = vunpack.c.l.b16 %v441
        %v696 = vunpack.c.h.b16 %v441
        %v697 = vunpack.c.l.b16 %v442
        %v698 = vunpack.c.h.b16 %v442
        %v699 = vunpack.c.l.b16 %v443
        %v700 = vunpack.c.h.b16 %v443
        %v701 = vunpack.c.l.b16 %v444
        %v702 = vunpack.c.h.b16 %v444
        %v703 = vunpack.c.l.b16 %v445
        %v704 = vunpack.c.h.b16 %v445
        %v705 = vunpack.c.l.b16 %v446
        %v706 = vunpack.c.h.b16 %v446
        %v707 = vunpack.c.l.b16 %v447
        %v708 = vunpack.c.h.b16 %v447
        %v709 = vunpack.c.l.b16 %v448
        %v710 = vunpack.c.h.b16 %v448
        %v711 = vunpack.c.l.b16 %v449
        %v712 = vunpack.c.h.b16 %v449
        %v713 = vunpack.c.l.b16 %v450
        %v714 = vunpack.c.h.b16 %v450
        %v715 = vunpack.c.l.b16 %v451
        %v716 = vunpack.c.h.b16 %v451
        %v717 = vunpack.c.l.b16 %v452
        %v718 = vunpack.c.h.b16 %v452
        %v719 = vunpack.c.l.b16 %v453
        %v720 = vunpack.c.h.b16 %v453
        %v721 = vunpack.c.l.b16 %v454
        %v722 = vunpack.c.h.b16 %v454
        %v723 = vunpack.c.l.b16 %v455
        %v724 = vunpack.c.h.b16 %v455
        %v725 = vunpack.c.l.b16 %v456
        %v726 = vunpack.c.h.b16 %v456
        %v727 = vpack.c.b16 %v567, %v551
        %v728 = vpack.c.b16 %v568, %v552
        %v729 = vpack.c.b16 %v569, %v553
        %v730 = vpack.c.b16 %v570, %v554
        %v731 = vpack.c.b16 %v571, %v555
        %v732 = vpack.c.b16 %v572, %v556
        %v733 = vpack.c.b16 %v573, %v557
        %v734 = vpack.c.b16 %v574, %v558
        %v735 = vpack.c.b16 %v575, %v559
        %v736 = vpack.c.b16 %v576, %v560
        %v737 = vpack.c.b16 %v577, %v561
        %v738 = vpack.c.b16 %v578, %v562
        %v739 = vpack.c.b16 %v579, %v563
        %v740 = vpack.c.b16 %v580, %v564
        %v741 = vpack.c.b16 %v581, %v565
        %v742 = vpack.c.b16 %v582, %v566
        %v743 = vpack.c.b16 %v599, %v583
        %v744 = vpack.c.b16 %v600, %v584
        %v745 = vpack.c.b16 %v601, %v585
        %v746 = vpack.c.b16 %v602, %v586
        %v747 = vpack.c.b16 %v603, %v587
        %v748 = vpack.c.b16 %v604, %v588
        %v749 = vpack.c.b16 %v605, %v589
        %v750 = vpack.c.b16 %v606, %v590
        %v751 = vpack.c.b16 %v607, %v591
        %v752 = vpack.c.b16 %v608, %v592
        %v753 = vpack.c.b16 %v609, %v593
        %v754 = vpack.c.b16 %v610, %v594
        %v755 = vpack.c.b16 %v611, %v595
        %v756 = vpack.c.b16 %v612, %v596
        %v757 = vpack.c.b16 %v613, %v597
        %v758 = vpack.c.b16 %v614, %v598
        %v759 = vpack.c.b16 %v631, %v615
        %v760 = vpack.c.b16 %v632, %v616
        %v761 = vpack.c.b16 %v633, %v617
        %v762 = vpack.c.b16 %v634, %v618
        %v763 = vpack.c.b16 %v635, %v619
        %v764 = vpack.c.b16 %v636, %v620
        %v765 = vpack.c.b16 %v637, %v621
        %v766 = vpack.c.b16 %v638, %v622
        %v767 = vpack.c.b16 %v639, %v623
        %v768 = vpack.c.b16 %v640, %v624
        %v769 = vpack.c.b16 %v641, %v625
        %v770 = vpack.c.b16 %v642, %v626
        %v771 = vpack.c.b16 %v643, %v627
        %v772 = vpack.c.b16 %v644, %v628
        %v773 = vpack.c.b16 %v645, %v629
        %v774 = vpack.c.b16 %v646, %v630
        %v775 = vpack.c.b16 %v663, %v647
        %v776 = vpack.c.b16 %v664, %v648
        %v777 = vpack.c.b16 %v665, %v649
        %v778 = vpack.c.b16 %v666, %v650
        %v779 = vpack.c.b16 %v667, %v651
        %v780 = vpack.c.b16 %v668, %v652
        %v781 = vpack.c.b16 %v669, %v653
        %v782 = vpack.c.b16 %v670, %v654
        %v783 = vpack.c.b16 %v671, %v655
        %v784 = vpack.c.b16 %v672, %v656
        %v785 = vpack.c.b16 %v673, %v657
        %v786 = vpack.c.b16 %v674, %v658
        %v787 = vpack.c.b16 %v675, %v659
        %v788 = vpack.c.b16 %v676, %v660
        %v789 = vpack.c.b16 %v677, %v661
        %v790 = vpack.c.b16 %v678, %v662
        %v791 = vpack.c.b16 %v695, %v679
        %v792 = vpack.c.b16 %v696, %v680
        %v793 = vpack.c.b16 %v697, %v681
        %v794 = vpack.c.b16 %v698, %v682
        %v795 = vpack.c.b16 %v699, %v683
        %v796 = vpack.c.b16 %v700, %v684
        %v797 = vpack.c.b16 %v701, %v685
        %v798 = vpack.c.b16 %v702, %v686
        %v799 = vpack.c.b16 %v703, %v687
        %v800 = vpack.c.b16 %v704, %v688
        %v801 = vpack.c.b16 %v705, %v689
        %v802 = vpack.c.b16 %v706, %v690
        %v803 = vpack.c.b16 %v707, %v691
        %v804 = vpack.c.b16 %v708, %v692
        %v805 = vpack.c.b16 %v709, %v693
        %v806 = vpack.c.b16 %v710, %v694
        %v807 = vpack.c.b16 %v711, %v711
        %v808 = vpack.c.b16 %v712, %v712
        %v809 = vpack.c.b16 %v713, %v713
        %v810 = vpack.c.b16 %v714, %v714
        %v811 = vpack.c.b16 %v715, %v715
        %v812 = vpack.c.b16 %v716, %v716
        %v813 = vpack.c.b16 %v717, %v717
        %v814 = vpack.c.b16 %v718, %v718
        %v815 = vpack.c.b16 %v719, %v719
        %v816 = vpack.c.b16 %v720, %v720
        %v817 = vpack.c.b16 %v721, %v721
        %v818 = vpack.c.b16 %v722, %v722
        %v819 = vpack.c.b16 %v723, %v723
        %v820 = vpack.c.b16 %v724, %v724
        %v821 = vpack.c.b16 %v725, %v725
        %v822 = vpack.c.b16 %v726, %v726
        %vm903 = vcmask 662528
        %v905 = vsel %vm903, %v368, 0
        %vm907 = vcmask 1040384
        %v908 = vsel 0, 4294967295, 65535
        %v909 = vsel %vm907, %v908, 0
        %v911 = vand.u32 %v807, %v909
        %v914 = vand.u32 %v808, %v909
        %v917 = vand.u32 %v809, %v909
        %v920 = vand.u32 %v810, %v909
        %v923 = vand.u32 %v811, %v909
        %v926 = vand.u32 %v812, %v909
        %v929 = vand.u32 %v813, %v909
        %v932 = vand.u32 %v814, %v909
        %v935 = vand.u32 %v815, %v909
        %v938 = vand.u32 %v816, %v909
        %v941 = vand.u32 %v817, %v909
        %v944 = vand.u32 %v818, %v909
        %v947 = vand.u32 %v819, %v909
        %v950 = vand.u32 %v820, %v909
        %v953 = vand.u32 %v821, %v909
        %v956 = vand.u32 %v822, %v909
        %958 = vmatprep.subr.bf16.mxu0 %v728
        %959 = vmatpush1.bf16.msra.mxu0 %v727
        %960 = vmatprep.subr.bf16.mxu0 %v744
        %961 = vmatpush1.bf16.msra.mxu0 %v743
        %962 = vmatprep.subr.bf16.mxu0 %v760
        %963 = vmatpush1.bf16.msra.mxu0 %v759
        %964 = vmatprep.subr.bf16.mxu0 %v776
        %965 = vmatpush1.bf16.msra.mxu0 %v775
        %966 = vmatprep.subr.bf16.mxu0 %v792
        %967 = vmatpush1.bf16.msra.mxu0 %v791
        %968 = vmatprep.subr.bf16.mxu0 %v914
        %969 = vmatpush1.bf16.msra.mxu0 %v911
        %970 = vmatprep.subr.bf16.mxu0 0
        %971 = vmatpush1.bf16.msra.mxu0 0
        %972 = vmatprep.subr.bf16.mxu0 0
        %973 = vmatpush1.bf16.msra.mxu0 0
        %974 = vmatprep.subr.bf16.mxu0 0
        %975 = vmatpush1.bf16.msra.mxu0 0
        %976 = vmatprep.subr.bf16.mxu0 0
        %977 = vmatpush1.bf16.msra.mxu0 0
        %978 = vmatprep.subr.bf16.mxu0 0
        %979 = vmatpush1.bf16.msra.mxu0 0
        %980 = vmatprep.subr.bf16.mxu0 0
        %981 = vmatpush1.bf16.msra.mxu0 0
        %982 = vmatprep.subr.bf16.mxu0 0
        %983 = vmatpush1.bf16.msra.mxu0 0
        %984 = vmatprep.subr.bf16.mxu0 0
        %985 = vmatpush1.bf16.msra.mxu0 0
        %986 = vmatprep.subr.bf16.mxu0 0
        %987 = vmatpush1.bf16.msra.mxu0 0
        %988 = vmatprep.subr.bf16.mxu0 0
        %989 = vmatpush1.bf16.msra.mxu0 0
        %990 = vmatprep.mubr.bf16.mxu0 0
        %991 = vmatmul.mubr.bf16.gmra.mrb[0].mxu0 %v905
        %v992 = vpop.f32.mrb[0].mxu0
        %v993 = vadd.f32 %v461, %v992
        %v994 = vpop.f32.mrb[0].mxu0
        %v995 = vadd.f32 %v461, %v994
        %v996 = vpop.f32.mrb[0].mxu0
        %v997 = vpop.f32.mrb[0].mxu0
        %998 = vdwg.mxu0
        %999 = vmatprep.subr.bf16.mxu0 %v730
        %1000 = vmatpush1.bf16.msra.mxu0 %v729
        %1001 = vmatprep.subr.bf16.mxu0 %v746
        %1002 = vmatpush1.bf16.msra.mxu0 %v745
        %1003 = vmatprep.subr.bf16.mxu0 %v762
        %1004 = vmatpush1.bf16.msra.mxu0 %v761
        %1005 = vmatprep.subr.bf16.mxu0 %v778
        %1006 = vmatpush1.bf16.msra.mxu0 %v777
        %1007 = vmatprep.subr.bf16.mxu0 %v794
        %1008 = vmatpush1.bf16.msra.mxu0 %v793
        %1009 = vmatprep.subr.bf16.mxu0 %v920
        %1010 = vmatpush1.bf16.msra.mxu0 %v917
        %1011 = vmatprep.subr.bf16.mxu0 0
        %1012 = vmatpush1.bf16.msra.mxu0 0
        %1013 = vmatprep.subr.bf16.mxu0 0
        %1014 = vmatpush1.bf16.msra.mxu0 0
        %1015 = vmatprep.subr.bf16.mxu0 0
        %1016 = vmatpush1.bf16.msra.mxu0 0
        %1017 = vmatprep.subr.bf16.mxu0 0
        %1018 = vmatpush1.bf16.msra.mxu0 0
        %1019 = vmatprep.subr.bf16.mxu0 0
        %1020 = vmatpush1.bf16.msra.mxu0 0
        %1021 = vmatprep.subr.bf16.mxu0 0
        %1022 = vmatpush1.bf16.msra.mxu0 0
        %1023 = vmatprep.subr.bf16.mxu0 0
        %1024 = vmatpush1.bf16.msra.mxu0 0
        %1025 = vmatprep.subr.bf16.mxu0 0
        %1026 = vmatpush1.bf16.msra.mxu0 0
        %1027 = vmatprep.subr.bf16.mxu0 0
        %1028 = vmatpush1.bf16.msra.mxu0 0
        %1029 = vmatprep.subr.bf16.mxu0 0
        %1030 = vmatpush1.bf16.msra.mxu0 0
        %1031 = vmatprep.mubr.bf16.mxu0 0
        %1032 = vmatmul.mubr.bf16.gmra.mrb[0].mxu0 %v905
        %v1033 = vpop.f32.mrb[0].mxu0
        %v1034 = vadd.f32 %v461, %v1033
        %v1035 = vpop.f32.mrb[0].mxu0
        %v1036 = vadd.f32 %v461, %v1035
        %v1037 = vpop.f32.mrb[0].mxu0
        %v1038 = vpop.f32.mrb[0].mxu0
        %1039 = vdwg.mxu0
        %1040 = vmatprep.subr.bf16.mxu0 %v732
        %1041 = vmatpush1.bf16.msra.mxu0 %v731
        %1042 = vmatprep.subr.bf16.mxu0 %v748
        %1043 = vmatpush1.bf16.msra.mxu0 %v747
        %1044 = vmatprep.subr.bf16.mxu0 %v764
        %1045 = vmatpush1.bf16.msra.mxu0 %v763
        %1046 = vmatprep.subr.bf16.mxu0 %v780
        %1047 = vmatpush1.bf16.msra.mxu0 %v779
        %1048 = vmatprep.subr.bf16.mxu0 %v796
        %1049 = vmatpush1.bf16.msra.mxu0 %v795
        %1050 = vmatprep.subr.bf16.mxu0 %v926
        %1051 = vmatpush1.bf16.msra.mxu0 %v923
        %1052 = vmatprep.subr.bf16.mxu0 0
        %1053 = vmatpush1.bf16.msra.mxu0 0
        %1054 = vmatprep.subr.bf16.mxu0 0
        %1055 = vmatpush1.bf16.msra.mxu0 0
        %1056 = vmatprep.subr.bf16.mxu0 0
        %1057 = vmatpush1.bf16.msra.mxu0 0
        %1058 = vmatprep.subr.bf16.mxu0 0
        %1059 = vmatpush1.bf16.msra.mxu0 0
        %1060 = vmatprep.subr.bf16.mxu0 0
        %1061 = vmatpush1.bf16.msra.mxu0 0
        %1062 = vmatprep.subr.bf16.mxu0 0
        %1063 = vmatpush1.bf16.msra.mxu0 0
        %1064 = vmatprep.subr.bf16.mxu0 0
        %1065 = vmatpush1.bf16.msra.mxu0 0
        %1066 = vmatprep.subr.bf16.mxu0 0
        %1067 = vmatpush1.bf16.msra.mxu0 0
        %1068 = vmatprep.subr.bf16.mxu0 0
        %1069 = vmatpush1.bf16.msra.mxu0 0
        %1070 = vmatprep.subr.bf16.mxu0 0
        %1071 = vmatpush1.bf16.msra.mxu0 0
        %1072 = vmatprep.mubr.bf16.mxu0 0
        %1073 = vmatmul.mubr.bf16.gmra.mrb[0].mxu0 %v905
        %v1074 = vpop.f32.mrb[0].mxu0
        %v1075 = vadd.f32 %v461, %v1074
        %v1076 = vpop.f32.mrb[0].mxu0
        %v1077 = vadd.f32 %v461, %v1076
        %v1078 = vpop.f32.mrb[0].mxu0
        %v1079 = vpop.f32.mrb[0].mxu0
        %1080 = vdwg.mxu0
        %1081 = vmatprep.subr.bf16.mxu0 %v734
        %1082 = vmatpush1.bf16.msra.mxu0 %v733
        %1083 = vmatprep.subr.bf16.mxu0 %v750
        %1084 = vmatpush1.bf16.msra.mxu0 %v749
        %1085 = vmatprep.subr.bf16.mxu0 %v766
        %1086 = vmatpush1.bf16.msra.mxu0 %v765
        %1087 = vmatprep.subr.bf16.mxu0 %v782
        %1088 = vmatpush1.bf16.msra.mxu0 %v781
        %1089 = vmatprep.subr.bf16.mxu0 %v798
        %1090 = vmatpush1.bf16.msra.mxu0 %v797
        %1091 = vmatprep.subr.bf16.mxu0 %v932
        %1092 = vmatpush1.bf16.msra.mxu0 %v929
        %1093 = vmatprep.subr.bf16.mxu0 0
        %1094 = vmatpush1.bf16.msra.mxu0 0
        %1095 = vmatprep.subr.bf16.mxu0 0
        %1096 = vmatpush1.bf16.msra.mxu0 0
        %1097 = vmatprep.subr.bf16.mxu0 0
        %1098 = vmatpush1.bf16.msra.mxu0 0
        %1099 = vmatprep.subr.bf16.mxu0 0
        %1100 = vmatpush1.bf16.msra.mxu0 0
        %1101 = vmatprep.subr.bf16.mxu0 0
        %1102 = vmatpush1.bf16.msra.mxu0 0
        %1103 = vmatprep.subr.bf16.mxu0 0
        %1104 = vmatpush1.bf16.msra.mxu0 0
        %1105 = vmatprep.subr.bf16.mxu0 0
        %1106 = vmatpush1.bf16.msra.mxu0 0
        %1107 = vmatprep.subr.bf16.mxu0 0
        %1108 = vmatpush1.bf16.msra.mxu0 0
        %1109 = vmatprep.subr.bf16.mxu0 0
        %1110 = vmatpush1.bf16.msra.mxu0 0
        %1111 = vmatprep.subr.bf16.mxu0 0
        %1112 = vmatpush1.bf16.msra.mxu0 0
        %1113 = vmatprep.mubr.bf16.mxu0 0
        %1114 = vmatmul.mubr.bf16.gmra.mrb[0].mxu0 %v905
        %v1115 = vpop.f32.mrb[0].mxu0
        %v1116 = vadd.f32 %v461, %v1115
        %v1117 = vpop.f32.mrb[0].mxu0
        %v1118 = vadd.f32 %v461, %v1117
        %v1119 = vpop.f32.mrb[0].mxu0
        %v1120 = vpop.f32.mrb[0].mxu0
        %1121 = vdwg.mxu0
        %1122 = vmatprep.subr.bf16.mxu0 %v736
        %1123 = vmatpush1.bf16.msra.mxu0 %v735
        %1124 = vmatprep.subr.bf16.mxu0 %v752
        %1125 = vmatpush1.bf16.msra.mxu0 %v751
        %1126 = vmatprep.subr.bf16.mxu0 %v768
        %1127 = vmatpush1.bf16.msra.mxu0 %v767
        %1128 = vmatprep.subr.bf16.mxu0 %v784
        %1129 = vmatpush1.bf16.msra.mxu0 %v783
        %1130 = vmatprep.subr.bf16.mxu0 %v800
        %1131 = vmatpush1.bf16.msra.mxu0 %v799
        %1132 = vmatprep.subr.bf16.mxu0 %v938
        %1133 = vmatpush1.bf16.msra.mxu0 %v935
        %1134 = vmatprep.subr.bf16.mxu0 0
        %1135 = vmatpush1.bf16.msra.mxu0 0
        %1136 = vmatprep.subr.bf16.mxu0 0
        %1137 = vmatpush1.bf16.msra.mxu0 0
        %1138 = vmatprep.subr.bf16.mxu0 0
        %1139 = vmatpush1.bf16.msra.mxu0 0
        %1140 = vmatprep.subr.bf16.mxu0 0
        %1141 = vmatpush1.bf16.msra.mxu0 0
        %1142 = vmatprep.subr.bf16.mxu0 0
        %1143 = vmatpush1.bf16.msra.mxu0 0
        %1144 = vmatprep.subr.bf16.mxu0 0
        %1145 = vmatpush1.bf16.msra.mxu0 0
        %1146 = vmatprep.subr.bf16.mxu0 0
        %1147 = vmatpush1.bf16.msra.mxu0 0
        %1148 = vmatprep.subr.bf16.mxu0 0
        %1149 = vmatpush1.bf16.msra.mxu0 0
        %1150 = vmatprep.subr.bf16.mxu0 0
        %1151 = vmatpush1.bf16.msra.mxu0 0
        %1152 = vmatprep.subr.bf16.mxu0 0
        %1153 = vmatpush1.bf16.msra.mxu0 0
        %1154 = vmatprep.mubr.bf16.mxu0 0
        %1155 = vmatmul.mubr.bf16.gmra.mrb[0].mxu0 %v905
        %v1156 = vpop.f32.mrb[0].mxu0
        %v1157 = vadd.f32 %v461, %v1156
        %v1158 = vpop.f32.mrb[0].mxu0
        %v1159 = vadd.f32 %v461, %v1158
        %v1160 = vpop.f32.mrb[0].mxu0
        %v1161 = vpop.f32.mrb[0].mxu0
        %1162 = vdwg.mxu0
        %1163 = vmatprep.subr.bf16.mxu0 %v738
        %1164 = vmatpush1.bf16.msra.mxu0 %v737
        %1165 = vmatprep.subr.bf16.mxu0 %v754
        %1166 = vmatpush1.bf16.msra.mxu0 %v753
        %1167 = vmatprep.subr.bf16.mxu0 %v770
        %1168 = vmatpush1.bf16.msra.mxu0 %v769
        %1169 = vmatprep.subr.bf16.mxu0 %v786
        %1170 = vmatpush1.bf16.msra.mxu0 %v785
        %1171 = vmatprep.subr.bf16.mxu0 %v802
        %1172 = vmatpush1.bf16.msra.mxu0 %v801
        %1173 = vmatprep.subr.bf16.mxu0 %v944
        %1174 = vmatpush1.bf16.msra.mxu0 %v941
        %1175 = vmatprep.subr.bf16.mxu0 0
        %1176 = vmatpush1.bf16.msra.mxu0 0
        %1177 = vmatprep.subr.bf16.mxu0 0
        %1178 = vmatpush1.bf16.msra.mxu0 0
        %1179 = vmatprep.subr.bf16.mxu0 0
        %1180 = vmatpush1.bf16.msra.mxu0 0
        %1181 = vmatprep.subr.bf16.mxu0 0
        %1182 = vmatpush1.bf16.msra.mxu0 0
        %1183 = vmatprep.subr.bf16.mxu0 0
        %1184 = vmatpush1.bf16.msra.mxu0 0
        %1185 = vmatprep.subr.bf16.mxu0 0
        %1186 = vmatpush1.bf16.msra.mxu0 0
        %1187 = vmatprep.subr.bf16.mxu0 0
        %1188 = vmatpush1.bf16.msra.mxu0 0
        %1189 = vmatprep.subr.bf16.mxu0 0
        %1190 = vmatpush1.bf16.msra.mxu0 0
        %1191 = vmatprep.subr.bf16.mxu0 0
        %1192 = vmatpush1.bf16.msra.mxu0 0
        %1193 = vmatprep.subr.bf16.mxu0 0
        %1194 = vmatpush1.bf16.msra.mxu0 0
        %1195 = vmatprep.mubr.bf16.mxu0 0
        %1196 = vmatmul.mubr.bf16.gmra.mrb[0].mxu0 %v905
        %v1197 = vpop.f32.mrb[0].mxu0
        %v1198 = vadd.f32 %v461, %v1197
        %v1199 = vpop.f32.mrb[0].mxu0
        %v1200 = vadd.f32 %v461, %v1199
        %v1201 = vpop.f32.mrb[0].mxu0
        %v1202 = vpop.f32.mrb[0].mxu0
        %1203 = vdwg.mxu0
        %1204 = vmatprep.subr.bf16.mxu0 %v740
        %1205 = vmatpush1.bf16.msra.mxu0 %v739
        %1206 = vmatprep.subr.bf16.mxu0 %v756
        %1207 = vmatpush1.bf16.msra.mxu0 %v755
        %1208 = vmatprep.subr.bf16.mxu0 %v772
        %1209 = vmatpush1.bf16.msra.mxu0 %v771
        %1210 = vmatprep.subr.bf16.mxu0 %v788
        %1211 = vmatpush1.bf16.msra.mxu0 %v787
        %1212 = vmatprep.subr.bf16.mxu0 %v804
        %1213 = vmatpush1.bf16.msra.mxu0 %v803
        %1214 = vmatprep.subr.bf16.mxu0 %v950
        %1215 = vmatpush1.bf16.msra.mxu0 %v947
        %1216 = vmatprep.subr.bf16.mxu0 0
        %1217 = vmatpush1.bf16.msra.mxu0 0
        %1218 = vmatprep.subr.bf16.mxu0 0
        %1219 = vmatpush1.bf16.msra.mxu0 0
        %1220 = vmatprep.subr.bf16.mxu0 0
        %1221 = vmatpush1.bf16.msra.mxu0 0
        %1222 = vmatprep.subr.bf16.mxu0 0
        %1223 = vmatpush1.bf16.msra.mxu0 0
        %1224 = vmatprep.subr.bf16.mxu0 0
        %1225 = vmatpush1.bf16.msra.mxu0 0
        %1226 = vmatprep.subr.bf16.mxu0 0
        %1227 = vmatpush1.bf16.msra.mxu0 0
        %1228 = vmatprep.subr.bf16.mxu0 0
        %1229 = vmatpush1.bf16.msra.mxu0 0
        %1230 = vmatprep.subr.bf16.mxu0 0
        %1231 = vmatpush1.bf16.msra.mxu0 0
        %1232 = vmatprep.subr.bf16.mxu0 0
        %1233 = vmatpush1.bf16.msra.mxu0 0
        %1234 = vmatprep.subr.bf16.mxu0 0
        %1235 = vmatpush1.bf16.msra.mxu0 0
        %1236 = vmatprep.mubr.bf16.mxu0 0
        %1237 = vmatmul.mubr.bf16.gmra.mrb[0].mxu0 %v905
        %v1238 = vpop.f32.mrb[0].mxu0
        %v1239 = vadd.f32 %v461, %v1238
        %v1240 = vpop.f32.mrb[0].mxu0
        %v1241 = vadd.f32 %v461, %v1240
        %v1242 = vpop.f32.mrb[0].mxu0
        %v1243 = vpop.f32.mrb[0].mxu0
        %1244 = vdwg.mxu0
        %1245 = vmatprep.subr.bf16.mxu0 %v742
        %1246 = vmatpush1.bf16.msra.mxu0 %v741
        %1247 = vmatprep.subr.bf16.mxu0 %v758
        %1248 = vmatpush1.bf16.msra.mxu0 %v757
        %1249 = vmatprep.subr.bf16.mxu0 %v774
        %1250 = vmatpush1.bf16.msra.mxu0 %v773
        %1251 = vmatprep.subr.bf16.mxu0 %v790
        %1252 = vmatpush1.bf16.msra.mxu0 %v789
        %1253 = vmatprep.subr.bf16.mxu0 %v806
        %1254 = vmatpush1.bf16.msra.mxu0 %v805
        %1255 = vmatprep.subr.bf16.mxu0 %v956
        %1256 = vmatpush1.bf16.msra.mxu0 %v953
        %1257 = vmatprep.subr.bf16.mxu0 0
        %1258 = vmatpush1.bf16.msra.mxu0 0
        %1259 = vmatprep.subr.bf16.mxu0 0
        %1260 = vmatpush1.bf16.msra.mxu0 0
        %1261 = vmatprep.subr.bf16.mxu0 0
        %1262 = vmatpush1.bf16.msra.mxu0 0
        %1263 = vmatprep.subr.bf16.mxu0 0
        %1264 = vmatpush1.bf16.msra.mxu0 0
        %1265 = vmatprep.subr.bf16.mxu0 0
        %1266 = vmatpush1.bf16.msra.mxu0 0
        %1267 = vmatprep.subr.bf16.mxu0 0
        %1268 = vmatpush1.bf16.msra.mxu0 0
        %1269 = vmatprep.subr.bf16.mxu0 0
        %1270 = vmatpush1.bf16.msra.mxu0 0
        %1271 = vmatprep.subr.bf16.mxu0 0
        %1272 = vmatpush1.bf16.msra.mxu0 0
        %1273 = vmatprep.subr.bf16.mxu0 0
        %1274 = vmatpush1.bf16.msra.mxu0 0
        %1275 = vmatprep.subr.bf16.mxu0 0
        %1276 = vmatpush1.bf16.msra.mxu0 0
        %1277 = vmatprep.mubr.bf16.mxu0 0
        %1278 = vmatmul.mubr.bf16.gmra.mrb[0].mxu0 %v905
        %v1279 = vpop.f32.mrb[0].mxu0
        %v1280 = vadd.f32 %v461, %v1279
        %v1281 = vpop.f32.mrb[0].mxu0
        %v1282 = vadd.f32 %v461, %v1281
        %v1283 = vpop.f32.mrb[0].mxu0
        %v1284 = vpop.f32.mrb[0].mxu0
        %1285 = vdwg.mxu0
        %vm1286 = vcmp.ge.f32.partialorder %v993, 0.0
        %vm1287 = vcmp.ge.f32.partialorder %v995, 0.0
        %vm1288 = vcmp.ge.f32.partialorder %v1034, 0.0
        %vm1289 = vcmp.ge.f32.partialorder %v1036, 0.0
        %vm1290 = vcmp.ge.f32.partialorder %v1075, 0.0
        %vm1291 = vcmp.ge.f32.partialorder %v1077, 0.0
        %vm1292 = vcmp.ge.f32.partialorder %v1116, 0.0
        %vm1293 = vcmp.ge.f32.partialorder %v1118, 0.0
        %vm1294 = vcmp.ge.f32.partialorder %v1157, 0.0
        %vm1295 = vcmp.ge.f32.partialorder %v1159, 0.0
        %vm1296 = vcmp.ge.f32.partialorder %v1198, 0.0
        %vm1297 = vcmp.ge.f32.partialorder %v1200, 0.0
        %vm1298 = vcmp.ge.f32.partialorder %v1239, 0.0
        %vm1299 = vcmp.ge.f32.partialorder %v1241, 0.0
        %vm1300 = vcmp.ge.f32.partialorder %v1280, 0.0
        %vm1301 = vcmp.ge.f32.partialorder %v1282, 0.0
        %v1302 = vmul.f32 %v993, 0.01
        %v1303 = vmul.f32 %v995, 0.01
        %v1304 = vmul.f32 %v1034, 0.01
        %v1305 = vmul.f32 %v1036, 0.01
        %v1306 = vmul.f32 %v1075, 0.01
        %v1307 = vmul.f32 %v1077, 0.01
        %v1308 = vmul.f32 %v1116, 0.01
        %v1309 = vmul.f32 %v1118, 0.01
        %v1310 = vmul.f32 %v1157, 0.01
        %v1311 = vmul.f32 %v1159, 0.01
        %v1312 = vmul.f32 %v1198, 0.01
        %v1313 = vmul.f32 %v1200, 0.01
        %v1314 = vmul.f32 %v1239, 0.01
        %v1315 = vmul.f32 %v1241, 0.01
        %v1316 = vmul.f32 %v1280, 0.01
        %v1317 = vmul.f32 %v1282, 0.01
        %v1318 = vsel %vm1286, %v993, %v1302
        %v1319 = vsel %vm1287, %v995, %v1303
        %v1320 = vsel %vm1288, %v1034, %v1304
        %v1321 = vsel %vm1289, %v1036, %v1305
        %v1322 = vsel %vm1290, %v1075, %v1306
        %v1323 = vsel %vm1291, %v1077, %v1307
        %v1324 = vsel %vm1292, %v1116, %v1308
        %v1325 = vsel %vm1293, %v1118, %v1309
        %v1326 = vsel %vm1294, %v1157, %v1310
        %v1327 = vsel %vm1295, %v1159, %v1311
        %v1328 = vsel %vm1296, %v1198, %v1312
        %v1329 = vsel %vm1297, %v1200, %v1313
        %v1330 = vsel %vm1298, %v1239, %v1314
        %v1331 = vsel %vm1299, %v1241, %v1315
        %v1332 = vsel %vm1300, %v1280, %v1316
        %v1333 = vsel %vm1301, %v1282, %v1317
        %1334 = vset.pattern.permute.xlu0 1
        %1335 = vperm.xlu0 %1334, %v457
        %v1336 = vpop.permute.xlu0 %1335
        %v1338 = vmul.f32 %v1318, %v1336
        %v1339 = vmul.f32 %v1319, %v1336
        %v1340 = vmul.f32 %v1320, %v1336
        %v1341 = vmul.f32 %v1321, %v1336
        %v1342 = vmul.f32 %v1322, %v1336
        %v1343 = vmul.f32 %v1323, %v1336
        %v1344 = vmul.f32 %v1324, %v1336
        %v1345 = vmul.f32 %v1325, %v1336
        %v1346 = vmul.f32 %v1326, %v1336
        %v1347 = vmul.f32 %v1327, %v1336
        %v1348 = vmul.f32 %v1328, %v1336
        %v1349 = vmul.f32 %v1329, %v1336
        %v1350 = vmul.f32 %v1330, %v1336
        %v1351 = vmul.f32 %v1331, %v1336
        %v1352 = vmul.f32 %v1332, %v1336
        %v1353 = vmul.f32 %v1333, %v1336
        %1354 = vset.pattern.permute.xlu0 2
        %1355 = vperm.xlu0 %1354, %v457
        %v1356 = vpop.permute.xlu0 %1355
        %v1358 = vadd.f32 %v1338, %v1356
        %v1359 = vadd.f32 %v1339, %v1356
        %v1360 = vadd.f32 %v1340, %v1356
        %v1361 = vadd.f32 %v1341, %v1356
        %v1362 = vadd.f32 %v1342, %v1356
        %v1363 = vadd.f32 %v1343, %v1356
        %v1364 = vadd.f32 %v1344, %v1356
        %v1365 = vadd.f32 %v1345, %v1356
        %v1366 = vadd.f32 %v1346, %v1356
        %v1367 = vadd.f32 %v1347, %v1356
        %v1368 = vadd.f32 %v1348, %v1356
        %v1369 = vadd.f32 %v1349, %v1356
        %v1370 = vadd.f32 %v1350, %v1356
        %v1371 = vadd.f32 %v1351, %v1356
        %v1372 = vadd.f32 %v1352, %v1356
        %v1373 = vadd.f32 %v1353, %v1356
        %v1374 = vpack.c.bf16 %v1358, %v1358
        %v1375 = vpack.c.bf16 %v1359, %v1359
        %v1376 = vpack.c.bf16 %v1360, %v1360
        %v1377 = vpack.c.bf16 %v1361, %v1361
        %v1378 = vpack.c.bf16 %v1362, %v1362
        %v1379 = vpack.c.bf16 %v1363, %v1363
        %v1380 = vpack.c.bf16 %v1364, %v1364
        %v1381 = vpack.c.bf16 %v1365, %v1365
        %v1382 = vpack.c.bf16 %v1366, %v1366
        %v1383 = vpack.c.bf16 %v1367, %v1367
        %v1384 = vpack.c.bf16 %v1368, %v1368
        %v1385 = vpack.c.bf16 %v1369, %v1369
        %v1386 = vpack.c.bf16 %v1370, %v1370
        %v1387 = vpack.c.bf16 %v1371, %v1371
        %v1388 = vpack.c.bf16 %v1372, %v1372
        %v1389 = vpack.c.bf16 %v1373, %v1373
        %v1406 = vunpack.c.l.b16 %v1374
        %v1407 = vunpack.c.l.b16 %v1375
        %v1408 = vunpack.c.l.b16 %v1376
        %v1409 = vunpack.c.l.b16 %v1377
        %v1410 = vunpack.c.l.b16 %v1378
        %v1411 = vunpack.c.l.b16 %v1379
        %v1412 = vunpack.c.l.b16 %v1380
        %v1413 = vunpack.c.l.b16 %v1381
        %v1414 = vunpack.c.l.b16 %v1382
        %v1415 = vunpack.c.l.b16 %v1383
        %v1416 = vunpack.c.l.b16 %v1384
        %v1417 = vunpack.c.l.b16 %v1385
        %v1418 = vunpack.c.l.b16 %v1386
        %v1419 = vunpack.c.l.b16 %v1387
        %v1420 = vunpack.c.l.b16 %v1388
        %v1421 = vunpack.c.l.b16 %v1389
        %v1422 = vpack.c.b16 %v1407, %v1406
        %v1423 = vpack.c.b16 %v1409, %v1408
        %v1424 = vpack.c.b16 %v1411, %v1410
        %v1425 = vpack.c.b16 %v1413, %v1412
        %v1426 = vpack.c.b16 %v1415, %v1414
        %v1427 = vpack.c.b16 %v1417, %v1416
        %v1428 = vpack.c.b16 %v1419, %v1418
        %v1429 = vpack.c.b16 %v1421, %v1420
        %1438 = vst [vmem:[%s365] sm:$0xff] %v1422
        %1439 = vst [vmem:[%s365 + $0x8] sm:$0xff] %v1423
        %1440 = vst [vmem:[%s365 + $0x10] sm:$0xff] %v1424
        %1441 = vst [vmem:[%s365 + $0x18] sm:$0xff] %v1425
        %1442 = vst [vmem:[%s365 + $0x20] sm:$0xff] %v1426
        %1443 = vst [vmem:[%s365 + $0x28] sm:$0xff] %v1427
        %1444 = vst [vmem:[%s365 + $0x30] sm:$0xff] %v1428
        %1445 = vst [vmem:[%s365 + $0x38] sm:$0xff] %v1429
        %s1446 = smul.u32 16, %s14
        %p1447 = scmp.lt.s32.totalorder %s1446, 31
        %s1448 = scalar_select %p1447, %s1446, 31
        %s1449 = smul.addr %s1448, 4
        %s1450 = scalar_lea.vmem %s3, %s1449
        // Predicated region
        $region56: #{_lambda_.32} parent=50 // pred_check
          %p1451 = pneg %p100
        $region57: #{_lambda_.32} parent=50 // pred_check_branch
          %1453 = sbr.rel (%p1451) target = $region59
        $region58: #{_lambda_.32} parent=50 // pred_region
          %s1454 = smul.u32 16, %s14
        $region59: #{_lambda_.32} parent=50 // pred_fallthru
          _
      $region51: #{_lambda_.32} parent=5 // pred_fallthru
        _
      %p1455 = scmp.le.s32.totalorder 2, %s9
      // Predicated region
      $region60: #{_lambda_.32} parent=5 // pred_check
        %p1456 = pneg %p1455
      $region61: #{_lambda_.32} parent=5 // pred_check_branch
        %1458 = sbr.rel (%p1456) target = $region63
      $region62: #{_lambda_.32} parent=5 // pred_region
        %s1459 = ssub.s32 %s9, 2
        // Predicated region
        $region64: #{_lambda_.32} parent=62 // pred_check
          %p1460 = pneg %p106
        $region65: #{_lambda_.32} parent=62 // pred_check_branch
          %1462 = sbr.rel (%p1460) target = $region67
        $region66: #{_lambda_.32} parent=62 // pred_region
          %s1463 = smul.u32 16, %s15
          %p1464 = scmp.lt.s32.totalorder %s1463, 31
          %s1465 = scalar_select %p1464, %s1463, 31
          %s1466 = smul.addr %s1465, 4
          %s1467 = scalar_lea.vmem %s3, %s1466
        $region67: #{_lambda_.32} parent=62 // pred_fallthru
          _
      $region63: #{_lambda_.32} parent=5 // pred_fallthru
        _
    $region6: #{_lambda_.32} parent=1 // loop_footer
      %s13 = sadd.s32 1, %s9
    $region7: #{_lambda_.32} parent=1 // loop_footer_branch
      %8 = sbr.rel target = $region3
    $region8: #{_lambda_.32} parent=1 // loop_exit
      _

// kernel: _lambda_.33
$region0: #{_lambda_.33}
  #allocation0 [shape = 'u32[]', space=smem, size = 0x4, offset = 0x4, fixed_abs, tag = 'smem constant byte address 0x4 - core index']
  #allocation1 [shape = 'u32[144,128]{1,0:T(1,128)}', space=vmem, size = 0x12000, scoped, tag = 'internal scratch']
  %s0 = inlined_call_operand.vmem [shape: bf16[8,81], index: 0, kind: input, shape index: {}]
  %s1 = inlined_call_operand.vmem [shape: bf16[81,4096], index: 1, kind: input, shape index: {}]
  %s2 = inlined_call_operand.vmem [shape: f32[8,3], index: 2, kind: input, shape index: {}]
  %s3 = inlined_call_operand.vmem [shape: bf16[8,4096], index: 3, kind: input, shape index: {}]
  %s4 = inlined_call_operand.vmem [shape: f32[8,4096], index: 4, kind: output, shape index: {}]
  %s5 = sld [smem:[#allocation0]]
  $region72: #{_lambda_.33} parent=0
    _
  %s7 = ssub.s32 1, %s5
  %s8 = scalar_select 0, %s7, %s5
  $region1: #{_lambda_.33} parent=0
    #allocation2 [shape = 'u8[720896]{0}', space=vmem, size = 0xb0000, scoped, tag = 'input window, operand 1']
    loop: start=0, step=1, limit=4
    $region2: #{_lambda_.33} parent=1 // loop_pre_header
      _
    $region3: #{_lambda_.33} parent=1 // loop_header
      %s10 = sphi 0, %s14
      %p11 = scmp.ge.s32.totalorder %s10, 4
      %s18 = sphi 0, %s18
      %s20 = sphi 0, %s18
      %s21 = sphi 0, %s20
      %s35 = sphi 0, %s21
      %s41 = sphi 0, %s43
      %s44 = sphi 0, %s41
      %s45 = sphi 0, %s44
      %s61 = sphi 0, %s45
      %s65 = sphi 0, %s65
      %s67 = sphi 0, %s65
      %s68 = sphi 0, %s67
      %s82 = sphi 0, %s68
      %s88 = sphi 0, %s90
      %s91 = sphi 0, %s88
      %s92 = sphi 0, %s91
      %s108 = sphi 0, %s92
      %s114 = sphi 0, %s116
      %s117 = sphi 0, %s114
      %s118 = sphi 0, %s117
      %s134 = sphi 0, %s118
    $region4: #{_lambda_.33} parent=1 // loop_header_branch
      %13 = sbr.rel (%p11) target = $region8
    $region5: #{_lambda_.33} parent=1 // loop_body
      %s15 = ssub.s32 %s10, 1
      %s16 = ssub.s32 %s10, 2
      %s17 = sadd.s32 %s10, 1
      %s19 = sadd.s32 %s18, 1
      %p22 = scmp.eq.s32.totalorder %s10, 1
      %p23 = scmp.ne.s32.totalorder %s18, %s20
      %p24 = scmp.eq.s32.totalorder %s10, 0
      %p25 = por %p23, %p24
      %p26 = scmp.ne.s32.totalorder %s18, %s20
      %p27 = scmp.eq.s32.totalorder %s15, 1
      %p28 = por %p26, %p27
      %p29 = scmp.ne.s32.totalorder %s20, %s21
      %p30 = scmp.eq.s32.totalorder %s15, 0
      %p31 = por %p29, %p30
      %p32 = scmp.ne.s32.totalorder %s20, %s21
      %p33 = scmp.eq.s32.totalorder %s16, 1
      %p34 = por %p32, %p33
      %p36 = scmp.ne.s32.totalorder %s21, %s35
      %p37 = scmp.eq.s32.totalorder %s16, 0
      %p38 = por %p36, %p37
      %s39 = ssub.s32 %s10, %s17
      %p40 = scmp.eq.s32.totalorder %s39, 0
      %s42 = sadd.s32 %s41, 1
      %s43 = scalar_select %p40, %s41, %s42
      %p46 = pneg %p40
      %p47 = scmp.eq.s32.totalorder %s10, 1
      %p48 = por %p46, %p47
      %p49 = scmp.ne.s32.totalorder %s41, %s44
      %p50 = scmp.eq.s32.totalorder %s10, 0
      %p51 = por %p49, %p50
      %p52 = scmp.ne.s32.totalorder %s41, %s44
      %p53 = scmp.eq.s32.totalorder %s15, 1
      %p54 = por %p52, %p53
      %p55 = scmp.ne.s32.totalorder %s44, %s45
      %p56 = scmp.eq.s32.totalorder %s15, 0
      %p57 = por %p55, %p56
      %p58 = scmp.ne.s32.totalorder %s44, %s45
      %p59 = scmp.eq.s32.totalorder %s16, 1
      %p60 = por %p58, %p59
      %p62 = scmp.ne.s32.totalorder %s45, %s61
      %p63 = scmp.eq.s32.totalorder %s16, 0
      %p64 = por %p62, %p63
      %s66 = sadd.s32 %s65, 1
      %p69 = scmp.eq.s32.totalorder %s10, 1
      %p70 = scmp.ne.s32.totalorder %s65, %s67
      %p71 = scmp.eq.s32.totalorder %s10, 0
      %p72 = por %p70, %p71
      %p73 = scmp.ne.s32.totalorder %s65, %s67
      %p74 = scmp.eq.s32.totalorder %s15, 1
      %p75 = por %p73, %p74
      %p76 = scmp.ne.s32.totalorder %s67, %s68
      %p77 = scmp.eq.s32.totalorder %s15, 0
      %p78 = por %p76, %p77
      %p79 = scmp.ne.s32.totalorder %s67, %s68
      %p80 = scmp.eq.s32.totalorder %s16, 1
      %p81 = por %p79, %p80
      %p83 = scmp.ne.s32.totalorder %s68, %s82
      %p84 = scmp.eq.s32.totalorder %s16, 0
      %p85 = por %p83, %p84
      %s86 = ssub.s32 %s10, %s17
      %p87 = scmp.eq.s32.totalorder %s86, 0
      %s89 = sadd.s32 %s88, 1
      %s90 = scalar_select %p87, %s88, %s89
      %p93 = pneg %p87
      %p94 = scmp.eq.s32.totalorder %s10, 1
      %p95 = por %p93, %p94
      %p96 = scmp.ne.s32.totalorder %s88, %s91
      %p97 = scmp.eq.s32.totalorder %s10, 0
      %p98 = por %p96, %p97
      %p99 = scmp.ne.s32.totalorder %s88, %s91
      %p100 = scmp.eq.s32.totalorder %s15, 1
      %p101 = por %p99, %p100
      %p102 = scmp.ne.s32.totalorder %s91, %s92
      %p103 = scmp.eq.s32.totalorder %s15, 0
      %p104 = por %p102, %p103
      %p105 = scmp.ne.s32.totalorder %s91, %s92
      %p106 = scmp.eq.s32.totalorder %s16, 1
      %p107 = por %p105, %p106
      %p109 = scmp.ne.s32.totalorder %s92, %s108
      %p110 = scmp.eq.s32.totalorder %s16, 0
      %p111 = por %p109, %p110
      %s112 = ssub.s32 %s10, %s17
      %p113 = scmp.eq.s32.totalorder %s112, 0
      %s115 = sadd.s32 %s114, 1
      %s116 = scalar_select %p113, %s114, %s115
      %p119 = pneg %p113
      %p120 = scmp.eq.s32.totalorder %s10, 1
      %p121 = por %p119, %p120
      %p122 = scmp.ne.s32.totalorder %s114, %s117
      %p123 = scmp.eq.s32.totalorder %s10, 0
      %p124 = por %p122, %p123
      %p125 = scmp.ne.s32.totalorder %s114, %s117
      %p126 = scmp.eq.s32.totalorder %s15, 1
      %p127 = por %p125, %p126
      %p128 = scmp.ne.s32.totalorder %s117, %s118
      %p129 = scmp.eq.s32.totalorder %s15, 0
      %p130 = por %p128, %p129
      %p131 = scmp.ne.s32.totalorder %s117, %s118
      %p132 = scmp.eq.s32.totalorder %s16, 1
      %p133 = por %p131, %p132
      %p135 = scmp.ne.s32.totalorder %s118, %s134
      %p136 = scmp.eq.s32.totalorder %s16, 0
      %p137 = por %p135, %p136
      %p138 = scmp.le.s32.totalorder 1, %s10
      %p139 = scmp.lt.s32.totalorder %s10, 3
      %p140 = pnand %p138, %p139
      %p141 = pneg %p140
      // Predicated region
      $region9: #{_lambda_.33} parent=5 // pred_check
        _
      $region10: #{_lambda_.33} parent=5 // pred_check_branch
        %143 = sbr.rel (%p140) target = $region12
      $region11: #{_lambda_.33} parent=5 // pred_region
        %s144 = ssub.s32 %s10, 1
        // Predicated region
        $region13: #{_lambda_.33} parent=11 // pred_check
          %p145 = pneg %p31
        $region14: #{_lambda_.33} parent=11 // pred_check_branch
          %147 = sbr.rel (%p145) target = $region16
        $region15: #{_lambda_.33} parent=11 // pred_region
          _
        $region16: #{_lambda_.33} parent=11 // pred_fallthru
          _
        // Predicated region
        $region17: #{_lambda_.33} parent=11 // pred_check
          %p148 = pneg %p78
        $region18: #{_lambda_.33} parent=11 // pred_check_branch
          %150 = sbr.rel (%p148) target = $region20
        $region19: #{_lambda_.33} parent=11 // pred_region
          _
        $region20: #{_lambda_.33} parent=11 // pred_fallthru
          _
      $region12: #{_lambda_.33} parent=5 // pred_fallthru
        _
      %p151 = scmp.lt.s32.totalorder %s10, 2
      // Predicated region
      $region21: #{_lambda_.33} parent=5 // pred_check
        %p152 = pneg %p151
      $region22: #{_lambda_.33} parent=5 // pred_check_branch
        %154 = sbr.rel (%p152) target = $region24
      $region23: #{_lambda_.33} parent=5 // pred_region
        // Predicated region
        $region25: #{_lambda_.33} parent=23 // pred_check
          %p155 = pneg %p51
        $region26: #{_lambda_.33} parent=23 // pred_check_branch
          %157 = sbr.rel (%p155) target = $region28
        $region27: #{_lambda_.33} parent=23 // pred_region
          %s158 = sand.u32 %s41, 1
          %s159 = sand.u32 %s41, 1
          %s160 = smul.addr %s159, 704
          %s161 = scalar_lea.vmem [#allocation2], %s160
          %s162 = smul.u32 16, %s10
          %s163 = smul.addr %s162, 4
          %s164 = scalar_lea.vmem %s1, %s163
          // Predicated region
          $region29: #{_lambda_.33} parent=27 // pred_check
            _
          $region30: #{_lambda_.33} parent=27 // pred_check_branch
            %166 = sbr.rel (0) target = $region32
          $region31: #{_lambda_.33} parent=27 // pred_region
            // Predicated region
            $region33: #{_lambda_.33} parent=31 // pred_check
              _
            $region34: #{_lambda_.33} parent=31 // pred_check_branch
              %168 = sbr.rel (0) target = $region36
            $region35: #{_lambda_.33} parent=31 // pred_region
              loop: start=0, step=1, limit=1
              $region37: #{_lambda_.33} parent=35 // loop_pre_header
                _
              $region38: #{_lambda_.33} parent=35 // loop_header
                %s170 = sphi 0, %s174
                %p171 = scmp.ge.s32.totalorder %s170, 1
                %s175 = sphi %s164, %s164
                %s176 = sphi %s161, %s161
              $region39: #{_lambda_.33} parent=35 // loop_header_branch
                %173 = sbr.rel (%p171) target = $region43
              $region40: #{_lambda_.33} parent=35 // loop_body
                %v177 = vld [vmem:[%s175] sm:$0xff]
                %178 = vst [vmem:[%s176] sm:$0xff] %v177
                %v179 = vld [vmem:[%s175 + $0x8] sm:$0xff]
                %180 = vst [vmem:[%s176 + $0x8] sm:$0xff] %v179
                %v181 = vld [vmem:[%s175 + $0x10] sm:$0xff]
                %182 = vst [vmem:[%s176 + $0x10] sm:$0xff] %v181
                %v183 = vld [vmem:[%s175 + $0x18] sm:$0xff]
                %184 = vst [vmem:[%s176 + $0x18] sm:$0xff] %v183
                %v185 = vld [vmem:[%s175 + $0x20] sm:$0xff]
                %186 = vst [vmem:[%s176 + $0x20] sm:$0xff] %v185
                %v187 = vld [vmem:[%s175 + $0x28] sm:$0xff]
                %188 = vst [vmem:[%s176 + $0x28] sm:$0xff] %v187
                %v189 = vld [vmem:[%s175 + $0x30] sm:$0xff]
                %190 = vst [vmem:[%s176 + $0x30] sm:$0xff] %v189
                %v191 = vld [vmem:[%s175 + $0x38] sm:$0xff]
                %192 = vst [vmem:[%s176 + $0x38] sm:$0xff] %v191
                %v193 = vld [vmem:[%s175 + $0x80] sm:$0xff]
                %194 = vst [vmem:[%s176 + $0x40] sm:$0xff] %v193
                %v195 = vld [vmem:[%s175 + $0x88] sm:$0xff]
                %196 = vst [vmem:[%s176 + $0x48] sm:$0xff] %v195
                %v197 = vld [vmem:[%s175 + $0x90] sm:$0xff]
                %198 = vst [vmem:[%s176 + $0x50] sm:$0xff] %v197
                %v199 = vld [vmem:[%s175 + $0x98] sm:$0xff]
                %200 = vst [vmem:[%s176 + $0x58] sm:$0xff] %v199
                %v201 = vld [vmem:[%s175 + $0xa0] sm:$0xff]
                %202 = vst [vmem:[%s176 + $0x60] sm:$0xff] %v201
                %v203 = vld [vmem:[%s175 + $0xa8] sm:$0xff]
                %204 = vst [vmem:[%s176 + $0x68] sm:$0xff] %v203
                %v205 = vld [vmem:[%s175 + $0xb0] sm:$0xff]
                %206 = vst [vmem:[%s176 + $0x70] sm:$0xff] %v205
                %v207 = vld [vmem:[%s175 + $0xb8] sm:$0xff]
                %208 = vst [vmem:[%s176 + $0x78] sm:$0xff] %v207
                %v209 = vld [vmem:[%s175 + $0x100] sm:$0xff]
                %210 = vst [vmem:[%s176 + $0x80] sm:$0xff] %v209
                %v211 = vld [vmem:[%s175 + $0x108] sm:$0xff]
                %212 = vst [vmem:[%s176 + $0x88] sm:$0xff] %v211
                %v213 = vld [vmem:[%s175 + $0x110] sm:$0xff]
                %214 = vst [vmem:[%s176 + $0x90] sm:$0xff] %v213
                %v215 = vld [vmem:[%s175 + $0x118] sm:$0xff]
                %216 = vst [vmem:[%s176 + $0x98] sm:$0xff] %v215
                %v217 = vld [vmem:[%s175 + $0x120] sm:$0xff]
                %218 = vst [vmem:[%s176 + $0xa0] sm:$0xff] %v217
                %v219 = vld [vmem:[%s175 + $0x128] sm:$0xff]
                %220 = vst [vmem:[%s176 + $0xa8] sm:$0xff] %v219
                %v221 = vld [vmem:[%s175 + $0x130] sm:$0xff]
                %222 = vst [vmem:[%s176 + $0xb0] sm:$0xff] %v221
                %v223 = vld [vmem:[%s175 + $0x138] sm:$0xff]
                %224 = vst [vmem:[%s176 + $0xb8] sm:$0xff] %v223
                %v225 = vld [vmem:[%s175 + $0x180] sm:$0xff]
                %226 = vst [vmem:[%s176 + $0xc0] sm:$0xff] %v225
                %v227 = vld [vmem:[%s175 + $0x188] sm:$0xff]
                %228 = vst [vmem:[%s176 + $0xc8] sm:$0xff] %v227
                %v229 = vld [vmem:[%s175 + $0x190] sm:$0xff]
                %230 = vst [vmem:[%s176 + $0xd0] sm:$0xff] %v229
                %v231 = vld [vmem:[%s175 + $0x198] sm:$0xff]
                %232 = vst [vmem:[%s176 + $0xd8] sm:$0xff] %v231
                %v233 = vld [vmem:[%s175 + $0x1a0] sm:$0xff]
                %234 = vst [vmem:[%s176 + $0xe0] sm:$0xff] %v233
                %v235 = vld [vmem:[%s175 + $0x1a8] sm:$0xff]
                %236 = vst [vmem:[%s176 + $0xe8] sm:$0xff] %v235
                %v237 = vld [vmem:[%s175 + $0x1b0] sm:$0xff]
                %238 = vst [vmem:[%s176 + $0xf0] sm:$0xff] %v237
                %v239 = vld [vmem:[%s175 + $0x1b8] sm:$0xff]
                %240 = vst [vmem:[%s176 + $0xf8] sm:$0xff] %v239
                %v241 = vld [vmem:[%s175 + $0x200] sm:$0xff]
                %242 = vst [vmem:[%s176 + $0x100] sm:$0xff] %v241
                %v243 = vld [vmem:[%s175 + $0x208] sm:$0xff]
                %244 = vst [vmem:[%s176 + $0x108] sm:$0xff] %v243
                %v245 = vld [vmem:[%s175 + $0x210] sm:$0xff]
                %246 = vst [vmem:[%s176 + $0x110] sm:$0xff] %v245
                %v247 = vld [vmem:[%s175 + $0x218] sm:$0xff]
                %248 = vst [vmem:[%s176 + $0x118] sm:$0xff] %v247
                %v249 = vld [vmem:[%s175 + $0x220] sm:$0xff]
                %250 = vst [vmem:[%s176 + $0x120] sm:$0xff] %v249
                %v251 = vld [vmem:[%s175 + $0x228] sm:$0xff]
                %252 = vst [vmem:[%s176 + $0x128] sm:$0xff] %v251
                %v253 = vld [vmem:[%s175 + $0x230] sm:$0xff]
                %254 = vst [vmem:[%s176 + $0x130] sm:$0xff] %v253
                %v255 = vld [vmem:[%s175 + $0x238] sm:$0xff]
                %256 = vst [vmem:[%s176 + $0x138] sm:$0xff] %v255
                %v257 = vld [vmem:[%s175 + $0x280] sm:$0xff]
                %258 = vst [vmem:[%s176 + $0x140] sm:$0xff] %v257
                %v259 = vld [vmem:[%s175 + $0x288] sm:$0xff]
                %260 = vst [vmem:[%s176 + $0x148] sm:$0xff] %v259
                %v261 = vld [vmem:[%s175 + $0x290] sm:$0xff]
                %262 = vst [vmem:[%s176 + $0x150] sm:$0xff] %v261
                %v263 = vld [vmem:[%s175 + $0x298] sm:$0xff]
                %264 = vst [vmem:[%s176 + $0x158] sm:$0xff] %v263
                %v265 = vld [vmem:[%s175 + $0x2a0] sm:$0xff]
                %266 = vst [vmem:[%s176 + $0x160] sm:$0xff] %v265
                %v267 = vld [vmem:[%s175 + $0x2a8] sm:$0xff]
                %268 = vst [vmem:[%s176 + $0x168] sm:$0xff] %v267
                %v269 = vld [vmem:[%s175 + $0x2b0] sm:$0xff]
                %270 = vst [vmem:[%s176 + $0x170] sm:$0xff] %v269
                %v271 = vld [vmem:[%s175 + $0x2b8] sm:$0xff]
                %272 = vst [vmem:[%s176 + $0x178] sm:$0xff] %v271
                %v273 = vld [vmem:[%s175 + $0x300] sm:$0xff]
                %274 = vst [vmem:[%s176 + $0x180] sm:$0xff] %v273
                %v275 = vld [vmem:[%s175 + $0x308] sm:$0xff]
                %276 = vst [vmem:[%s176 + $0x188] sm:$0xff] %v275
                %v277 = vld [vmem:[%s175 + $0x310] sm:$0xff]
                %278 = vst [vmem:[%s176 + $0x190] sm:$0xff] %v277
                %v279 = vld [vmem:[%s175 + $0x318] sm:$0xff]
                %280 = vst [vmem:[%s176 + $0x198] sm:$0xff] %v279
                %v281 = vld [vmem:[%s175 + $0x320] sm:$0xff]
                %282 = vst [vmem:[%s176 + $0x1a0] sm:$0xff] %v281
                %v283 = vld [vmem:[%s175 + $0x328] sm:$0xff]
                %284 = vst [vmem:[%s176 + $0x1a8] sm:$0xff] %v283
                %v285 = vld [vmem:[%s175 + $0x330] sm:$0xff]
                %286 = vst [vmem:[%s176 + $0x1b0] sm:$0xff] %v285
                %v287 = vld [vmem:[%s175 + $0x338] sm:$0xff]
                %288 = vst [vmem:[%s176 + $0x1b8] sm:$0xff] %v287
                %v289 = vld [vmem:[%s175 + $0x380] sm:$0xff]
                %290 = vst [vmem:[%s176 + $0x1c0] sm:$0xff] %v289
                %v291 = vld [vmem:[%s175 + $0x388] sm:$0xff]
                %292 = vst [vmem:[%s176 + $0x1c8] sm:$0xff] %v291
                %v293 = vld [vmem:[%s175 + $0x390] sm:$0xff]
                %294 = vst [vmem:[%s176 + $0x1d0] sm:$0xff] %v293
                %v295 = vld [vmem:[%s175 + $0x398] sm:$0xff]
                %296 = vst [vmem:[%s176 + $0x1d8] sm:$0xff] %v295
                %v297 = vld [vmem:[%s175 + $0x3a0] sm:$0xff]
                %298 = vst [vmem:[%s176 + $0x1e0] sm:$0xff] %v297
                %v299 = vld [vmem:[%s175 + $0x3a8] sm:$0xff]
                %300 = vst [vmem:[%s176 + $0x1e8] sm:$0xff] %v299
                %v301 = vld [vmem:[%s175 + $0x3b0] sm:$0xff]
                %302 = vst [vmem:[%s176 + $0x1f0] sm:$0xff] %v301
                %v303 = vld [vmem:[%s175 + $0x3b8] sm:$0xff]
                %304 = vst [vmem:[%s176 + $0x1f8] sm:$0xff] %v303
                %v305 = vld [vmem:[%s175 + $0x400] sm:$0xff]
                %306 = vst [vmem:[%s176 + $0x200] sm:$0xff] %v305
                %v307 = vld [vmem:[%s175 + $0x408] sm:$0xff]
                %308 = vst [vmem:[%s176 + $0x208] sm:$0xff] %v307
                %v309 = vld [vmem:[%s175 + $0x410] sm:$0xff]
                %310 = vst [vmem:[%s176 + $0x210] sm:$0xff] %v309
                %v311 = vld [vmem:[%s175 + $0x418] sm:$0xff]
                %312 = vst [vmem:[%s176 + $0x218] sm:$0xff] %v311
                %v313 = vld [vmem:[%s175 + $0x420] sm:$0xff]
                %314 = vst [vmem:[%s176 + $0x220] sm:$0xff] %v313
                %v315 = vld [vmem:[%s175 + $0x428] sm:$0xff]
                %316 = vst [vmem:[%s176 + $0x228] sm:$0xff] %v315
                %v317 = vld [vmem:[%s175 + $0x430] sm:$0xff]
                %318 = vst [vmem:[%s176 + $0x230] sm:$0xff] %v317
                %v319 = vld [vmem:[%s175 + $0x438] sm:$0xff]
                %320 = vst [vmem:[%s176 + $0x238] sm:$0xff] %v319
                %v321 = vld [vmem:[%s175 + $0x480] sm:$0xff]
                %322 = vst [vmem:[%s176 + $0x240] sm:$0xff] %v321
                %v323 = vld [vmem:[%s175 + $0x488] sm:$0xff]
                %324 = vst [vmem:[%s176 + $0x248] sm:$0xff] %v323
                %v325 = vld [vmem:[%s175 + $0x490] sm:$0xff]
                %326 = vst [vmem:[%s176 + $0x250] sm:$0xff] %v325
                %v327 = vld [vmem:[%s175 + $0x498] sm:$0xff]
                %328 = vst [vmem:[%s176 + $0x258] sm:$0xff] %v327
                %v329 = vld [vmem:[%s175 + $0x4a0] sm:$0xff]
                %330 = vst [vmem:[%s176 + $0x260] sm:$0xff] %v329
                %v331 = vld [vmem:[%s175 + $0x4a8] sm:$0xff]
                %332 = vst [vmem:[%s176 + $0x268] sm:$0xff] %v331
                %v333 = vld [vmem:[%s175 + $0x4b0] sm:$0xff]
                %334 = vst [vmem:[%s176 + $0x270] sm:$0xff] %v333
                %v335 = vld [vmem:[%s175 + $0x4b8] sm:$0xff]
                %336 = vst [vmem:[%s176 + $0x278] sm:$0xff] %v335
                %v337 = vld [vmem:[%s175 + $0x500] sm:$0xff]
                %338 = vst [vmem:[%s176 + $0x280] sm:$0xff] %v337
                %v339 = vld [vmem:[%s175 + $0x508] sm:$0xff]
                %340 = vst [vmem:[%s176 + $0x288] sm:$0xff] %v339
                %v341 = vld [vmem:[%s175 + $0x510] sm:$0xff]
                %342 = vst [vmem:[%s176 + $0x290] sm:$0xff] %v341
                %v343 = vld [vmem:[%s175 + $0x518] sm:$0xff]
                %344 = vst [vmem:[%s176 + $0x298] sm:$0xff] %v343
                %v345 = vld [vmem:[%s175 + $0x520] sm:$0xff]
                %346 = vst [vmem:[%s176 + $0x2a0] sm:$0xff] %v345
                %v347 = vld [vmem:[%s175 + $0x528] sm:$0xff]
                %348 = vst [vmem:[%s176 + $0x2a8] sm:$0xff] %v347
                %v349 = vld [vmem:[%s175 + $0x530] sm:$0xff]
                %350 = vst [vmem:[%s176 + $0x2b0] sm:$0xff] %v349
                %v351 = vld [vmem:[%s175 + $0x538] sm:$0xff]
                %352 = vst [vmem:[%s176 + $0x2b8] sm:$0xff] %v351
              $region41: #{_lambda_.33} parent=35 // loop_footer
                %s174 = sadd.s32 1, %s170
              $region42: #{_lambda_.33} parent=35 // loop_footer_branch
                %169 = sbr.rel target = $region38
              $region43: #{_lambda_.33} parent=35 // loop_exit
                _
            $region36: #{_lambda_.33} parent=31 // pred_fallthru
              _
            // Predicated region
            $region44: #{_lambda_.33} parent=31 // pred_check
              _
            $region45: #{_lambda_.33} parent=31 // pred_check_branch
              %354 = sbr.rel target = $region47
            $region46: #{_lambda_.33} parent=31 // pred_region
              _
            $region47: #{_lambda_.33} parent=31 // pred_fallthru
              _
          $region32: #{_lambda_.33} parent=27 // pred_fallthru
            _
          %355 = vnop
        $region28: #{_lambda_.33} parent=23 // pred_fallthru
          _
        // Predicated region
        $region48: #{_lambda_.33} parent=23 // pred_check
          %p356 = pneg %p98
        $region49: #{_lambda_.33} parent=23 // pred_check_branch
          %358 = sbr.rel (%p356) target = $region51
        $region50: #{_lambda_.33} parent=23 // pred_region
          %s359 = smul.u32 16, %s10
          %p360 = scmp.lt.s32.totalorder %s359, 31
          %s361 = scalar_select %p360, %s359, 31
          %s362 = smul.addr %s361, 4
          %s363 = scalar_lea.vmem %s3, %s362
          %s364 = smul.u32 16, %s10
        $region51: #{_lambda_.33} parent=23 // pred_fallthru
          _
      $region24: #{_lambda_.33} parent=5 // pred_fallthru
        _
      %p365 = scmp.le.s32.totalorder 1, %s10
      %p366 = scmp.lt.s32.totalorder %s10, 3
      %p367 = pnand %p365, %p366
      %p368 = pneg %p367
      // Predicated region
      $region52: #{_lambda_.33} parent=5 // pred_check
        _
      $region53: #{_lambda_.33} parent=5 // pred_check_branch
        %370 = sbr.rel (%p367) target = $region55
      $region54: #{_lambda_.33} parent=5 // pred_region
        %s371 = ssub.s32 %s10, 1
        %s372 = sand.u32 %s44, 1
        %s373 = sand.u32 %s44, 1
        %s374 = smul.addr %s373, 704
        %s375 = scalar_lea.vmem [#allocation2], %s374
        // Predicated region
        $region56: #{_lambda_.33} parent=54 // pred_check
          %p376 = pneg %p57
        $region57: #{_lambda_.33} parent=54 // pred_check_branch
          %378 = sbr.rel (%p376) target = $region59
        $region58: #{_lambda_.33} parent=54 // pred_region
          _
        $region59: #{_lambda_.33} parent=54 // pred_fallthru
          _
        %p379 = pneg %p31
        %p380 = pneg %p28
        %s381 = sand.u32 %s44, 1
        %s382 = sand.u32 %s44, 1
        %s383 = smul.addr %s382, 704
        %s384 = scalar_lea.vmem [#allocation2], %s383
        %p385 = pneg %p57
        %p386 = pneg %p54
        %p387 = pneg %p78
        %p388 = pneg %p75
        %s389 = smul.u32 16, %s15
        %p390 = scmp.lt.s32.totalorder %s389, 31
        %s391 = scalar_select %p390, %s389, 31
        %s392 = smul.addr %s391, 4
        %s393 = scalar_lea.vmem %s3, %s392
        %p394 = pneg %p104
        %p395 = pneg %p101
        %p396 = pneg %p130
        %p397 = pneg %p127
        %s398 = smul.u32 16, %s15
        %p399 = scmp.lt.s32.totalorder %s398, 31
        %s400 = scalar_select %p399, %s398, 31
        %s401 = smul.addr %s400, 8
        %s402 = scalar_lea.vmem %s4, %s401
        %s403 = smul.u32 16, %s15
        %s404 = smul.u32 16, %s15
        %p405 = scmp.lt.s32.totalorder %s404, 31
        %s406 = scalar_select %p405, %s404, 31
        %s407 = smul.addr %s406, 4
        %s408 = scalar_lea.vmem %s3, %s407
        %s409 = smul.u32 16, %s15
        %s410 = smul.u32 16, %s15
        %p411 = scmp.lt.s32.totalorder %s410, 31
        %s412 = scalar_select %p411, %s410, 31
        %s413 = smul.addr %s412, 8
        %s414 = scalar_lea.vmem %s4, %s413
        %s415 = smul.u32 16, %s15
        %v417 = vld [vmem:[%s0] sm:$0xf]
        %v418 = vld [vmem:[%s375] sm:$0xff]
        %v419 = vld [vmem:[%s375 + $0x8] sm:$0xff]
        %v420 = vld [vmem:[%s375 + $0x10] sm:$0xff]
        %v421 = vld [vmem:[%s375 + $0x18] sm:$0xff]
        %v422 = vld [vmem:[%s375 + $0x20] sm:$0xff]
        %v423 = vld [vmem:[%s375 + $0x28] sm:$0xff]
        %v424 = vld [vmem:[%s375 + $0x30] sm:$0xff]
        %v425 = vld [vmem:[%s375 + $0x38] sm:$0xff]
        %v426 = vld [vmem:[%s375 + $0x40] sm:$0xff]
        %v427 = vld [vmem:[%s375 + $0x48] sm:$0xff]
        %v428 = vld [vmem:[%s375 + $0x50] sm:$0xff]
        %v429 = vld [vmem:[%s375 + $0x58] sm:$0xff]
        %v430 = vld [vmem:[%s375 + $0x60] sm:$0xff]
        %v431 = vld [vmem:[%s375 + $0x68] sm:$0xff]
        %v432 = vld [vmem:[%s375 + $0x70] sm:$0xff]
        %v433 = vld [vmem:[%s375 + $0x78] sm:$0xff]
        %v434 = vld [vmem:[%s375 + $0x80] sm:$0xff]
        %v435 = vld [vmem:[%s375 + $0x88] sm:$0xff]
        %v436 = vld [vmem:[%s375 + $0x90] sm:$0xff]
        %v437 = vld [vmem:[%s375 + $0x98] sm:$0xff]
        %v438 = vld [vmem:[%s375 + $0xa0] sm:$0xff]
        %v439 = vld [vmem:[%s375 + $0xa8] sm:$0xff]
        %v440 = vld [vmem:[%s375 + $0xb0] sm:$0xff]
        %v441 = vld [vmem:[%s375 + $0xb8] sm:$0xff]
        %v442 = vld [vmem:[%s375 + $0xc0] sm:$0xff]
        %v443 = vld [vmem:[%s375 + $0xc8] sm:$0xff]
        %v444 = vld [vmem:[%s375 + $0xd0] sm:$0xff]
        %v445 = vld [vmem:[%s375 + $0xd8] sm:$0xff]
        %v446 = vld [vmem:[%s375 + $0xe0] sm:$0xff]
        %v447 = vld [vmem:[%s375 + $0xe8] sm:$0xff]
        %v448 = vld [vmem:[%s375 + $0xf0] sm:$0xff]
        %v449 = vld [vmem:[%s375 + $0xf8] sm:$0xff]
        %v450 = vld [vmem:[%s375 + $0x100] sm:$0xff]
        %v451 = vld [vmem:[%s375 + $0x108] sm:$0xff]
        %v452 = vld [vmem:[%s375 + $0x110] sm:$0xff]
        %v453 = vld [vmem:[%s375 + $0x118] sm:$0xff]
        %v454 = vld [vmem:[%s375 + $0x120] sm:$0xff]
        %v455 = vld [vmem:[%s375 + $0x128] sm:$0xff]
        %v456 = vld [vmem:[%s375 + $0x130] sm:$0xff]
        %v457 = vld [vmem:[%s375 + $0x138] sm:$0xff]
        %v458 = vld [vmem:[%s375 + $0x140] sm:$0xff]
        %v459 = vld [vmem:[%s375 + $0x148] sm:$0xff]
        %v460 = vld [vmem:[%s375 + $0x150] sm:$0xff]
        %v461 = vld [vmem:[%s375 + $0x158] sm:$0xff]
        %v462 = vld [vmem:[%s375 + $0x160] sm:$0xff]
        %v463 = vld [vmem:[%s375 + $0x168] sm:$0xff]
        %v464 = vld [vmem:[%s375 + $0x170] sm:$0xff]
        %v465 = vld [vmem:[%s375 + $0x178] sm:$0xff]
        %v466 = vld [vmem:[%s375 + $0x180] sm:$0xff]
        %v467 = vld [vmem:[%s375 + $0x188] sm:$0xff]
        %v468 = vld [vmem:[%s375 + $0x190] sm:$0xff]
        %v469 = vld [vmem:[%s375 + $0x198] sm:$0xff]
        %v470 = vld [vmem:[%s375 + $0x1a0] sm:$0xff]
        %v471 = vld [vmem:[%s375 + $0x1a8] sm:$0xff]
        %v472 = vld [vmem:[%s375 + $0x1b0] sm:$0xff]
        %v473 = vld [vmem:[%s375 + $0x1b8] sm:$0xff]
        %v474 = vld [vmem:[%s375 + $0x1c0] sm:$0xff]
        %v475 = vld [vmem:[%s375 + $0x1c8] sm:$0xff]
        %v476 = vld [vmem:[%s375 + $0x1d0] sm:$0xff]
        %v477 = vld [vmem:[%s375 + $0x1d8] sm:$0xff]
        %v478 = vld [vmem:[%s375 + $0x1e0] sm:$0xff]
        %v479 = vld [vmem:[%s375 + $0x1e8] sm:$0xff]
        %v480 = vld [vmem:[%s375 + $0x1f0] sm:$0xff]
        %v481 = vld [vmem:[%s375 + $0x1f8] sm:$0xff]
        %v482 = vld [vmem:[%s375 + $0x200] sm:$0xff]
        %v483 = vld [vmem:[%s375 + $0x208] sm:$0xff]
        %v484 = vld [vmem:[%s375 + $0x210] sm:$0xff]
        %v485 = vld [vmem:[%s375 + $0x218] sm:$0xff]
        %v486 = vld [vmem:[%s375 + $0x220] sm:$0xff]
        %v487 = vld [vmem:[%s375 + $0x228] sm:$0xff]
        %v488 = vld [vmem:[%s375 + $0x230] sm:$0xff]
        %v489 = vld [vmem:[%s375 + $0x238] sm:$0xff]
        %v490 = vld [vmem:[%s375 + $0x240] sm:$0xff]
        %v491 = vld [vmem:[%s375 + $0x248] sm:$0xff]
        %v492 = vld [vmem:[%s375 + $0x250] sm:$0xff]
        %v493 = vld [vmem:[%s375 + $0x258] sm:$0xff]
        %v494 = vld [vmem:[%s375 + $0x260] sm:$0xff]
        %v495 = vld [vmem:[%s375 + $0x268] sm:$0xff]
        %v496 = vld [vmem:[%s375 + $0x270] sm:$0xff]
        %v497 = vld [vmem:[%s375 + $0x278] sm:$0xff]
        %v498 = vld [vmem:[%s375 + $0x280] sm:$0x11]
        %v499 = vld [vmem:[%s375 + $0x288] sm:$0x11]
        %v500 = vld [vmem:[%s375 + $0x290] sm:$0x11]
        %v501 = vld [vmem:[%s375 + $0x298] sm:$0x11]
        %v502 = vld [vmem:[%s375 + $0x2a0] sm:$0x11]
        %v503 = vld [vmem:[%s375 + $0x2a8] sm:$0x11]
        %v504 = vld [vmem:[%s375 + $0x2b0] sm:$0x11]
        %v505 = vld [vmem:[%s375 + $0x2b8] sm:$0x11]
        %v594 = vunpack.c.l.b16 %v418
        %v595 = vunpack.c.h.b16 %v418
        %v596 = vunpack.c.l.b16 %v419
        %v597 = vunpack.c.h.b16 %v419
        %v598 = vunpack.c.l.b16 %v420
        %v599 = vunpack.c.h.b16 %v420
        %v600 = vunpack.c.l.b16 %v421
        %v601 = vunpack.c.h.b16 %v421
        %v602 = vunpack.c.l.b16 %v422
        %v603 = vunpack.c.h.b16 %v422
        %v604 = vunpack.c.l.b16 %v423
        %v605 = vunpack.c.h.b16 %v423
        %v606 = vunpack.c.l.b16 %v424
        %v607 = vunpack.c.h.b16 %v424
        %v608 = vunpack.c.l.b16 %v425
        %v609 = vunpack.c.h.b16 %v425
        %v610 = vunpack.c.l.b16 %v426
        %v611 = vunpack.c.h.b16 %v426
        %v612 = vunpack.c.l.b16 %v427
        %v613 = vunpack.c.h.b16 %v427
        %v614 = vunpack.c.l.b16 %v428
        %v615 = vunpack.c.h.b16 %v428
        %v616 = vunpack.c.l.b16 %v429
        %v617 = vunpack.c.h.b16 %v429
        %v618 = vunpack.c.l.b16 %v430
        %v619 = vunpack.c.h.b16 %v430
        %v620 = vunpack.c.l.b16 %v431
        %v621 = vunpack.c.h.b16 %v431
        %v622 = vunpack.c.l.b16 %v432
        %v623 = vunpack.c.h.b16 %v432
        %v624 = vunpack.c.l.b16 %v433
        %v625 = vunpack.c.h.b16 %v433
        %v626 = vunpack.c.l.b16 %v434
        %v627 = vunpack.c.h.b16 %v434
        %v628 = vunpack.c.l.b16 %v435
        %v629 = vunpack.c.h.b16 %v435
        %v630 = vunpack.c.l.b16 %v436
        %v631 = vunpack.c.h.b16 %v436
        %v632 = vunpack.c.l.b16 %v437
        %v633 = vunpack.c.h.b16 %v437
        %v634 = vunpack.c.l.b16 %v438
        %v635 = vunpack.c.h.b16 %v438
        %v636 = vunpack.c.l.b16 %v439
        %v637 = vunpack.c.h.b16 %v439
        %v638 = vunpack.c.l.b16 %v440
        %v639 = vunpack.c.h.b16 %v440
        %v640 = vunpack.c.l.b16 %v441
        %v641 = vunpack.c.h.b16 %v441
        %v642 = vunpack.c.l.b16 %v442
        %v643 = vunpack.c.h.b16 %v442
        %v644 = vunpack.c.l.b16 %v443
        %v645 = vunpack.c.h.b16 %v443
        %v646 = vunpack.c.l.b16 %v444
        %v647 = vunpack.c.h.b16 %v444
        %v648 = vunpack.c.l.b16 %v445
        %v649 = vunpack.c.h.b16 %v445
        %v650 = vunpack.c.l.b16 %v446
        %v651 = vunpack.c.h.b16 %v446
        %v652 = vunpack.c.l.b16 %v447
        %v653 = vunpack.c.h.b16 %v447
        %v654 = vunpack.c.l.b16 %v448
        %v655 = vunpack.c.h.b16 %v448
        %v656 = vunpack.c.l.b16 %v449
        %v657 = vunpack.c.h.b16 %v449
        %v658 = vunpack.c.l.b16 %v450
        %v659 = vunpack.c.h.b16 %v450
        %v660 = vunpack.c.l.b16 %v451
        %v661 = vunpack.c.h.b16 %v451
        %v662 = vunpack.c.l.b16 %v452
        %v663 = vunpack.c.h.b16 %v452
        %v664 = vunpack.c.l.b16 %v453
        %v665 = vunpack.c.h.b16 %v453
        %v666 = vunpack.c.l.b16 %v454
        %v667 = vunpack.c.h.b16 %v454
        %v668 = vunpack.c.l.b16 %v455
        %v669 = vunpack.c.h.b16 %v455
        %v670 = vunpack.c.l.b16 %v456
        %v671 = vunpack.c.h.b16 %v456
        %v672 = vunpack.c.l.b16 %v457
        %v673 = vunpack.c.h.b16 %v457
        %v674 = vunpack.c.l.b16 %v458
        %v675 = vunpack.c.h.b16 %v458
        %v676 = vunpack.c.l.b16 %v459
        %v677 = vunpack.c.h.b16 %v459
        %v678 = vunpack.c.l.b16 %v460
        %v679 = vunpack.c.h.b16 %v460
        %v680 = vunpack.c.l.b16 %v461
        %v681 = vunpack.c.h.b16 %v461
        %v682 = vunpack.c.l.b16 %v462
        %v683 = vunpack.c.h.b16 %v462
        %v684 = vunpack.c.l.b16 %v463
        %v685 = vunpack.c.h.b16 %v463
        %v686 = vunpack.c.l.b16 %v464
        %v687 = vunpack.c.h.b16 %v464
        %v688 = vunpack.c.l.b16 %v465
        %v689 = vunpack.c.h.b16 %v465
        %v690 = vunpack.c.l.b16 %v466
        %v691 = vunpack.c.h.b16 %v466
        %v692 = vunpack.c.l.b16 %v467
        %v693 = vunpack.c.h.b16 %v467
        %v694 = vunpack.c.l.b16 %v468
        %v695 = vunpack.c.h.b16 %v468
        %v696 = vunpack.c.l.b16 %v469
        %v697 = vunpack.c.h.b16 %v469
        %v698 = vunpack.c.l.b16 %v470
        %v699 = vunpack.c.h.b16 %v470
        %v700 = vunpack.c.l.b16 %v471
        %v701 = vunpack.c.h.b16 %v471
        %v702 = vunpack.c.l.b16 %v472
        %v703 = vunpack.c.h.b16 %v472
        %v704 = vunpack.c.l.b16 %v473
        %v705 = vunpack.c.h.b16 %v473
        %v706 = vunpack.c.l.b16 %v474
        %v707 = vunpack.c.h.b16 %v474
        %v708 = vunpack.c.l.b16 %v475
        %v709 = vunpack.c.h.b16 %v475
        %v710 = vunpack.c.l.b16 %v476
        %v711 = vunpack.c.h.b16 %v476
        %v712 = vunpack.c.l.b16 %v477
        %v713 = vunpack.c.h.b16 %v477
        %v714 = vunpack.c.l.b16 %v478
        %v715 = vunpack.c.h.b16 %v478
        %v716 = vunpack.c.l.b16 %v479
        %v717 = vunpack.c.h.b16 %v479
        %v718 = vunpack.c.l.b16 %v480
        %v719 = vunpack.c.h.b16 %v480
        %v720 = vunpack.c.l.b16 %v481
        %v721 = vunpack.c.h.b16 %v481
        %v722 = vunpack.c.l.b16 %v482
        %v723 = vunpack.c.h.b16 %v482
        %v724 = vunpack.c.l.b16 %v483
        %v725 = vunpack.c.h.b16 %v483
        %v726 = vunpack.c.l.b16 %v484
        %v727 = vunpack.c.h.b16 %v484
        %v728 = vunpack.c.l.b16 %v485
        %v729 = vunpack.c.h.b16 %v485
        %v730 = vunpack.c.l.b16 %v486
        %v731 = vunpack.c.h.b16 %v486
        %v732 = vunpack.c.l.b16 %v487
        %v733 = vunpack.c.h.b16 %v487
        %v734 = vunpack.c.l.b16 %v488
        %v735 = vunpack.c.h.b16 %v488
        %v736 = vunpack.c.l.b16 %v489
        %v737 = vunpack.c.h.b16 %v489
        %v738 = vunpack.c.l.b16 %v490
        %v739 = vunpack.c.h.b16 %v490
        %v740 = vunpack.c.l.b16 %v491
        %v741 = vunpack.c.h.b16 %v491
        %v742 = vunpack.c.l.b16 %v492
        %v743 = vunpack.c.h.b16 %v492
        %v744 = vunpack.c.l.b16 %v493
        %v745 = vunpack.c.h.b16 %v493
        %v746 = vunpack.c.l.b16 %v494
        %v747 = vunpack.c.h.b16 %v494
        %v748 = vunpack.c.l.b16 %v495
        %v749 = vunpack.c.h.b16 %v495
        %v750 = vunpack.c.l.b16 %v496
        %v751 = vunpack.c.h.b16 %v496
        %v752 = vunpack.c.l.b16 %v497
        %v753 = vunpack.c.h.b16 %v497
        %v754 = vunpack.c.l.b16 %v498
        %v755 = vunpack.c.h.b16 %v498
        %v756 = vunpack.c.l.b16 %v499
        %v757 = vunpack.c.h.b16 %v499
        %v758 = vunpack.c.l.b16 %v500
        %v759 = vunpack.c.h.b16 %v500
        %v760 = vunpack.c.l.b16 %v501
        %v761 = vunpack.c.h.b16 %v501
        %v762 = vunpack.c.l.b16 %v502
        %v763 = vunpack.c.h.b16 %v502
        %v764 = vunpack.c.l.b16 %v503
        %v765 = vunpack.c.h.b16 %v503
        %v766 = vunpack.c.l.b16 %v504
        %v767 = vunpack.c.h.b16 %v504
        %v768 = vunpack.c.l.b16 %v505
        %v769 = vunpack.c.h.b16 %v505
        %v770 = vpack.c.b16 %v610, %v594
        %v771 = vpack.c.b16 %v611, %v595
        %v772 = vpack.c.b16 %v612, %v596
        %v773 = vpack.c.b16 %v613, %v597
        %v774 = vpack.c.b16 %v614, %v598
        %v775 = vpack.c.b16 %v615, %v599
        %v776 = vpack.c.b16 %v616, %v600
        %v777 = vpack.c.b16 %v617, %v601
        %v778 = vpack.c.b16 %v618, %v602
        %v779 = vpack.c.b16 %v619, %v603
        %v780 = vpack.c.b16 %v620, %v604
        %v781 = vpack.c.b16 %v621, %v605
        %v782 = vpack.c.b16 %v622, %v606
        %v783 = vpack.c.b16 %v623, %v607
        %v784 = vpack.c.b16 %v624, %v608
        %v785 = vpack.c.b16 %v625, %v609
        %v786 = vpack.c.b16 %v642, %v626
        %v787 = vpack.c.b16 %v643, %v627
        %v788 = vpack.c.b16 %v644, %v628
        %v789 = vpack.c.b16 %v645, %v629
        %v790 = vpack.c.b16 %v646, %v630
        %v791 = vpack.c.b16 %v647, %v631
        %v792 = vpack.c.b16 %v648, %v632
        %v793 = vpack.c.b16 %v649, %v633
        %v794 = vpack.c.b16 %v650, %v634
        %v795 = vpack.c.b16 %v651, %v635
        %v796 = vpack.c.b16 %v652, %v636
        %v797 = vpack.c.b16 %v653, %v637
        %v798 = vpack.c.b16 %v654, %v638
        %v799 = vpack.c.b16 %v655, %v639
        %v800 = vpack.c.b16 %v656, %v640
        %v801 = vpack.c.b16 %v657, %v641
        %v802 = vpack.c.b16 %v674, %v658
        %v803 = vpack.c.b16 %v675, %v659
        %v804 = vpack.c.b16 %v676, %v660
        %v805 = vpack.c.b16 %v677, %v661
        %v806 = vpack.c.b16 %v678, %v662
        %v807 = vpack.c.b16 %v679, %v663
        %v808 = vpack.c.b16 %v680, %v664
        %v809 = vpack.c.b16 %v681, %v665
        %v810 = vpack.c.b16 %v682, %v666
        %v811 = vpack.c.b16 %v683, %v667
        %v812 = vpack.c.b16 %v684, %v668
        %v813 = vpack.c.b16 %v685, %v669
        %v814 = vpack.c.b16 %v686, %v670
        %v815 = vpack.c.b16 %v687, %v671
        %v816 = vpack.c.b16 %v688, %v672
        %v817 = vpack.c.b16 %v689, %v673
        %v818 = vpack.c.b16 %v706, %v690
        %v819 = vpack.c.b16 %v707, %v691
        %v820 = vpack.c.b16 %v708, %v692
        %v821 = vpack.c.b16 %v709, %v693
        %v822 = vpack.c.b16 %v710, %v694
        %v823 = vpack.c.b16 %v711, %v695
        %v824 = vpack.c.b16 %v712, %v696
        %v825 = vpack.c.b16 %v713, %v697
        %v826 = vpack.c.b16 %v714, %v698
        %v827 = vpack.c.b16 %v715, %v699
        %v828 = vpack.c.b16 %v716, %v700
        %v829 = vpack.c.b16 %v717, %v701
        %v830 = vpack.c.b16 %v718, %v702
        %v831 = vpack.c.b16 %v719, %v703
        %v832 = vpack.c.b16 %v720, %v704
        %v833 = vpack.c.b16 %v721, %v705
        %v834 = vpack.c.b16 %v738, %v722
        %v835 = vpack.c.b16 %v739, %v723
        %v836 = vpack.c.b16 %v740, %v724
        %v837 = vpack.c.b16 %v741, %v725
        %v838 = vpack.c.b16 %v742, %v726
        %v839 = vpack.c.b16 %v743, %v727
        %v840 = vpack.c.b16 %v744, %v728
        %v841 = vpack.c.b16 %v745, %v729
        %v842 = vpack.c.b16 %v746, %v730
        %v843 = vpack.c.b16 %v747, %v731
        %v844 = vpack.c.b16 %v748, %v732
        %v845 = vpack.c.b16 %v749, %v733
        %v846 = vpack.c.b16 %v750, %v734
        %v847 = vpack.c.b16 %v751, %v735
        %v848 = vpack.c.b16 %v752, %v736
        %v849 = vpack.c.b16 %v753, %v737
        %v850 = vpack.c.b16 %v754, %v754
        %v851 = vpack.c.b16 %v755, %v755
        %v852 = vpack.c.b16 %v756, %v756
        %v853 = vpack.c.b16 %v757, %v757
        %v854 = vpack.c.b16 %v758, %v758
        %v855 = vpack.c.b16 %v759, %v759
        %v856 = vpack.c.b16 %v760, %v760
        %v857 = vpack.c.b16 %v761, %v761
        %v858 = vpack.c.b16 %v762, %v762
        %v859 = vpack.c.b16 %v763, %v763
        %v860 = vpack.c.b16 %v764, %v764
        %v861 = vpack.c.b16 %v765, %v765
        %v862 = vpack.c.b16 %v766, %v766
        %v863 = vpack.c.b16 %v767, %v767
        %v864 = vpack.c.b16 %v768, %v768
        %v865 = vpack.c.b16 %v769, %v769
        %vm946 = vcmask 662528
        %v948 = vsel %vm946, %v417, 0
        %vm950 = vcmask 1040384
        %v951 = vsel 0, 4294967295, 65535
        %v952 = vsel %vm950, %v951, 0
        %v954 = vand.u32 %v850, %v952
        %v957 = vand.u32 %v851, %v952
        %v960 = vand.u32 %v852, %v952
        %v963 = vand.u32 %v853, %v952
        %v966 = vand.u32 %v854, %v952
        %v969 = vand.u32 %v855, %v952
        %v972 = vand.u32 %v856, %v952
        %v975 = vand.u32 %v857, %v952
        %v978 = vand.u32 %v858, %v952
        %v981 = vand.u32 %v859, %v952
        %v984 = vand.u32 %v860, %v952
        %v987 = vand.u32 %v861, %v952
        %v990 = vand.u32 %v862, %v952
        %v993 = vand.u32 %v863, %v952
        %v996 = vand.u32 %v864, %v952
        %v999 = vand.u32 %v865, %v952
        %1001 = vmatprep.subr.bf16.mxu0 %v771
        %1002 = vmatpush1.bf16.msra.mxu0 %v770
        %1003 = vmatprep.subr.bf16.mxu0 %v787
        %1004 = vmatpush1.bf16.msra.mxu0 %v786
        %1005 = vmatprep.subr.bf16.mxu0 %v803
        %1006 = vmatpush1.bf16.msra.mxu0 %v802
        %1007 = vmatprep.subr.bf16.mxu0 %v819
        %1008 = vmatpush1.bf16.msra.mxu0 %v818
        %1009 = vmatprep.subr.bf16.mxu0 %v835
        %1010 = vmatpush1.bf16.msra.mxu0 %v834
        %1011 = vmatprep.subr.bf16.mxu0 %v957
        %1012 = vmatpush1.bf16.msra.mxu0 %v954
        %1013 = vmatprep.subr.bf16.mxu0 0
        %1014 = vmatpush1.bf16.msra.mxu0 0
        %1015 = vmatprep.subr.bf16.mxu0 0
        %1016 = vmatpush1.bf16.msra.mxu0 0
        %1017 = vmatprep.subr.bf16.mxu0 0
        %1018 = vmatpush1.bf16.msra.mxu0 0
        %1019 = vmatprep.subr.bf16.mxu0 0
        %1020 = vmatpush1.bf16.msra.mxu0 0
        %1021 = vmatprep.subr.bf16.mxu0 0
        %1022 = vmatpush1.bf16.msra.mxu0 0
        %1023 = vmatprep.subr.bf16.mxu0 0
        %1024 = vmatpush1.bf16.msra.mxu0 0
        %1025 = vmatprep.subr.bf16.mxu0 0
        %1026 = vmatpush1.bf16.msra.mxu0 0
        %1027 = vmatprep.subr.bf16.mxu0 0
        %1028 = vmatpush1.bf16.msra.mxu0 0
        %1029 = vmatprep.subr.bf16.mxu0 0
        %1030 = vmatpush1.bf16.msra.mxu0 0
        %1031 = vmatprep.subr.bf16.mxu0 0
        %1032 = vmatpush1.bf16.msra.mxu0 0
        %1033 = vmatprep.mubr.bf16.mxu0 0
        %1034 = vmatmul.mubr.bf16.gmra.mrb[0].mxu0 %v948
        %v1035 = vpop.f32.mrb[0].mxu0
        %v1036 = vadd.f32 0.0, %v1035
        %v1037 = vpop.f32.mrb[0].mxu0
        %v1038 = vadd.f32 0.0, %v1037
        %v1039 = vpop.f32.mrb[0].mxu0
        %v1040 = vpop.f32.mrb[0].mxu0
        %1041 = vdwg.mxu0
        %1042 = vmatprep.subr.bf16.mxu0 %v773
        %1043 = vmatpush1.bf16.msra.mxu0 %v772
        %1044 = vmatprep.subr.bf16.mxu0 %v789
        %1045 = vmatpush1.bf16.msra.mxu0 %v788
        %1046 = vmatprep.subr.bf16.mxu0 %v805
        %1047 = vmatpush1.bf16.msra.mxu0 %v804
        %1048 = vmatprep.subr.bf16.mxu0 %v821
        %1049 = vmatpush1.bf16.msra.mxu0 %v820
        %1050 = vmatprep.subr.bf16.mxu0 %v837
        %1051 = vmatpush1.bf16.msra.mxu0 %v836
        %1052 = vmatprep.subr.bf16.mxu0 %v963
        %1053 = vmatpush1.bf16.msra.mxu0 %v960
        %1054 = vmatprep.subr.bf16.mxu0 0
        %1055 = vmatpush1.bf16.msra.mxu0 0
        %1056 = vmatprep.subr.bf16.mxu0 0
        %1057 = vmatpush1.bf16.msra.mxu0 0
        %1058 = vmatprep.subr.bf16.mxu0 0
        %1059 = vmatpush1.bf16.msra.mxu0 0
        %1060 = vmatprep.subr.bf16.mxu0 0
        %1061 = vmatpush1.bf16.msra.mxu0 0
        %1062 = vmatprep.subr.bf16.mxu0 0
        %1063 = vmatpush1.bf16.msra.mxu0 0
        %1064 = vmatprep.subr.bf16.mxu0 0
        %1065 = vmatpush1.bf16.msra.mxu0 0
        %1066 = vmatprep.subr.bf16.mxu0 0
        %1067 = vmatpush1.bf16.msra.mxu0 0
        %1068 = vmatprep.subr.bf16.mxu0 0
        %1069 = vmatpush1.bf16.msra.mxu0 0
        %1070 = vmatprep.subr.bf16.mxu0 0
        %1071 = vmatpush1.bf16.msra.mxu0 0
        %1072 = vmatprep.subr.bf16.mxu0 0
        %1073 = vmatpush1.bf16.msra.mxu0 0
        %1074 = vmatprep.mubr.bf16.mxu0 0
        %1075 = vmatmul.mubr.bf16.gmra.mrb[0].mxu0 %v948
        %v1076 = vpop.f32.mrb[0].mxu0
        %v1077 = vadd.f32 0.0, %v1076
        %v1078 = vpop.f32.mrb[0].mxu0
        %v1079 = vadd.f32 0.0, %v1078
        %v1080 = vpop.f32.mrb[0].mxu0
        %v1081 = vpop.f32.mrb[0].mxu0
        %1082 = vdwg.mxu0
        %1083 = vmatprep.subr.bf16.mxu0 %v775
        %1084 = vmatpush1.bf16.msra.mxu0 %v774
        %1085 = vmatprep.subr.bf16.mxu0 %v791
        %1086 = vmatpush1.bf16.msra.mxu0 %v790
        %1087 = vmatprep.subr.bf16.mxu0 %v807
        %1088 = vmatpush1.bf16.msra.mxu0 %v806
        %1089 = vmatprep.subr.bf16.mxu0 %v823
        %1090 = vmatpush1.bf16.msra.mxu0 %v822
        %1091 = vmatprep.subr.bf16.mxu0 %v839
        %1092 = vmatpush1.bf16.msra.mxu0 %v838
        %1093 = vmatprep.subr.bf16.mxu0 %v969
        %1094 = vmatpush1.bf16.msra.mxu0 %v966
        %1095 = vmatprep.subr.bf16.mxu0 0
        %1096 = vmatpush1.bf16.msra.mxu0 0
        %1097 = vmatprep.subr.bf16.mxu0 0
        %1098 = vmatpush1.bf16.msra.mxu0 0
        %1099 = vmatprep.subr.bf16.mxu0 0
        %1100 = vmatpush1.bf16.msra.mxu0 0
        %1101 = vmatprep.subr.bf16.mxu0 0
        %1102 = vmatpush1.bf16.msra.mxu0 0
        %1103 = vmatprep.subr.bf16.mxu0 0
        %1104 = vmatpush1.bf16.msra.mxu0 0
        %1105 = vmatprep.subr.bf16.mxu0 0
        %1106 = vmatpush1.bf16.msra.mxu0 0
        %1107 = vmatprep.subr.bf16.mxu0 0
        %1108 = vmatpush1.bf16.msra.mxu0 0
        %1109 = vmatprep.subr.bf16.mxu0 0
        %1110 = vmatpush1.bf16.msra.mxu0 0
        %1111 = vmatprep.subr.bf16.mxu0 0
        %1112 = vmatpush1.bf16.msra.mxu0 0
        %1113 = vmatprep.subr.bf16.mxu0 0
        %1114 = vmatpush1.bf16.msra.mxu0 0
        %1115 = vmatprep.mubr.bf16.mxu0 0
        %1116 = vmatmul.mubr.bf16.gmra.mrb[0].mxu0 %v948
        %v1117 = vpop.f32.mrb[0].mxu0
        %v1118 = vadd.f32 0.0, %v1117
        %v1119 = vpop.f32.mrb[0].mxu0
        %v1120 = vadd.f32 0.0, %v1119
        %v1121 = vpop.f32.mrb[0].mxu0
        %v1122 = vpop.f32.mrb[0].mxu0
        %1123 = vdwg.mxu0
        %1124 = vmatprep.subr.bf16.mxu0 %v777
        %1125 = vmatpush1.bf16.msra.mxu0 %v776
        %1126 = vmatprep.subr.bf16.mxu0 %v793
        %1127 = vmatpush1.bf16.msra.mxu0 %v792
        %1128 = vmatprep.subr.bf16.mxu0 %v809
        %1129 = vmatpush1.bf16.msra.mxu0 %v808
        %1130 = vmatprep.subr.bf16.mxu0 %v825
        %1131 = vmatpush1.bf16.msra.mxu0 %v824
        %1132 = vmatprep.subr.bf16.mxu0 %v841
        %1133 = vmatpush1.bf16.msra.mxu0 %v840
        %1134 = vmatprep.subr.bf16.mxu0 %v975
        %1135 = vmatpush1.bf16.msra.mxu0 %v972
        %1136 = vmatprep.subr.bf16.mxu0 0
        %1137 = vmatpush1.bf16.msra.mxu0 0
        %1138 = vmatprep.subr.bf16.mxu0 0
        %1139 = vmatpush1.bf16.msra.mxu0 0
        %1140 = vmatprep.subr.bf16.mxu0 0
        %1141 = vmatpush1.bf16.msra.mxu0 0
        %1142 = vmatprep.subr.bf16.mxu0 0
        %1143 = vmatpush1.bf16.msra.mxu0 0
        %1144 = vmatprep.subr.bf16.mxu0 0
        %1145 = vmatpush1.bf16.msra.mxu0 0
        %1146 = vmatprep.subr.bf16.mxu0 0
        %1147 = vmatpush1.bf16.msra.mxu0 0
        %1148 = vmatprep.subr.bf16.mxu0 0
        %1149 = vmatpush1.bf16.msra.mxu0 0
        %1150 = vmatprep.subr.bf16.mxu0 0
        %1151 = vmatpush1.bf16.msra.mxu0 0
        %1152 = vmatprep.subr.bf16.mxu0 0
        %1153 = vmatpush1.bf16.msra.mxu0 0
        %1154 = vmatprep.subr.bf16.mxu0 0
        %1155 = vmatpush1.bf16.msra.mxu0 0
        %1156 = vmatprep.mubr.bf16.mxu0 0
        %1157 = vmatmul.mubr.bf16.gmra.mrb[0].mxu0 %v948
        %v1158 = vpop.f32.mrb[0].mxu0
        %v1159 = vadd.f32 0.0, %v1158
        %v1160 = vpop.f32.mrb[0].mxu0
        %v1161 = vadd.f32 0.0, %v1160
        %v1162 = vpop.f32.mrb[0].mxu0
        %v1163 = vpop.f32.mrb[0].mxu0
        %1164 = vdwg.mxu0
        %1165 = vmatprep.subr.bf16.mxu0 %v779
        %1166 = vmatpush1.bf16.msra.mxu0 %v778
        %1167 = vmatprep.subr.bf16.mxu0 %v795
        %1168 = vmatpush1.bf16.msra.mxu0 %v794
        %1169 = vmatprep.subr.bf16.mxu0 %v811
        %1170 = vmatpush1.bf16.msra.mxu0 %v810
        %1171 = vmatprep.subr.bf16.mxu0 %v827
        %1172 = vmatpush1.bf16.msra.mxu0 %v826
        %1173 = vmatprep.subr.bf16.mxu0 %v843
        %1174 = vmatpush1.bf16.msra.mxu0 %v842
        %1175 = vmatprep.subr.bf16.mxu0 %v981
        %1176 = vmatpush1.bf16.msra.mxu0 %v978
        %1177 = vmatprep.subr.bf16.mxu0 0
        %1178 = vmatpush1.bf16.msra.mxu0 0
        %1179 = vmatprep.subr.bf16.mxu0 0
        %1180 = vmatpush1.bf16.msra.mxu0 0
        %1181 = vmatprep.subr.bf16.mxu0 0
        %1182 = vmatpush1.bf16.msra.mxu0 0
        %1183 = vmatprep.subr.bf16.mxu0 0
        %1184 = vmatpush1.bf16.msra.mxu0 0
        %1185 = vmatprep.subr.bf16.mxu0 0
        %1186 = vmatpush1.bf16.msra.mxu0 0
        %1187 = vmatprep.subr.bf16.mxu0 0
        %1188 = vmatpush1.bf16.msra.mxu0 0
        %1189 = vmatprep.subr.bf16.mxu0 0
        %1190 = vmatpush1.bf16.msra.mxu0 0
        %1191 = vmatprep.subr.bf16.mxu0 0
        %1192 = vmatpush1.bf16.msra.mxu0 0
        %1193 = vmatprep.subr.bf16.mxu0 0
        %1194 = vmatpush1.bf16.msra.mxu0 0
        %1195 = vmatprep.subr.bf16.mxu0 0
        %1196 = vmatpush1.bf16.msra.mxu0 0
        %1197 = vmatprep.mubr.bf16.mxu0 0
        %1198 = vmatmul.mubr.bf16.gmra.mrb[0].mxu0 %v948
        %v1199 = vpop.f32.mrb[0].mxu0
        %v1200 = vadd.f32 0.0, %v1199
        %v1201 = vpop.f32.mrb[0].mxu0
        %v1202 = vadd.f32 0.0, %v1201
        %v1203 = vpop.f32.mrb[0].mxu0
        %v1204 = vpop.f32.mrb[0].mxu0
        %1205 = vdwg.mxu0
        %1206 = vmatprep.subr.bf16.mxu0 %v781
        %1207 = vmatpush1.bf16.msra.mxu0 %v780
        %1208 = vmatprep.subr.bf16.mxu0 %v797
        %1209 = vmatpush1.bf16.msra.mxu0 %v796
        %1210 = vmatprep.subr.bf16.mxu0 %v813
        %1211 = vmatpush1.bf16.msra.mxu0 %v812
        %1212 = vmatprep.subr.bf16.mxu0 %v829
        %1213 = vmatpush1.bf16.msra.mxu0 %v828
        %1214 = vmatprep.subr.bf16.mxu0 %v845
        %1215 = vmatpush1.bf16.msra.mxu0 %v844
        %1216 = vmatprep.subr.bf16.mxu0 %v987
        %1217 = vmatpush1.bf16.msra.mxu0 %v984
        %1218 = vmatprep.subr.bf16.mxu0 0
        %1219 = vmatpush1.bf16.msra.mxu0 0
        %1220 = vmatprep.subr.bf16.mxu0 0
        %1221 = vmatpush1.bf16.msra.mxu0 0
        %1222 = vmatprep.subr.bf16.mxu0 0
        %1223 = vmatpush1.bf16.msra.mxu0 0
        %1224 = vmatprep.subr.bf16.mxu0 0
        %1225 = vmatpush1.bf16.msra.mxu0 0
        %1226 = vmatprep.subr.bf16.mxu0 0
        %1227 = vmatpush1.bf16.msra.mxu0 0
        %1228 = vmatprep.subr.bf16.mxu0 0
        %1229 = vmatpush1.bf16.msra.mxu0 0
        %1230 = vmatprep.subr.bf16.mxu0 0
        %1231 = vmatpush1.bf16.msra.mxu0 0
        %1232 = vmatprep.subr.bf16.mxu0 0
        %1233 = vmatpush1.bf16.msra.mxu0 0
        %1234 = vmatprep.subr.bf16.mxu0 0
        %1235 = vmatpush1.bf16.msra.mxu0 0
        %1236 = vmatprep.subr.bf16.mxu0 0
        %1237 = vmatpush1.bf16.msra.mxu0 0
        %1238 = vmatprep.mubr.bf16.mxu0 0
        %1239 = vmatmul.mubr.bf16.gmra.mrb[0].mxu0 %v948
        %v1240 = vpop.f32.mrb[0].mxu0
        %v1241 = vadd.f32 0.0, %v1240
        %v1242 = vpop.f32.mrb[0].mxu0
        %v1243 = vadd.f32 0.0, %v1242
        %v1244 = vpop.f32.mrb[0].mxu0
        %v1245 = vpop.f32.mrb[0].mxu0
        %1246 = vdwg.mxu0
        %1247 = vmatprep.subr.bf16.mxu0 %v783
        %1248 = vmatpush1.bf16.msra.mxu0 %v782
        %1249 = vmatprep.subr.bf16.mxu0 %v799
        %1250 = vmatpush1.bf16.msra.mxu0 %v798
        %1251 = vmatprep.subr.bf16.mxu0 %v815
        %1252 = vmatpush1.bf16.msra.mxu0 %v814
        %1253 = vmatprep.subr.bf16.mxu0 %v831
        %1254 = vmatpush1.bf16.msra.mxu0 %v830
        %1255 = vmatprep.subr.bf16.mxu0 %v847
        %1256 = vmatpush1.bf16.msra.mxu0 %v846
        %1257 = vmatprep.subr.bf16.mxu0 %v993
        %1258 = vmatpush1.bf16.msra.mxu0 %v990
        %1259 = vmatprep.subr.bf16.mxu0 0
        %1260 = vmatpush1.bf16.msra.mxu0 0
        %1261 = vmatprep.subr.bf16.mxu0 0
        %1262 = vmatpush1.bf16.msra.mxu0 0
        %1263 = vmatprep.subr.bf16.mxu0 0
        %1264 = vmatpush1.bf16.msra.mxu0 0
        %1265 = vmatprep.subr.bf16.mxu0 0
        %1266 = vmatpush1.bf16.msra.mxu0 0
        %1267 = vmatprep.subr.bf16.mxu0 0
        %1268 = vmatpush1.bf16.msra.mxu0 0
        %1269 = vmatprep.subr.bf16.mxu0 0
        %1270 = vmatpush1.bf16.msra.mxu0 0
        %1271 = vmatprep.subr.bf16.mxu0 0
        %1272 = vmatpush1.bf16.msra.mxu0 0
        %1273 = vmatprep.subr.bf16.mxu0 0
        %1274 = vmatpush1.bf16.msra.mxu0 0
        %1275 = vmatprep.subr.bf16.mxu0 0
        %1276 = vmatpush1.bf16.msra.mxu0 0
        %1277 = vmatprep.subr.bf16.mxu0 0
        %1278 = vmatpush1.bf16.msra.mxu0 0
        %1279 = vmatprep.mubr.bf16.mxu0 0
        %1280 = vmatmul.mubr.bf16.gmra.mrb[0].mxu0 %v948
        %v1281 = vpop.f32.mrb[0].mxu0
        %v1282 = vadd.f32 0.0, %v1281
        %v1283 = vpop.f32.mrb[0].mxu0
        %v1284 = vadd.f32 0.0, %v1283
        %v1285 = vpop.f32.mrb[0].mxu0
        %v1286 = vpop.f32.mrb[0].mxu0
        %1287 = vdwg.mxu0
        %1288 = vmatprep.subr.bf16.mxu0 %v785
        %1289 = vmatpush1.bf16.msra.mxu0 %v784
        %1290 = vmatprep.subr.bf16.mxu0 %v801
        %1291 = vmatpush1.bf16.msra.mxu0 %v800
        %1292 = vmatprep.subr.bf16.mxu0 %v817
        %1293 = vmatpush1.bf16.msra.mxu0 %v816
        %1294 = vmatprep.subr.bf16.mxu0 %v833
        %1295 = vmatpush1.bf16.msra.mxu0 %v832
        %1296 = vmatprep.subr.bf16.mxu0 %v849
        %1297 = vmatpush1.bf16.msra.mxu0 %v848
        %1298 = vmatprep.subr.bf16.mxu0 %v999
        %1299 = vmatpush1.bf16.msra.mxu0 %v996
        %1300 = vmatprep.subr.bf16.mxu0 0
        %1301 = vmatpush1.bf16.msra.mxu0 0
        %1302 = vmatprep.subr.bf16.mxu0 0
        %1303 = vmatpush1.bf16.msra.mxu0 0
        %1304 = vmatprep.subr.bf16.mxu0 0
        %1305 = vmatpush1.bf16.msra.mxu0 0
        %1306 = vmatprep.subr.bf16.mxu0 0
        %1307 = vmatpush1.bf16.msra.mxu0 0
        %1308 = vmatprep.subr.bf16.mxu0 0
        %1309 = vmatpush1.bf16.msra.mxu0 0
        %1310 = vmatprep.subr.bf16.mxu0 0
        %1311 = vmatpush1.bf16.msra.mxu0 0
        %1312 = vmatprep.subr.bf16.mxu0 0
        %1313 = vmatpush1.bf16.msra.mxu0 0
        %1314 = vmatprep.subr.bf16.mxu0 0
        %1315 = vmatpush1.bf16.msra.mxu0 0
        %1316 = vmatprep.subr.bf16.mxu0 0
        %1317 = vmatpush1.bf16.msra.mxu0 0
        %1318 = vmatprep.subr.bf16.mxu0 0
        %1319 = vmatpush1.bf16.msra.mxu0 0
        %1320 = vmatprep.mubr.bf16.mxu0 0
        %1321 = vmatmul.mubr.bf16.gmra.mrb[0].mxu0 %v948
        %v1322 = vpop.f32.mrb[0].mxu0
        %v1323 = vadd.f32 0.0, %v1322
        %v1324 = vpop.f32.mrb[0].mxu0
        %v1325 = vadd.f32 0.0, %v1324
        %v1326 = vpop.f32.mrb[0].mxu0
        %v1327 = vpop.f32.mrb[0].mxu0
        %1328 = vdwg.mxu0
        %v1329 = vld [vmem:[%s2] sm:$0xff]
        %1331 = vset.pattern.permute.xlu0 1
        %1332 = vperm.xlu0 %1331, %v1329
        %v1333 = vpop.permute.xlu0 %1332
        %v1335 = vmul.f32 %v1036, %v1333
        %v1336 = vmul.f32 %v1038, %v1333
        %v1337 = vmul.f32 %v1077, %v1333
        %v1338 = vmul.f32 %v1079, %v1333
        %v1339 = vmul.f32 %v1118, %v1333
        %v1340 = vmul.f32 %v1120, %v1333
        %v1341 = vmul.f32 %v1159, %v1333
        %v1342 = vmul.f32 %v1161, %v1333
        %v1343 = vmul.f32 %v1200, %v1333
        %v1344 = vmul.f32 %v1202, %v1333
        %v1345 = vmul.f32 %v1241, %v1333
        %v1346 = vmul.f32 %v1243, %v1333
        %v1347 = vmul.f32 %v1282, %v1333
        %v1348 = vmul.f32 %v1284, %v1333
        %v1349 = vmul.f32 %v1323, %v1333
        %v1350 = vmul.f32 %v1325, %v1333
        %1351 = vset.pattern.permute.xlu0 2
        %1352 = vperm.xlu0 %1351, %v1329
        %v1353 = vpop.permute.xlu0 %1352
        %v1355 = vadd.f32 %v1335, %v1353
        %v1356 = vadd.f32 %v1336, %v1353
        %v1357 = vadd.f32 %v1337, %v1353
        %v1358 = vadd.f32 %v1338, %v1353
        %v1359 = vadd.f32 %v1339, %v1353
        %v1360 = vadd.f32 %v1340, %v1353
        %v1361 = vadd.f32 %v1341, %v1353
        %v1362 = vadd.f32 %v1342, %v1353
        %v1363 = vadd.f32 %v1343, %v1353
        %v1364 = vadd.f32 %v1344, %v1353
        %v1365 = vadd.f32 %v1345, %v1353
        %v1366 = vadd.f32 %v1346, %v1353
        %v1367 = vadd.f32 %v1347, %v1353
        %v1368 = vadd.f32 %v1348, %v1353
        %v1369 = vadd.f32 %v1349, %v1353
        %v1370 = vadd.f32 %v1350, %v1353
        %v1371 = vld [vmem:[%s408] sm:$0xff]
        %v1372 = vld [vmem:[%s408 + $0x8] sm:$0xff]
        %v1373 = vld [vmem:[%s408 + $0x10] sm:$0xff]
        %v1374 = vld [vmem:[%s408 + $0x18] sm:$0xff]
        %v1375 = vld [vmem:[%s408 + $0x20] sm:$0xff]
        %v1376 = vld [vmem:[%s408 + $0x28] sm:$0xff]
        %v1377 = vld [vmem:[%s408 + $0x30] sm:$0xff]
        %v1378 = vld [vmem:[%s408 + $0x38] sm:$0xff]
        %v1379 = vunpack.c.l.bf16 %v1371
        %v1380 = vunpack.c.h.bf16 %v1371
        %v1381 = vunpack.c.l.bf16 %v1372
        %v1382 = vunpack.c.h.bf16 %v1372
        %v1383 = vunpack.c.l.bf16 %v1373
        %v1384 = vunpack.c.h.bf16 %v1373
        %v1385 = vunpack.c.l.bf16 %v1374
        %v1386 = vunpack.c.h.bf16 %v1374
        %v1387 = vunpack.c.l.bf16 %v1375
        %v1388 = vunpack.c.h.bf16 %v1375
        %v1389 = vunpack.c.l.bf16 %v1376
        %v1390 = vunpack.c.h.bf16 %v1376
        %v1391 = vunpack.c.l.bf16 %v1377
        %v1392 = vunpack.c.h.bf16 %v1377
        %v1393 = vunpack.c.l.bf16 %v1378
        %v1394 = vunpack.c.h.bf16 %v1378
        %v1395 = vadd.f32 %v1355, %v1379
        %v1396 = vadd.f32 %v1356, %v1380
        %v1397 = vadd.f32 %v1357, %v1381
        %v1398 = vadd.f32 %v1358, %v1382
        %v1399 = vadd.f32 %v1359, %v1383
        %v1400 = vadd.f32 %v1360, %v1384
        %v1401 = vadd.f32 %v1361, %v1385
        %v1402 = vadd.f32 %v1362, %v1386
        %v1403 = vadd.f32 %v1363, %v1387
        %v1404 = vadd.f32 %v1364, %v1388
        %v1405 = vadd.f32 %v1365, %v1389
        %v1406 = vadd.f32 %v1366, %v1390
        %v1407 = vadd.f32 %v1367, %v1391
        %v1408 = vadd.f32 %v1368, %v1392
        %v1409 = vadd.f32 %v1369, %v1393
        %v1410 = vadd.f32 %v1370, %v1394
        %v1411 = vxor.u32 %v1395, 2147483648
        %v1412 = vxor.u32 %v1396, 2147483648
        %v1413 = vxor.u32 %v1397, 2147483648
        %v1414 = vxor.u32 %v1398, 2147483648
        %v1415 = vxor.u32 %v1399, 2147483648
        %v1416 = vxor.u32 %v1400, 2147483648
        %v1417 = vxor.u32 %v1401, 2147483648
        %v1418 = vxor.u32 %v1402, 2147483648
        %v1419 = vxor.u32 %v1403, 2147483648
        %v1420 = vxor.u32 %v1404, 2147483648
        %v1421 = vxor.u32 %v1405, 2147483648
        %v1422 = vxor.u32 %v1406, 2147483648
        %v1423 = vxor.u32 %v1407, 2147483648
        %v1424 = vxor.u32 %v1408, 2147483648
        %v1425 = vxor.u32 %v1409, 2147483648
        %v1426 = vxor.u32 %v1410, 2147483648
        %v1427 = vmul.f32 %v1411, 1.442695
        %v1428 = vpow.pop %v1427
        %v1429 = vmul.f32 %v1412, 1.442695
        %v1430 = vpow.pop %v1429
        %v1431 = vmul.f32 %v1413, 1.442695
        %v1432 = vpow.pop %v1431
        %v1433 = vmul.f32 %v1414, 1.442695
        %v1434 = vpow.pop %v1433
        %v1435 = vmul.f32 %v1415, 1.442695
        %v1436 = vpow.pop %v1435
        %v1437 = vmul.f32 %v1416, 1.442695
        %v1438 = vpow.pop %v1437
        %v1439 = vmul.f32 %v1417, 1.442695
        %v1440 = vpow.pop %v1439
        %v1441 = vmul.f32 %v1418, 1.442695
        %v1442 = vpow.pop %v1441
        %v1443 = vmul.f32 %v1419, 1.442695
        %v1444 = vpow.pop %v1443
        %v1445 = vmul.f32 %v1420, 1.442695
        %v1446 = vpow.pop %v1445
        %v1447 = vmul.f32 %v1421, 1.442695
        %v1448 = vpow.pop %v1447
        %v1449 = vmul.f32 %v1422, 1.442695
        %v1450 = vpow.pop %v1449
        %v1451 = vmul.f32 %v1423, 1.442695
        %v1452 = vpow.pop %v1451
        %v1453 = vmul.f32 %v1424, 1.442695
        %v1454 = vpow.pop %v1453
        %v1455 = vmul.f32 %v1425, 1.442695
        %v1456 = vpow.pop %v1455
        %v1457 = vmul.f32 %v1426, 1.442695
        %v1458 = vpow.pop %v1457
        %v1459 = vadd.f32 %v1428, 1.0
        %v1460 = vadd.f32 %v1430, 1.0
        %v1461 = vadd.f32 %v1432, 1.0
        %v1462 = vadd.f32 %v1434, 1.0
        %v1463 = vadd.f32 %v1436, 1.0
        %v1464 = vadd.f32 %v1438, 1.0
        %v1465 = vadd.f32 %v1440, 1.0
        %v1466 = vadd.f32 %v1442, 1.0
        %v1467 = vadd.f32 %v1444, 1.0
        %v1468 = vadd.f32 %v1446, 1.0
        %v1469 = vadd.f32 %v1448, 1.0
        %v1470 = vadd.f32 %v1450, 1.0
        %v1471 = vadd.f32 %v1452, 1.0
        %v1472 = vadd.f32 %v1454, 1.0
        %v1473 = vadd.f32 %v1456, 1.0
        %v1474 = vadd.f32 %v1458, 1.0
        %v1475 = vrcp.pop %v1459
        %v1476 = vmul.f32 1.0, %v1475
        %v1477 = vrcp.pop %v1460
        %v1478 = vmul.f32 1.0, %v1477
        %v1479 = vrcp.pop %v1461
        %v1480 = vmul.f32 1.0, %v1479
        %v1481 = vrcp.pop %v1462
        %v1482 = vmul.f32 1.0, %v1481
        %v1483 = vrcp.pop %v1463
        %v1484 = vmul.f32 1.0, %v1483
        %v1485 = vrcp.pop %v1464
        %v1486 = vmul.f32 1.0, %v1485
        %v1487 = vrcp.pop %v1465
        %v1488 = vmul.f32 1.0, %v1487
        %v1489 = vrcp.pop %v1466
        %v1490 = vmul.f32 1.0, %v1489
        %v1491 = vrcp.pop %v1467
        %v1492 = vmul.f32 1.0, %v1491
        %v1493 = vrcp.pop %v1468
        %v1494 = vmul.f32 1.0, %v1493
        %v1495 = vrcp.pop %v1469
        %v1496 = vmul.f32 1.0, %v1495
        %v1497 = vrcp.pop %v1470
        %v1498 = vmul.f32 1.0, %v1497
        %v1499 = vrcp.pop %v1471
        %v1500 = vmul.f32 1.0, %v1499
        %v1501 = vrcp.pop %v1472
        %v1502 = vmul.f32 1.0, %v1501
        %v1503 = vrcp.pop %v1473
        %v1504 = vmul.f32 1.0, %v1503
        %v1505 = vrcp.pop %v1474
        %v1506 = vmul.f32 1.0, %v1505
        %1507 = vst [vmem:[%s414] sm:$0xff] %v1476
        %1508 = vst [vmem:[%s414 + $0x8] sm:$0xff] %v1478
        %1509 = vst [vmem:[%s414 + $0x10] sm:$0xff] %v1480
        %1510 = vst [vmem:[%s414 + $0x18] sm:$0xff] %v1482
        %1511 = vst [vmem:[%s414 + $0x20] sm:$0xff] %v1484
        %1512 = vst [vmem:[%s414 + $0x28] sm:$0xff] %v1486
        %1513 = vst [vmem:[%s414 + $0x30] sm:$0xff] %v1488
        %1514 = vst [vmem:[%s414 + $0x38] sm:$0xff] %v1490
        %1515 = vst [vmem:[%s414 + $0x40] sm:$0xff] %v1492
        %1516 = vst [vmem:[%s414 + $0x48] sm:$0xff] %v1494
        %1517 = vst [vmem:[%s414 + $0x50] sm:$0xff] %v1496
        %1518 = vst [vmem:[%s414 + $0x58] sm:$0xff] %v1498
        %1519 = vst [vmem:[%s414 + $0x60] sm:$0xff] %v1500
        %1520 = vst [vmem:[%s414 + $0x68] sm:$0xff] %v1502
        %1521 = vst [vmem:[%s414 + $0x70] sm:$0xff] %v1504
        %1522 = vst [vmem:[%s414 + $0x78] sm:$0xff] %v1506
        %s1523 = smul.u32 16, %s15
        %p1524 = scmp.lt.s32.totalorder %s1523, 31
        %s1525 = scalar_select %p1524, %s1523, 31
        %s1526 = smul.addr %s1525, 8
        %s1527 = scalar_lea.vmem %s4, %s1526
        // Predicated region
        $region60: #{_lambda_.33} parent=54 // pred_check
          %p1528 = pneg %p127
        $region61: #{_lambda_.33} parent=54 // pred_check_branch
          %1530 = sbr.rel (%p1528) target = $region63
        $region62: #{_lambda_.33} parent=54 // pred_region
          %s1531 = smul.u32 16, %s15
        $region63: #{_lambda_.33} parent=54 // pred_fallthru
          _
      $region55: #{_lambda_.33} parent=5 // pred_fallthru
        _
      %p1532 = scmp.le.s32.totalorder 2, %s10
      // Predicated region
      $region64: #{_lambda_.33} parent=5 // pred_check
        %p1533 = pneg %p1532
      $region65: #{_lambda_.33} parent=5 // pred_check_branch
        %1535 = sbr.rel (%p1533) target = $region67
      $region66: #{_lambda_.33} parent=5 // pred_region
        %s1536 = ssub.s32 %s10, 2
        // Predicated region
        $region68: #{_lambda_.33} parent=66 // pred_check
          %p1537 = pneg %p133
        $region69: #{_lambda_.33} parent=66 // pred_check_branch
          %1539 = sbr.rel (%p1537) target = $region71
        $region70: #{_lambda_.33} parent=66 // pred_region
          %s1540 = smul.u32 16, %s16
          %p1541 = scmp.lt.s32.totalorder %s1540, 31
          %s1542 = scalar_select %p1541, %s1540, 31
          %s1543 = smul.addr %s1542, 8
          %s1544 = scalar_lea.vmem %s4, %s1543
        $region71: #{_lambda_.33} parent=66 // pred_fallthru
          _
      $region67: #{_lambda_.33} parent=5 // pred_fallthru
        _
    $region6: #{_lambda_.33} parent=1 // loop_footer
      %s14 = sadd.s32 1, %s10
    $region7: #{_lambda_.33} parent=1 // loop_footer_branch
      %9 = sbr.rel target = $region3
    $region8: #{_lambda_.33} parent=1 // loop_exit
      _

</llo_original>
